<compile_context>
chip_gen: v6e
topology: v6e:2x2x1
jax: 0.10.0
libtpu: 0.0.40
codegen_flags: <defaults>
</compile_context>

<pallas_src>
import numpy as np
import jax
import jax.numpy as jnp
from jax.experimental import pallas as pl
from jax.experimental.pallas import tpu as pltpu

_VMEM_LIMIT = 48 * 1024 * 1024  # < v7x 64 MiB/TC, comfortable on v5e/v6e


def _round_up(v, m):
    return ((v + m - 1) // m) * m


# ----------------------------------------------------------------------------
# Fused forward kernel (whole network for one batch tile)
# ----------------------------------------------------------------------------
def _fused_net_kernel(x_ref, w1_ref, b1_ref, w2_ref, b2_ref, w3_ref, b3_ref,
                      fc1w_ref, fc1b_ref, fc2w_ref, fc2b_ref,
                      out_ref, a2_scr, a3_scr):
    B = x_ref.shape[1]

    def conv_relu_pool(src_ref, wk_ref, b_ref, oh, pw, cout):
        """5x5 conv (pad=1, banded-matmul form) + bias + ReLU + 2x2 max-pool.

        src_ref: (Hp, B, K) bf16 activation; rows 0 / Hp-1 are the zero height
                 padding; lane index = w*Cin + ci (no width padding -- the band
                 in the weight matrix is clipped at the edges instead).
        wk_ref : (5, K, 2*pw*cout) bf16, one banded matrix per kernel row kh;
                 output columns are [even conv cols | odd conv cols].
        b_ref  : (1, pw*cout) f32 bias tiled over the pooled width.
        Returns (pw, B, pw*cout) f32 pooled activation (square output).
        """
        k = src_ref.shape[2]
        acc = None
        for kh in range(5):                                   # static, unrolled
            lhs = src_ref[pl.ds(kh, oh)]                      # (oh, B, k)
            lhs = lhs.reshape(oh * B, k)                      # free: B % 16 == 0
            d = jnp.dot(lhs, wk_ref[kh], preferred_element_type=jnp.float32)
            acc = d if acc is None else acc + d               # (oh*B, 2*pw*cout)
        half = pw * cout
        y = jnp.maximum(acc[:, :half], acc[:, half:])         # width pool
        y = jnp.maximum(y + b_ref[...], 0.0)                  # bias + ReLU
        y = y.reshape(oh, B, half)[:2 * pw]                   # drop unused row(s)
        y = y.reshape(pw, 2, B, half)
        return jnp.maximum(y[:, 0], y[:, 1])                  # height pool

    # --- stage 1: conv1 + ReLU + pool : 1x28x28 -> 10x13x13 -------------------
    y1 = conv_relu_pool(x_ref, w1_ref, b1_ref, oh=26, pw=13, cout=10)  # (13,B,130)
    a2_scr[...] = jnp.zeros(a2_scr.shape, a2_scr.dtype)
    a2_scr[pl.ds(1, 13)] = y1.astype(a2_scr.dtype)            # rows 0/14 = zero pad

    # --- stage 2: conv2 + ReLU + pool : 10x13x13 -> 20x5x5 --------------------
    # TODO(synk): nn.Dropout2d after this pool is identity (eval-mode semantics).
    y2 = conv_relu_pool(a2_scr, w2_ref, b2_ref, oh=11, pw=5, cout=20)  # (5,B,100)
    a3_scr[...] = jnp.zeros(a3_scr.shape, a3_scr.dtype)
    a3_scr[pl.ds(1, 5)] = y2.astype(a3_scr.dtype)             # rows 0/6 = zero pad

    # --- stage 3: conv3 + ReLU + pool : 20x5x5 -> 32x1x1 ----------------------
    y3 = conv_relu_pool(a3_scr, w3_ref, b3_ref, oh=3, pw=1, cout=32)   # (1,B,32)

    # --- flatten (spatial is 1x1, so flatten == channels) + fc head -----------
    feat = y3[0]                                              # (B, 32) f32
    h = jnp.dot(feat, fc1w_ref[...], preferred_element_type=jnp.float32)
    h = jnp.maximum(h + fc1b_ref[...], 0.0)
    # TODO(synk): F.dropout between fc1 and fc2 is identity (eval-mode semantics).
    logits = jnp.dot(h, fc2w_ref[...], preferred_element_type=jnp.float32)
    logits = logits + fc2b_ref[...]
    m = jnp.max(logits, axis=-1, keepdims=True)
    lse = m + jnp.log(jnp.sum(jnp.exp(logits - m), axis=-1, keepdims=True))
    out_ref[...] = logits - lse


# ----------------------------------------------------------------------------
# Weight packing (plain JAX / numpy, done once per forward at trace time)
# ----------------------------------------------------------------------------
def _banded_conv_weights(w_oihw, w_in, pw, dtype=jnp.bfloat16):
    """PyTorch (Cout,Cin,5,5) conv weight -> (5, w_in*Cin, 2*pw*Cout) banded matrices.

    Row index    = w*Cin + ci            (w = un-padded input column)
    Column index = j*Cout + co, j < pw are even conv columns (ow=2j),
                   j >= pw the odd ones (ow=2(j-pw)+1).
    Entry        = w_oihw[co, ci, kh, w - ow + 1] when 0 <= w - ow + 1 < 5,
                   else 0 (the +1 encodes the conv's padding=1; out-of-range
                   entries reproduce zero padding without widening the lanes).
    """
    cout, cin, kh, kw = w_oihw.shape
    ow = np.concatenate([2 * np.arange(pw), 2 * np.arange(pw) + 1])        # (2*pw,)
    sel = (np.arange(w_in)[:, None, None] - ow[None, :, None] + 1
           == np.arange(kw)[None, None, :]).astype(np.float32)             # (w_in, 2pw, kw)
    wt = jnp.transpose(w_oihw, (2, 3, 1, 0)).astype(jnp.float32)           # (kh, kw, cin, cout)
    wk = jnp.einsum("wjk,hkic->hwijc", jnp.asarray(sel), wt)               # (kh, w, cin, 2pw, cout)
    return wk.reshape(kh, w_in * cin, 2 * pw * cout).astype(dtype)


def _tiled_bias(b, pw):
    return jnp.tile(b, pw).reshape(1, -1).astype(jnp.float32)


# ----------------------------------------------------------------------------
# Wrapper
# ----------------------------------------------------------------------------
def net_forward(x_nchw, p):
    N = x_nchw.shape[0]
    # Batch tile: multiple of 16 (bf16 sublane packing), and always >= 2 grid
    # steps so the "parallel" axis can shard across both v7x TensorCores.
    TILE_B = min(128, max(16, _round_up((N + 1) // 2, 16)))
    Npad = max(_round_up(N, TILE_B), 2 * TILE_B)

    # Input laid out (padded_h, batch, w): kernel-row slices become outer-dim
    # slices; height zero padding (conv padding=1) is physical, width padding
    # is folded into the banded weight matrices.
    xi = jnp.transpose(x_nchw[:, 0, :, :], (1, 0, 2))                       # (28, N, 28)
    xi = jnp.pad(xi, ((1, 1), (0, Npad - N), (0, 0))).astype(jnp.bfloat16)  # (30, Npad, 28)

    w1 = _banded_conv_weights(p["conv1_w"], 28, 13)            # (5, 28, 260)
    b1 = _tiled_bias(p["conv1_b"], 13)                         # (1, 130)
    w2 = _banded_conv_weights(p["conv2_w"], 13, 5)             # (5, 130, 200)
    b2 = _tiled_bias(p["conv2_b"], 5)                          # (1, 100)
    w3 = _banded_conv_weights(p["conv3_w"], 5, 1)              # (5, 100, 64)
    b3 = _tiled_bias(p["conv3_b"], 1)                          # (1, 32)
    fc1w = p["fc1_w"].T.astype(jnp.float32)                    # (32, 64)
    fc1b = p["fc1_b"].reshape(1, -1).astype(jnp.float32)       # (1, 64)
    fc2w = p["fc2_w"].T.astype(jnp.float32)                    # (64, 10)
    fc2b = p["fc2_b"].reshape(1, -1).astype(jnp.float32)       # (1, 10)

    out = pl.pallas_call(
        _fused_net_kernel,
        out_shape=jax.ShapeDtypeStruct((Npad, 10), jnp.float32),
        grid=(Npad // TILE_B,),
        in_specs=[
            pl.BlockSpec((30, TILE_B, 28), lambda i: (0, i, 0)),   # input tile
            pl.BlockSpec((5, 28, 260), lambda i: (0, 0, 0)),       # conv1 banded
            pl.BlockSpec((1, 130), lambda i: (0, 0)),
            pl.BlockSpec((5, 130, 200), lambda i: (0, 0, 0)),      # conv2 banded
            pl.BlockSpec((1, 100), lambda i: (0, 0)),
            pl.BlockSpec((5, 100, 64), lambda i: (0, 0, 0)),       # conv3 banded
            pl.BlockSpec((1, 32), lambda i: (0, 0)),
            pl.BlockSpec((32, 64), lambda i: (0, 0)),              # fc1
            pl.BlockSpec((1, 64), lambda i: (0, 0)),
            pl.BlockSpec((64, 10), lambda i: (0, 0)),              # fc2
            pl.BlockSpec((1, 10), lambda i: (0, 0)),
        ],
        out_specs=pl.BlockSpec((TILE_B, 10), lambda i: (i, 0)),
        scratch_shapes=[
            pltpu.VMEM((15, TILE_B, 130), jnp.bfloat16),   # conv2 input (h-padded)
            pltpu.VMEM((7, TILE_B, 100), jnp.bfloat16),    # conv3 input (h-padded)
        ],
        compiler_params=pltpu.CompilerParams(
            dimension_semantics=("parallel",),
            vmem_limit_bytes=_VMEM_LIMIT),
    )(xi, w1, b1, w2, b2, w3, b3, fc1w, fc1b, fc2w, fc2b)
    return out[:N]


# ----------------------------------------------------------------------------
# Deterministic parameter init (PyTorch-like uniform(-1/sqrt(fan_in), +..))
# ----------------------------------------------------------------------------
def init_params(key):
    def uni(k, shape, fan_in):
        bound = 1.0 / np.sqrt(fan_in)
        return jax.random.uniform(k, shape, jnp.float32, -bound, bound)

    ks = jax.random.split(key, 10)
    return {
        "conv1_w": uni(ks[0], (10, 1, 5, 5), 1 * 25),
        "conv1_b": uni(ks[1], (10,), 1 * 25),
        "conv2_w": uni(ks[2], (20, 10, 5, 5), 10 * 25),
        "conv2_b": uni(ks[3], (20,), 10 * 25),
        "conv3_w": uni(ks[4], (32, 20, 5, 5), 20 * 25),
        "conv3_b": uni(ks[5], (32,), 20 * 25),
        "fc1_w": uni(ks[6], (64, 32), 32),
        "fc1_b": uni(ks[7], (64,), 32),
        "fc2_w": uni(ks[8], (10, 64), 64),
        "fc2_b": uni(ks[9], (10,), 64),
    }


# ----------------------------------------------------------------------------
# Pure-JAX f32 reference (for the sanity check)
# ----------------------------------------------------------------------------
def reference_forward(x_nchw, p):
    x = jnp.transpose(x_nchw, (0, 2, 3, 1)).astype(jnp.float32)

    def conv(x, w, b):
        w_hwio = jnp.transpose(w, (2, 3, 1, 0))
        y = jax.lax.conv_general_dilated(
            x, w_hwio, window_strides=(1, 1), padding=((1, 1), (1, 1)),
            dimension_numbers=("NHWC", "HWIO", "NHWC"))
        return jax.nn.relu(y + b)

    def pool(x):
        N, H, W, C = x.shape
        PH, PW = H // 2, W // 2
        xc = x[:, :2 * PH, :2 * PW, :].reshape(N, PH, 2, PW, 2, C)
        return jnp.max(xc, axis=(2, 4))

    x = pool(conv(x, p["conv1_w"], p["conv1_b"]))
    x = pool(conv(x, p["conv2_w"], p["conv2_b"]))
    x = pool(conv(x, p["conv3_w"], p["conv3_b"]))
    x = x.reshape(x.shape[0], -1)
    x = jax.nn.relu(x @ p["fc1_w"].T + p["fc1_b"])
    x = x @ p["fc2_w"].T + p["fc2_b"]
    return jax.nn.log_softmax(x, axis=1)


if __name__ == "__main__":
    key = jax.random.PRNGKey(0)
    pkey, xkey = jax.random.split(key)
    params = init_params(pkey)
    # Input implied by the module: flatten must yield 32 features => 1x28x28.
    x = jax.random.normal(xkey, (2, 1, 28, 28), dtype=jnp.float32)  # NCHW like PyTorch

    fwd = jax.jit(net_forward)
    out = jax.block_until_ready(fwd(x, params))

    ref = np.asarray(reference_forward(x, params))
    out_np = np.asarray(out)

    assert out_np.shape == (2, 10), out_np.shape
    assert np.all(np.isfinite(out_np))
    # log_softmax rows must exponentiate to probability distributions
    assert np.allclose(np.exp(out_np).sum(axis=1), 1.0, atol=1e-3)
    # agree with the pure-f32 reference (loose tol for the bf16 MXU path)
    assert np.allclose(out_np, ref, atol=2e-1, rtol=2e-1), np.max(np.abs(out_np - ref))

    print("KERNEL_OK")
</pallas_src>

<mosaic_0001>
module attributes {stable_mosaic.version = 11 : i64} {
  func.func @_fused_net_kernel(%arg0: i32, %arg1: memref<30x16x28xbf16, #tpu.memory_space<vmem>>, %arg2: memref<5x28x260xbf16, #tpu.memory_space<vmem>>, %arg3: memref<1x130xf32, #tpu.memory_space<vmem>>, %arg4: memref<5x130x200xbf16, #tpu.memory_space<vmem>>, %arg5: memref<1x100xf32, #tpu.memory_space<vmem>>, %arg6: memref<5x100x64xbf16, #tpu.memory_space<vmem>>, %arg7: memref<1x32xf32, #tpu.memory_space<vmem>>, %arg8: memref<32x64xf32, #tpu.memory_space<vmem>>, %arg9: memref<1x64xf32, #tpu.memory_space<vmem>>, %arg10: memref<64x10xf32, #tpu.memory_space<vmem>>, %arg11: memref<1x10xf32, #tpu.memory_space<vmem>>, %arg12: memref<16x10xf32, #tpu.memory_space<vmem>>, %arg13: memref<15x16x130xbf16, #tpu.memory_space<vmem>>, %arg14: memref<7x16x100xbf16, #tpu.memory_space<vmem>>) attributes {dimension_semantics = [#tpu.dimension_semantics<parallel>], iteration_bounds = array<i64: 2>, scalar_prefetch = 0 : i64, scratch_operands = 2 : i64, tpu.core_type = #tpu.core_type<tc>, window_params = [{transform_indices = @transform_0, window_bounds = array<i64: 30, 16, 28>}, {pipeline_mode = #tpu.pipeline_mode<synchronous>, transform_indices = @transform_1, window_bounds = array<i64: 5, 28, 260>}, {pipeline_mode = #tpu.pipeline_mode<synchronous>, transform_indices = @transform_2, window_bounds = array<i64: 1, 130>}, {pipeline_mode = #tpu.pipeline_mode<synchronous>, transform_indices = @transform_3, window_bounds = array<i64: 5, 130, 200>}, {pipeline_mode = #tpu.pipeline_mode<synchronous>, transform_indices = @transform_4, window_bounds = array<i64: 1, 100>}, {pipeline_mode = #tpu.pipeline_mode<synchronous>, transform_indices = @transform_5, window_bounds = array<i64: 5, 100, 64>}, {pipeline_mode = #tpu.pipeline_mode<synchronous>, transform_indices = @transform_6, window_bounds = array<i64: 1, 32>}, {pipeline_mode = #tpu.pipeline_mode<synchronous>, transform_indices = @transform_7, window_bounds = array<i64: 32, 64>}, {pipeline_mode = #tpu.pipeline_mode<synchronous>, transform_indices = @transform_8, window_bounds = array<i64: 1, 64>}, {pipeline_mode = #tpu.pipeline_mode<synchronous>, transform_indices = @transform_9, window_bounds = array<i64: 64, 10>}, {pipeline_mode = #tpu.pipeline_mode<synchronous>, transform_indices = @transform_10, window_bounds = array<i64: 1, 10>}, {transform_indices = @transform_11, window_bounds = array<i64: 16, 10>}]} {
    %c0 = arith.constant 0 : index
    %c0_0 = arith.constant 0 : index
    %c0_1 = arith.constant 0 : index
    %0 = vector.load %arg1[%c0, %c0_0, %c0_1] : memref<30x16x28xbf16, #tpu.memory_space<vmem>>, vector<26x16x28xbf16>
    %1 = vector.shape_cast %0 : vector<26x16x28xbf16> to vector<416x28xbf16>
    %c0_2 = arith.constant 0 : index
    %c0_3 = arith.constant 0 : index
    %c0_4 = arith.constant 0 : index
    %2 = vector.load %arg2[%c0_2, %c0_3, %c0_4] : memref<5x28x260xbf16, #tpu.memory_space<vmem>>, vector<1x28x260xbf16>
    %3 = vector.shape_cast %2 : vector<1x28x260xbf16> to vector<28x260xbf16>
    %cst = arith.constant dense<0.000000e+00> : vector<416x260xf32>
    %4 = tpu.matmul %1, %3, %cst {dimension_numbers = #tpu.dot_dimension_numbers<[1], [0], [0], [1], [0, 0, 1, 1], [], []>} : vector<416x28xbf16>, vector<28x260xbf16>, vector<416x260xf32> -> vector<416x260xf32>
    %c1 = arith.constant 1 : index
    %c0_5 = arith.constant 0 : index
    %c0_6 = arith.constant 0 : index
    %5 = vector.load %arg1[%c1, %c0_5, %c0_6] : memref<30x16x28xbf16, #tpu.memory_space<vmem>>, vector<26x16x28xbf16>
    %6 = vector.shape_cast %5 : vector<26x16x28xbf16> to vector<416x28xbf16>
    %c1_7 = arith.constant 1 : index
    %c0_8 = arith.constant 0 : index
    %c0_9 = arith.constant 0 : index
    %7 = vector.load %arg2[%c1_7, %c0_8, %c0_9] : memref<5x28x260xbf16, #tpu.memory_space<vmem>>, vector<1x28x260xbf16>
    %8 = vector.shape_cast %7 : vector<1x28x260xbf16> to vector<28x260xbf16>
    %cst_10 = arith.constant dense<0.000000e+00> : vector<416x260xf32>
    %9 = tpu.matmul %6, %8, %cst_10 {dimension_numbers = #tpu.dot_dimension_numbers<[1], [0], [0], [1], [0, 0, 1, 1], [], []>} : vector<416x28xbf16>, vector<28x260xbf16>, vector<416x260xf32> -> vector<416x260xf32>
    %10 = arith.addf %4, %9 : vector<416x260xf32>
    %c2 = arith.constant 2 : index
    %c0_11 = arith.constant 0 : index
    %c0_12 = arith.constant 0 : index
    %11 = vector.load %arg1[%c2, %c0_11, %c0_12] : memref<30x16x28xbf16, #tpu.memory_space<vmem>>, vector<26x16x28xbf16>
    %12 = vector.shape_cast %11 : vector<26x16x28xbf16> to vector<416x28xbf16>
    %c2_13 = arith.constant 2 : index
    %c0_14 = arith.constant 0 : index
    %c0_15 = arith.constant 0 : index
    %13 = vector.load %arg2[%c2_13, %c0_14, %c0_15] : memref<5x28x260xbf16, #tpu.memory_space<vmem>>, vector<1x28x260xbf16>
    %14 = vector.shape_cast %13 : vector<1x28x260xbf16> to vector<28x260xbf16>
    %cst_16 = arith.constant dense<0.000000e+00> : vector<416x260xf32>
    %15 = tpu.matmul %12, %14, %cst_16 {dimension_numbers = #tpu.dot_dimension_numbers<[1], [0], [0], [1], [0, 0, 1, 1], [], []>} : vector<416x28xbf16>, vector<28x260xbf16>, vector<416x260xf32> -> vector<416x260xf32>
    %16 = arith.addf %10, %15 : vector<416x260xf32>
    %c3 = arith.constant 3 : index
    %c0_17 = arith.constant 0 : index
    %c0_18 = arith.constant 0 : index
    %17 = vector.load %arg1[%c3, %c0_17, %c0_18] : memref<30x16x28xbf16, #tpu.memory_space<vmem>>, vector<26x16x28xbf16>
    %18 = vector.shape_cast %17 : vector<26x16x28xbf16> to vector<416x28xbf16>
    %c3_19 = arith.constant 3 : index
    %c0_20 = arith.constant 0 : index
    %c0_21 = arith.constant 0 : index
    %19 = vector.load %arg2[%c3_19, %c0_20, %c0_21] : memref<5x28x260xbf16, #tpu.memory_space<vmem>>, vector<1x28x260xbf16>
    %20 = vector.shape_cast %19 : vector<1x28x260xbf16> to vector<28x260xbf16>
    %cst_22 = arith.constant dense<0.000000e+00> : vector<416x260xf32>
    %21 = tpu.matmul %18, %20, %cst_22 {dimension_numbers = #tpu.dot_dimension_numbers<[1], [0], [0], [1], [0, 0, 1, 1], [], []>} : vector<416x28xbf16>, vector<28x260xbf16>, vector<416x260xf32> -> vector<416x260xf32>
    %22 = arith.addf %16, %21 : vector<416x260xf32>
    %c4 = arith.constant 4 : index
    %c0_23 = arith.constant 0 : index
    %c0_24 = arith.constant 0 : index
    %23 = vector.load %arg1[%c4, %c0_23, %c0_24] : memref<30x16x28xbf16, #tpu.memory_space<vmem>>, vector<26x16x28xbf16>
    %24 = vector.shape_cast %23 : vector<26x16x28xbf16> to vector<416x28xbf16>
    %c4_25 = arith.constant 4 : index
    %c0_26 = arith.constant 0 : index
    %c0_27 = arith.constant 0 : index
    %25 = vector.load %arg2[%c4_25, %c0_26, %c0_27] : memref<5x28x260xbf16, #tpu.memory_space<vmem>>, vector<1x28x260xbf16>
    %26 = vector.shape_cast %25 : vector<1x28x260xbf16> to vector<28x260xbf16>
    %cst_28 = arith.constant dense<0.000000e+00> : vector<416x260xf32>
    %27 = tpu.matmul %24, %26, %cst_28 {dimension_numbers = #tpu.dot_dimension_numbers<[1], [0], [0], [1], [0, 0, 1, 1], [], []>} : vector<416x28xbf16>, vector<28x260xbf16>, vector<416x260xf32> -> vector<416x260xf32>
    %28 = arith.addf %22, %27 : vector<416x260xf32>
    %29 = vector.extract_strided_slice %28 {offsets = [0, 0], sizes = [416, 130], strides = [1, 1]} : vector<416x260xf32> to vector<416x130xf32>
    %30 = vector.extract_strided_slice %28 {offsets = [0, 130], sizes = [416, 130], strides = [1, 1]} : vector<416x260xf32> to vector<416x130xf32>
    %31 = arith.maximumf %29, %30 : vector<416x130xf32>
    %c0_29 = arith.constant 0 : index
    %c0_30 = arith.constant 0 : index
    %32 = vector.load %arg3[%c0_29, %c0_30] : memref<1x130xf32, #tpu.memory_space<vmem>>, vector<1x130xf32>
    %33 = vector.broadcast %32 : vector<1x130xf32> to vector<416x130xf32>
    %34 = arith.addf %31, %33 : vector<416x130xf32>
    %cst_31 = arith.constant 0.000000e+00 : f32
    %35 = vector.broadcast %cst_31 : f32 to vector<416x130xf32>
    %36 = arith.maximumf %34, %35 : vector<416x130xf32>
    %37 = vector.shape_cast %36 : vector<416x130xf32> to vector<26x16x130xf32>
    %38 = vector.shape_cast %37 : vector<26x16x130xf32> to vector<13x2x16x130xf32>
    %39 = vector.extract_strided_slice %38 {offsets = [0, 0, 0, 0], sizes = [13, 1, 16, 130], strides = [1, 1, 1, 1]} : vector<13x2x16x130xf32> to vector<13x1x16x130xf32>
    %40 = vector.shape_cast %39 : vector<13x1x16x130xf32> to vector<13x16x130xf32>
    %41 = vector.extract_strided_slice %38 {offsets = [0, 1, 0, 0], sizes = [13, 1, 16, 130], strides = [1, 1, 1, 1]} : vector<13x2x16x130xf32> to vector<13x1x16x130xf32>
    %42 = vector.shape_cast %41 : vector<13x1x16x130xf32> to vector<13x16x130xf32>
    %43 = arith.maximumf %40, %42 : vector<13x16x130xf32>
    %cst_32 = arith.constant 0.000000e+00 : bf16
    %44 = vector.broadcast %cst_32 : bf16 to vector<15x16x130xbf16>
    %c0_33 = arith.constant 0 : index
    %c0_34 = arith.constant 0 : index
    %c0_35 = arith.constant 0 : index
    %45 = vector.load %arg13[%c0_33, %c0_34, %c0_35] : memref<15x16x130xbf16, #tpu.memory_space<vmem>>, vector<15x16x130xbf16>
    tpu.vector_store %arg13[%c0_33, %c0_34, %c0_35], %44 {strides = array<i32>} : memref<15x16x130xbf16, #tpu.memory_space<vmem>>, vector<15x16x130xbf16>,
    %46 = arith.truncf %43 : vector<13x16x130xf32> to vector<13x16x130xbf16>
    %c1_36 = arith.constant 1 : index
    %c0_37 = arith.constant 0 : index
    %c0_38 = arith.constant 0 : index
    %47 = vector.load %arg13[%c1_36, %c0_37, %c0_38] : memref<15x16x130xbf16, #tpu.memory_space<vmem>>, vector<13x16x130xbf16>
    tpu.vector_store %arg13[%c1_36, %c0_37, %c0_38], %46 {strides = array<i32>} : memref<15x16x130xbf16, #tpu.memory_space<vmem>>, vector<13x16x130xbf16>,
    %c0_39 = arith.constant 0 : index
    %c0_40 = arith.constant 0 : index
    %c0_41 = arith.constant 0 : index
    %48 = vector.load %arg13[%c0_39, %c0_40, %c0_41] : memref<15x16x130xbf16, #tpu.memory_space<vmem>>, vector<11x16x130xbf16>
    %49 = vector.shape_cast %48 : vector<11x16x130xbf16> to vector<176x130xbf16>
    %c0_42 = arith.constant 0 : index
    %c0_43 = arith.constant 0 : index
    %c0_44 = arith.constant 0 : index
    %50 = vector.load %arg4[%c0_42, %c0_43, %c0_44] : memref<5x130x200xbf16, #tpu.memory_space<vmem>>, vector<1x130x200xbf16>
    %51 = vector.shape_cast %50 : vector<1x130x200xbf16> to vector<130x200xbf16>
    %cst_45 = arith.constant dense<0.000000e+00> : vector<176x200xf32>
    %52 = tpu.matmul %49, %51, %cst_45 {dimension_numbers = #tpu.dot_dimension_numbers<[1], [0], [0], [1], [0, 0, 1, 1], [], []>} : vector<176x130xbf16>, vector<130x200xbf16>, vector<176x200xf32> -> vector<176x200xf32>
    %c1_46 = arith.constant 1 : index
    %c0_47 = arith.constant 0 : index
    %c0_48 = arith.constant 0 : index
    %53 = vector.load %arg13[%c1_46, %c0_47, %c0_48] : memref<15x16x130xbf16, #tpu.memory_space<vmem>>, vector<11x16x130xbf16>
    %54 = vector.shape_cast %53 : vector<11x16x130xbf16> to vector<176x130xbf16>
    %c1_49 = arith.constant 1 : index
    %c0_50 = arith.constant 0 : index
    %c0_51 = arith.constant 0 : index
    %55 = vector.load %arg4[%c1_49, %c0_50, %c0_51] : memref<5x130x200xbf16, #tpu.memory_space<vmem>>, vector<1x130x200xbf16>
    %56 = vector.shape_cast %55 : vector<1x130x200xbf16> to vector<130x200xbf16>
    %cst_52 = arith.constant dense<0.000000e+00> : vector<176x200xf32>
    %57 = tpu.matmul %54, %56, %cst_52 {dimension_numbers = #tpu.dot_dimension_numbers<[1], [0], [0], [1], [0, 0, 1, 1], [], []>} : vector<176x130xbf16>, vector<130x200xbf16>, vector<176x200xf32> -> vector<176x200xf32>
    %58 = arith.addf %52, %57 : vector<176x200xf32>
    %c2_53 = arith.constant 2 : index
    %c0_54 = arith.constant 0 : index
    %c0_55 = arith.constant 0 : index
    %59 = vector.load %arg13[%c2_53, %c0_54, %c0_55] : memref<15x16x130xbf16, #tpu.memory_space<vmem>>, vector<11x16x130xbf16>
    %60 = vector.shape_cast %59 : vector<11x16x130xbf16> to vector<176x130xbf16>
    %c2_56 = arith.constant 2 : index
    %c0_57 = arith.constant 0 : index
    %c0_58 = arith.constant 0 : index
    %61 = vector.load %arg4[%c2_56, %c0_57, %c0_58] : memref<5x130x200xbf16, #tpu.memory_space<vmem>>, vector<1x130x200xbf16>
    %62 = vector.shape_cast %61 : vector<1x130x200xbf16> to vector<130x200xbf16>
    %cst_59 = arith.constant dense<0.000000e+00> : vector<176x200xf32>
    %63 = tpu.matmul %60, %62, %cst_59 {dimension_numbers = #tpu.dot_dimension_numbers<[1], [0], [0], [1], [0, 0, 1, 1], [], []>} : vector<176x130xbf16>, vector<130x200xbf16>, vector<176x200xf32> -> vector<176x200xf32>
    %64 = arith.addf %58, %63 : vector<176x200xf32>
    %c3_60 = arith.constant 3 : index
    %c0_61 = arith.constant 0 : index
    %c0_62 = arith.constant 0 : index
    %65 = vector.load %arg13[%c3_60, %c0_61, %c0_62] : memref<15x16x130xbf16, #tpu.memory_space<vmem>>, vector<11x16x130xbf16>
    %66 = vector.shape_cast %65 : vector<11x16x130xbf16> to vector<176x130xbf16>
    %c3_63 = arith.constant 3 : index
    %c0_64 = arith.constant 0 : index
    %c0_65 = arith.constant 0 : index
    %67 = vector.load %arg4[%c3_63, %c0_64, %c0_65] : memref<5x130x200xbf16, #tpu.memory_space<vmem>>, vector<1x130x200xbf16>
    %68 = vector.shape_cast %67 : vector<1x130x200xbf16> to vector<130x200xbf16>
    %cst_66 = arith.constant dense<0.000000e+00> : vector<176x200xf32>
    %69 = tpu.matmul %66, %68, %cst_66 {dimension_numbers = #tpu.dot_dimension_numbers<[1], [0], [0], [1], [0, 0, 1, 1], [], []>} : vector<176x130xbf16>, vector<130x200xbf16>, vector<176x200xf32> -> vector<176x200xf32>
    %70 = arith.addf %64, %69 : vector<176x200xf32>
    %c4_67 = arith.constant 4 : index
    %c0_68 = arith.constant 0 : index
    %c0_69 = arith.constant 0 : index
    %71 = vector.load %arg13[%c4_67, %c0_68, %c0_69] : memref<15x16x130xbf16, #tpu.memory_space<vmem>>, vector<11x16x130xbf16>
    %72 = vector.shape_cast %71 : vector<11x16x130xbf16> to vector<176x130xbf16>
    %c4_70 = arith.constant 4 : index
    %c0_71 = arith.constant 0 : index
    %c0_72 = arith.constant 0 : index
    %73 = vector.load %arg4[%c4_70, %c0_71, %c0_72] : memref<5x130x200xbf16, #tpu.memory_space<vmem>>, vector<1x130x200xbf16>
    %74 = vector.shape_cast %73 : vector<1x130x200xbf16> to vector<130x200xbf16>
    %cst_73 = arith.constant dense<0.000000e+00> : vector<176x200xf32>
    %75 = tpu.matmul %72, %74, %cst_73 {dimension_numbers = #tpu.dot_dimension_numbers<[1], [0], [0], [1], [0, 0, 1, 1], [], []>} : vector<176x130xbf16>, vector<130x200xbf16>, vector<176x200xf32> -> vector<176x200xf32>
    %76 = arith.addf %70, %75 : vector<176x200xf32>
    %77 = vector.extract_strided_slice %76 {offsets = [0, 0], sizes = [176, 100], strides = [1, 1]} : vector<176x200xf32> to vector<176x100xf32>
    %78 = vector.extract_strided_slice %76 {offsets = [0, 100], sizes = [176, 100], strides = [1, 1]} : vector<176x200xf32> to vector<176x100xf32>
    %79 = arith.maximumf %77, %78 : vector<176x100xf32>
    %c0_74 = arith.constant 0 : index
    %c0_75 = arith.constant 0 : index
    %80 = vector.load %arg5[%c0_74, %c0_75] : memref<1x100xf32, #tpu.memory_space<vmem>>, vector<1x100xf32>
    %81 = vector.broadcast %80 : vector<1x100xf32> to vector<176x100xf32>
    %82 = arith.addf %79, %81 : vector<176x100xf32>
    %cst_76 = arith.constant 0.000000e+00 : f32
    %83 = vector.broadcast %cst_76 : f32 to vector<176x100xf32>
    %84 = arith.maximumf %82, %83 : vector<176x100xf32>
    %85 = vector.shape_cast %84 : vector<176x100xf32> to vector<11x16x100xf32>
    %86 = vector.extract_strided_slice %85 {offsets = [0, 0, 0], sizes = [10, 16, 100], strides = [1, 1, 1]} : vector<11x16x100xf32> to vector<10x16x100xf32>
    %87 = vector.shape_cast %86 : vector<10x16x100xf32> to vector<5x2x16x100xf32>
    %88 = vector.extract_strided_slice %87 {offsets = [0, 0, 0, 0], sizes = [5, 1, 16, 100], strides = [1, 1, 1, 1]} : vector<5x2x16x100xf32> to vector<5x1x16x100xf32>
    %89 = vector.shape_cast %88 : vector<5x1x16x100xf32> to vector<5x16x100xf32>
    %90 = vector.extract_strided_slice %87 {offsets = [0, 1, 0, 0], sizes = [5, 1, 16, 100], strides = [1, 1, 1, 1]} : vector<5x2x16x100xf32> to vector<5x1x16x100xf32>
    %91 = vector.shape_cast %90 : vector<5x1x16x100xf32> to vector<5x16x100xf32>
    %92 = arith.maximumf %89, %91 : vector<5x16x100xf32>
    %cst_77 = arith.constant 0.000000e+00 : bf16
    %93 = vector.broadcast %cst_77 : bf16 to vector<7x16x100xbf16>
    %c0_78 = arith.constant 0 : index
    %c0_79 = arith.constant 0 : index
    %c0_80 = arith.constant 0 : index
    %94 = vector.load %arg14[%c0_78, %c0_79, %c0_80] : memref<7x16x100xbf16, #tpu.memory_space<vmem>>, vector<7x16x100xbf16>
    tpu.vector_store %arg14[%c0_78, %c0_79, %c0_80], %93 {strides = array<i32>} : memref<7x16x100xbf16, #tpu.memory_space<vmem>>, vector<7x16x100xbf16>,
    %95 = arith.truncf %92 : vector<5x16x100xf32> to vector<5x16x100xbf16>
    %c1_81 = arith.constant 1 : index
    %c0_82 = arith.constant 0 : index
    %c0_83 = arith.constant 0 : index
    %96 = vector.load %arg14[%c1_81, %c0_82, %c0_83] : memref<7x16x100xbf16, #tpu.memory_space<vmem>>, vector<5x16x100xbf16>
    tpu.vector_store %arg14[%c1_81, %c0_82, %c0_83], %95 {strides = array<i32>} : memref<7x16x100xbf16, #tpu.memory_space<vmem>>, vector<5x16x100xbf16>,
    %c0_84 = arith.constant 0 : index
    %c0_85 = arith.constant 0 : index
    %c0_86 = arith.constant 0 : index
    %97 = vector.load %arg14[%c0_84, %c0_85, %c0_86] : memref<7x16x100xbf16, #tpu.memory_space<vmem>>, vector<3x16x100xbf16>
    %98 = vector.shape_cast %97 : vector<3x16x100xbf16> to vector<48x100xbf16>
    %c0_87 = arith.constant 0 : index
    %c0_88 = arith.constant 0 : index
    %c0_89 = arith.constant 0 : index
    %99 = vector.load %arg6[%c0_87, %c0_88, %c0_89] : memref<5x100x64xbf16, #tpu.memory_space<vmem>>, vector<1x100x64xbf16>
    %100 = vector.shape_cast %99 : vector<1x100x64xbf16> to vector<100x64xbf16>
    %cst_90 = arith.constant dense<0.000000e+00> : vector<48x64xf32>
    %101 = tpu.matmul %98, %100, %cst_90 {dimension_numbers = #tpu.dot_dimension_numbers<[1], [0], [0], [1], [0, 0, 1, 1], [], []>} : vector<48x100xbf16>, vector<100x64xbf16>, vector<48x64xf32> -> vector<48x64xf32>
    %c1_91 = arith.constant 1 : index
    %c0_92 = arith.constant 0 : index
    %c0_93 = arith.constant 0 : index
    %102 = vector.load %arg14[%c1_91, %c0_92, %c0_93] : memref<7x16x100xbf16, #tpu.memory_space<vmem>>, vector<3x16x100xbf16>
    %103 = vector.shape_cast %102 : vector<3x16x100xbf16> to vector<48x100xbf16>
    %c1_94 = arith.constant 1 : index
    %c0_95 = arith.constant 0 : index
    %c0_96 = arith.constant 0 : index
    %104 = vector.load %arg6[%c1_94, %c0_95, %c0_96] : memref<5x100x64xbf16, #tpu.memory_space<vmem>>, vector<1x100x64xbf16>
    %105 = vector.shape_cast %104 : vector<1x100x64xbf16> to vector<100x64xbf16>
    %cst_97 = arith.constant dense<0.000000e+00> : vector<48x64xf32>
    %106 = tpu.matmul %103, %105, %cst_97 {dimension_numbers = #tpu.dot_dimension_numbers<[1], [0], [0], [1], [0, 0, 1, 1], [], []>} : vector<48x100xbf16>, vector<100x64xbf16>, vector<48x64xf32> -> vector<48x64xf32>
    %107 = arith.addf %101, %106 : vector<48x64xf32>
    %c2_98 = arith.constant 2 : index
    %c0_99 = arith.constant 0 : index
    %c0_100 = arith.constant 0 : index
    %108 = vector.load %arg14[%c2_98, %c0_99, %c0_100] : memref<7x16x100xbf16, #tpu.memory_space<vmem>>, vector<3x16x100xbf16>
    %109 = vector.shape_cast %108 : vector<3x16x100xbf16> to vector<48x100xbf16>
    %c2_101 = arith.constant 2 : index
    %c0_102 = arith.constant 0 : index
    %c0_103 = arith.constant 0 : index
    %110 = vector.load %arg6[%c2_101, %c0_102, %c0_103] : memref<5x100x64xbf16, #tpu.memory_space<vmem>>, vector<1x100x64xbf16>
    %111 = vector.shape_cast %110 : vector<1x100x64xbf16> to vector<100x64xbf16>
    %cst_104 = arith.constant dense<0.000000e+00> : vector<48x64xf32>
    %112 = tpu.matmul %109, %111, %cst_104 {dimension_numbers = #tpu.dot_dimension_numbers<[1], [0], [0], [1], [0, 0, 1, 1], [], []>} : vector<48x100xbf16>, vector<100x64xbf16>, vector<48x64xf32> -> vector<48x64xf32>
    %113 = arith.addf %107, %112 : vector<48x64xf32>
    %c3_105 = arith.constant 3 : index
    %c0_106 = arith.constant 0 : index
    %c0_107 = arith.constant 0 : index
    %114 = vector.load %arg14[%c3_105, %c0_106, %c0_107] : memref<7x16x100xbf16, #tpu.memory_space<vmem>>, vector<3x16x100xbf16>
    %115 = vector.shape_cast %114 : vector<3x16x100xbf16> to vector<48x100xbf16>
    %c3_108 = arith.constant 3 : index
    %c0_109 = arith.constant 0 : index
    %c0_110 = arith.constant 0 : index
    %116 = vector.load %arg6[%c3_108, %c0_109, %c0_110] : memref<5x100x64xbf16, #tpu.memory_space<vmem>>, vector<1x100x64xbf16>
    %117 = vector.shape_cast %116 : vector<1x100x64xbf16> to vector<100x64xbf16>
    %cst_111 = arith.constant dense<0.000000e+00> : vector<48x64xf32>
    %118 = tpu.matmul %115, %117, %cst_111 {dimension_numbers = #tpu.dot_dimension_numbers<[1], [0], [0], [1], [0, 0, 1, 1], [], []>} : vector<48x100xbf16>, vector<100x64xbf16>, vector<48x64xf32> -> vector<48x64xf32>
    %119 = arith.addf %113, %118 : vector<48x64xf32>
    %c4_112 = arith.constant 4 : index
    %c0_113 = arith.constant 0 : index
    %c0_114 = arith.constant 0 : index
    %120 = vector.load %arg14[%c4_112, %c0_113, %c0_114] : memref<7x16x100xbf16, #tpu.memory_space<vmem>>, vector<3x16x100xbf16>
    %121 = vector.shape_cast %120 : vector<3x16x100xbf16> to vector<48x100xbf16>
    %c4_115 = arith.constant 4 : index
    %c0_116 = arith.constant 0 : index
    %c0_117 = arith.constant 0 : index
    %122 = vector.load %arg6[%c4_115, %c0_116, %c0_117] : memref<5x100x64xbf16, #tpu.memory_space<vmem>>, vector<1x100x64xbf16>
    %123 = vector.shape_cast %122 : vector<1x100x64xbf16> to vector<100x64xbf16>
    %cst_118 = arith.constant dense<0.000000e+00> : vector<48x64xf32>
    %124 = tpu.matmul %121, %123, %cst_118 {dimension_numbers = #tpu.dot_dimension_numbers<[1], [0], [0], [1], [0, 0, 1, 1], [], []>} : vector<48x100xbf16>, vector<100x64xbf16>, vector<48x64xf32> -> vector<48x64xf32>
    %125 = arith.addf %119, %124 : vector<48x64xf32>
    %126 = vector.extract_strided_slice %125 {offsets = [0, 0], sizes = [48, 32], strides = [1, 1]} : vector<48x64xf32> to vector<48x32xf32>
    %127 = vector.extract_strided_slice %125 {offsets = [0, 32], sizes = [48, 32], strides = [1, 1]} : vector<48x64xf32> to vector<48x32xf32>
    %128 = arith.maximumf %126, %127 : vector<48x32xf32>
    %c0_119 = arith.constant 0 : index
    %c0_120 = arith.constant 0 : index
    %129 = vector.load %arg7[%c0_119, %c0_120] : memref<1x32xf32, #tpu.memory_space<vmem>>, vector<1x32xf32>
    %130 = vector.broadcast %129 : vector<1x32xf32> to vector<48x32xf32>
    %131 = arith.addf %128, %130 : vector<48x32xf32>
    %cst_121 = arith.constant 0.000000e+00 : f32
    %132 = vector.broadcast %cst_121 : f32 to vector<48x32xf32>
    %133 = arith.maximumf %131, %132 : vector<48x32xf32>
    %134 = vector.shape_cast %133 : vector<48x32xf32> to vector<3x16x32xf32>
    %135 = vector.extract_strided_slice %134 {offsets = [0, 0, 0], sizes = [2, 16, 32], strides = [1, 1, 1]} : vector<3x16x32xf32> to vector<2x16x32xf32>
    %136 = vector.shape_cast %135 : vector<2x16x32xf32> to vector<1x2x16x32xf32>
    %137 = vector.extract_strided_slice %136 {offsets = [0, 0, 0, 0], sizes = [1, 1, 16, 32], strides = [1, 1, 1, 1]} : vector<1x2x16x32xf32> to vector<1x1x16x32xf32>
    %138 = vector.shape_cast %137 : vector<1x1x16x32xf32> to vector<1x16x32xf32>
    %139 = vector.extract_strided_slice %136 {offsets = [0, 1, 0, 0], sizes = [1, 1, 16, 32], strides = [1, 1, 1, 1]} : vector<1x2x16x32xf32> to vector<1x1x16x32xf32>
    %140 = vector.shape_cast %139 : vector<1x1x16x32xf32> to vector<1x16x32xf32>
    %141 = arith.maximumf %138, %140 : vector<1x16x32xf32>
    %142 = vector.shape_cast %141 : vector<1x16x32xf32> to vector<16x32xf32>
    %c0_122 = arith.constant 0 : index
    %c0_123 = arith.constant 0 : index
    %143 = vector.load %arg8[%c0_122, %c0_123] : memref<32x64xf32, #tpu.memory_space<vmem>>, vector<32x64xf32>
    %cst_124 = arith.constant dense<0.000000e+00> : vector<16x64xf32>
    %144 = tpu.matmul %142, %143, %cst_124 {dimension_numbers = #tpu.dot_dimension_numbers<[1], [0], [0], [1], [0, 0, 1, 1], [], []>} : vector<16x32xf32>, vector<32x64xf32>, vector<16x64xf32> -> vector<16x64xf32>
    %c0_125 = arith.constant 0 : index
    %c0_126 = arith.constant 0 : index
    %145 = vector.load %arg9[%c0_125, %c0_126] : memref<1x64xf32, #tpu.memory_space<vmem>>, vector<1x64xf32>
    %146 = vector.broadcast %145 : vector<1x64xf32> to vector<16x64xf32>
    %147 = arith.addf %144, %146 : vector<16x64xf32>
    %cst_127 = arith.constant 0.000000e+00 : f32
    %148 = vector.broadcast %cst_127 : f32 to vector<16x64xf32>
    %149 = arith.maximumf %147, %148 : vector<16x64xf32>
    %c0_128 = arith.constant 0 : index
    %c0_129 = arith.constant 0 : index
    %150 = vector.load %arg10[%c0_128, %c0_129] : memref<64x10xf32, #tpu.memory_space<vmem>>, vector<64x10xf32>
    %cst_130 = arith.constant dense<0.000000e+00> : vector<16x10xf32>
    %151 = tpu.matmul %149, %150, %cst_130 {dimension_numbers = #tpu.dot_dimension_numbers<[1], [0], [0], [1], [0, 0, 1, 1], [], []>} : vector<16x64xf32>, vector<64x10xf32>, vector<16x10xf32> -> vector<16x10xf32>
    %c0_131 = arith.constant 0 : index
    %c0_132 = arith.constant 0 : index
    %152 = vector.load %arg11[%c0_131, %c0_132] : memref<1x10xf32, #tpu.memory_space<vmem>>, vector<1x10xf32>
    %153 = vector.broadcast %152 : vector<1x10xf32> to vector<16x10xf32>
    %154 = arith.addf %151, %153 : vector<16x10xf32>
    %cst_133 = arith.constant dense<0xFF800000> : vector<16xf32>
    %155 = vector.multi_reduction <maximumf>, %154, %cst_133 [1] : vector<16x10xf32> to vector<16xf32>
    %156 = vector.shape_cast %155 : vector<16xf32> to vector<16x1xf32>
    %157 = vector.broadcast %156 : vector<16x1xf32> to vector<16x10xf32>
    %158 = arith.subf %154, %157 : vector<16x10xf32>
    %159 = math.exp %158 : vector<16x10xf32>
    %cst_134 = arith.constant dense<0.000000e+00> : vector<16xf32>
    %160 = vector.multi_reduction <add>, %159, %cst_134 [1] : vector<16x10xf32> to vector<16xf32>
    %161 = vector.shape_cast %160 : vector<16xf32> to vector<16x1xf32>
    %162 = math.log %161 : vector<16x1xf32>
    %163 = arith.addf %156, %162 : vector<16x1xf32>
    %164 = vector.broadcast %163 : vector<16x1xf32> to vector<16x10xf32>
    %165 = arith.subf %154, %164 : vector<16x10xf32>
    %c0_135 = arith.constant 0 : index
    %c0_136 = arith.constant 0 : index
    %166 = vector.load %arg12[%c0_135, %c0_136] : memref<16x10xf32, #tpu.memory_space<vmem>>, vector<16x10xf32>
    tpu.vector_store %arg12[%c0_135, %c0_136], %165 {strides = array<i32>} : memref<16x10xf32, #tpu.memory_space<vmem>>, vector<16x10xf32>,
    return
  }
  func.func @transform_0(%arg0: i32) -> (i32, i32, i32) {
    %c0_i32 = arith.constant 0 : i32
    %c0_i32_0 = arith.constant 0 : i32
    %c0_i32_1 = arith.constant 0 : i32
    return %c0_i32, %arg0, %c0_i32_0 : i32, i32, i32
  }
  func.func @transform_1(%arg0: i32) -> (i32, i32, i32) {
    %c0_i32 = arith.constant 0 : i32
    %c0_i32_0 = arith.constant 0 : i32
    %c0_i32_1 = arith.constant 0 : i32
    %c0_i32_2 = arith.constant 0 : i32
    return %c0_i32, %c0_i32_0, %c0_i32_1 : i32, i32, i32
  }
  func.func @transform_2(%arg0: i32) -> (i32, i32) {
    %c0_i32 = arith.constant 0 : i32
    %c0_i32_0 = arith.constant 0 : i32
    %c0_i32_1 = arith.constant 0 : i32
    return %c0_i32, %c0_i32_0 : i32, i32
  }
  func.func @transform_3(%arg0: i32) -> (i32, i32, i32) {
    %c0_i32 = arith.constant 0 : i32
    %c0_i32_0 = arith.constant 0 : i32
    %c0_i32_1 = arith.constant 0 : i32
    %c0_i32_2 = arith.constant 0 : i32
    return %c0_i32, %c0_i32_0, %c0_i32_1 : i32, i32, i32
  }
  func.func @transform_4(%arg0: i32) -> (i32, i32) {
    %c0_i32 = arith.constant 0 : i32
    %c0_i32_0 = arith.constant 0 : i32
    %c0_i32_1 = arith.constant 0 : i32
    return %c0_i32, %c0_i32_0 : i32, i32
  }
  func.func @transform_5(%arg0: i32) -> (i32, i32, i32) {
    %c0_i32 = arith.constant 0 : i32
    %c0_i32_0 = arith.constant 0 : i32
    %c0_i32_1 = arith.constant 0 : i32
    %c0_i32_2 = arith.constant 0 : i32
    return %c0_i32, %c0_i32_0, %c0_i32_1 : i32, i32, i32
  }
  func.func @transform_6(%arg0: i32) -> (i32, i32) {
    %c0_i32 = arith.constant 0 : i32
    %c0_i32_0 = arith.constant 0 : i32
    %c0_i32_1 = arith.constant 0 : i32
    return %c0_i32, %c0_i32_0 : i32, i32
  }
  func.func @transform_7(%arg0: i32) -> (i32, i32) {
    %c0_i32 = arith.constant 0 : i32
    %c0_i32_0 = arith.constant 0 : i32
    %c0_i32_1 = arith.constant 0 : i32
    return %c0_i32, %c0_i32_0 : i32, i32
  }
  func.func @transform_8(%arg0: i32) -> (i32, i32) {
    %c0_i32 = arith.constant 0 : i32
    %c0_i32_0 = arith.constant 0 : i32
    %c0_i32_1 = arith.constant 0 : i32
    return %c0_i32, %c0_i32_0 : i32, i32
  }
  func.func @transform_9(%arg0: i32) -> (i32, i32) {
    %c0_i32 = arith.constant 0 : i32
    %c0_i32_0 = arith.constant 0 : i32
    %c0_i32_1 = arith.constant 0 : i32
    return %c0_i32, %c0_i32_0 : i32, i32
  }
  func.func @transform_10(%arg0: i32) -> (i32, i32) {
    %c0_i32 = arith.constant 0 : i32
    %c0_i32_0 = arith.constant 0 : i32
    %c0_i32_1 = arith.constant 0 : i32
    return %c0_i32, %c0_i32_0 : i32, i32
  }
  func.func @transform_11(%arg0: i32) -> (i32, i32) {
    %c0_i32 = arith.constant 0 : i32
    %c0_i32_0 = arith.constant 0 : i32
    return %arg0, %c0_i32 : i32, i32
  }
}

</mosaic_0001>

<llo_original>
// kernel: tile.14
$region0: #{tile.14}
  #allocation0 [shape = 's32[1]{0}', space=sflag, size = 0x4, scoped, tag = 'scoped memory for tile.14']
  %s0 = inlined_call_operand.vmem [shape: f32[10], index: 0, kind: input, shape index: {}]
  %s1 = inlined_call_operand.vmem [shape: f32[13,10], index: 1, kind: output, shape index: {}]
  // Predicated region
  $region2: #{tile.14} parent=0 // pred_check
    _
  $region3: #{tile.14} parent=0 // pred_check_branch
    %3 = sbr.rel (0) target = $region5
  $region4: #{tile.14} parent=0 // pred_region
    _
  $region5: #{tile.14} parent=0 // pred_fallthru
    _
  %v4 = vld [vmem:[%s0] ss:$0 sm:$0xff]
  %5 = vst [vmem:[%s1] sm:$0xff] %v4
  %s6 = scalar_lea.vmem %s1, 8
  %7 = vst [vmem:[%s6] sm:$0xff] %v4

// kernel: tile.15
$region0: #{tile.15}
  %s0 = inlined_call_operand.vmem [shape: f32[13,10], index: 0, kind: input, shape index: {}]
  %s1 = inlined_call_operand.vmem [shape: f32[1,130], index: 1, kind: output, shape index: {}]
  $region1: #{tile.15} parent=0
    #allocation0 [shape = 'u8[8192]{0}', space=vmem, size = 0x2000, scoped, tag = 'scoped mem for output reshape']
    %v2 = vld [vmem:[%s0] sm:$0x1]
    %vm3 = vcmask 80896
    %4 = vst.msk [vmem:[#allocation0] sm:$0x1] %vm3, %v2
    %s5 = scalar_lea.vmem %s0, 12
    %v6 = vld [vmem:[%s5] sm:$0x1]
    %s7 = scalar_lea.vmem %s0, 12
    %v8 = vld [vmem:[%s7] sm:$0x1]
    %vm9 = vcmask 64512
    %v10 = vsel %vm9, %v8, %v6
    %11 = vrot.lane.b32.xlu0 %v10, 120
    %v12 = vpop.permute.xlu0 %11
    %vm13 = vcmask 15360
    %s14 = scalar_lea.vmem [#allocation0], 8
    %15 = vst.msk [vmem:[%s14] sm:$0x1] %vm13, %v12
    %vm16 = vcmask 1048512
    %17 = vst.msk [vmem:[#allocation0] sm:$0x1] %vm16, %v12
    %s18 = scalar_lea.vmem %s0, 11
    %v19 = vld [vmem:[%s18] sm:$0x1]
    %20 = vrot.lane.b32.xlu0 %v19, 110
    %v21 = vpop.permute.xlu0 %20
    %vm22 = vcmask 982896
    %23 = vst.msk [vmem:[#allocation0] sm:$0x1] %vm22, %v21
    %s24 = scalar_lea.vmem %s0, 10
    %v25 = vld [vmem:[%s24] sm:$0x1]
    %26 = vrot.lane.b32.xlu0 %v25, 100
    %v27 = vpop.permute.xlu0 %26
    %vm28 = vcmask 900896
    %29 = vst.msk [vmem:[#allocation0] sm:$0x1] %vm28, %v27
    %s30 = scalar_lea.vmem %s0, 9
    %v31 = vld [vmem:[%s30] sm:$0x1]
    %32 = vrot.lane.b32.xlu0 %v31, 90
    %v33 = vpop.permute.xlu0 %32
    %vm34 = vcmask 818896
    %35 = vst.msk [vmem:[#allocation0] sm:$0x1] %vm34, %v33
    %s36 = scalar_lea.vmem %s0, 8
    %v37 = vld [vmem:[%s36] sm:$0x1]
    %38 = vrot.lane.b32.xlu0 %v37, 80
    %v39 = vpop.permute.xlu0 %38
    %vm40 = vcmask 736896
    %41 = vst.msk [vmem:[#allocation0] sm:$0x1] %vm40, %v39
    %s42 = scalar_lea.vmem %s0, 7
    %v43 = vld [vmem:[%s42] sm:$0x1]
    %44 = vrot.lane.b32.xlu0 %v43, 70
    %v45 = vpop.permute.xlu0 %44
    %vm46 = vcmask 654896
    %47 = vst.msk [vmem:[#allocation0] sm:$0x1] %vm46, %v45
    %s48 = scalar_lea.vmem %s0, 6
    %v49 = vld [vmem:[%s48] sm:$0x1]
    %50 = vrot.lane.b32.xlu0 %v49, 60
    %v51 = vpop.permute.xlu0 %50
    %vm52 = vcmask 572896
    %53 = vst.msk [vmem:[#allocation0] sm:$0x1] %vm52, %v51
    %s54 = scalar_lea.vmem %s0, 5
    %v55 = vld [vmem:[%s54] sm:$0x1]
    %56 = vrot.lane.b32.xlu0 %v55, 50
    %v57 = vpop.permute.xlu0 %56
    %vm58 = vcmask 490896
    %59 = vst.msk [vmem:[#allocation0] sm:$0x1] %vm58, %v57
    %s60 = scalar_lea.vmem %s0, 4
    %v61 = vld [vmem:[%s60] sm:$0x1]
    %62 = vrot.lane.b32.xlu0 %v61, 40
    %v63 = vpop.permute.xlu0 %62
    %vm64 = vcmask 408896
    %65 = vst.msk [vmem:[#allocation0] sm:$0x1] %vm64, %v63
    %s66 = scalar_lea.vmem %s0, 3
    %v67 = vld [vmem:[%s66] sm:$0x1]
    %68 = vrot.lane.b32.xlu0 %v67, 30
    %v69 = vpop.permute.xlu0 %68
    %vm70 = vcmask 326896
    %71 = vst.msk [vmem:[#allocation0] sm:$0x1] %vm70, %v69
    %s72 = scalar_lea.vmem %s0, 2
    %v73 = vld [vmem:[%s72] sm:$0x1]
    %74 = vrot.lane.b32.xlu0 %v73, 20
    %v75 = vpop.permute.xlu0 %74
    %vm76 = vcmask 244896
    %77 = vst.msk [vmem:[#allocation0] sm:$0x1] %vm76, %v75
    %s78 = scalar_lea.vmem %s0, 1
    %v79 = vld [vmem:[%s78] sm:$0x1]
    %80 = vrot.lane.b32.xlu0 %v79, 10
    %v81 = vpop.permute.xlu0 %80
    %vm82 = vcmask 162896
    %83 = vst.msk [vmem:[#allocation0] sm:$0x1] %vm82, %v81
    %s85 = sshll.u32 1, 1
    %s86 = ssub.s32 %s85, 1
    %v88 = vld [vmem:[#allocation0] sm:%s86]
    %s89 = sshll.u32 1, 1
    %s90 = ssub.s32 %s89, 1
    %91 = vst [vmem:[%s1] sm:%s90] %v88
    %s92 = scalar_lea.vmem [#allocation0], 8
    %v93 = vld [vmem:[%s92] sm:%s86]
    %s94 = sshll.u32 1, 1
    %s95 = ssub.s32 %s94, 1
    %s96 = scalar_lea.vmem %s1, 1
    %97 = vst [vmem:[%s96] sm:%s95] %v93

// kernel: tile.19
$region0: #{tile.19}
  #allocation0 [shape = 's32[1]{0}', space=sflag, size = 0x4, scoped, tag = 'scoped memory for tile.19']
  %s0 = inlined_call_operand.vmem [shape: f32[20], index: 0, kind: input, shape index: {}]
  %s1 = inlined_call_operand.vmem [shape: f32[5,20], index: 1, kind: output, shape index: {}]
  // Predicated region
  $region2: #{tile.19} parent=0 // pred_check
    _
  $region3: #{tile.19} parent=0 // pred_check_branch
    %3 = sbr.rel (0) target = $region5
  $region4: #{tile.19} parent=0 // pred_region
    _
  $region5: #{tile.19} parent=0 // pred_fallthru
    _
  %v4 = vld [vmem:[%s0] ss:$0 sm:$0xff]
  %5 = vst [vmem:[%s1] sm:$0xff] %v4

// kernel: tile.20
$region0: #{tile.20}
  %s0 = inlined_call_operand.vmem [shape: f32[5,20], index: 0, kind: input, shape index: {}]
  %s1 = inlined_call_operand.vmem [shape: f32[1,100], index: 1, kind: output, shape index: {}]
  $region1: #{tile.20} parent=0
    #allocation0 [shape = 'u8[4096]{0}', space=vmem, size = 0x1000, scoped, tag = 'scoped mem for output reshape']
    %v2 = vld [vmem:[%s0] sm:$0x1]
    %vm3 = vcmask 162816
    %4 = vst.msk [vmem:[#allocation0] sm:$0x1] %vm3, %v2
    %s5 = scalar_lea.vmem %s0, 4
    %v6 = vld [vmem:[%s5] sm:$0x1]
    %7 = vrot.lane.b32.xlu0 %v6, 80
    %v8 = vpop.permute.xlu0 %7
    %vm9 = vcmask 818816
    %10 = vst.msk [vmem:[#allocation0] sm:$0x1] %vm9, %v8
    %s11 = scalar_lea.vmem %s0, 3
    %v12 = vld [vmem:[%s11] sm:$0x1]
    %13 = vrot.lane.b32.xlu0 %v12, 60
    %v14 = vpop.permute.xlu0 %13
    %vm15 = vcmask 654816
    %16 = vst.msk [vmem:[#allocation0] sm:$0x1] %vm15, %v14
    %s17 = scalar_lea.vmem %s0, 2
    %v18 = vld [vmem:[%s17] sm:$0x1]
    %19 = vrot.lane.b32.xlu0 %v18, 40
    %v20 = vpop.permute.xlu0 %19
    %vm21 = vcmask 490816
    %22 = vst.msk [vmem:[#allocation0] sm:$0x1] %vm21, %v20
    %s23 = scalar_lea.vmem %s0, 1
    %v24 = vld [vmem:[%s23] sm:$0x1]
    %25 = vrot.lane.b32.xlu0 %v24, 20
    %v26 = vpop.permute.xlu0 %25
    %vm27 = vcmask 326816
    %28 = vst.msk [vmem:[#allocation0] sm:$0x1] %vm27, %v26
    %s30 = sshll.u32 1, 1
    %s31 = ssub.s32 %s30, 1
    %v33 = vld [vmem:[#allocation0] sm:%s31]
    %s34 = sshll.u32 1, 1
    %s35 = ssub.s32 %s34, 1
    %36 = vst [vmem:[%s1] sm:%s35] %v33

// kernel: net_forward.1
$region0: #{net_forward.1}
  #allocation0 [shape = 'u32[]', space=smem, size = 0x4, offset = 0x4, fixed_abs, tag = 'smem constant byte address 0x4 - core index']
  #allocation1 [shape = 'u32[144,128]{1,0:T(1,128)}', space=vmem, size = 0x12000, scoped, tag = 'internal scratch']
  #allocation2 [shape = 'bf16[15,16,130]{2,1,0:T(8,128)(2,1)}', space=vmem, size = 0x1e000, scoped, tag = 'scratch operand']
  #allocation3 [shape = 'bf16[7,16,100]{2,1,0:T(8,128)(2,1)}', space=vmem, size = 0x7000, scoped, tag = 'scratch operand']
  %s0 = inlined_call_operand.vmem [shape: bf16[30,32,28], index: 0, kind: input, shape index: {}]
  %s1 = inlined_call_operand.vmem [shape: bf16[5,28,260], index: 1, kind: input, shape index: {}]
  %s2 = inlined_call_operand.vmem [shape: f32[1,130], index: 2, kind: input, shape index: {}]
  %s3 = inlined_call_operand.vmem [shape: bf16[5,130,200], index: 3, kind: input, shape index: {}]
  %s4 = inlined_call_operand.vmem [shape: f32[1,100], index: 4, kind: input, shape index: {}]
  %s5 = inlined_call_operand.vmem [shape: bf16[5,100,64], index: 5, kind: input, shape index: {}]
  %s6 = inlined_call_operand.vmem [shape: f32[1,32], index: 6, kind: input, shape index: {}]
  %s7 = inlined_call_operand.vmem [shape: f32[32,64], index: 7, kind: input, shape index: {}]
  %s8 = inlined_call_operand.vmem [shape: f32[1,64], index: 8, kind: input, shape index: {}]
  %s9 = inlined_call_operand.vmem [shape: f32[64,10], index: 9, kind: input, shape index: {}]
  %s10 = inlined_call_operand.vmem [shape: f32[1,10], index: 10, kind: input, shape index: {}]
  %s11 = inlined_call_operand.vmem [shape: f32[32,10], index: 11, kind: output, shape index: {}]
  %s12 = sld [smem:[#allocation0]]
  $region118: #{net_forward.1} parent=0
    _
  %s14 = ssub.s32 1, %s12
  %s15 = scalar_select 0, %s14, %s12
  $region1: #{net_forward.1} parent=0
    #allocation4 [shape = 'u8[245760]{0}', space=vmem, size = 0x3c000, scoped, tag = 'input window, operand 0']
    loop: start=0, step=1, limit=4
    $region2: #{net_forward.1} parent=1 // loop_pre_header
      _
    $region3: #{net_forward.1} parent=1 // loop_header
      %s17 = sphi 0, %s21
      %p18 = scmp.ge.s32.totalorder %s17, 4
      %s27 = sphi 0, %s29
      %s30 = sphi 0, %s27
      %s31 = sphi 0, %s30
      %s47 = sphi 0, %s31
      %s51 = sphi 0, %s51
      %s53 = sphi 0, %s51
      %s54 = sphi 0, %s53
      %s68 = sphi 0, %s54
      %s72 = sphi 0, %s72
      %s74 = sphi 0, %s72
      %s75 = sphi 0, %s74
      %s89 = sphi 0, %s75
      %s93 = sphi 0, %s93
      %s95 = sphi 0, %s93
      %s96 = sphi 0, %s95
      %s110 = sphi 0, %s96
      %s114 = sphi 0, %s114
      %s116 = sphi 0, %s114
      %s117 = sphi 0, %s116
      %s131 = sphi 0, %s117
      %s135 = sphi 0, %s135
      %s137 = sphi 0, %s135
      %s138 = sphi 0, %s137
      %s152 = sphi 0, %s138
      %s156 = sphi 0, %s156
      %s158 = sphi 0, %s156
      %s159 = sphi 0, %s158
      %s173 = sphi 0, %s159
      %s177 = sphi 0, %s177
      %s179 = sphi 0, %s177
      %s180 = sphi 0, %s179
      %s194 = sphi 0, %s180
      %s198 = sphi 0, %s198
      %s200 = sphi 0, %s198
      %s201 = sphi 0, %s200
      %s215 = sphi 0, %s201
      %s219 = sphi 0, %s219
      %s221 = sphi 0, %s219
      %s222 = sphi 0, %s221
      %s236 = sphi 0, %s222
      %s240 = sphi 0, %s240
      %s242 = sphi 0, %s240
      %s243 = sphi 0, %s242
      %s257 = sphi 0, %s243
      %s263 = sphi 0, %s265
      %s266 = sphi 0, %s263
      %s267 = sphi 0, %s266
      %s283 = sphi 0, %s267
    $region4: #{net_forward.1} parent=1 // loop_header_branch
      %20 = sbr.rel (%p18) target = $region8
    $region5: #{net_forward.1} parent=1 // loop_body
      %s22 = ssub.s32 %s17, 1
      %s23 = ssub.s32 %s17, 2
      %s24 = sadd.s32 %s17, 1
      %s25 = ssub.s32 %s17, %s24
      %p26 = scmp.eq.s32.totalorder %s25, 0
      %s28 = sadd.s32 %s27, 1
      %s29 = scalar_select %p26, %s27, %s28
      %p32 = pneg %p26
      %p33 = scmp.eq.s32.totalorder %s17, 1
      %p34 = por %p32, %p33
      %p35 = scmp.ne.s32.totalorder %s27, %s30
      %p36 = scmp.eq.s32.totalorder %s17, 0
      %p37 = por %p35, %p36
      %p38 = scmp.ne.s32.totalorder %s27, %s30
      %p39 = scmp.eq.s32.totalorder %s22, 1
      %p40 = por %p38, %p39
      %p41 = scmp.ne.s32.totalorder %s30, %s31
      %p42 = scmp.eq.s32.totalorder %s22, 0
      %p43 = por %p41, %p42
      %p44 = scmp.ne.s32.totalorder %s30, %s31
      %p45 = scmp.eq.s32.totalorder %s23, 1
      %p46 = por %p44, %p45
      %p48 = scmp.ne.s32.totalorder %s31, %s47
      %p49 = scmp.eq.s32.totalorder %s23, 0
      %p50 = por %p48, %p49
      %s52 = sadd.s32 %s51, 1
      %p55 = scmp.eq.s32.totalorder %s17, 1
      %p56 = scmp.ne.s32.totalorder %s51, %s53
      %p57 = scmp.eq.s32.totalorder %s17, 0
      %p58 = por %p56, %p57
      %p59 = scmp.ne.s32.totalorder %s51, %s53
      %p60 = scmp.eq.s32.totalorder %s22, 1
      %p61 = por %p59, %p60
      %p62 = scmp.ne.s32.totalorder %s53, %s54
      %p63 = scmp.eq.s32.totalorder %s22, 0
      %p64 = por %p62, %p63
      %p65 = scmp.ne.s32.totalorder %s53, %s54
      %p66 = scmp.eq.s32.totalorder %s23, 1
      %p67 = por %p65, %p66
      %p69 = scmp.ne.s32.totalorder %s54, %s68
      %p70 = scmp.eq.s32.totalorder %s23, 0
      %p71 = por %p69, %p70
      %s73 = sadd.s32 %s72, 1
      %p76 = scmp.eq.s32.totalorder %s17, 1
      %p77 = scmp.ne.s32.totalorder %s72, %s74
      %p78 = scmp.eq.s32.totalorder %s17, 0
      %p79 = por %p77, %p78
      %p80 = scmp.ne.s32.totalorder %s72, %s74
      %p81 = scmp.eq.s32.totalorder %s22, 1
      %p82 = por %p80, %p81
      %p83 = scmp.ne.s32.totalorder %s74, %s75
      %p84 = scmp.eq.s32.totalorder %s22, 0
      %p85 = por %p83, %p84
      %p86 = scmp.ne.s32.totalorder %s74, %s75
      %p87 = scmp.eq.s32.totalorder %s23, 1
      %p88 = por %p86, %p87
      %p90 = scmp.ne.s32.totalorder %s75, %s89
      %p91 = scmp.eq.s32.totalorder %s23, 0
      %p92 = por %p90, %p91
      %s94 = sadd.s32 %s93, 1
      %p97 = scmp.eq.s32.totalorder %s17, 1
      %p98 = scmp.ne.s32.totalorder %s93, %s95
      %p99 = scmp.eq.s32.totalorder %s17, 0
      %p100 = por %p98, %p99
      %p101 = scmp.ne.s32.totalorder %s93, %s95
      %p102 = scmp.eq.s32.totalorder %s22, 1
      %p103 = por %p101, %p102
      %p104 = scmp.ne.s32.totalorder %s95, %s96
      %p105 = scmp.eq.s32.totalorder %s22, 0
      %p106 = por %p104, %p105
      %p107 = scmp.ne.s32.totalorder %s95, %s96
      %p108 = scmp.eq.s32.totalorder %s23, 1
      %p109 = por %p107, %p108
      %p111 = scmp.ne.s32.totalorder %s96, %s110
      %p112 = scmp.eq.s32.totalorder %s23, 0
      %p113 = por %p111, %p112
      %s115 = sadd.s32 %s114, 1
      %p118 = scmp.eq.s32.totalorder %s17, 1
      %p119 = scmp.ne.s32.totalorder %s114, %s116
      %p120 = scmp.eq.s32.totalorder %s17, 0
      %p121 = por %p119, %p120
      %p122 = scmp.ne.s32.totalorder %s114, %s116
      %p123 = scmp.eq.s32.totalorder %s22, 1
      %p124 = por %p122, %p123
      %p125 = scmp.ne.s32.totalorder %s116, %s117
      %p126 = scmp.eq.s32.totalorder %s22, 0
      %p127 = por %p125, %p126
      %p128 = scmp.ne.s32.totalorder %s116, %s117
      %p129 = scmp.eq.s32.totalorder %s23, 1
      %p130 = por %p128, %p129
      %p132 = scmp.ne.s32.totalorder %s117, %s131
      %p133 = scmp.eq.s32.totalorder %s23, 0
      %p134 = por %p132, %p133
      %s136 = sadd.s32 %s135, 1
      %p139 = scmp.eq.s32.totalorder %s17, 1
      %p140 = scmp.ne.s32.totalorder %s135, %s137
      %p141 = scmp.eq.s32.totalorder %s17, 0
      %p142 = por %p140, %p141
      %p143 = scmp.ne.s32.totalorder %s135, %s137
      %p144 = scmp.eq.s32.totalorder %s22, 1
      %p145 = por %p143, %p144
      %p146 = scmp.ne.s32.totalorder %s137, %s138
      %p147 = scmp.eq.s32.totalorder %s22, 0
      %p148 = por %p146, %p147
      %p149 = scmp.ne.s32.totalorder %s137, %s138
      %p150 = scmp.eq.s32.totalorder %s23, 1
      %p151 = por %p149, %p150
      %p153 = scmp.ne.s32.totalorder %s138, %s152
      %p154 = scmp.eq.s32.totalorder %s23, 0
      %p155 = por %p153, %p154
      %s157 = sadd.s32 %s156, 1
      %p160 = scmp.eq.s32.totalorder %s17, 1
      %p161 = scmp.ne.s32.totalorder %s156, %s158
      %p162 = scmp.eq.s32.totalorder %s17, 0
      %p163 = por %p161, %p162
      %p164 = scmp.ne.s32.totalorder %s156, %s158
      %p165 = scmp.eq.s32.totalorder %s22, 1
      %p166 = por %p164, %p165
      %p167 = scmp.ne.s32.totalorder %s158, %s159
      %p168 = scmp.eq.s32.totalorder %s22, 0
      %p169 = por %p167, %p168
      %p170 = scmp.ne.s32.totalorder %s158, %s159
      %p171 = scmp.eq.s32.totalorder %s23, 1
      %p172 = por %p170, %p171
      %p174 = scmp.ne.s32.totalorder %s159, %s173
      %p175 = scmp.eq.s32.totalorder %s23, 0
      %p176 = por %p174, %p175
      %s178 = sadd.s32 %s177, 1
      %p181 = scmp.eq.s32.totalorder %s17, 1
      %p182 = scmp.ne.s32.totalorder %s177, %s179
      %p183 = scmp.eq.s32.totalorder %s17, 0
      %p184 = por %p182, %p183
      %p185 = scmp.ne.s32.totalorder %s177, %s179
      %p186 = scmp.eq.s32.totalorder %s22, 1
      %p187 = por %p185, %p186
      %p188 = scmp.ne.s32.totalorder %s179, %s180
      %p189 = scmp.eq.s32.totalorder %s22, 0
      %p190 = por %p188, %p189
      %p191 = scmp.ne.s32.totalorder %s179, %s180
      %p192 = scmp.eq.s32.totalorder %s23, 1
      %p193 = por %p191, %p192
      %p195 = scmp.ne.s32.totalorder %s180, %s194
      %p196 = scmp.eq.s32.totalorder %s23, 0
      %p197 = por %p195, %p196
      %s199 = sadd.s32 %s198, 1
      %p202 = scmp.eq.s32.totalorder %s17, 1
      %p203 = scmp.ne.s32.totalorder %s198, %s200
      %p204 = scmp.eq.s32.totalorder %s17, 0
      %p205 = por %p203, %p204
      %p206 = scmp.ne.s32.totalorder %s198, %s200
      %p207 = scmp.eq.s32.totalorder %s22, 1
      %p208 = por %p206, %p207
      %p209 = scmp.ne.s32.totalorder %s200, %s201
      %p210 = scmp.eq.s32.totalorder %s22, 0
      %p211 = por %p209, %p210
      %p212 = scmp.ne.s32.totalorder %s200, %s201
      %p213 = scmp.eq.s32.totalorder %s23, 1
      %p214 = por %p212, %p213
      %p216 = scmp.ne.s32.totalorder %s201, %s215
      %p217 = scmp.eq.s32.totalorder %s23, 0
      %p218 = por %p216, %p217
      %s220 = sadd.s32 %s219, 1
      %p223 = scmp.eq.s32.totalorder %s17, 1
      %p224 = scmp.ne.s32.totalorder %s219, %s221
      %p225 = scmp.eq.s32.totalorder %s17, 0
      %p226 = por %p224, %p225
      %p227 = scmp.ne.s32.totalorder %s219, %s221
      %p228 = scmp.eq.s32.totalorder %s22, 1
      %p229 = por %p227, %p228
      %p230 = scmp.ne.s32.totalorder %s221, %s222
      %p231 = scmp.eq.s32.totalorder %s22, 0
      %p232 = por %p230, %p231
      %p233 = scmp.ne.s32.totalorder %s221, %s222
      %p234 = scmp.eq.s32.totalorder %s23, 1
      %p235 = por %p233, %p234
      %p237 = scmp.ne.s32.totalorder %s222, %s236
      %p238 = scmp.eq.s32.totalorder %s23, 0
      %p239 = por %p237, %p238
      %s241 = sadd.s32 %s240, 1
      %p244 = scmp.eq.s32.totalorder %s17, 1
      %p245 = scmp.ne.s32.totalorder %s240, %s242
      %p246 = scmp.eq.s32.totalorder %s17, 0
      %p247 = por %p245, %p246
      %p248 = scmp.ne.s32.totalorder %s240, %s242
      %p249 = scmp.eq.s32.totalorder %s22, 1
      %p250 = por %p248, %p249
      %p251 = scmp.ne.s32.totalorder %s242, %s243
      %p252 = scmp.eq.s32.totalorder %s22, 0
      %p253 = por %p251, %p252
      %p254 = scmp.ne.s32.totalorder %s242, %s243
      %p255 = scmp.eq.s32.totalorder %s23, 1
      %p256 = por %p254, %p255
      %p258 = scmp.ne.s32.totalorder %s243, %s257
      %p259 = scmp.eq.s32.totalorder %s23, 0
      %p260 = por %p258, %p259
      %s261 = ssub.s32 %s17, %s24
      %p262 = scmp.eq.s32.totalorder %s261, 0
      %s264 = sadd.s32 %s263, 1
      %s265 = scalar_select %p262, %s263, %s264
      %p268 = pneg %p262
      %p269 = scmp.eq.s32.totalorder %s17, 1
      %p270 = por %p268, %p269
      %p271 = scmp.ne.s32.totalorder %s263, %s266
      %p272 = scmp.eq.s32.totalorder %s17, 0
      %p273 = por %p271, %p272
      %p274 = scmp.ne.s32.totalorder %s263, %s266
      %p275 = scmp.eq.s32.totalorder %s22, 1
      %p276 = por %p274, %p275
      %p277 = scmp.ne.s32.totalorder %s266, %s267
      %p278 = scmp.eq.s32.totalorder %s22, 0
      %p279 = por %p277, %p278
      %p280 = scmp.ne.s32.totalorder %s266, %s267
      %p281 = scmp.eq.s32.totalorder %s23, 1
      %p282 = por %p280, %p281
      %p284 = scmp.ne.s32.totalorder %s267, %s283
      %p285 = scmp.eq.s32.totalorder %s23, 0
      %p286 = por %p284, %p285
      %p287 = scmp.le.s32.totalorder 1, %s17
      %p288 = scmp.lt.s32.totalorder %s17, 3
      %p289 = pnand %p287, %p288
      %p290 = pneg %p289
      // Predicated region
      $region9: #{net_forward.1} parent=5 // pred_check
        _
      $region10: #{net_forward.1} parent=5 // pred_check_branch
        %292 = sbr.rel (%p289) target = $region12
      $region11: #{net_forward.1} parent=5 // pred_region
        %s293 = ssub.s32 %s17, 1
        // Predicated region
        $region13: #{net_forward.1} parent=11 // pred_check
          %p294 = pneg %p64
        $region14: #{net_forward.1} parent=11 // pred_check_branch
          %296 = sbr.rel (%p294) target = $region16
        $region15: #{net_forward.1} parent=11 // pred_region
          _
        $region16: #{net_forward.1} parent=11 // pred_fallthru
          _
        // Predicated region
        $region17: #{net_forward.1} parent=11 // pred_check
          %p297 = pneg %p85
        $region18: #{net_forward.1} parent=11 // pred_check_branch
          %299 = sbr.rel (%p297) target = $region20
        $region19: #{net_forward.1} parent=11 // pred_region
          _
        $region20: #{net_forward.1} parent=11 // pred_fallthru
          _
        // Predicated region
        $region21: #{net_forward.1} parent=11 // pred_check
          %p300 = pneg %p106
        $region22: #{net_forward.1} parent=11 // pred_check_branch
          %302 = sbr.rel (%p300) target = $region24
        $region23: #{net_forward.1} parent=11 // pred_region
          _
        $region24: #{net_forward.1} parent=11 // pred_fallthru
          _
        // Predicated region
        $region25: #{net_forward.1} parent=11 // pred_check
          %p303 = pneg %p127
        $region26: #{net_forward.1} parent=11 // pred_check_branch
          %305 = sbr.rel (%p303) target = $region28
        $region27: #{net_forward.1} parent=11 // pred_region
          _
        $region28: #{net_forward.1} parent=11 // pred_fallthru
          _
        // Predicated region
        $region29: #{net_forward.1} parent=11 // pred_check
          %p306 = pneg %p148
        $region30: #{net_forward.1} parent=11 // pred_check_branch
          %308 = sbr.rel (%p306) target = $region32
        $region31: #{net_forward.1} parent=11 // pred_region
          _
        $region32: #{net_forward.1} parent=11 // pred_fallthru
          _
        // Predicated region
        $region33: #{net_forward.1} parent=11 // pred_check
          %p309 = pneg %p169
        $region34: #{net_forward.1} parent=11 // pred_check_branch
          %311 = sbr.rel (%p309) target = $region36
        $region35: #{net_forward.1} parent=11 // pred_region
          _
        $region36: #{net_forward.1} parent=11 // pred_fallthru
          _
        // Predicated region
        $region37: #{net_forward.1} parent=11 // pred_check
          %p312 = pneg %p190
        $region38: #{net_forward.1} parent=11 // pred_check_branch
          %314 = sbr.rel (%p312) target = $region40
        $region39: #{net_forward.1} parent=11 // pred_region
          _
        $region40: #{net_forward.1} parent=11 // pred_fallthru
          _
        // Predicated region
        $region41: #{net_forward.1} parent=11 // pred_check
          %p315 = pneg %p211
        $region42: #{net_forward.1} parent=11 // pred_check_branch
          %317 = sbr.rel (%p315) target = $region44
        $region43: #{net_forward.1} parent=11 // pred_region
          _
        $region44: #{net_forward.1} parent=11 // pred_fallthru
          _
        // Predicated region
        $region45: #{net_forward.1} parent=11 // pred_check
          %p318 = pneg %p232
        $region46: #{net_forward.1} parent=11 // pred_check_branch
          %320 = sbr.rel (%p318) target = $region48
        $region47: #{net_forward.1} parent=11 // pred_region
          _
        $region48: #{net_forward.1} parent=11 // pred_fallthru
          _
        // Predicated region
        $region49: #{net_forward.1} parent=11 // pred_check
          %p321 = pneg %p253
        $region50: #{net_forward.1} parent=11 // pred_check_branch
          %323 = sbr.rel (%p321) target = $region52
        $region51: #{net_forward.1} parent=11 // pred_region
          _
        $region52: #{net_forward.1} parent=11 // pred_fallthru
          _
      $region12: #{net_forward.1} parent=5 // pred_fallthru
        _
      %p324 = scmp.lt.s32.totalorder %s17, 2
      // Predicated region
      $region53: #{net_forward.1} parent=5 // pred_check
        %p325 = pneg %p324
      $region54: #{net_forward.1} parent=5 // pred_check_branch
        %327 = sbr.rel (%p325) target = $region56
      $region55: #{net_forward.1} parent=5 // pred_region
        // Predicated region
        $region57: #{net_forward.1} parent=55 // pred_check
          %p328 = pneg %p37
        $region58: #{net_forward.1} parent=55 // pred_check_branch
          %330 = sbr.rel (%p328) target = $region60
        $region59: #{net_forward.1} parent=55 // pred_region
          %s331 = sand.u32 %s27, 1
          %s332 = sand.u32 %s27, 1
          %s333 = smul.addr %s332, 240
          %s334 = scalar_lea.vmem [#allocation4], %s333
          %s335 = smul.u32 2, %s17
          %s336 = smul.addr %s335, 4
          %s337 = scalar_lea.vmem %s0, %s336
          // Predicated region
          $region61: #{net_forward.1} parent=59 // pred_check
            _
          $region62: #{net_forward.1} parent=59 // pred_check_branch
            %339 = sbr.rel (0) target = $region64
          $region63: #{net_forward.1} parent=59 // pred_region
            // Predicated region
            $region65: #{net_forward.1} parent=63 // pred_check
              _
            $region66: #{net_forward.1} parent=63 // pred_check_branch
              %341 = sbr.rel target = $region68
            $region67: #{net_forward.1} parent=63 // pred_region
              // Predicated region
              $region80: #{net_forward.1} parent=67 // pred_check
                _
              $region81: #{net_forward.1} parent=67 // pred_check_branch
                %475 = sbr.rel (0) target = $region83
              $region82: #{net_forward.1} parent=67 // pred_region
                loop: start=0, step=1, limit=1
                $region84: #{net_forward.1} parent=82 // loop_pre_header
                  _
                $region85: #{net_forward.1} parent=82 // loop_header
                  %s477 = sphi 0, %s481
                  %p478 = scmp.ge.s32.totalorder %s477, 1
                  %s482 = sphi %s337, %s337
                  %s483 = sphi %s334, %s334
                $region86: #{net_forward.1} parent=82 // loop_header_branch
                  %480 = sbr.rel (%p478) target = $region90
                $region87: #{net_forward.1} parent=82 // loop_body
                  _
                $region88: #{net_forward.1} parent=82 // loop_footer
                  %s481 = sadd.s32 1, %s477
                $region89: #{net_forward.1} parent=82 // loop_footer_branch
                  %476 = sbr.rel target = $region85
                $region90: #{net_forward.1} parent=82 // loop_exit
                  _
                %s485 = ssub.s32 16, 1
                loop: start=0, step=1, limit=1
                $region91: #{net_forward.1} parent=82 // loop_pre_header
                  _
                $region92: #{net_forward.1} parent=82 // loop_header
                  %s487 = sphi 0, %s491
                  %p488 = scmp.ge.s32.totalorder %s487, 1
                  %s492 = sphi %s337, %s337
                  %s493 = sphi %s334, %s334
                $region93: #{net_forward.1} parent=82 // loop_header_branch
                  %490 = sbr.rel (%p488) target = $region97
                $region94: #{net_forward.1} parent=82 // loop_body
                  %v494 = vld [vmem:[%s492] sm:%s485]
                  %495 = vst [vmem:[%s493] sm:%s485] %v494
                  %v496 = vld [vmem:[%s492 + $0x4] sm:%s485]
                  %497 = vst [vmem:[%s493 + $0x4] sm:%s485] %v496
                  %v498 = vld [vmem:[%s492 + $0x10] sm:%s485]
                  %499 = vst [vmem:[%s493 + $0x8] sm:%s485] %v498
                  %v500 = vld [vmem:[%s492 + $0x14] sm:%s485]
                  %501 = vst [vmem:[%s493 + $0xc] sm:%s485] %v500
                  %v502 = vld [vmem:[%s492 + $0x20] sm:%s485]
                  %503 = vst [vmem:[%s493 + $0x10] sm:%s485] %v502
                  %v504 = vld [vmem:[%s492 + $0x24] sm:%s485]
                  %505 = vst [vmem:[%s493 + $0x14] sm:%s485] %v504
                  %v506 = vld [vmem:[%s492 + $0x30] sm:%s485]
                  %507 = vst [vmem:[%s493 + $0x18] sm:%s485] %v506
                  %v508 = vld [vmem:[%s492 + $0x34] sm:%s485]
                  %509 = vst [vmem:[%s493 + $0x1c] sm:%s485] %v508
                  %v510 = vld [vmem:[%s492 + $0x40] sm:%s485]
                  %511 = vst [vmem:[%s493 + $0x20] sm:%s485] %v510
                  %v512 = vld [vmem:[%s492 + $0x44] sm:%s485]
                  %513 = vst [vmem:[%s493 + $0x24] sm:%s485] %v512
                  %v514 = vld [vmem:[%s492 + $0x50] sm:%s485]
                  %515 = vst [vmem:[%s493 + $0x28] sm:%s485] %v514
                  %v516 = vld [vmem:[%s492 + $0x54] sm:%s485]
                  %517 = vst [vmem:[%s493 + $0x2c] sm:%s485] %v516
                  %v518 = vld [vmem:[%s492 + $0x60] sm:%s485]
                  %519 = vst [vmem:[%s493 + $0x30] sm:%s485] %v518
                  %v520 = vld [vmem:[%s492 + $0x64] sm:%s485]
                  %521 = vst [vmem:[%s493 + $0x34] sm:%s485] %v520
                  %v522 = vld [vmem:[%s492 + $0x70] sm:%s485]
                  %523 = vst [vmem:[%s493 + $0x38] sm:%s485] %v522
                  %v524 = vld [vmem:[%s492 + $0x74] sm:%s485]
                  %525 = vst [vmem:[%s493 + $0x3c] sm:%s485] %v524
                  %v526 = vld [vmem:[%s492 + $0x80] sm:%s485]
                  %527 = vst [vmem:[%s493 + $0x40] sm:%s485] %v526
                  %v528 = vld [vmem:[%s492 + $0x84] sm:%s485]
                  %529 = vst [vmem:[%s493 + $0x44] sm:%s485] %v528
                  %v530 = vld [vmem:[%s492 + $0x90] sm:%s485]
                  %531 = vst [vmem:[%s493 + $0x48] sm:%s485] %v530
                  %v532 = vld [vmem:[%s492 + $0x94] sm:%s485]
                  %533 = vst [vmem:[%s493 + $0x4c] sm:%s485] %v532
                  %v534 = vld [vmem:[%s492 + $0xa0] sm:%s485]
                  %535 = vst [vmem:[%s493 + $0x50] sm:%s485] %v534
                  %v536 = vld [vmem:[%s492 + $0xa4] sm:%s485]
                  %537 = vst [vmem:[%s493 + $0x54] sm:%s485] %v536
                  %v538 = vld [vmem:[%s492 + $0xb0] sm:%s485]
                  %539 = vst [vmem:[%s493 + $0x58] sm:%s485] %v538
                  %v540 = vld [vmem:[%s492 + $0xb4] sm:%s485]
                  %541 = vst [vmem:[%s493 + $0x5c] sm:%s485] %v540
                  %v542 = vld [vmem:[%s492 + $0xc0] sm:%s485]
                  %543 = vst [vmem:[%s493 + $0x60] sm:%s485] %v542
                  %v544 = vld [vmem:[%s492 + $0xc4] sm:%s485]
                  %545 = vst [vmem:[%s493 + $0x64] sm:%s485] %v544
                  %v546 = vld [vmem:[%s492 + $0xd0] sm:%s485]
                  %547 = vst [vmem:[%s493 + $0x68] sm:%s485] %v546
                  %v548 = vld [vmem:[%s492 + $0xd4] sm:%s485]
                  %549 = vst [vmem:[%s493 + $0x6c] sm:%s485] %v548
                  %v550 = vld [vmem:[%s492 + $0xe0] sm:%s485]
                  %551 = vst [vmem:[%s493 + $0x70] sm:%s485] %v550
                  %v552 = vld [vmem:[%s492 + $0xe4] sm:%s485]
                  %553 = vst [vmem:[%s493 + $0x74] sm:%s485] %v552
                  %v554 = vld [vmem:[%s492 + $0xf0] sm:%s485]
                  %555 = vst [vmem:[%s493 + $0x78] sm:%s485] %v554
                  %v556 = vld [vmem:[%s492 + $0xf4] sm:%s485]
                  %557 = vst [vmem:[%s493 + $0x7c] sm:%s485] %v556
                  %v558 = vld [vmem:[%s492 + $0x100] sm:%s485]
                  %559 = vst [vmem:[%s493 + $0x80] sm:%s485] %v558
                  %v560 = vld [vmem:[%s492 + $0x104] sm:%s485]
                  %561 = vst [vmem:[%s493 + $0x84] sm:%s485] %v560
                  %v562 = vld [vmem:[%s492 + $0x110] sm:%s485]
                  %563 = vst [vmem:[%s493 + $0x88] sm:%s485] %v562
                  %v564 = vld [vmem:[%s492 + $0x114] sm:%s485]
                  %565 = vst [vmem:[%s493 + $0x8c] sm:%s485] %v564
                  %v566 = vld [vmem:[%s492 + $0x120] sm:%s485]
                  %567 = vst [vmem:[%s493 + $0x90] sm:%s485] %v566
                  %v568 = vld [vmem:[%s492 + $0x124] sm:%s485]
                  %569 = vst [vmem:[%s493 + $0x94] sm:%s485] %v568
                  %v570 = vld [vmem:[%s492 + $0x130] sm:%s485]
                  %571 = vst [vmem:[%s493 + $0x98] sm:%s485] %v570
                  %v572 = vld [vmem:[%s492 + $0x134] sm:%s485]
                  %573 = vst [vmem:[%s493 + $0x9c] sm:%s485] %v572
                  %v574 = vld [vmem:[%s492 + $0x140] sm:%s485]
                  %575 = vst [vmem:[%s493 + $0xa0] sm:%s485] %v574
                  %v576 = vld [vmem:[%s492 + $0x144] sm:%s485]
                  %577 = vst [vmem:[%s493 + $0xa4] sm:%s485] %v576
                  %v578 = vld [vmem:[%s492 + $0x150] sm:%s485]
                  %579 = vst [vmem:[%s493 + $0xa8] sm:%s485] %v578
                  %v580 = vld [vmem:[%s492 + $0x154] sm:%s485]
                  %581 = vst [vmem:[%s493 + $0xac] sm:%s485] %v580
                  %v582 = vld [vmem:[%s492 + $0x160] sm:%s485]
                  %583 = vst [vmem:[%s493 + $0xb0] sm:%s485] %v582
                  %v584 = vld [vmem:[%s492 + $0x164] sm:%s485]
                  %585 = vst [vmem:[%s493 + $0xb4] sm:%s485] %v584
                  %v586 = vld [vmem:[%s492 + $0x170] sm:%s485]
                  %587 = vst [vmem:[%s493 + $0xb8] sm:%s485] %v586
                  %v588 = vld [vmem:[%s492 + $0x174] sm:%s485]
                  %589 = vst [vmem:[%s493 + $0xbc] sm:%s485] %v588
                  %v590 = vld [vmem:[%s492 + $0x180] sm:%s485]
                  %591 = vst [vmem:[%s493 + $0xc0] sm:%s485] %v590
                  %v592 = vld [vmem:[%s492 + $0x184] sm:%s485]
                  %593 = vst [vmem:[%s493 + $0xc4] sm:%s485] %v592
                  %v594 = vld [vmem:[%s492 + $0x190] sm:%s485]
                  %595 = vst [vmem:[%s493 + $0xc8] sm:%s485] %v594
                  %v596 = vld [vmem:[%s492 + $0x194] sm:%s485]
                  %597 = vst [vmem:[%s493 + $0xcc] sm:%s485] %v596
                  %v598 = vld [vmem:[%s492 + $0x1a0] sm:%s485]
                  %599 = vst [vmem:[%s493 + $0xd0] sm:%s485] %v598
                  %v600 = vld [vmem:[%s492 + $0x1a4] sm:%s485]
                  %601 = vst [vmem:[%s493 + $0xd4] sm:%s485] %v600
                  %v602 = vld [vmem:[%s492 + $0x1b0] sm:%s485]
                  %603 = vst [vmem:[%s493 + $0xd8] sm:%s485] %v602
                  %v604 = vld [vmem:[%s492 + $0x1b4] sm:%s485]
                  %605 = vst [vmem:[%s493 + $0xdc] sm:%s485] %v604
                  %v606 = vld [vmem:[%s492 + $0x1c0] sm:%s485]
                  %607 = vst [vmem:[%s493 + $0xe0] sm:%s485] %v606
                  %v608 = vld [vmem:[%s492 + $0x1c4] sm:%s485]
                  %609 = vst [vmem:[%s493 + $0xe4] sm:%s485] %v608
                  %v610 = vld [vmem:[%s492 + $0x1d0] sm:%s485]
                  %611 = vst [vmem:[%s493 + $0xe8] sm:%s485] %v610
                  %v612 = vld [vmem:[%s492 + $0x1d4] sm:%s485]
                  %613 = vst [vmem:[%s493 + $0xec] sm:%s485] %v612
                $region95: #{net_forward.1} parent=82 // loop_footer
                  %s491 = sadd.s32 1, %s487
                $region96: #{net_forward.1} parent=82 // loop_footer_branch
                  %486 = sbr.rel target = $region92
                $region97: #{net_forward.1} parent=82 // loop_exit
                  _
              $region83: #{net_forward.1} parent=67 // pred_fallthru
                _
            $region68: #{net_forward.1} parent=63 // pred_fallthru
              _
            // Predicated region
            $region69: #{net_forward.1} parent=63 // pred_check
              _
            $region70: #{net_forward.1} parent=63 // pred_check_branch
              %343 = sbr.rel (0) target = $region72
            $region71: #{net_forward.1} parent=63 // pred_region
              %s345 = ssub.s32 16, 1
              loop: start=0, step=1, limit=1
              $region73: #{net_forward.1} parent=71 // loop_pre_header
                _
              $region74: #{net_forward.1} parent=71 // loop_header
                %s347 = sphi 0, %s351
                %p348 = scmp.ge.s32.totalorder %s347, 1
                %s352 = sphi %s337, %s337
                %s353 = sphi %s334, %s334
              $region75: #{net_forward.1} parent=71 // loop_header_branch
                %350 = sbr.rel (%p348) target = $region79
              $region76: #{net_forward.1} parent=71 // loop_body
                %v354 = vld [vmem:[%s352] sm:%s345]
                %355 = vst [vmem:[%s353] sm:%s345] %v354
                %v356 = vld [vmem:[%s352 + $0x4] sm:%s345]
                %357 = vst [vmem:[%s353 + $0x4] sm:%s345] %v356
                %v358 = vld [vmem:[%s352 + $0x10] sm:%s345]
                %359 = vst [vmem:[%s353 + $0x8] sm:%s345] %v358
                %v360 = vld [vmem:[%s352 + $0x14] sm:%s345]
                %361 = vst [vmem:[%s353 + $0xc] sm:%s345] %v360
                %v362 = vld [vmem:[%s352 + $0x20] sm:%s345]
                %363 = vst [vmem:[%s353 + $0x10] sm:%s345] %v362
                %v364 = vld [vmem:[%s352 + $0x24] sm:%s345]
                %365 = vst [vmem:[%s353 + $0x14] sm:%s345] %v364
                %v366 = vld [vmem:[%s352 + $0x30] sm:%s345]
                %367 = vst [vmem:[%s353 + $0x18] sm:%s345] %v366
                %v368 = vld [vmem:[%s352 + $0x34] sm:%s345]
                %369 = vst [vmem:[%s353 + $0x1c] sm:%s345] %v368
                %v370 = vld [vmem:[%s352 + $0x40] sm:%s345]
                %371 = vst [vmem:[%s353 + $0x20] sm:%s345] %v370
                %v372 = vld [vmem:[%s352 + $0x44] sm:%s345]
                %373 = vst [vmem:[%s353 + $0x24] sm:%s345] %v372
                %v374 = vld [vmem:[%s352 + $0x50] sm:%s345]
                %375 = vst [vmem:[%s353 + $0x28] sm:%s345] %v374
                %v376 = vld [vmem:[%s352 + $0x54] sm:%s345]
                %377 = vst [vmem:[%s353 + $0x2c] sm:%s345] %v376
                %v378 = vld [vmem:[%s352 + $0x60] sm:%s345]
                %379 = vst [vmem:[%s353 + $0x30] sm:%s345] %v378
                %v380 = vld [vmem:[%s352 + $0x64] sm:%s345]
                %381 = vst [vmem:[%s353 + $0x34] sm:%s345] %v380
                %v382 = vld [vmem:[%s352 + $0x70] sm:%s345]
                %383 = vst [vmem:[%s353 + $0x38] sm:%s345] %v382
                %v384 = vld [vmem:[%s352 + $0x74] sm:%s345]
                %385 = vst [vmem:[%s353 + $0x3c] sm:%s345] %v384
                %v386 = vld [vmem:[%s352 + $0x80] sm:%s345]
                %387 = vst [vmem:[%s353 + $0x40] sm:%s345] %v386
                %v388 = vld [vmem:[%s352 + $0x84] sm:%s345]
                %389 = vst [vmem:[%s353 + $0x44] sm:%s345] %v388
                %v390 = vld [vmem:[%s352 + $0x90] sm:%s345]
                %391 = vst [vmem:[%s353 + $0x48] sm:%s345] %v390
                %v392 = vld [vmem:[%s352 + $0x94] sm:%s345]
                %393 = vst [vmem:[%s353 + $0x4c] sm:%s345] %v392
                %v394 = vld [vmem:[%s352 + $0xa0] sm:%s345]
                %395 = vst [vmem:[%s353 + $0x50] sm:%s345] %v394
                %v396 = vld [vmem:[%s352 + $0xa4] sm:%s345]
                %397 = vst [vmem:[%s353 + $0x54] sm:%s345] %v396
                %v398 = vld [vmem:[%s352 + $0xb0] sm:%s345]
                %399 = vst [vmem:[%s353 + $0x58] sm:%s345] %v398
                %v400 = vld [vmem:[%s352 + $0xb4] sm:%s345]
                %401 = vst [vmem:[%s353 + $0x5c] sm:%s345] %v400
                %v402 = vld [vmem:[%s352 + $0xc0] sm:%s345]
                %403 = vst [vmem:[%s353 + $0x60] sm:%s345] %v402
                %v404 = vld [vmem:[%s352 + $0xc4] sm:%s345]
                %405 = vst [vmem:[%s353 + $0x64] sm:%s345] %v404
                %v406 = vld [vmem:[%s352 + $0xd0] sm:%s345]
                %407 = vst [vmem:[%s353 + $0x68] sm:%s345] %v406
                %v408 = vld [vmem:[%s352 + $0xd4] sm:%s345]
                %409 = vst [vmem:[%s353 + $0x6c] sm:%s345] %v408
                %v410 = vld [vmem:[%s352 + $0xe0] sm:%s345]
                %411 = vst [vmem:[%s353 + $0x70] sm:%s345] %v410
                %v412 = vld [vmem:[%s352 + $0xe4] sm:%s345]
                %413 = vst [vmem:[%s353 + $0x74] sm:%s345] %v412
                %v414 = vld [vmem:[%s352 + $0xf0] sm:%s345]
                %415 = vst [vmem:[%s353 + $0x78] sm:%s345] %v414
                %v416 = vld [vmem:[%s352 + $0xf4] sm:%s345]
                %417 = vst [vmem:[%s353 + $0x7c] sm:%s345] %v416
                %v418 = vld [vmem:[%s352 + $0x100] sm:%s345]
                %419 = vst [vmem:[%s353 + $0x80] sm:%s345] %v418
                %v420 = vld [vmem:[%s352 + $0x104] sm:%s345]
                %421 = vst [vmem:[%s353 + $0x84] sm:%s345] %v420
                %v422 = vld [vmem:[%s352 + $0x110] sm:%s345]
                %423 = vst [vmem:[%s353 + $0x88] sm:%s345] %v422
                %v424 = vld [vmem:[%s352 + $0x114] sm:%s345]
                %425 = vst [vmem:[%s353 + $0x8c] sm:%s345] %v424
                %v426 = vld [vmem:[%s352 + $0x120] sm:%s345]
                %427 = vst [vmem:[%s353 + $0x90] sm:%s345] %v426
                %v428 = vld [vmem:[%s352 + $0x124] sm:%s345]
                %429 = vst [vmem:[%s353 + $0x94] sm:%s345] %v428
                %v430 = vld [vmem:[%s352 + $0x130] sm:%s345]
                %431 = vst [vmem:[%s353 + $0x98] sm:%s345] %v430
                %v432 = vld [vmem:[%s352 + $0x134] sm:%s345]
                %433 = vst [vmem:[%s353 + $0x9c] sm:%s345] %v432
                %v434 = vld [vmem:[%s352 + $0x140] sm:%s345]
                %435 = vst [vmem:[%s353 + $0xa0] sm:%s345] %v434
                %v436 = vld [vmem:[%s352 + $0x144] sm:%s345]
                %437 = vst [vmem:[%s353 + $0xa4] sm:%s345] %v436
                %v438 = vld [vmem:[%s352 + $0x150] sm:%s345]
                %439 = vst [vmem:[%s353 + $0xa8] sm:%s345] %v438
                %v440 = vld [vmem:[%s352 + $0x154] sm:%s345]
                %441 = vst [vmem:[%s353 + $0xac] sm:%s345] %v440
                %v442 = vld [vmem:[%s352 + $0x160] sm:%s345]
                %443 = vst [vmem:[%s353 + $0xb0] sm:%s345] %v442
                %v444 = vld [vmem:[%s352 + $0x164] sm:%s345]
                %445 = vst [vmem:[%s353 + $0xb4] sm:%s345] %v444
                %v446 = vld [vmem:[%s352 + $0x170] sm:%s345]
                %447 = vst [vmem:[%s353 + $0xb8] sm:%s345] %v446
                %v448 = vld [vmem:[%s352 + $0x174] sm:%s345]
                %449 = vst [vmem:[%s353 + $0xbc] sm:%s345] %v448
                %v450 = vld [vmem:[%s352 + $0x180] sm:%s345]
                %451 = vst [vmem:[%s353 + $0xc0] sm:%s345] %v450
                %v452 = vld [vmem:[%s352 + $0x184] sm:%s345]
                %453 = vst [vmem:[%s353 + $0xc4] sm:%s345] %v452
                %v454 = vld [vmem:[%s352 + $0x190] sm:%s345]
                %455 = vst [vmem:[%s353 + $0xc8] sm:%s345] %v454
                %v456 = vld [vmem:[%s352 + $0x194] sm:%s345]
                %457 = vst [vmem:[%s353 + $0xcc] sm:%s345] %v456
                %v458 = vld [vmem:[%s352 + $0x1a0] sm:%s345]
                %459 = vst [vmem:[%s353 + $0xd0] sm:%s345] %v458
                %v460 = vld [vmem:[%s352 + $0x1a4] sm:%s345]
                %461 = vst [vmem:[%s353 + $0xd4] sm:%s345] %v460
                %v462 = vld [vmem:[%s352 + $0x1b0] sm:%s345]
                %463 = vst [vmem:[%s353 + $0xd8] sm:%s345] %v462
                %v464 = vld [vmem:[%s352 + $0x1b4] sm:%s345]
                %465 = vst [vmem:[%s353 + $0xdc] sm:%s345] %v464
                %v466 = vld [vmem:[%s352 + $0x1c0] sm:%s345]
                %467 = vst [vmem:[%s353 + $0xe0] sm:%s345] %v466
                %v468 = vld [vmem:[%s352 + $0x1c4] sm:%s345]
                %469 = vst [vmem:[%s353 + $0xe4] sm:%s345] %v468
                %v470 = vld [vmem:[%s352 + $0x1d0] sm:%s345]
                %471 = vst [vmem:[%s353 + $0xe8] sm:%s345] %v470
                %v472 = vld [vmem:[%s352 + $0x1d4] sm:%s345]
                %473 = vst [vmem:[%s353 + $0xec] sm:%s345] %v472
              $region77: #{net_forward.1} parent=71 // loop_footer
                %s351 = sadd.s32 1, %s347
              $region78: #{net_forward.1} parent=71 // loop_footer_branch
                %346 = sbr.rel target = $region74
              $region79: #{net_forward.1} parent=71 // loop_exit
                _
            $region72: #{net_forward.1} parent=63 // pred_fallthru
              _
          $region64: #{net_forward.1} parent=59 // pred_fallthru
            _
          %614 = vnop
        $region60: #{net_forward.1} parent=55 // pred_fallthru
          _
      $region56: #{net_forward.1} parent=5 // pred_fallthru
        _
      %p615 = scmp.le.s32.totalorder 1, %s17
      %p616 = scmp.lt.s32.totalorder %s17, 3
      %p617 = pnand %p615, %p616
      %p618 = pneg %p617
      // Predicated region
      $region98: #{net_forward.1} parent=5 // pred_check
        _
      $region99: #{net_forward.1} parent=5 // pred_check_branch
        %620 = sbr.rel (%p617) target = $region101
      $region100: #{net_forward.1} parent=5 // pred_region
        %s621 = ssub.s32 %s17, 1
        %s622 = sand.u32 %s30, 1
        %s623 = sand.u32 %s30, 1
        %s624 = smul.addr %s623, 240
        %s625 = scalar_lea.vmem [#allocation4], %s624
        // Predicated region
        $region102: #{net_forward.1} parent=100 // pred_check
          %p626 = pneg %p43
        $region103: #{net_forward.1} parent=100 // pred_check_branch
          %628 = sbr.rel (%p626) target = $region105
        $region104: #{net_forward.1} parent=100 // pred_region
          _
        $region105: #{net_forward.1} parent=100 // pred_fallthru
          _
        %s629 = sand.u32 %s30, 1
        %s630 = sand.u32 %s30, 1
        %s631 = smul.addr %s630, 240
        %s632 = scalar_lea.vmem [#allocation4], %s631
        %p633 = pneg %p43
        %p634 = pneg %p40
        %p635 = pneg %p64
        %p636 = pneg %p61
        %p637 = pneg %p85
        %p638 = pneg %p82
        %p639 = pneg %p106
        %p640 = pneg %p103
        %p641 = pneg %p127
        %p642 = pneg %p124
        %p643 = pneg %p148
        %p644 = pneg %p145
        %p645 = pneg %p169
        %p646 = pneg %p166
        %p647 = pneg %p190
        %p648 = pneg %p187
        %p649 = pneg %p211
        %p650 = pneg %p208
        %p651 = pneg %p232
        %p652 = pneg %p229
        %p653 = pneg %p253
        %p654 = pneg %p250
        %p655 = pneg %p279
        %p656 = pneg %p276
        %s657 = smul.u32 2, %s22
        %p658 = scmp.lt.s32.totalorder %s657, 3
        %s659 = scalar_select %p658, %s657, 3
        %s660 = smul.addr %s659, 8
        %s661 = scalar_lea.vmem %s11, %s660
        %s662 = smul.u32 2, %s22
        %s663 = smul.u32 2, %s22
        %p664 = scmp.lt.s32.totalorder %s663, 3
        %s665 = scalar_select %p664, %s663, 3
        %s666 = smul.addr %s665, 8
        %s667 = scalar_lea.vmem %s11, %s666
        %s668 = smul.u32 2, %s22
        %v670 = vld [vmem:[%s625] sm:$0xf]
        %v671 = vld [vmem:[%s625 + $0x4] sm:$0xf]
        %v672 = vld [vmem:[%s625 + $0x8] sm:$0xf]
        %v673 = vld [vmem:[%s625 + $0xc] sm:$0xf]
        %v674 = vld [vmem:[%s625 + $0x10] sm:$0xf]
        %v675 = vld [vmem:[%s625 + $0x14] sm:$0xf]
        %v676 = vld [vmem:[%s625 + $0x18] sm:$0xf]
        %v677 = vld [vmem:[%s625 + $0x1c] sm:$0xf]
        %v678 = vld [vmem:[%s625 + $0x20] sm:$0xf]
        %v679 = vld [vmem:[%s625 + $0x24] sm:$0xf]
        %v680 = vld [vmem:[%s625 + $0x28] sm:$0xf]
        %v681 = vld [vmem:[%s625 + $0x2c] sm:$0xf]
        %v682 = vld [vmem:[%s625 + $0x30] sm:$0xf]
        %v683 = vld [vmem:[%s625 + $0x34] sm:$0xf]
        %v684 = vld [vmem:[%s625 + $0x38] sm:$0xf]
        %v685 = vld [vmem:[%s625 + $0x3c] sm:$0xf]
        %v686 = vld [vmem:[%s625 + $0x40] sm:$0xf]
        %v687 = vld [vmem:[%s625 + $0x44] sm:$0xf]
        %v688 = vld [vmem:[%s625 + $0x48] sm:$0xf]
        %v689 = vld [vmem:[%s625 + $0x4c] sm:$0xf]
        %v690 = vld [vmem:[%s625 + $0x50] sm:$0xf]
        %v691 = vld [vmem:[%s625 + $0x54] sm:$0xf]
        %v692 = vld [vmem:[%s625 + $0x58] sm:$0xf]
        %v693 = vld [vmem:[%s625 + $0x5c] sm:$0xf]
        %v694 = vld [vmem:[%s625 + $0x60] sm:$0xf]
        %v695 = vld [vmem:[%s625 + $0x64] sm:$0xf]
        %v696 = vld [vmem:[%s625 + $0x68] sm:$0xf]
        %v697 = vld [vmem:[%s625 + $0x6c] sm:$0xf]
        %v698 = vld [vmem:[%s625 + $0x70] sm:$0xf]
        %v699 = vld [vmem:[%s625 + $0x74] sm:$0xf]
        %v700 = vld [vmem:[%s625 + $0x78] sm:$0xf]
        %v701 = vld [vmem:[%s625 + $0x7c] sm:$0xf]
        %v702 = vld [vmem:[%s625 + $0x80] sm:$0xf]
        %v703 = vld [vmem:[%s625 + $0x84] sm:$0xf]
        %v704 = vld [vmem:[%s625 + $0x88] sm:$0xf]
        %v705 = vld [vmem:[%s625 + $0x8c] sm:$0xf]
        %v706 = vld [vmem:[%s625 + $0x90] sm:$0xf]
        %v707 = vld [vmem:[%s625 + $0x94] sm:$0xf]
        %v708 = vld [vmem:[%s625 + $0x98] sm:$0xf]
        %v709 = vld [vmem:[%s625 + $0x9c] sm:$0xf]
        %v710 = vld [vmem:[%s625 + $0xa0] sm:$0xf]
        %v711 = vld [vmem:[%s625 + $0xa4] sm:$0xf]
        %v712 = vld [vmem:[%s625 + $0xa8] sm:$0xf]
        %v713 = vld [vmem:[%s625 + $0xac] sm:$0xf]
        %v714 = vld [vmem:[%s625 + $0xb0] sm:$0xf]
        %v715 = vld [vmem:[%s625 + $0xb4] sm:$0xf]
        %v716 = vld [vmem:[%s625 + $0xb8] sm:$0xf]
        %v717 = vld [vmem:[%s625 + $0xbc] sm:$0xf]
        %v718 = vld [vmem:[%s625 + $0xc0] sm:$0xf]
        %v719 = vld [vmem:[%s625 + $0xc4] sm:$0xf]
        %v720 = vld [vmem:[%s625 + $0xc8] sm:$0xf]
        %v721 = vld [vmem:[%s625 + $0xcc] sm:$0xf]
        %v722 = vld [vmem:[%s1] sm:$0xff]
        %v723 = vld [vmem:[%s1 + $0x8] sm:$0xf]
        %v724 = vld [vmem:[%s1 + $0xc] sm:$0xff]
        %v725 = vld [vmem:[%s1 + $0x14] sm:$0xf]
        %v726 = vld [vmem:[%s1 + $0x18] sm:$0xff]
        %v727 = vld [vmem:[%s1 + $0x20] sm:$0xf]
        %v728 = vld [vmem:[%s1 + $0x24] sm:$0x33]
        %v729 = vld [vmem:[%s1 + $0x2c] sm:$0x3]
        %s730 = scalar_lea.vmem %s625, 8 [#allocation4]
        %v731 = vld [vmem:[%s730] sm:$0xf]
        %v732 = vld [vmem:[%s730 + $0x4] sm:$0xf]
        %v733 = vld [vmem:[%s730 + $0x8] sm:$0xf]
        %v734 = vld [vmem:[%s730 + $0xc] sm:$0xf]
        %v735 = vld [vmem:[%s730 + $0x10] sm:$0xf]
        %v736 = vld [vmem:[%s730 + $0x14] sm:$0xf]
        %v737 = vld [vmem:[%s730 + $0x18] sm:$0xf]
        %v738 = vld [vmem:[%s730 + $0x1c] sm:$0xf]
        %v739 = vld [vmem:[%s730 + $0x20] sm:$0xf]
        %v740 = vld [vmem:[%s730 + $0x24] sm:$0xf]
        %v741 = vld [vmem:[%s730 + $0x28] sm:$0xf]
        %v742 = vld [vmem:[%s730 + $0x2c] sm:$0xf]
        %v743 = vld [vmem:[%s730 + $0x30] sm:$0xf]
        %v744 = vld [vmem:[%s730 + $0x34] sm:$0xf]
        %v745 = vld [vmem:[%s730 + $0x38] sm:$0xf]
        %v746 = vld [vmem:[%s730 + $0x3c] sm:$0xf]
        %v747 = vld [vmem:[%s730 + $0x40] sm:$0xf]
        %v748 = vld [vmem:[%s730 + $0x44] sm:$0xf]
        %v749 = vld [vmem:[%s730 + $0x48] sm:$0xf]
        %v750 = vld [vmem:[%s730 + $0x4c] sm:$0xf]
        %v751 = vld [vmem:[%s730 + $0x50] sm:$0xf]
        %v752 = vld [vmem:[%s730 + $0x54] sm:$0xf]
        %v753 = vld [vmem:[%s730 + $0x58] sm:$0xf]
        %v754 = vld [vmem:[%s730 + $0x5c] sm:$0xf]
        %v755 = vld [vmem:[%s730 + $0x60] sm:$0xf]
        %v756 = vld [vmem:[%s730 + $0x64] sm:$0xf]
        %v757 = vld [vmem:[%s730 + $0x68] sm:$0xf]
        %v758 = vld [vmem:[%s730 + $0x6c] sm:$0xf]
        %v759 = vld [vmem:[%s730 + $0x70] sm:$0xf]
        %v760 = vld [vmem:[%s730 + $0x74] sm:$0xf]
        %v761 = vld [vmem:[%s730 + $0x78] sm:$0xf]
        %v762 = vld [vmem:[%s730 + $0x7c] sm:$0xf]
        %v763 = vld [vmem:[%s730 + $0x80] sm:$0xf]
        %v764 = vld [vmem:[%s730 + $0x84] sm:$0xf]
        %v765 = vld [vmem:[%s730 + $0x88] sm:$0xf]
        %v766 = vld [vmem:[%s730 + $0x8c] sm:$0xf]
        %v767 = vld [vmem:[%s730 + $0x90] sm:$0xf]
        %v768 = vld [vmem:[%s730 + $0x94] sm:$0xf]
        %v769 = vld [vmem:[%s730 + $0x98] sm:$0xf]
        %v770 = vld [vmem:[%s730 + $0x9c] sm:$0xf]
        %v771 = vld [vmem:[%s730 + $0xa0] sm:$0xf]
        %v772 = vld [vmem:[%s730 + $0xa4] sm:$0xf]
        %v773 = vld [vmem:[%s730 + $0xa8] sm:$0xf]
        %v774 = vld [vmem:[%s730 + $0xac] sm:$0xf]
        %v775 = vld [vmem:[%s730 + $0xb0] sm:$0xf]
        %v776 = vld [vmem:[%s730 + $0xb4] sm:$0xf]
        %v777 = vld [vmem:[%s730 + $0xb8] sm:$0xf]
        %v778 = vld [vmem:[%s730 + $0xbc] sm:$0xf]
        %v779 = vld [vmem:[%s730 + $0xc0] sm:$0xf]
        %v780 = vld [vmem:[%s730 + $0xc4] sm:$0xf]
        %v781 = vld [vmem:[%s730 + $0xc8] sm:$0xf]
        %v782 = vld [vmem:[%s730 + $0xcc] sm:$0xf]
        %s783 = scalar_lea.vmem %s1, 48
        %v784 = vld [vmem:[%s783] sm:$0xff]
        %v785 = vld [vmem:[%s783 + $0x8] sm:$0xf]
        %v786 = vld [vmem:[%s783 + $0xc] sm:$0xff]
        %v787 = vld [vmem:[%s783 + $0x14] sm:$0xf]
        %v788 = vld [vmem:[%s783 + $0x18] sm:$0xff]
        %v789 = vld [vmem:[%s783 + $0x20] sm:$0xf]
        %v790 = vld [vmem:[%s783 + $0x24] sm:$0x33]
        %v791 = vld [vmem:[%s783 + $0x2c] sm:$0x3]
        %v844 = vunpack.c.l.b16 %v731
        %v845 = vunpack.c.l.b16 %v732
        %v846 = vunpack.c.l.b16 %v733
        %v847 = vunpack.c.l.b16 %v734
        %v848 = vunpack.c.l.b16 %v735
        %v849 = vunpack.c.l.b16 %v736
        %v850 = vunpack.c.l.b16 %v737
        %v851 = vunpack.c.l.b16 %v738
        %v852 = vunpack.c.l.b16 %v739
        %v853 = vunpack.c.l.b16 %v740
        %v854 = vunpack.c.l.b16 %v741
        %v855 = vunpack.c.l.b16 %v742
        %v856 = vunpack.c.l.b16 %v743
        %v857 = vunpack.c.l.b16 %v744
        %v858 = vunpack.c.l.b16 %v745
        %v859 = vunpack.c.l.b16 %v746
        %v860 = vunpack.c.l.b16 %v747
        %v861 = vunpack.c.l.b16 %v748
        %v862 = vunpack.c.l.b16 %v749
        %v863 = vunpack.c.l.b16 %v750
        %v864 = vunpack.c.l.b16 %v751
        %v865 = vunpack.c.l.b16 %v752
        %v866 = vunpack.c.l.b16 %v753
        %v867 = vunpack.c.l.b16 %v754
        %v868 = vunpack.c.l.b16 %v755
        %v869 = vunpack.c.l.b16 %v756
        %v870 = vunpack.c.l.b16 %v757
        %v871 = vunpack.c.l.b16 %v758
        %v872 = vunpack.c.l.b16 %v759
        %v873 = vunpack.c.l.b16 %v760
        %v874 = vunpack.c.l.b16 %v761
        %v875 = vunpack.c.l.b16 %v762
        %v876 = vunpack.c.l.b16 %v763
        %v877 = vunpack.c.l.b16 %v764
        %v878 = vunpack.c.l.b16 %v765
        %v879 = vunpack.c.l.b16 %v766
        %v880 = vunpack.c.l.b16 %v767
        %v881 = vunpack.c.l.b16 %v768
        %v882 = vunpack.c.l.b16 %v769
        %v883 = vunpack.c.l.b16 %v770
        %v884 = vunpack.c.l.b16 %v771
        %v885 = vunpack.c.l.b16 %v772
        %v886 = vunpack.c.l.b16 %v773
        %v887 = vunpack.c.l.b16 %v774
        %v888 = vunpack.c.l.b16 %v775
        %v889 = vunpack.c.l.b16 %v776
        %v890 = vunpack.c.l.b16 %v777
        %v891 = vunpack.c.l.b16 %v778
        %v892 = vunpack.c.l.b16 %v779
        %v893 = vunpack.c.l.b16 %v780
        %v894 = vunpack.c.l.b16 %v781
        %v895 = vunpack.c.l.b16 %v782
        %v896 = vpack.c.b16 %v845, %v844
        %v897 = vpack.c.b16 %v847, %v846
        %v898 = vpack.c.b16 %v849, %v848
        %v899 = vpack.c.b16 %v851, %v850
        %v900 = vpack.c.b16 %v853, %v852
        %v901 = vpack.c.b16 %v855, %v854
        %v902 = vpack.c.b16 %v857, %v856
        %v903 = vpack.c.b16 %v859, %v858
        %v904 = vpack.c.b16 %v861, %v860
        %v905 = vpack.c.b16 %v863, %v862
        %v906 = vpack.c.b16 %v865, %v864
        %v907 = vpack.c.b16 %v867, %v866
        %v908 = vpack.c.b16 %v869, %v868
        %v909 = vpack.c.b16 %v871, %v870
        %v910 = vpack.c.b16 %v873, %v872
        %v911 = vpack.c.b16 %v875, %v874
        %v912 = vpack.c.b16 %v877, %v876
        %v913 = vpack.c.b16 %v879, %v878
        %v914 = vpack.c.b16 %v881, %v880
        %v915 = vpack.c.b16 %v883, %v882
        %v916 = vpack.c.b16 %v885, %v884
        %v917 = vpack.c.b16 %v887, %v886
        %v918 = vpack.c.b16 %v889, %v888
        %v919 = vpack.c.b16 %v891, %v890
        %v920 = vpack.c.b16 %v893, %v892
        %v921 = vpack.c.b16 %v895, %v894
        %v930 = vunpack.c.l.b16 %v784
        %v931 = vunpack.c.h.b16 %v784
        %v932 = vunpack.c.l.b16 %v785
        %v933 = vunpack.c.l.b16 %v786
        %v934 = vunpack.c.h.b16 %v786
        %v935 = vunpack.c.l.b16 %v787
        %v936 = vunpack.c.l.b16 %v788
        %v937 = vunpack.c.h.b16 %v788
        %v938 = vunpack.c.l.b16 %v789
        %v939 = vunpack.c.l.b16 %v790
        %v940 = vunpack.c.h.b16 %v790
        %v941 = vunpack.c.l.b16 %v791
        %v942 = vpack.c.b16 %v933, %v930
        %v943 = vpack.c.b16 %v934, %v931
        %v944 = vpack.c.b16 %v935, %v932
        %v945 = vpack.c.b16 %v939, %v936
        %v946 = vpack.c.b16 %v940, %v937
        %v947 = vpack.c.b16 %v941, %v938
        %vm951 = vcmask 228352
        %v953 = vsel %vm951, %v896, 0
        %v956 = vsel %vm951, %v897, 0
        %v959 = vsel %vm951, %v898, 0
        %v962 = vsel %vm951, %v899, 0
        %v965 = vsel %vm951, %v900, 0
        %v968 = vsel %vm951, %v901, 0
        %v971 = vsel %vm951, %v902, 0
        %v974 = vsel %vm951, %v903, 0
        %v977 = vsel %vm951, %v904, 0
        %v980 = vsel %vm951, %v905, 0
        %v983 = vsel %vm951, %v906, 0
        %v986 = vsel %vm951, %v907, 0
        %v989 = vsel %vm951, %v908, 0
        %v992 = vsel %vm951, %v909, 0
        %v995 = vsel %vm951, %v910, 0
        %v998 = vsel %vm951, %v911, 0
        %v1001 = vsel %vm951, %v912, 0
        %v1004 = vsel %vm951, %v913, 0
        %v1007 = vsel %vm951, %v914, 0
        %v1010 = vsel %vm951, %v915, 0
        %v1013 = vsel %vm951, %v916, 0
        %v1016 = vsel %vm951, %v917, 0
        %v1019 = vsel %vm951, %v918, 0
        %v1022 = vsel %vm951, %v919, 0
        %v1025 = vsel %vm951, %v920, 0
        %v1028 = vsel %vm951, %v921, 0
        %vm1030 = vcmask 1045504
        %v1032 = vsel %vm1030, %v945, 0
        %v1035 = vsel %vm1030, %v946, 0
        %v1038 = vsel %vm1030, %v947, 0
        %1040 = vmatprep.subr.bf16.mxu0 0
        %1041 = vmatpush1.bf16.msra.mxu0 0
        %1042 = vmatprep.subr.bf16.mxu0 0
        %1043 = vmatpush1.bf16.msra.mxu0 0
        %1044 = vmatprep.subr.bf16.mxu0 0
        %1045 = vmatpush1.bf16.msra.mxu0 0
        %1046 = vmatprep.subr.bf16.mxu0 0
        %1047 = vmatpush1.bf16.msra.mxu0 0
        %1048 = vmatprep.subr.bf16.mxu0 0
        %1049 = vmatpush1.bf16.msra.mxu0 0
        %1050 = vmatprep.subr.bf16.mxu0 0
        %1051 = vmatpush1.bf16.msra.mxu0 0
        %1052 = vmatprep.subr.bf16.mxu0 %v1035
        %1053 = vmatpush1.bf16.msra.mxu0 %v1032
        %1054 = vmatprep.subr.bf16.mxu0 %v943
        %1055 = vmatpush1.bf16.msra.mxu0 %v942
        %1056 = vmatprep.subr.bf16.mxu0 0
        %1057 = vmatpush2.bf16.msra.mxu0 0
        %1058 = vmatprep.subr.bf16.mxu0 0
        %1059 = vmatpush2.bf16.msra.mxu0 0
        %1060 = vmatprep.subr.bf16.mxu0 0
        %1061 = vmatpush2.bf16.msra.mxu0 0
        %1062 = vmatprep.subr.bf16.mxu0 0
        %1063 = vmatpush2.bf16.msra.mxu0 0
        %1064 = vmatprep.subr.bf16.mxu0 0
        %1065 = vmatpush2.bf16.msra.mxu0 0
        %1066 = vmatprep.subr.bf16.mxu0 0
        %1067 = vmatpush2.bf16.msra.mxu0 0
        %1068 = vmatprep.subr.bf16.mxu0 0
        %1069 = vmatpush2.bf16.msra.mxu0 0
        %1070 = vmatprep.subr.bf16.mxu0 0
        %1071 = vmatpush2.bf16.msra.mxu0 0
        %1072 = vmatprep.mubr.bf16.mxu0 0
        %1073 = vmatmul.mubr.bf16.gmra.mxu0 %v953
        %v1074 = vpop.f32.mrf.mxu0
        %v1075 = vadd.f32 0.0, %v1074
        %v1076 = vpop.f32.mrf.mxu0
        %v1077 = vadd.f32 0.0, %v1076
        %v1078 = vpop.f32.mrf.mxu0
        %v1079 = vadd.f32 0.0, %v1078
        %v1080 = vpop.f32.mrf.mxu0
        %v1081 = vadd.f32 0.0, %v1080
        %1082 = vmatprep.mubr.bf16.mxu0 0
        %1083 = vmatmul.mubr.bf16.gmra.mxu0 %v956
        %v1084 = vpop.f32.mrf.mxu0
        %v1085 = vadd.f32 0.0, %v1084
        %v1086 = vpop.f32.mrf.mxu0
        %v1087 = vadd.f32 0.0, %v1086
        %v1088 = vpop.f32.mrf.mxu0
        %v1089 = vadd.f32 0.0, %v1088
        %v1090 = vpop.f32.mrf.mxu0
        %v1091 = vadd.f32 0.0, %v1090
        %1092 = vmatprep.mubr.bf16.mxu0 0
        %1093 = vmatmul.mubr.bf16.gmra.mxu0 %v959
        %v1094 = vpop.f32.mrf.mxu0
        %v1095 = vadd.f32 0.0, %v1094
        %v1096 = vpop.f32.mrf.mxu0
        %v1097 = vadd.f32 0.0, %v1096
        %v1098 = vpop.f32.mrf.mxu0
        %v1099 = vadd.f32 0.0, %v1098
        %v1100 = vpop.f32.mrf.mxu0
        %v1101 = vadd.f32 0.0, %v1100
        %1102 = vmatprep.mubr.bf16.mxu0 0
        %1103 = vmatmul.mubr.bf16.gmra.mxu0 %v962
        %v1104 = vpop.f32.mrf.mxu0
        %v1105 = vadd.f32 0.0, %v1104
        %v1106 = vpop.f32.mrf.mxu0
        %v1107 = vadd.f32 0.0, %v1106
        %v1108 = vpop.f32.mrf.mxu0
        %v1109 = vadd.f32 0.0, %v1108
        %v1110 = vpop.f32.mrf.mxu0
        %v1111 = vadd.f32 0.0, %v1110
        %1112 = vmatprep.mubr.bf16.mxu0 0
        %1113 = vmatmul.mubr.bf16.gmra.mxu0 %v965
        %v1114 = vpop.f32.mrf.mxu0
        %v1115 = vadd.f32 0.0, %v1114
        %v1116 = vpop.f32.mrf.mxu0
        %v1117 = vadd.f32 0.0, %v1116
        %v1118 = vpop.f32.mrf.mxu0
        %v1119 = vadd.f32 0.0, %v1118
        %v1120 = vpop.f32.mrf.mxu0
        %v1121 = vadd.f32 0.0, %v1120
        %1122 = vmatprep.mubr.bf16.mxu0 0
        %1123 = vmatmul.mubr.bf16.gmra.mxu0 %v968
        %v1124 = vpop.f32.mrf.mxu0
        %v1125 = vadd.f32 0.0, %v1124
        %v1126 = vpop.f32.mrf.mxu0
        %v1127 = vadd.f32 0.0, %v1126
        %v1128 = vpop.f32.mrf.mxu0
        %v1129 = vadd.f32 0.0, %v1128
        %v1130 = vpop.f32.mrf.mxu0
        %v1131 = vadd.f32 0.0, %v1130
        %1132 = vmatprep.mubr.bf16.mxu0 0
        %1133 = vmatmul.mubr.bf16.gmra.mxu0 %v971
        %v1134 = vpop.f32.mrf.mxu0
        %v1135 = vadd.f32 0.0, %v1134
        %v1136 = vpop.f32.mrf.mxu0
        %v1137 = vadd.f32 0.0, %v1136
        %v1138 = vpop.f32.mrf.mxu0
        %v1139 = vadd.f32 0.0, %v1138
        %v1140 = vpop.f32.mrf.mxu0
        %v1141 = vadd.f32 0.0, %v1140
        %1142 = vmatprep.mubr.bf16.mxu0 0
        %1143 = vmatmul.mubr.bf16.gmra.mxu0 %v974
        %v1144 = vpop.f32.mrf.mxu0
        %v1145 = vadd.f32 0.0, %v1144
        %v1146 = vpop.f32.mrf.mxu0
        %v1147 = vadd.f32 0.0, %v1146
        %v1148 = vpop.f32.mrf.mxu0
        %v1149 = vadd.f32 0.0, %v1148
        %v1150 = vpop.f32.mrf.mxu0
        %v1151 = vadd.f32 0.0, %v1150
        %1152 = vmatprep.mubr.bf16.mxu0 0
        %1153 = vmatmul.mubr.bf16.gmra.mxu0 %v977
        %v1154 = vpop.f32.mrf.mxu0
        %v1155 = vadd.f32 0.0, %v1154
        %v1156 = vpop.f32.mrf.mxu0
        %v1157 = vadd.f32 0.0, %v1156
        %v1158 = vpop.f32.mrf.mxu0
        %v1159 = vadd.f32 0.0, %v1158
        %v1160 = vpop.f32.mrf.mxu0
        %v1161 = vadd.f32 0.0, %v1160
        %1162 = vmatprep.mubr.bf16.mxu0 0
        %1163 = vmatmul.mubr.bf16.gmra.mxu0 %v980
        %v1164 = vpop.f32.mrf.mxu0
        %v1165 = vadd.f32 0.0, %v1164
        %v1166 = vpop.f32.mrf.mxu0
        %v1167 = vadd.f32 0.0, %v1166
        %v1168 = vpop.f32.mrf.mxu0
        %v1169 = vadd.f32 0.0, %v1168
        %v1170 = vpop.f32.mrf.mxu0
        %v1171 = vadd.f32 0.0, %v1170
        %1172 = vmatprep.mubr.bf16.mxu0 0
        %1173 = vmatmul.mubr.bf16.gmra.mxu0 %v983
        %v1174 = vpop.f32.mrf.mxu0
        %v1175 = vadd.f32 0.0, %v1174
        %v1176 = vpop.f32.mrf.mxu0
        %v1177 = vadd.f32 0.0, %v1176
        %v1178 = vpop.f32.mrf.mxu0
        %v1179 = vadd.f32 0.0, %v1178
        %v1180 = vpop.f32.mrf.mxu0
        %v1181 = vadd.f32 0.0, %v1180
        %1182 = vmatprep.mubr.bf16.mxu0 0
        %1183 = vmatmul.mubr.bf16.gmra.mxu0 %v986
        %v1184 = vpop.f32.mrf.mxu0
        %v1185 = vadd.f32 0.0, %v1184
        %v1186 = vpop.f32.mrf.mxu0
        %v1187 = vadd.f32 0.0, %v1186
        %v1188 = vpop.f32.mrf.mxu0
        %v1189 = vadd.f32 0.0, %v1188
        %v1190 = vpop.f32.mrf.mxu0
        %v1191 = vadd.f32 0.0, %v1190
        %1192 = vmatprep.mubr.bf16.mxu0 0
        %1193 = vmatmul.mubr.bf16.gmra.mxu0 %v989
        %v1194 = vpop.f32.mrf.mxu0
        %v1195 = vadd.f32 0.0, %v1194
        %v1196 = vpop.f32.mrf.mxu0
        %v1197 = vadd.f32 0.0, %v1196
        %v1198 = vpop.f32.mrf.mxu0
        %v1199 = vadd.f32 0.0, %v1198
        %v1200 = vpop.f32.mrf.mxu0
        %v1201 = vadd.f32 0.0, %v1200
        %1202 = vmatprep.mubr.bf16.mxu0 0
        %1203 = vmatmul.mubr.bf16.gmra.mxu0 %v992
        %v1204 = vpop.f32.mrf.mxu0
        %v1205 = vadd.f32 0.0, %v1204
        %v1206 = vpop.f32.mrf.mxu0
        %v1207 = vadd.f32 0.0, %v1206
        %v1208 = vpop.f32.mrf.mxu0
        %v1209 = vadd.f32 0.0, %v1208
        %v1210 = vpop.f32.mrf.mxu0
        %v1211 = vadd.f32 0.0, %v1210
        %1212 = vmatprep.mubr.bf16.mxu0 0
        %1213 = vmatmul.mubr.bf16.gmra.mxu0 %v995
        %v1214 = vpop.f32.mrf.mxu0
        %v1215 = vadd.f32 0.0, %v1214
        %v1216 = vpop.f32.mrf.mxu0
        %v1217 = vadd.f32 0.0, %v1216
        %v1218 = vpop.f32.mrf.mxu0
        %v1219 = vadd.f32 0.0, %v1218
        %v1220 = vpop.f32.mrf.mxu0
        %v1221 = vadd.f32 0.0, %v1220
        %1222 = vmatprep.mubr.bf16.mxu0 0
        %1223 = vmatmul.mubr.bf16.gmra.mxu0 %v998
        %v1224 = vpop.f32.mrf.mxu0
        %v1225 = vadd.f32 0.0, %v1224
        %v1226 = vpop.f32.mrf.mxu0
        %v1227 = vadd.f32 0.0, %v1226
        %v1228 = vpop.f32.mrf.mxu0
        %v1229 = vadd.f32 0.0, %v1228
        %v1230 = vpop.f32.mrf.mxu0
        %v1231 = vadd.f32 0.0, %v1230
        %1232 = vmatprep.mubr.bf16.mxu0 0
        %1233 = vmatmul.mubr.bf16.gmra.mxu0 %v1001
        %v1234 = vpop.f32.mrf.mxu0
        %v1235 = vadd.f32 0.0, %v1234
        %v1236 = vpop.f32.mrf.mxu0
        %v1237 = vadd.f32 0.0, %v1236
        %v1238 = vpop.f32.mrf.mxu0
        %v1239 = vadd.f32 0.0, %v1238
        %v1240 = vpop.f32.mrf.mxu0
        %v1241 = vadd.f32 0.0, %v1240
        %1242 = vmatprep.mubr.bf16.mxu0 0
        %1243 = vmatmul.mubr.bf16.gmra.mxu0 %v1004
        %v1244 = vpop.f32.mrf.mxu0
        %v1245 = vadd.f32 0.0, %v1244
        %v1246 = vpop.f32.mrf.mxu0
        %v1247 = vadd.f32 0.0, %v1246
        %v1248 = vpop.f32.mrf.mxu0
        %v1249 = vadd.f32 0.0, %v1248
        %v1250 = vpop.f32.mrf.mxu0
        %v1251 = vadd.f32 0.0, %v1250
        %1252 = vmatprep.mubr.bf16.mxu0 0
        %1253 = vmatmul.mubr.bf16.gmra.mxu0 %v1007
        %v1254 = vpop.f32.mrf.mxu0
        %v1255 = vadd.f32 0.0, %v1254
        %v1256 = vpop.f32.mrf.mxu0
        %v1257 = vadd.f32 0.0, %v1256
        %v1258 = vpop.f32.mrf.mxu0
        %v1259 = vadd.f32 0.0, %v1258
        %v1260 = vpop.f32.mrf.mxu0
        %v1261 = vadd.f32 0.0, %v1260
        %1262 = vmatprep.mubr.bf16.mxu0 0
        %1263 = vmatmul.mubr.bf16.gmra.mxu0 %v1010
        %v1264 = vpop.f32.mrf.mxu0
        %v1265 = vadd.f32 0.0, %v1264
        %v1266 = vpop.f32.mrf.mxu0
        %v1267 = vadd.f32 0.0, %v1266
        %v1268 = vpop.f32.mrf.mxu0
        %v1269 = vadd.f32 0.0, %v1268
        %v1270 = vpop.f32.mrf.mxu0
        %v1271 = vadd.f32 0.0, %v1270
        %1272 = vmatprep.mubr.bf16.mxu0 0
        %1273 = vmatmul.mubr.bf16.gmra.mxu0 %v1013
        %v1274 = vpop.f32.mrf.mxu0
        %v1275 = vadd.f32 0.0, %v1274
        %v1276 = vpop.f32.mrf.mxu0
        %v1277 = vadd.f32 0.0, %v1276
        %v1278 = vpop.f32.mrf.mxu0
        %v1279 = vadd.f32 0.0, %v1278
        %v1280 = vpop.f32.mrf.mxu0
        %v1281 = vadd.f32 0.0, %v1280
        %1282 = vmatprep.mubr.bf16.mxu0 0
        %1283 = vmatmul.mubr.bf16.gmra.mxu0 %v1016
        %v1284 = vpop.f32.mrf.mxu0
        %v1285 = vadd.f32 0.0, %v1284
        %v1286 = vpop.f32.mrf.mxu0
        %v1287 = vadd.f32 0.0, %v1286
        %v1288 = vpop.f32.mrf.mxu0
        %v1289 = vadd.f32 0.0, %v1288
        %v1290 = vpop.f32.mrf.mxu0
        %v1291 = vadd.f32 0.0, %v1290
        %1292 = vmatprep.mubr.bf16.mxu0 0
        %1293 = vmatmul.mubr.bf16.gmra.mxu0 %v1019
        %v1294 = vpop.f32.mrf.mxu0
        %v1295 = vadd.f32 0.0, %v1294
        %v1296 = vpop.f32.mrf.mxu0
        %v1297 = vadd.f32 0.0, %v1296
        %v1298 = vpop.f32.mrf.mxu0
        %v1299 = vadd.f32 0.0, %v1298
        %v1300 = vpop.f32.mrf.mxu0
        %v1301 = vadd.f32 0.0, %v1300
        %1302 = vmatprep.mubr.bf16.mxu0 0
        %1303 = vmatmul.mubr.bf16.gmra.mxu0 %v1022
        %v1304 = vpop.f32.mrf.mxu0
        %v1305 = vadd.f32 0.0, %v1304
        %v1306 = vpop.f32.mrf.mxu0
        %v1307 = vadd.f32 0.0, %v1306
        %v1308 = vpop.f32.mrf.mxu0
        %v1309 = vadd.f32 0.0, %v1308
        %v1310 = vpop.f32.mrf.mxu0
        %v1311 = vadd.f32 0.0, %v1310
        %1312 = vmatprep.mubr.bf16.mxu0 0
        %1313 = vmatmul.mubr.bf16.gmra.mxu0 %v1025
        %v1314 = vpop.f32.mrf.mxu0
        %v1315 = vadd.f32 0.0, %v1314
        %v1316 = vpop.f32.mrf.mxu0
        %v1317 = vadd.f32 0.0, %v1316
        %v1318 = vpop.f32.mrf.mxu0
        %v1319 = vadd.f32 0.0, %v1318
        %v1320 = vpop.f32.mrf.mxu0
        %v1321 = vadd.f32 0.0, %v1320
        %1322 = vmatprep.mubr.bf16.mxu0 0
        %1323 = vmatmul.mubr.bf16.gmra.mxu0 %v1028
        %v1324 = vpop.f32.mrf.mxu0
        %v1325 = vadd.f32 0.0, %v1324
        %v1326 = vpop.f32.mrf.mxu0
        %v1327 = vadd.f32 0.0, %v1326
        %v1328 = vpop.f32.mrf.mxu0
        %v1329 = vadd.f32 0.0, %v1328
        %v1330 = vpop.f32.mrf.mxu0
        %v1331 = vadd.f32 0.0, %v1330
        %1332 = vdwg.mxu0
        %1333 = vmatprep.subr.bf16.mxu0 0
        %1334 = vmatpush1.bf16.msra.mxu0 0
        %1335 = vmatprep.subr.bf16.mxu0 0
        %1336 = vmatpush1.bf16.msra.mxu0 0
        %1337 = vmatprep.subr.bf16.mxu0 0
        %1338 = vmatpush1.bf16.msra.mxu0 0
        %1339 = vmatprep.subr.bf16.mxu0 0
        %1340 = vmatpush1.bf16.msra.mxu0 0
        %1341 = vmatprep.subr.bf16.mxu0 0
        %1342 = vmatpush1.bf16.msra.mxu0 0
        %1343 = vmatprep.subr.bf16.mxu0 0
        %1344 = vmatpush1.bf16.msra.mxu0 0
        %1345 = vmatprep.subr.bf16.mxu0 0
        %1346 = vmatpush1.bf16.msra.mxu0 %v1038
        %1347 = vmatprep.subr.bf16.mxu0 0
        %1348 = vmatpush1.bf16.msra.mxu0 %v944
        %1349 = vmatprep.subr.bf16.mxu0 0
        %1350 = vmatpush2.bf16.msra.mxu0 0
        %1351 = vmatprep.subr.bf16.mxu0 0
        %1352 = vmatpush2.bf16.msra.mxu0 0
        %1353 = vmatprep.subr.bf16.mxu0 0
        %1354 = vmatpush2.bf16.msra.mxu0 0
        %1355 = vmatprep.subr.bf16.mxu0 0
        %1356 = vmatpush2.bf16.msra.mxu0 0
        %1357 = vmatprep.subr.bf16.mxu0 0
        %1358 = vmatpush2.bf16.msra.mxu0 0
        %1359 = vmatprep.subr.bf16.mxu0 0
        %1360 = vmatpush2.bf16.msra.mxu0 0
        %1361 = vmatprep.subr.bf16.mxu0 0
        %1362 = vmatpush2.bf16.msra.mxu0 0
        %1363 = vmatprep.subr.bf16.mxu0 0
        %1364 = vmatpush2.bf16.msra.mxu0 0
        %1365 = vmatprep.mubr.bf16.mxu0 0
        %1366 = vmatmul.mubr.bf16.gmra.mxu0 %v953
        %v1367 = vpop.f32.mrf.mxu0
        %v1368 = vadd.f32 0.0, %v1367
        %v1369 = vpop.f32.mrf.mxu0
        %v1370 = vpop.f32.mrf.mxu0
        %v1371 = vadd.f32 0.0, %v1370
        %v1372 = vpop.f32.mrf.mxu0
        %1373 = vmatprep.mubr.bf16.mxu0 0
        %1374 = vmatmul.mubr.bf16.gmra.mxu0 %v956
        %v1375 = vpop.f32.mrf.mxu0
        %v1376 = vadd.f32 0.0, %v1375
        %v1377 = vpop.f32.mrf.mxu0
        %v1378 = vpop.f32.mrf.mxu0
        %v1379 = vadd.f32 0.0, %v1378
        %v1380 = vpop.f32.mrf.mxu0
        %1381 = vmatprep.mubr.bf16.mxu0 0
        %1382 = vmatmul.mubr.bf16.gmra.mxu0 %v959
        %v1383 = vpop.f32.mrf.mxu0
        %v1384 = vadd.f32 0.0, %v1383
        %v1385 = vpop.f32.mrf.mxu0
        %v1386 = vpop.f32.mrf.mxu0
        %v1387 = vadd.f32 0.0, %v1386
        %v1388 = vpop.f32.mrf.mxu0
        %1389 = vmatprep.mubr.bf16.mxu0 0
        %1390 = vmatmul.mubr.bf16.gmra.mxu0 %v962
        %v1391 = vpop.f32.mrf.mxu0
        %v1392 = vadd.f32 0.0, %v1391
        %v1393 = vpop.f32.mrf.mxu0
        %v1394 = vpop.f32.mrf.mxu0
        %v1395 = vadd.f32 0.0, %v1394
        %v1396 = vpop.f32.mrf.mxu0
        %1397 = vmatprep.mubr.bf16.mxu0 0
        %1398 = vmatmul.mubr.bf16.gmra.mxu0 %v965
        %v1399 = vpop.f32.mrf.mxu0
        %v1400 = vadd.f32 0.0, %v1399
        %v1401 = vpop.f32.mrf.mxu0
        %v1402 = vpop.f32.mrf.mxu0
        %v1403 = vadd.f32 0.0, %v1402
        %v1404 = vpop.f32.mrf.mxu0
        %1405 = vmatprep.mubr.bf16.mxu0 0
        %1406 = vmatmul.mubr.bf16.gmra.mxu0 %v968
        %v1407 = vpop.f32.mrf.mxu0
        %v1408 = vadd.f32 0.0, %v1407
        %v1409 = vpop.f32.mrf.mxu0
        %v1410 = vpop.f32.mrf.mxu0
        %v1411 = vadd.f32 0.0, %v1410
        %v1412 = vpop.f32.mrf.mxu0
        %1413 = vmatprep.mubr.bf16.mxu0 0
        %1414 = vmatmul.mubr.bf16.gmra.mxu0 %v971
        %v1415 = vpop.f32.mrf.mxu0
        %v1416 = vadd.f32 0.0, %v1415
        %v1417 = vpop.f32.mrf.mxu0
        %v1418 = vpop.f32.mrf.mxu0
        %v1419 = vadd.f32 0.0, %v1418
        %v1420 = vpop.f32.mrf.mxu0
        %1421 = vmatprep.mubr.bf16.mxu0 0
        %1422 = vmatmul.mubr.bf16.gmra.mxu0 %v974
        %v1423 = vpop.f32.mrf.mxu0
        %v1424 = vadd.f32 0.0, %v1423
        %v1425 = vpop.f32.mrf.mxu0
        %v1426 = vpop.f32.mrf.mxu0
        %v1427 = vadd.f32 0.0, %v1426
        %v1428 = vpop.f32.mrf.mxu0
        %1429 = vmatprep.mubr.bf16.mxu0 0
        %1430 = vmatmul.mubr.bf16.gmra.mxu0 %v977
        %v1431 = vpop.f32.mrf.mxu0
        %v1432 = vadd.f32 0.0, %v1431
        %v1433 = vpop.f32.mrf.mxu0
        %v1434 = vpop.f32.mrf.mxu0
        %v1435 = vadd.f32 0.0, %v1434
        %v1436 = vpop.f32.mrf.mxu0
        %1437 = vmatprep.mubr.bf16.mxu0 0
        %1438 = vmatmul.mubr.bf16.gmra.mxu0 %v980
        %v1439 = vpop.f32.mrf.mxu0
        %v1440 = vadd.f32 0.0, %v1439
        %v1441 = vpop.f32.mrf.mxu0
        %v1442 = vpop.f32.mrf.mxu0
        %v1443 = vadd.f32 0.0, %v1442
        %v1444 = vpop.f32.mrf.mxu0
        %1445 = vmatprep.mubr.bf16.mxu0 0
        %1446 = vmatmul.mubr.bf16.gmra.mxu0 %v983
        %v1447 = vpop.f32.mrf.mxu0
        %v1448 = vadd.f32 0.0, %v1447
        %v1449 = vpop.f32.mrf.mxu0
        %v1450 = vpop.f32.mrf.mxu0
        %v1451 = vadd.f32 0.0, %v1450
        %v1452 = vpop.f32.mrf.mxu0
        %1453 = vmatprep.mubr.bf16.mxu0 0
        %1454 = vmatmul.mubr.bf16.gmra.mxu0 %v986
        %v1455 = vpop.f32.mrf.mxu0
        %v1456 = vadd.f32 0.0, %v1455
        %v1457 = vpop.f32.mrf.mxu0
        %v1458 = vpop.f32.mrf.mxu0
        %v1459 = vadd.f32 0.0, %v1458
        %v1460 = vpop.f32.mrf.mxu0
        %1461 = vmatprep.mubr.bf16.mxu0 0
        %1462 = vmatmul.mubr.bf16.gmra.mxu0 %v989
        %v1463 = vpop.f32.mrf.mxu0
        %v1464 = vadd.f32 0.0, %v1463
        %v1465 = vpop.f32.mrf.mxu0
        %v1466 = vpop.f32.mrf.mxu0
        %v1467 = vadd.f32 0.0, %v1466
        %v1468 = vpop.f32.mrf.mxu0
        %1469 = vmatprep.mubr.bf16.mxu0 0
        %1470 = vmatmul.mubr.bf16.gmra.mxu0 %v992
        %v1471 = vpop.f32.mrf.mxu0
        %v1472 = vadd.f32 0.0, %v1471
        %v1473 = vpop.f32.mrf.mxu0
        %v1474 = vpop.f32.mrf.mxu0
        %v1475 = vadd.f32 0.0, %v1474
        %v1476 = vpop.f32.mrf.mxu0
        %1477 = vmatprep.mubr.bf16.mxu0 0
        %1478 = vmatmul.mubr.bf16.gmra.mxu0 %v995
        %v1479 = vpop.f32.mrf.mxu0
        %v1480 = vadd.f32 0.0, %v1479
        %v1481 = vpop.f32.mrf.mxu0
        %v1482 = vpop.f32.mrf.mxu0
        %v1483 = vadd.f32 0.0, %v1482
        %v1484 = vpop.f32.mrf.mxu0
        %1485 = vmatprep.mubr.bf16.mxu0 0
        %1486 = vmatmul.mubr.bf16.gmra.mxu0 %v998
        %v1487 = vpop.f32.mrf.mxu0
        %v1488 = vadd.f32 0.0, %v1487
        %v1489 = vpop.f32.mrf.mxu0
        %v1490 = vpop.f32.mrf.mxu0
        %v1491 = vadd.f32 0.0, %v1490
        %v1492 = vpop.f32.mrf.mxu0
        %1493 = vmatprep.mubr.bf16.mxu0 0
        %1494 = vmatmul.mubr.bf16.gmra.mxu0 %v1001
        %v1495 = vpop.f32.mrf.mxu0
        %v1496 = vadd.f32 0.0, %v1495
        %v1497 = vpop.f32.mrf.mxu0
        %v1498 = vpop.f32.mrf.mxu0
        %v1499 = vadd.f32 0.0, %v1498
        %v1500 = vpop.f32.mrf.mxu0
        %1501 = vmatprep.mubr.bf16.mxu0 0
        %1502 = vmatmul.mubr.bf16.gmra.mxu0 %v1004
        %v1503 = vpop.f32.mrf.mxu0
        %v1504 = vadd.f32 0.0, %v1503
        %v1505 = vpop.f32.mrf.mxu0
        %v1506 = vpop.f32.mrf.mxu0
        %v1507 = vadd.f32 0.0, %v1506
        %v1508 = vpop.f32.mrf.mxu0
        %1509 = vmatprep.mubr.bf16.mxu0 0
        %1510 = vmatmul.mubr.bf16.gmra.mxu0 %v1007
        %v1511 = vpop.f32.mrf.mxu0
        %v1512 = vadd.f32 0.0, %v1511
        %v1513 = vpop.f32.mrf.mxu0
        %v1514 = vpop.f32.mrf.mxu0
        %v1515 = vadd.f32 0.0, %v1514
        %v1516 = vpop.f32.mrf.mxu0
        %1517 = vmatprep.mubr.bf16.mxu0 0
        %1518 = vmatmul.mubr.bf16.gmra.mxu0 %v1010
        %v1519 = vpop.f32.mrf.mxu0
        %v1520 = vadd.f32 0.0, %v1519
        %v1521 = vpop.f32.mrf.mxu0
        %v1522 = vpop.f32.mrf.mxu0
        %v1523 = vadd.f32 0.0, %v1522
        %v1524 = vpop.f32.mrf.mxu0
        %1525 = vmatprep.mubr.bf16.mxu0 0
        %1526 = vmatmul.mubr.bf16.gmra.mxu0 %v1013
        %v1527 = vpop.f32.mrf.mxu0
        %v1528 = vadd.f32 0.0, %v1527
        %v1529 = vpop.f32.mrf.mxu0
        %v1530 = vpop.f32.mrf.mxu0
        %v1531 = vadd.f32 0.0, %v1530
        %v1532 = vpop.f32.mrf.mxu0
        %1533 = vmatprep.mubr.bf16.mxu0 0
        %1534 = vmatmul.mubr.bf16.gmra.mxu0 %v1016
        %v1535 = vpop.f32.mrf.mxu0
        %v1536 = vadd.f32 0.0, %v1535
        %v1537 = vpop.f32.mrf.mxu0
        %v1538 = vpop.f32.mrf.mxu0
        %v1539 = vadd.f32 0.0, %v1538
        %v1540 = vpop.f32.mrf.mxu0
        %1541 = vmatprep.mubr.bf16.mxu0 0
        %1542 = vmatmul.mubr.bf16.gmra.mxu0 %v1019
        %v1543 = vpop.f32.mrf.mxu0
        %v1544 = vadd.f32 0.0, %v1543
        %v1545 = vpop.f32.mrf.mxu0
        %v1546 = vpop.f32.mrf.mxu0
        %v1547 = vadd.f32 0.0, %v1546
        %v1548 = vpop.f32.mrf.mxu0
        %1549 = vmatprep.mubr.bf16.mxu0 0
        %1550 = vmatmul.mubr.bf16.gmra.mxu0 %v1022
        %v1551 = vpop.f32.mrf.mxu0
        %v1552 = vadd.f32 0.0, %v1551
        %v1553 = vpop.f32.mrf.mxu0
        %v1554 = vpop.f32.mrf.mxu0
        %v1555 = vadd.f32 0.0, %v1554
        %v1556 = vpop.f32.mrf.mxu0
        %1557 = vmatprep.mubr.bf16.mxu0 0
        %1558 = vmatmul.mubr.bf16.gmra.mxu0 %v1025
        %v1559 = vpop.f32.mrf.mxu0
        %v1560 = vadd.f32 0.0, %v1559
        %v1561 = vpop.f32.mrf.mxu0
        %v1562 = vpop.f32.mrf.mxu0
        %v1563 = vadd.f32 0.0, %v1562
        %v1564 = vpop.f32.mrf.mxu0
        %1565 = vmatprep.mubr.bf16.mxu0 0
        %1566 = vmatmul.mubr.bf16.gmra.mxu0 %v1028
        %v1567 = vpop.f32.mrf.mxu0
        %v1568 = vadd.f32 0.0, %v1567
        %v1569 = vpop.f32.mrf.mxu0
        %v1570 = vpop.f32.mrf.mxu0
        %v1571 = vadd.f32 0.0, %v1570
        %v1572 = vpop.f32.mrf.mxu0
        %1573 = vdwg.mxu0
        %v1626 = vunpack.c.l.b16 %v670
        %v1627 = vunpack.c.l.b16 %v671
        %v1628 = vunpack.c.l.b16 %v672
        %v1629 = vunpack.c.l.b16 %v673
        %v1630 = vunpack.c.l.b16 %v674
        %v1631 = vunpack.c.l.b16 %v675
        %v1632 = vunpack.c.l.b16 %v676
        %v1633 = vunpack.c.l.b16 %v677
        %v1634 = vunpack.c.l.b16 %v678
        %v1635 = vunpack.c.l.b16 %v679
        %v1636 = vunpack.c.l.b16 %v680
        %v1637 = vunpack.c.l.b16 %v681
        %v1638 = vunpack.c.l.b16 %v682
        %v1639 = vunpack.c.l.b16 %v683
        %v1640 = vunpack.c.l.b16 %v684
        %v1641 = vunpack.c.l.b16 %v685
        %v1642 = vunpack.c.l.b16 %v686
        %v1643 = vunpack.c.l.b16 %v687
        %v1644 = vunpack.c.l.b16 %v688
        %v1645 = vunpack.c.l.b16 %v689
        %v1646 = vunpack.c.l.b16 %v690
        %v1647 = vunpack.c.l.b16 %v691
        %v1648 = vunpack.c.l.b16 %v692
        %v1649 = vunpack.c.l.b16 %v693
        %v1650 = vunpack.c.l.b16 %v694
        %v1651 = vunpack.c.l.b16 %v695
        %v1652 = vunpack.c.l.b16 %v696
        %v1653 = vunpack.c.l.b16 %v697
        %v1654 = vunpack.c.l.b16 %v698
        %v1655 = vunpack.c.l.b16 %v699
        %v1656 = vunpack.c.l.b16 %v700
        %v1657 = vunpack.c.l.b16 %v701
        %v1658 = vunpack.c.l.b16 %v702
        %v1659 = vunpack.c.l.b16 %v703
        %v1660 = vunpack.c.l.b16 %v704
        %v1661 = vunpack.c.l.b16 %v705
        %v1662 = vunpack.c.l.b16 %v706
        %v1663 = vunpack.c.l.b16 %v707
        %v1664 = vunpack.c.l.b16 %v708
        %v1665 = vunpack.c.l.b16 %v709
        %v1666 = vunpack.c.l.b16 %v710
        %v1667 = vunpack.c.l.b16 %v711
        %v1668 = vunpack.c.l.b16 %v712
        %v1669 = vunpack.c.l.b16 %v713
        %v1670 = vunpack.c.l.b16 %v714
        %v1671 = vunpack.c.l.b16 %v715
        %v1672 = vunpack.c.l.b16 %v716
        %v1673 = vunpack.c.l.b16 %v717
        %v1674 = vunpack.c.l.b16 %v718
        %v1675 = vunpack.c.l.b16 %v719
        %v1676 = vunpack.c.l.b16 %v720
        %v1677 = vunpack.c.l.b16 %v721
        %v1678 = vpack.c.b16 %v1627, %v1626
        %v1679 = vpack.c.b16 %v1629, %v1628
        %v1680 = vpack.c.b16 %v1631, %v1630
        %v1681 = vpack.c.b16 %v1633, %v1632
        %v1682 = vpack.c.b16 %v1635, %v1634
        %v1683 = vpack.c.b16 %v1637, %v1636
        %v1684 = vpack.c.b16 %v1639, %v1638
        %v1685 = vpack.c.b16 %v1641, %v1640
        %v1686 = vpack.c.b16 %v1643, %v1642
        %v1687 = vpack.c.b16 %v1645, %v1644
        %v1688 = vpack.c.b16 %v1647, %v1646
        %v1689 = vpack.c.b16 %v1649, %v1648
        %v1690 = vpack.c.b16 %v1651, %v1650
        %v1691 = vpack.c.b16 %v1653, %v1652
        %v1692 = vpack.c.b16 %v1655, %v1654
        %v1693 = vpack.c.b16 %v1657, %v1656
        %v1694 = vpack.c.b16 %v1659, %v1658
        %v1695 = vpack.c.b16 %v1661, %v1660
        %v1696 = vpack.c.b16 %v1663, %v1662
        %v1697 = vpack.c.b16 %v1665, %v1664
        %v1698 = vpack.c.b16 %v1667, %v1666
        %v1699 = vpack.c.b16 %v1669, %v1668
        %v1700 = vpack.c.b16 %v1671, %v1670
        %v1701 = vpack.c.b16 %v1673, %v1672
        %v1702 = vpack.c.b16 %v1675, %v1674
        %v1703 = vpack.c.b16 %v1677, %v1676
        %v1712 = vunpack.c.l.b16 %v722
        %v1713 = vunpack.c.h.b16 %v722
        %v1714 = vunpack.c.l.b16 %v723
        %v1715 = vunpack.c.l.b16 %v724
        %v1716 = vunpack.c.h.b16 %v724
        %v1717 = vunpack.c.l.b16 %v725
        %v1718 = vunpack.c.l.b16 %v726
        %v1719 = vunpack.c.h.b16 %v726
        %v1720 = vunpack.c.l.b16 %v727
        %v1721 = vunpack.c.l.b16 %v728
        %v1722 = vunpack.c.h.b16 %v728
        %v1723 = vunpack.c.l.b16 %v729
        %v1724 = vpack.c.b16 %v1715, %v1712
        %v1725 = vpack.c.b16 %v1716, %v1713
        %v1726 = vpack.c.b16 %v1717, %v1714
        %v1727 = vpack.c.b16 %v1721, %v1718
        %v1728 = vpack.c.b16 %v1722, %v1719
        %v1729 = vpack.c.b16 %v1723, %v1720
        %v1734 = vsel %vm951, %v1678, 0
        %v1737 = vsel %vm951, %v1679, 0
        %v1740 = vsel %vm951, %v1680, 0
        %v1743 = vsel %vm951, %v1681, 0
        %v1746 = vsel %vm951, %v1682, 0
        %v1749 = vsel %vm951, %v1683, 0
        %v1752 = vsel %vm951, %v1684, 0
        %v1755 = vsel %vm951, %v1685, 0
        %v1758 = vsel %vm951, %v1686, 0
        %v1761 = vsel %vm951, %v1687, 0
        %v1764 = vsel %vm951, %v1688, 0
        %v1767 = vsel %vm951, %v1689, 0
        %v1770 = vsel %vm951, %v1690, 0
        %v1773 = vsel %vm951, %v1691, 0
        %v1776 = vsel %vm951, %v1692, 0
        %v1779 = vsel %vm951, %v1693, 0
        %v1782 = vsel %vm951, %v1694, 0
        %v1785 = vsel %vm951, %v1695, 0
        %v1788 = vsel %vm951, %v1696, 0
        %v1791 = vsel %vm951, %v1697, 0
        %v1794 = vsel %vm951, %v1698, 0
        %v1797 = vsel %vm951, %v1699, 0
        %v1800 = vsel %vm951, %v1700, 0
        %v1803 = vsel %vm951, %v1701, 0
        %v1806 = vsel %vm951, %v1702, 0
        %v1809 = vsel %vm951, %v1703, 0
        %v1812 = vsel %vm1030, %v1727, 0
        %v1815 = vsel %vm1030, %v1728, 0
        %v1818 = vsel %vm1030, %v1729, 0
        %1820 = vmatprep.subr.bf16.mxu0 0
        %1821 = vmatpush1.bf16.msra.mxu0 0
        %1822 = vmatprep.subr.bf16.mxu0 0
        %1823 = vmatpush1.bf16.msra.mxu0 0
        %1824 = vmatprep.subr.bf16.mxu0 0
        %1825 = vmatpush1.bf16.msra.mxu0 0
        %1826 = vmatprep.subr.bf16.mxu0 0
        %1827 = vmatpush1.bf16.msra.mxu0 0
        %1828 = vmatprep.subr.bf16.mxu0 0
        %1829 = vmatpush1.bf16.msra.mxu0 0
        %1830 = vmatprep.subr.bf16.mxu0 0
        %1831 = vmatpush1.bf16.msra.mxu0 0
        %1832 = vmatprep.subr.bf16.mxu0 %v1815
        %1833 = vmatpush1.bf16.msra.mxu0 %v1812
        %1834 = vmatprep.subr.bf16.mxu0 %v1725
        %1835 = vmatpush1.bf16.msra.mxu0 %v1724
        %1836 = vmatprep.subr.bf16.mxu0 0
        %1837 = vmatpush2.bf16.msra.mxu0 0
        %1838 = vmatprep.subr.bf16.mxu0 0
        %1839 = vmatpush2.bf16.msra.mxu0 0
        %1840 = vmatprep.subr.bf16.mxu0 0
        %1841 = vmatpush2.bf16.msra.mxu0 0
        %1842 = vmatprep.subr.bf16.mxu0 0
        %1843 = vmatpush2.bf16.msra.mxu0 0
        %1844 = vmatprep.subr.bf16.mxu0 0
        %1845 = vmatpush2.bf16.msra.mxu0 0
        %1846 = vmatprep.subr.bf16.mxu0 0
        %1847 = vmatpush2.bf16.msra.mxu0 0
        %1848 = vmatprep.subr.bf16.mxu0 0
        %1849 = vmatpush2.bf16.msra.mxu0 0
        %1850 = vmatprep.subr.bf16.mxu0 0
        %1851 = vmatpush2.bf16.msra.mxu0 0
        %1852 = vmatprep.mubr.bf16.mxu0 0
        %1853 = vmatmul.mubr.bf16.gmra.mxu0 %v1734
        %v1854 = vpop.f32.mrf.mxu0
        %v1855 = vadd.f32 %v1075, %v1854
        %v1856 = vpop.f32.mrf.mxu0
        %v1857 = vadd.f32 %v1077, %v1856
        %v1858 = vpop.f32.mrf.mxu0
        %v1859 = vadd.f32 %v1079, %v1858
        %v1860 = vpop.f32.mrf.mxu0
        %v1861 = vadd.f32 %v1081, %v1860
        %1862 = vmatprep.mubr.bf16.mxu0 0
        %1863 = vmatmul.mubr.bf16.gmra.mxu0 %v1737
        %v1864 = vpop.f32.mrf.mxu0
        %v1865 = vadd.f32 %v1085, %v1864
        %v1866 = vpop.f32.mrf.mxu0
        %v1867 = vadd.f32 %v1087, %v1866
        %v1868 = vpop.f32.mrf.mxu0
        %v1869 = vadd.f32 %v1089, %v1868
        %v1870 = vpop.f32.mrf.mxu0
        %v1871 = vadd.f32 %v1091, %v1870
        %1872 = vmatprep.mubr.bf16.mxu0 0
        %1873 = vmatmul.mubr.bf16.gmra.mxu0 %v1740
        %v1874 = vpop.f32.mrf.mxu0
        %v1875 = vadd.f32 %v1095, %v1874
        %v1876 = vpop.f32.mrf.mxu0
        %v1877 = vadd.f32 %v1097, %v1876
        %v1878 = vpop.f32.mrf.mxu0
        %v1879 = vadd.f32 %v1099, %v1878
        %v1880 = vpop.f32.mrf.mxu0
        %v1881 = vadd.f32 %v1101, %v1880
        %1882 = vmatprep.mubr.bf16.mxu0 0
        %1883 = vmatmul.mubr.bf16.gmra.mxu0 %v1743
        %v1884 = vpop.f32.mrf.mxu0
        %v1885 = vadd.f32 %v1105, %v1884
        %v1886 = vpop.f32.mrf.mxu0
        %v1887 = vadd.f32 %v1107, %v1886
        %v1888 = vpop.f32.mrf.mxu0
        %v1889 = vadd.f32 %v1109, %v1888
        %v1890 = vpop.f32.mrf.mxu0
        %v1891 = vadd.f32 %v1111, %v1890
        %1892 = vmatprep.mubr.bf16.mxu0 0
        %1893 = vmatmul.mubr.bf16.gmra.mxu0 %v1746
        %v1894 = vpop.f32.mrf.mxu0
        %v1895 = vadd.f32 %v1115, %v1894
        %v1896 = vpop.f32.mrf.mxu0
        %v1897 = vadd.f32 %v1117, %v1896
        %v1898 = vpop.f32.mrf.mxu0
        %v1899 = vadd.f32 %v1119, %v1898
        %v1900 = vpop.f32.mrf.mxu0
        %v1901 = vadd.f32 %v1121, %v1900
        %1902 = vmatprep.mubr.bf16.mxu0 0
        %1903 = vmatmul.mubr.bf16.gmra.mxu0 %v1749
        %v1904 = vpop.f32.mrf.mxu0
        %v1905 = vadd.f32 %v1125, %v1904
        %v1906 = vpop.f32.mrf.mxu0
        %v1907 = vadd.f32 %v1127, %v1906
        %v1908 = vpop.f32.mrf.mxu0
        %v1909 = vadd.f32 %v1129, %v1908
        %v1910 = vpop.f32.mrf.mxu0
        %v1911 = vadd.f32 %v1131, %v1910
        %1912 = vmatprep.mubr.bf16.mxu0 0
        %1913 = vmatmul.mubr.bf16.gmra.mxu0 %v1752
        %v1914 = vpop.f32.mrf.mxu0
        %v1915 = vadd.f32 %v1135, %v1914
        %v1916 = vpop.f32.mrf.mxu0
        %v1917 = vadd.f32 %v1137, %v1916
        %v1918 = vpop.f32.mrf.mxu0
        %v1919 = vadd.f32 %v1139, %v1918
        %v1920 = vpop.f32.mrf.mxu0
        %v1921 = vadd.f32 %v1141, %v1920
        %1922 = vmatprep.mubr.bf16.mxu0 0
        %1923 = vmatmul.mubr.bf16.gmra.mxu0 %v1755
        %v1924 = vpop.f32.mrf.mxu0
        %v1925 = vadd.f32 %v1145, %v1924
        %v1926 = vpop.f32.mrf.mxu0
        %v1927 = vadd.f32 %v1147, %v1926
        %v1928 = vpop.f32.mrf.mxu0
        %v1929 = vadd.f32 %v1149, %v1928
        %v1930 = vpop.f32.mrf.mxu0
        %v1931 = vadd.f32 %v1151, %v1930
        %1932 = vmatprep.mubr.bf16.mxu0 0
        %1933 = vmatmul.mubr.bf16.gmra.mxu0 %v1758
        %v1934 = vpop.f32.mrf.mxu0
        %v1935 = vadd.f32 %v1155, %v1934
        %v1936 = vpop.f32.mrf.mxu0
        %v1937 = vadd.f32 %v1157, %v1936
        %v1938 = vpop.f32.mrf.mxu0
        %v1939 = vadd.f32 %v1159, %v1938
        %v1940 = vpop.f32.mrf.mxu0
        %v1941 = vadd.f32 %v1161, %v1940
        %1942 = vmatprep.mubr.bf16.mxu0 0
        %1943 = vmatmul.mubr.bf16.gmra.mxu0 %v1761
        %v1944 = vpop.f32.mrf.mxu0
        %v1945 = vadd.f32 %v1165, %v1944
        %v1946 = vpop.f32.mrf.mxu0
        %v1947 = vadd.f32 %v1167, %v1946
        %v1948 = vpop.f32.mrf.mxu0
        %v1949 = vadd.f32 %v1169, %v1948
        %v1950 = vpop.f32.mrf.mxu0
        %v1951 = vadd.f32 %v1171, %v1950
        %1952 = vmatprep.mubr.bf16.mxu0 0
        %1953 = vmatmul.mubr.bf16.gmra.mxu0 %v1764
        %v1954 = vpop.f32.mrf.mxu0
        %v1955 = vadd.f32 %v1175, %v1954
        %v1956 = vpop.f32.mrf.mxu0
        %v1957 = vadd.f32 %v1177, %v1956
        %v1958 = vpop.f32.mrf.mxu0
        %v1959 = vadd.f32 %v1179, %v1958
        %v1960 = vpop.f32.mrf.mxu0
        %v1961 = vadd.f32 %v1181, %v1960
        %1962 = vmatprep.mubr.bf16.mxu0 0
        %1963 = vmatmul.mubr.bf16.gmra.mxu0 %v1767
        %v1964 = vpop.f32.mrf.mxu0
        %v1965 = vadd.f32 %v1185, %v1964
        %v1966 = vpop.f32.mrf.mxu0
        %v1967 = vadd.f32 %v1187, %v1966
        %v1968 = vpop.f32.mrf.mxu0
        %v1969 = vadd.f32 %v1189, %v1968
        %v1970 = vpop.f32.mrf.mxu0
        %v1971 = vadd.f32 %v1191, %v1970
        %1972 = vmatprep.mubr.bf16.mxu0 0
        %1973 = vmatmul.mubr.bf16.gmra.mxu0 %v1770
        %v1974 = vpop.f32.mrf.mxu0
        %v1975 = vadd.f32 %v1195, %v1974
        %v1976 = vpop.f32.mrf.mxu0
        %v1977 = vadd.f32 %v1197, %v1976
        %v1978 = vpop.f32.mrf.mxu0
        %v1979 = vadd.f32 %v1199, %v1978
        %v1980 = vpop.f32.mrf.mxu0
        %v1981 = vadd.f32 %v1201, %v1980
        %1982 = vmatprep.mubr.bf16.mxu0 0
        %1983 = vmatmul.mubr.bf16.gmra.mxu0 %v1773
        %v1984 = vpop.f32.mrf.mxu0
        %v1985 = vadd.f32 %v1205, %v1984
        %v1986 = vpop.f32.mrf.mxu0
        %v1987 = vadd.f32 %v1207, %v1986
        %v1988 = vpop.f32.mrf.mxu0
        %v1989 = vadd.f32 %v1209, %v1988
        %v1990 = vpop.f32.mrf.mxu0
        %v1991 = vadd.f32 %v1211, %v1990
        %1992 = vmatprep.mubr.bf16.mxu0 0
        %1993 = vmatmul.mubr.bf16.gmra.mxu0 %v1776
        %v1994 = vpop.f32.mrf.mxu0
        %v1995 = vadd.f32 %v1215, %v1994
        %v1996 = vpop.f32.mrf.mxu0
        %v1997 = vadd.f32 %v1217, %v1996
        %v1998 = vpop.f32.mrf.mxu0
        %v1999 = vadd.f32 %v1219, %v1998
        %v2000 = vpop.f32.mrf.mxu0
        %v2001 = vadd.f32 %v1221, %v2000
        %2002 = vmatprep.mubr.bf16.mxu0 0
        %2003 = vmatmul.mubr.bf16.gmra.mxu0 %v1779
        %v2004 = vpop.f32.mrf.mxu0
        %v2005 = vadd.f32 %v1225, %v2004
        %v2006 = vpop.f32.mrf.mxu0
        %v2007 = vadd.f32 %v1227, %v2006
        %v2008 = vpop.f32.mrf.mxu0
        %v2009 = vadd.f32 %v1229, %v2008
        %v2010 = vpop.f32.mrf.mxu0
        %v2011 = vadd.f32 %v1231, %v2010
        %2012 = vmatprep.mubr.bf16.mxu0 0
        %2013 = vmatmul.mubr.bf16.gmra.mxu0 %v1782
        %v2014 = vpop.f32.mrf.mxu0
        %v2015 = vadd.f32 %v1235, %v2014
        %v2016 = vpop.f32.mrf.mxu0
        %v2017 = vadd.f32 %v1237, %v2016
        %v2018 = vpop.f32.mrf.mxu0
        %v2019 = vadd.f32 %v1239, %v2018
        %v2020 = vpop.f32.mrf.mxu0
        %v2021 = vadd.f32 %v1241, %v2020
        %2022 = vmatprep.mubr.bf16.mxu0 0
        %2023 = vmatmul.mubr.bf16.gmra.mxu0 %v1785
        %v2024 = vpop.f32.mrf.mxu0
        %v2025 = vadd.f32 %v1245, %v2024
        %v2026 = vpop.f32.mrf.mxu0
        %v2027 = vadd.f32 %v1247, %v2026
        %v2028 = vpop.f32.mrf.mxu0
        %v2029 = vadd.f32 %v1249, %v2028
        %v2030 = vpop.f32.mrf.mxu0
        %v2031 = vadd.f32 %v1251, %v2030
        %2032 = vmatprep.mubr.bf16.mxu0 0
        %2033 = vmatmul.mubr.bf16.gmra.mxu0 %v1788
        %v2034 = vpop.f32.mrf.mxu0
        %v2035 = vadd.f32 %v1255, %v2034
        %v2036 = vpop.f32.mrf.mxu0
        %v2037 = vadd.f32 %v1257, %v2036
        %v2038 = vpop.f32.mrf.mxu0
        %v2039 = vadd.f32 %v1259, %v2038
        %v2040 = vpop.f32.mrf.mxu0
        %v2041 = vadd.f32 %v1261, %v2040
        %2042 = vmatprep.mubr.bf16.mxu0 0
        %2043 = vmatmul.mubr.bf16.gmra.mxu0 %v1791
        %v2044 = vpop.f32.mrf.mxu0
        %v2045 = vadd.f32 %v1265, %v2044
        %v2046 = vpop.f32.mrf.mxu0
        %v2047 = vadd.f32 %v1267, %v2046
        %v2048 = vpop.f32.mrf.mxu0
        %v2049 = vadd.f32 %v1269, %v2048
        %v2050 = vpop.f32.mrf.mxu0
        %v2051 = vadd.f32 %v1271, %v2050
        %2052 = vmatprep.mubr.bf16.mxu0 0
        %2053 = vmatmul.mubr.bf16.gmra.mxu0 %v1794
        %v2054 = vpop.f32.mrf.mxu0
        %v2055 = vadd.f32 %v1275, %v2054
        %v2056 = vpop.f32.mrf.mxu0
        %v2057 = vadd.f32 %v1277, %v2056
        %v2058 = vpop.f32.mrf.mxu0
        %v2059 = vadd.f32 %v1279, %v2058
        %v2060 = vpop.f32.mrf.mxu0
        %v2061 = vadd.f32 %v1281, %v2060
        %2062 = vmatprep.mubr.bf16.mxu0 0
        %2063 = vmatmul.mubr.bf16.gmra.mxu0 %v1797
        %v2064 = vpop.f32.mrf.mxu0
        %v2065 = vadd.f32 %v1285, %v2064
        %v2066 = vpop.f32.mrf.mxu0
        %v2067 = vadd.f32 %v1287, %v2066
        %v2068 = vpop.f32.mrf.mxu0
        %v2069 = vadd.f32 %v1289, %v2068
        %v2070 = vpop.f32.mrf.mxu0
        %v2071 = vadd.f32 %v1291, %v2070
        %2072 = vmatprep.mubr.bf16.mxu0 0
        %2073 = vmatmul.mubr.bf16.gmra.mxu0 %v1800
        %v2074 = vpop.f32.mrf.mxu0
        %v2075 = vadd.f32 %v1295, %v2074
        %v2076 = vpop.f32.mrf.mxu0
        %v2077 = vadd.f32 %v1297, %v2076
        %v2078 = vpop.f32.mrf.mxu0
        %v2079 = vadd.f32 %v1299, %v2078
        %v2080 = vpop.f32.mrf.mxu0
        %v2081 = vadd.f32 %v1301, %v2080
        %2082 = vmatprep.mubr.bf16.mxu0 0
        %2083 = vmatmul.mubr.bf16.gmra.mxu0 %v1803
        %v2084 = vpop.f32.mrf.mxu0
        %v2085 = vadd.f32 %v1305, %v2084
        %v2086 = vpop.f32.mrf.mxu0
        %v2087 = vadd.f32 %v1307, %v2086
        %v2088 = vpop.f32.mrf.mxu0
        %v2089 = vadd.f32 %v1309, %v2088
        %v2090 = vpop.f32.mrf.mxu0
        %v2091 = vadd.f32 %v1311, %v2090
        %2092 = vmatprep.mubr.bf16.mxu0 0
        %2093 = vmatmul.mubr.bf16.gmra.mxu0 %v1806
        %v2094 = vpop.f32.mrf.mxu0
        %v2095 = vadd.f32 %v1315, %v2094
        %v2096 = vpop.f32.mrf.mxu0
        %v2097 = vadd.f32 %v1317, %v2096
        %v2098 = vpop.f32.mrf.mxu0
        %v2099 = vadd.f32 %v1319, %v2098
        %v2100 = vpop.f32.mrf.mxu0
        %v2101 = vadd.f32 %v1321, %v2100
        %2102 = vmatprep.mubr.bf16.mxu0 0
        %2103 = vmatmul.mubr.bf16.gmra.mxu0 %v1809
        %v2104 = vpop.f32.mrf.mxu0
        %v2105 = vadd.f32 %v1325, %v2104
        %v2106 = vpop.f32.mrf.mxu0
        %v2107 = vadd.f32 %v1327, %v2106
        %v2108 = vpop.f32.mrf.mxu0
        %v2109 = vadd.f32 %v1329, %v2108
        %v2110 = vpop.f32.mrf.mxu0
        %v2111 = vadd.f32 %v1331, %v2110
        %2112 = vdwg.mxu0
        %2113 = vmatprep.subr.bf16.mxu0 0
        %2114 = vmatpush1.bf16.msra.mxu0 0
        %2115 = vmatprep.subr.bf16.mxu0 0
        %2116 = vmatpush1.bf16.msra.mxu0 0
        %2117 = vmatprep.subr.bf16.mxu0 0
        %2118 = vmatpush1.bf16.msra.mxu0 0
        %2119 = vmatprep.subr.bf16.mxu0 0
        %2120 = vmatpush1.bf16.msra.mxu0 0
        %2121 = vmatprep.subr.bf16.mxu0 0
        %2122 = vmatpush1.bf16.msra.mxu0 0
        %2123 = vmatprep.subr.bf16.mxu0 0
        %2124 = vmatpush1.bf16.msra.mxu0 0
        %2125 = vmatprep.subr.bf16.mxu0 0
        %2126 = vmatpush1.bf16.msra.mxu0 %v1818
        %2127 = vmatprep.subr.bf16.mxu0 0
        %2128 = vmatpush1.bf16.msra.mxu0 %v1726
        %2129 = vmatprep.subr.bf16.mxu0 0
        %2130 = vmatpush2.bf16.msra.mxu0 0
        %2131 = vmatprep.subr.bf16.mxu0 0
        %2132 = vmatpush2.bf16.msra.mxu0 0
        %2133 = vmatprep.subr.bf16.mxu0 0
        %2134 = vmatpush2.bf16.msra.mxu0 0
        %2135 = vmatprep.subr.bf16.mxu0 0
        %2136 = vmatpush2.bf16.msra.mxu0 0
        %2137 = vmatprep.subr.bf16.mxu0 0
        %2138 = vmatpush2.bf16.msra.mxu0 0
        %2139 = vmatprep.subr.bf16.mxu0 0
        %2140 = vmatpush2.bf16.msra.mxu0 0
        %2141 = vmatprep.subr.bf16.mxu0 0
        %2142 = vmatpush2.bf16.msra.mxu0 0
        %2143 = vmatprep.subr.bf16.mxu0 0
        %2144 = vmatpush2.bf16.msra.mxu0 0
        %2145 = vmatprep.mubr.bf16.mxu0 0
        %2146 = vmatmul.mubr.bf16.gmra.mxu0 %v1734
        %v2147 = vpop.f32.mrf.mxu0
        %v2148 = vadd.f32 %v1368, %v2147
        %v2149 = vpop.f32.mrf.mxu0
        %v2150 = vpop.f32.mrf.mxu0
        %v2151 = vadd.f32 %v1371, %v2150
        %v2152 = vpop.f32.mrf.mxu0
        %2153 = vmatprep.mubr.bf16.mxu0 0
        %2154 = vmatmul.mubr.bf16.gmra.mxu0 %v1737
        %v2155 = vpop.f32.mrf.mxu0
        %v2156 = vadd.f32 %v1376, %v2155
        %v2157 = vpop.f32.mrf.mxu0
        %v2158 = vpop.f32.mrf.mxu0
        %v2159 = vadd.f32 %v1379, %v2158
        %v2160 = vpop.f32.mrf.mxu0
        %2161 = vmatprep.mubr.bf16.mxu0 0
        %2162 = vmatmul.mubr.bf16.gmra.mxu0 %v1740
        %v2163 = vpop.f32.mrf.mxu0
        %v2164 = vadd.f32 %v1384, %v2163
        %v2165 = vpop.f32.mrf.mxu0
        %v2166 = vpop.f32.mrf.mxu0
        %v2167 = vadd.f32 %v1387, %v2166
        %v2168 = vpop.f32.mrf.mxu0
        %2169 = vmatprep.mubr.bf16.mxu0 0
        %2170 = vmatmul.mubr.bf16.gmra.mxu0 %v1743
        %v2171 = vpop.f32.mrf.mxu0
        %v2172 = vadd.f32 %v1392, %v2171
        %v2173 = vpop.f32.mrf.mxu0
        %v2174 = vpop.f32.mrf.mxu0
        %v2175 = vadd.f32 %v1395, %v2174
        %v2176 = vpop.f32.mrf.mxu0
        %2177 = vmatprep.mubr.bf16.mxu0 0
        %2178 = vmatmul.mubr.bf16.gmra.mxu0 %v1746
        %v2179 = vpop.f32.mrf.mxu0
        %v2180 = vadd.f32 %v1400, %v2179
        %v2181 = vpop.f32.mrf.mxu0
        %v2182 = vpop.f32.mrf.mxu0
        %v2183 = vadd.f32 %v1403, %v2182
        %v2184 = vpop.f32.mrf.mxu0
        %2185 = vmatprep.mubr.bf16.mxu0 0
        %2186 = vmatmul.mubr.bf16.gmra.mxu0 %v1749
        %v2187 = vpop.f32.mrf.mxu0
        %v2188 = vadd.f32 %v1408, %v2187
        %v2189 = vpop.f32.mrf.mxu0
        %v2190 = vpop.f32.mrf.mxu0
        %v2191 = vadd.f32 %v1411, %v2190
        %v2192 = vpop.f32.mrf.mxu0
        %2193 = vmatprep.mubr.bf16.mxu0 0
        %2194 = vmatmul.mubr.bf16.gmra.mxu0 %v1752
        %v2195 = vpop.f32.mrf.mxu0
        %v2196 = vadd.f32 %v1416, %v2195
        %v2197 = vpop.f32.mrf.mxu0
        %v2198 = vpop.f32.mrf.mxu0
        %v2199 = vadd.f32 %v1419, %v2198
        %v2200 = vpop.f32.mrf.mxu0
        %2201 = vmatprep.mubr.bf16.mxu0 0
        %2202 = vmatmul.mubr.bf16.gmra.mxu0 %v1755
        %v2203 = vpop.f32.mrf.mxu0
        %v2204 = vadd.f32 %v1424, %v2203
        %v2205 = vpop.f32.mrf.mxu0
        %v2206 = vpop.f32.mrf.mxu0
        %v2207 = vadd.f32 %v1427, %v2206
        %v2208 = vpop.f32.mrf.mxu0
        %2209 = vmatprep.mubr.bf16.mxu0 0
        %2210 = vmatmul.mubr.bf16.gmra.mxu0 %v1758
        %v2211 = vpop.f32.mrf.mxu0
        %v2212 = vadd.f32 %v1432, %v2211
        %v2213 = vpop.f32.mrf.mxu0
        %v2214 = vpop.f32.mrf.mxu0
        %v2215 = vadd.f32 %v1435, %v2214
        %v2216 = vpop.f32.mrf.mxu0
        %2217 = vmatprep.mubr.bf16.mxu0 0
        %2218 = vmatmul.mubr.bf16.gmra.mxu0 %v1761
        %v2219 = vpop.f32.mrf.mxu0
        %v2220 = vadd.f32 %v1440, %v2219
        %v2221 = vpop.f32.mrf.mxu0
        %v2222 = vpop.f32.mrf.mxu0
        %v2223 = vadd.f32 %v1443, %v2222
        %v2224 = vpop.f32.mrf.mxu0
        %2225 = vmatprep.mubr.bf16.mxu0 0
        %2226 = vmatmul.mubr.bf16.gmra.mxu0 %v1764
        %v2227 = vpop.f32.mrf.mxu0
        %v2228 = vadd.f32 %v1448, %v2227
        %v2229 = vpop.f32.mrf.mxu0
        %v2230 = vpop.f32.mrf.mxu0
        %v2231 = vadd.f32 %v1451, %v2230
        %v2232 = vpop.f32.mrf.mxu0
        %2233 = vmatprep.mubr.bf16.mxu0 0
        %2234 = vmatmul.mubr.bf16.gmra.mxu0 %v1767
        %v2235 = vpop.f32.mrf.mxu0
        %v2236 = vadd.f32 %v1456, %v2235
        %v2237 = vpop.f32.mrf.mxu0
        %v2238 = vpop.f32.mrf.mxu0
        %v2239 = vadd.f32 %v1459, %v2238
        %v2240 = vpop.f32.mrf.mxu0
        %2241 = vmatprep.mubr.bf16.mxu0 0
        %2242 = vmatmul.mubr.bf16.gmra.mxu0 %v1770
        %v2243 = vpop.f32.mrf.mxu0
        %v2244 = vadd.f32 %v1464, %v2243
        %v2245 = vpop.f32.mrf.mxu0
        %v2246 = vpop.f32.mrf.mxu0
        %v2247 = vadd.f32 %v1467, %v2246
        %v2248 = vpop.f32.mrf.mxu0
        %2249 = vmatprep.mubr.bf16.mxu0 0
        %2250 = vmatmul.mubr.bf16.gmra.mxu0 %v1773
        %v2251 = vpop.f32.mrf.mxu0
        %v2252 = vadd.f32 %v1472, %v2251
        %v2253 = vpop.f32.mrf.mxu0
        %v2254 = vpop.f32.mrf.mxu0
        %v2255 = vadd.f32 %v1475, %v2254
        %v2256 = vpop.f32.mrf.mxu0
        %2257 = vmatprep.mubr.bf16.mxu0 0
        %2258 = vmatmul.mubr.bf16.gmra.mxu0 %v1776
        %v2259 = vpop.f32.mrf.mxu0
        %v2260 = vadd.f32 %v1480, %v2259
        %v2261 = vpop.f32.mrf.mxu0
        %v2262 = vpop.f32.mrf.mxu0
        %v2263 = vadd.f32 %v1483, %v2262
        %v2264 = vpop.f32.mrf.mxu0
        %2265 = vmatprep.mubr.bf16.mxu0 0
        %2266 = vmatmul.mubr.bf16.gmra.mxu0 %v1779
        %v2267 = vpop.f32.mrf.mxu0
        %v2268 = vadd.f32 %v1488, %v2267
        %v2269 = vpop.f32.mrf.mxu0
        %v2270 = vpop.f32.mrf.mxu0
        %v2271 = vadd.f32 %v1491, %v2270
        %v2272 = vpop.f32.mrf.mxu0
        %2273 = vmatprep.mubr.bf16.mxu0 0
        %2274 = vmatmul.mubr.bf16.gmra.mxu0 %v1782
        %v2275 = vpop.f32.mrf.mxu0
        %v2276 = vadd.f32 %v1496, %v2275
        %v2277 = vpop.f32.mrf.mxu0
        %v2278 = vpop.f32.mrf.mxu0
        %v2279 = vadd.f32 %v1499, %v2278
        %v2280 = vpop.f32.mrf.mxu0
        %2281 = vmatprep.mubr.bf16.mxu0 0
        %2282 = vmatmul.mubr.bf16.gmra.mxu0 %v1785
        %v2283 = vpop.f32.mrf.mxu0
        %v2284 = vadd.f32 %v1504, %v2283
        %v2285 = vpop.f32.mrf.mxu0
        %v2286 = vpop.f32.mrf.mxu0
        %v2287 = vadd.f32 %v1507, %v2286
        %v2288 = vpop.f32.mrf.mxu0
        %2289 = vmatprep.mubr.bf16.mxu0 0
        %2290 = vmatmul.mubr.bf16.gmra.mxu0 %v1788
        %v2291 = vpop.f32.mrf.mxu0
        %v2292 = vadd.f32 %v1512, %v2291
        %v2293 = vpop.f32.mrf.mxu0
        %v2294 = vpop.f32.mrf.mxu0
        %v2295 = vadd.f32 %v1515, %v2294
        %v2296 = vpop.f32.mrf.mxu0
        %2297 = vmatprep.mubr.bf16.mxu0 0
        %2298 = vmatmul.mubr.bf16.gmra.mxu0 %v1791
        %v2299 = vpop.f32.mrf.mxu0
        %v2300 = vadd.f32 %v1520, %v2299
        %v2301 = vpop.f32.mrf.mxu0
        %v2302 = vpop.f32.mrf.mxu0
        %v2303 = vadd.f32 %v1523, %v2302
        %v2304 = vpop.f32.mrf.mxu0
        %2305 = vmatprep.mubr.bf16.mxu0 0
        %2306 = vmatmul.mubr.bf16.gmra.mxu0 %v1794
        %v2307 = vpop.f32.mrf.mxu0
        %v2308 = vadd.f32 %v1528, %v2307
        %v2309 = vpop.f32.mrf.mxu0
        %v2310 = vpop.f32.mrf.mxu0
        %v2311 = vadd.f32 %v1531, %v2310
        %v2312 = vpop.f32.mrf.mxu0
        %2313 = vmatprep.mubr.bf16.mxu0 0
        %2314 = vmatmul.mubr.bf16.gmra.mxu0 %v1797
        %v2315 = vpop.f32.mrf.mxu0
        %v2316 = vadd.f32 %v1536, %v2315
        %v2317 = vpop.f32.mrf.mxu0
        %v2318 = vpop.f32.mrf.mxu0
        %v2319 = vadd.f32 %v1539, %v2318
        %v2320 = vpop.f32.mrf.mxu0
        %2321 = vmatprep.mubr.bf16.mxu0 0
        %2322 = vmatmul.mubr.bf16.gmra.mxu0 %v1800
        %v2323 = vpop.f32.mrf.mxu0
        %v2324 = vadd.f32 %v1544, %v2323
        %v2325 = vpop.f32.mrf.mxu0
        %v2326 = vpop.f32.mrf.mxu0
        %v2327 = vadd.f32 %v1547, %v2326
        %v2328 = vpop.f32.mrf.mxu0
        %2329 = vmatprep.mubr.bf16.mxu0 0
        %2330 = vmatmul.mubr.bf16.gmra.mxu0 %v1803
        %v2331 = vpop.f32.mrf.mxu0
        %v2332 = vadd.f32 %v1552, %v2331
        %v2333 = vpop.f32.mrf.mxu0
        %v2334 = vpop.f32.mrf.mxu0
        %v2335 = vadd.f32 %v1555, %v2334
        %v2336 = vpop.f32.mrf.mxu0
        %2337 = vmatprep.mubr.bf16.mxu0 0
        %2338 = vmatmul.mubr.bf16.gmra.mxu0 %v1806
        %v2339 = vpop.f32.mrf.mxu0
        %v2340 = vadd.f32 %v1560, %v2339
        %v2341 = vpop.f32.mrf.mxu0
        %v2342 = vpop.f32.mrf.mxu0
        %v2343 = vadd.f32 %v1563, %v2342
        %v2344 = vpop.f32.mrf.mxu0
        %2345 = vmatprep.mubr.bf16.mxu0 0
        %2346 = vmatmul.mubr.bf16.gmra.mxu0 %v1809
        %v2347 = vpop.f32.mrf.mxu0
        %v2348 = vadd.f32 %v1568, %v2347
        %v2349 = vpop.f32.mrf.mxu0
        %v2350 = vpop.f32.mrf.mxu0
        %v2351 = vadd.f32 %v1571, %v2350
        %v2352 = vpop.f32.mrf.mxu0
        %2353 = vdwg.mxu0
        %s2354 = scalar_lea.vmem %s625, 16 [#allocation4]
        %v2355 = vld [vmem:[%s2354] sm:$0xf]
        %v2356 = vld [vmem:[%s2354 + $0x4] sm:$0xf]
        %v2357 = vld [vmem:[%s2354 + $0x8] sm:$0xf]
        %v2358 = vld [vmem:[%s2354 + $0xc] sm:$0xf]
        %v2359 = vld [vmem:[%s2354 + $0x10] sm:$0xf]
        %v2360 = vld [vmem:[%s2354 + $0x14] sm:$0xf]
        %v2361 = vld [vmem:[%s2354 + $0x18] sm:$0xf]
        %v2362 = vld [vmem:[%s2354 + $0x1c] sm:$0xf]
        %v2363 = vld [vmem:[%s2354 + $0x20] sm:$0xf]
        %v2364 = vld [vmem:[%s2354 + $0x24] sm:$0xf]
        %v2365 = vld [vmem:[%s2354 + $0x28] sm:$0xf]
        %v2366 = vld [vmem:[%s2354 + $0x2c] sm:$0xf]
        %v2367 = vld [vmem:[%s2354 + $0x30] sm:$0xf]
        %v2368 = vld [vmem:[%s2354 + $0x34] sm:$0xf]
        %v2369 = vld [vmem:[%s2354 + $0x38] sm:$0xf]
        %v2370 = vld [vmem:[%s2354 + $0x3c] sm:$0xf]
        %v2371 = vld [vmem:[%s2354 + $0x40] sm:$0xf]
        %v2372 = vld [vmem:[%s2354 + $0x44] sm:$0xf]
        %v2373 = vld [vmem:[%s2354 + $0x48] sm:$0xf]
        %v2374 = vld [vmem:[%s2354 + $0x4c] sm:$0xf]
        %v2375 = vld [vmem:[%s2354 + $0x50] sm:$0xf]
        %v2376 = vld [vmem:[%s2354 + $0x54] sm:$0xf]
        %v2377 = vld [vmem:[%s2354 + $0x58] sm:$0xf]
        %v2378 = vld [vmem:[%s2354 + $0x5c] sm:$0xf]
        %v2379 = vld [vmem:[%s2354 + $0x60] sm:$0xf]
        %v2380 = vld [vmem:[%s2354 + $0x64] sm:$0xf]
        %v2381 = vld [vmem:[%s2354 + $0x68] sm:$0xf]
        %v2382 = vld [vmem:[%s2354 + $0x6c] sm:$0xf]
        %v2383 = vld [vmem:[%s2354 + $0x70] sm:$0xf]
        %v2384 = vld [vmem:[%s2354 + $0x74] sm:$0xf]
        %v2385 = vld [vmem:[%s2354 + $0x78] sm:$0xf]
        %v2386 = vld [vmem:[%s2354 + $0x7c] sm:$0xf]
        %v2387 = vld [vmem:[%s2354 + $0x80] sm:$0xf]
        %v2388 = vld [vmem:[%s2354 + $0x84] sm:$0xf]
        %v2389 = vld [vmem:[%s2354 + $0x88] sm:$0xf]
        %v2390 = vld [vmem:[%s2354 + $0x8c] sm:$0xf]
        %v2391 = vld [vmem:[%s2354 + $0x90] sm:$0xf]
        %v2392 = vld [vmem:[%s2354 + $0x94] sm:$0xf]
        %v2393 = vld [vmem:[%s2354 + $0x98] sm:$0xf]
        %v2394 = vld [vmem:[%s2354 + $0x9c] sm:$0xf]
        %v2395 = vld [vmem:[%s2354 + $0xa0] sm:$0xf]
        %v2396 = vld [vmem:[%s2354 + $0xa4] sm:$0xf]
        %v2397 = vld [vmem:[%s2354 + $0xa8] sm:$0xf]
        %v2398 = vld [vmem:[%s2354 + $0xac] sm:$0xf]
        %v2399 = vld [vmem:[%s2354 + $0xb0] sm:$0xf]
        %v2400 = vld [vmem:[%s2354 + $0xb4] sm:$0xf]
        %v2401 = vld [vmem:[%s2354 + $0xb8] sm:$0xf]
        %v2402 = vld [vmem:[%s2354 + $0xbc] sm:$0xf]
        %v2403 = vld [vmem:[%s2354 + $0xc0] sm:$0xf]
        %v2404 = vld [vmem:[%s2354 + $0xc4] sm:$0xf]
        %v2405 = vld [vmem:[%s2354 + $0xc8] sm:$0xf]
        %v2406 = vld [vmem:[%s2354 + $0xcc] sm:$0xf]
        %s2407 = scalar_lea.vmem %s1, 96
        %v2408 = vld [vmem:[%s2407] sm:$0xff]
        %v2409 = vld [vmem:[%s2407 + $0x8] sm:$0xf]
        %v2410 = vld [vmem:[%s2407 + $0xc] sm:$0xff]
        %v2411 = vld [vmem:[%s2407 + $0x14] sm:$0xf]
        %v2412 = vld [vmem:[%s2407 + $0x18] sm:$0xff]
        %v2413 = vld [vmem:[%s2407 + $0x20] sm:$0xf]
        %v2414 = vld [vmem:[%s2407 + $0x24] sm:$0x33]
        %v2415 = vld [vmem:[%s2407 + $0x2c] sm:$0x3]
        %v2468 = vunpack.c.l.b16 %v2355
        %v2469 = vunpack.c.l.b16 %v2356
        %v2470 = vunpack.c.l.b16 %v2357
        %v2471 = vunpack.c.l.b16 %v2358
        %v2472 = vunpack.c.l.b16 %v2359
        %v2473 = vunpack.c.l.b16 %v2360
        %v2474 = vunpack.c.l.b16 %v2361
        %v2475 = vunpack.c.l.b16 %v2362
        %v2476 = vunpack.c.l.b16 %v2363
        %v2477 = vunpack.c.l.b16 %v2364
        %v2478 = vunpack.c.l.b16 %v2365
        %v2479 = vunpack.c.l.b16 %v2366
        %v2480 = vunpack.c.l.b16 %v2367
        %v2481 = vunpack.c.l.b16 %v2368
        %v2482 = vunpack.c.l.b16 %v2369
        %v2483 = vunpack.c.l.b16 %v2370
        %v2484 = vunpack.c.l.b16 %v2371
        %v2485 = vunpack.c.l.b16 %v2372
        %v2486 = vunpack.c.l.b16 %v2373
        %v2487 = vunpack.c.l.b16 %v2374
        %v2488 = vunpack.c.l.b16 %v2375
        %v2489 = vunpack.c.l.b16 %v2376
        %v2490 = vunpack.c.l.b16 %v2377
        %v2491 = vunpack.c.l.b16 %v2378
        %v2492 = vunpack.c.l.b16 %v2379
        %v2493 = vunpack.c.l.b16 %v2380
        %v2494 = vunpack.c.l.b16 %v2381
        %v2495 = vunpack.c.l.b16 %v2382
        %v2496 = vunpack.c.l.b16 %v2383
        %v2497 = vunpack.c.l.b16 %v2384
        %v2498 = vunpack.c.l.b16 %v2385
        %v2499 = vunpack.c.l.b16 %v2386
        %v2500 = vunpack.c.l.b16 %v2387
        %v2501 = vunpack.c.l.b16 %v2388
        %v2502 = vunpack.c.l.b16 %v2389
        %v2503 = vunpack.c.l.b16 %v2390
        %v2504 = vunpack.c.l.b16 %v2391
        %v2505 = vunpack.c.l.b16 %v2392
        %v2506 = vunpack.c.l.b16 %v2393
        %v2507 = vunpack.c.l.b16 %v2394
        %v2508 = vunpack.c.l.b16 %v2395
        %v2509 = vunpack.c.l.b16 %v2396
        %v2510 = vunpack.c.l.b16 %v2397
        %v2511 = vunpack.c.l.b16 %v2398
        %v2512 = vunpack.c.l.b16 %v2399
        %v2513 = vunpack.c.l.b16 %v2400
        %v2514 = vunpack.c.l.b16 %v2401
        %v2515 = vunpack.c.l.b16 %v2402
        %v2516 = vunpack.c.l.b16 %v2403
        %v2517 = vunpack.c.l.b16 %v2404
        %v2518 = vunpack.c.l.b16 %v2405
        %v2519 = vunpack.c.l.b16 %v2406
        %v2520 = vpack.c.b16 %v2469, %v2468
        %v2521 = vpack.c.b16 %v2471, %v2470
        %v2522 = vpack.c.b16 %v2473, %v2472
        %v2523 = vpack.c.b16 %v2475, %v2474
        %v2524 = vpack.c.b16 %v2477, %v2476
        %v2525 = vpack.c.b16 %v2479, %v2478
        %v2526 = vpack.c.b16 %v2481, %v2480
        %v2527 = vpack.c.b16 %v2483, %v2482
        %v2528 = vpack.c.b16 %v2485, %v2484
        %v2529 = vpack.c.b16 %v2487, %v2486
        %v2530 = vpack.c.b16 %v2489, %v2488
        %v2531 = vpack.c.b16 %v2491, %v2490
        %v2532 = vpack.c.b16 %v2493, %v2492
        %v2533 = vpack.c.b16 %v2495, %v2494
        %v2534 = vpack.c.b16 %v2497, %v2496
        %v2535 = vpack.c.b16 %v2499, %v2498
        %v2536 = vpack.c.b16 %v2501, %v2500
        %v2537 = vpack.c.b16 %v2503, %v2502
        %v2538 = vpack.c.b16 %v2505, %v2504
        %v2539 = vpack.c.b16 %v2507, %v2506
        %v2540 = vpack.c.b16 %v2509, %v2508
        %v2541 = vpack.c.b16 %v2511, %v2510
        %v2542 = vpack.c.b16 %v2513, %v2512
        %v2543 = vpack.c.b16 %v2515, %v2514
        %v2544 = vpack.c.b16 %v2517, %v2516
        %v2545 = vpack.c.b16 %v2519, %v2518
        %v2554 = vunpack.c.l.b16 %v2408
        %v2555 = vunpack.c.h.b16 %v2408
        %v2556 = vunpack.c.l.b16 %v2409
        %v2557 = vunpack.c.l.b16 %v2410
        %v2558 = vunpack.c.h.b16 %v2410
        %v2559 = vunpack.c.l.b16 %v2411
        %v2560 = vunpack.c.l.b16 %v2412
        %v2561 = vunpack.c.h.b16 %v2412
        %v2562 = vunpack.c.l.b16 %v2413
        %v2563 = vunpack.c.l.b16 %v2414
        %v2564 = vunpack.c.h.b16 %v2414
        %v2565 = vunpack.c.l.b16 %v2415
        %v2566 = vpack.c.b16 %v2557, %v2554
        %v2567 = vpack.c.b16 %v2558, %v2555
        %v2568 = vpack.c.b16 %v2559, %v2556
        %v2569 = vpack.c.b16 %v2563, %v2560
        %v2570 = vpack.c.b16 %v2564, %v2561
        %v2571 = vpack.c.b16 %v2565, %v2562
        %v2576 = vsel %vm951, %v2520, 0
        %v2579 = vsel %vm951, %v2521, 0
        %v2582 = vsel %vm951, %v2522, 0
        %v2585 = vsel %vm951, %v2523, 0
        %v2588 = vsel %vm951, %v2524, 0
        %v2591 = vsel %vm951, %v2525, 0
        %v2594 = vsel %vm951, %v2526, 0
        %v2597 = vsel %vm951, %v2527, 0
        %v2600 = vsel %vm951, %v2528, 0
        %v2603 = vsel %vm951, %v2529, 0
        %v2606 = vsel %vm951, %v2530, 0
        %v2609 = vsel %vm951, %v2531, 0
        %v2612 = vsel %vm951, %v2532, 0
        %v2615 = vsel %vm951, %v2533, 0
        %v2618 = vsel %vm951, %v2534, 0
        %v2621 = vsel %vm951, %v2535, 0
        %v2624 = vsel %vm951, %v2536, 0
        %v2627 = vsel %vm951, %v2537, 0
        %v2630 = vsel %vm951, %v2538, 0
        %v2633 = vsel %vm951, %v2539, 0
        %v2636 = vsel %vm951, %v2540, 0
        %v2639 = vsel %vm951, %v2541, 0
        %v2642 = vsel %vm951, %v2542, 0
        %v2645 = vsel %vm951, %v2543, 0
        %v2648 = vsel %vm951, %v2544, 0
        %v2651 = vsel %vm951, %v2545, 0
        %v2654 = vsel %vm1030, %v2569, 0
        %v2657 = vsel %vm1030, %v2570, 0
        %v2660 = vsel %vm1030, %v2571, 0
        %2662 = vmatprep.subr.bf16.mxu0 0
        %2663 = vmatpush1.bf16.msra.mxu0 0
        %2664 = vmatprep.subr.bf16.mxu0 0
        %2665 = vmatpush1.bf16.msra.mxu0 0
        %2666 = vmatprep.subr.bf16.mxu0 0
        %2667 = vmatpush1.bf16.msra.mxu0 0
        %2668 = vmatprep.subr.bf16.mxu0 0
        %2669 = vmatpush1.bf16.msra.mxu0 0
        %2670 = vmatprep.subr.bf16.mxu0 0
        %2671 = vmatpush1.bf16.msra.mxu0 0
        %2672 = vmatprep.subr.bf16.mxu0 0
        %2673 = vmatpush1.bf16.msra.mxu0 0
        %2674 = vmatprep.subr.bf16.mxu0 %v2657
        %2675 = vmatpush1.bf16.msra.mxu0 %v2654
        %2676 = vmatprep.subr.bf16.mxu0 %v2567
        %2677 = vmatpush1.bf16.msra.mxu0 %v2566
        %2678 = vmatprep.subr.bf16.mxu0 0
        %2679 = vmatpush2.bf16.msra.mxu0 0
        %2680 = vmatprep.subr.bf16.mxu0 0
        %2681 = vmatpush2.bf16.msra.mxu0 0
        %2682 = vmatprep.subr.bf16.mxu0 0
        %2683 = vmatpush2.bf16.msra.mxu0 0
        %2684 = vmatprep.subr.bf16.mxu0 0
        %2685 = vmatpush2.bf16.msra.mxu0 0
        %2686 = vmatprep.subr.bf16.mxu0 0
        %2687 = vmatpush2.bf16.msra.mxu0 0
        %2688 = vmatprep.subr.bf16.mxu0 0
        %2689 = vmatpush2.bf16.msra.mxu0 0
        %2690 = vmatprep.subr.bf16.mxu0 0
        %2691 = vmatpush2.bf16.msra.mxu0 0
        %2692 = vmatprep.subr.bf16.mxu0 0
        %2693 = vmatpush2.bf16.msra.mxu0 0
        %2694 = vmatprep.mubr.bf16.mxu0 0
        %2695 = vmatmul.mubr.bf16.gmra.mxu0 %v2576
        %v2696 = vpop.f32.mrf.mxu0
        %v2697 = vadd.f32 0.0, %v2696
        %v2698 = vpop.f32.mrf.mxu0
        %v2699 = vadd.f32 0.0, %v2698
        %v2700 = vpop.f32.mrf.mxu0
        %v2701 = vadd.f32 0.0, %v2700
        %v2702 = vpop.f32.mrf.mxu0
        %v2703 = vadd.f32 0.0, %v2702
        %2704 = vmatprep.mubr.bf16.mxu0 0
        %2705 = vmatmul.mubr.bf16.gmra.mxu0 %v2579
        %v2706 = vpop.f32.mrf.mxu0
        %v2707 = vadd.f32 0.0, %v2706
        %v2708 = vpop.f32.mrf.mxu0
        %v2709 = vadd.f32 0.0, %v2708
        %v2710 = vpop.f32.mrf.mxu0
        %v2711 = vadd.f32 0.0, %v2710
        %v2712 = vpop.f32.mrf.mxu0
        %v2713 = vadd.f32 0.0, %v2712
        %2714 = vmatprep.mubr.bf16.mxu0 0
        %2715 = vmatmul.mubr.bf16.gmra.mxu0 %v2582
        %v2716 = vpop.f32.mrf.mxu0
        %v2717 = vadd.f32 0.0, %v2716
        %v2718 = vpop.f32.mrf.mxu0
        %v2719 = vadd.f32 0.0, %v2718
        %v2720 = vpop.f32.mrf.mxu0
        %v2721 = vadd.f32 0.0, %v2720
        %v2722 = vpop.f32.mrf.mxu0
        %v2723 = vadd.f32 0.0, %v2722
        %2724 = vmatprep.mubr.bf16.mxu0 0
        %2725 = vmatmul.mubr.bf16.gmra.mxu0 %v2585
        %v2726 = vpop.f32.mrf.mxu0
        %v2727 = vadd.f32 0.0, %v2726
        %v2728 = vpop.f32.mrf.mxu0
        %v2729 = vadd.f32 0.0, %v2728
        %v2730 = vpop.f32.mrf.mxu0
        %v2731 = vadd.f32 0.0, %v2730
        %v2732 = vpop.f32.mrf.mxu0
        %v2733 = vadd.f32 0.0, %v2732
        %2734 = vmatprep.mubr.bf16.mxu0 0
        %2735 = vmatmul.mubr.bf16.gmra.mxu0 %v2588
        %v2736 = vpop.f32.mrf.mxu0
        %v2737 = vadd.f32 0.0, %v2736
        %v2738 = vpop.f32.mrf.mxu0
        %v2739 = vadd.f32 0.0, %v2738
        %v2740 = vpop.f32.mrf.mxu0
        %v2741 = vadd.f32 0.0, %v2740
        %v2742 = vpop.f32.mrf.mxu0
        %v2743 = vadd.f32 0.0, %v2742
        %2744 = vmatprep.mubr.bf16.mxu0 0
        %2745 = vmatmul.mubr.bf16.gmra.mxu0 %v2591
        %v2746 = vpop.f32.mrf.mxu0
        %v2747 = vadd.f32 0.0, %v2746
        %v2748 = vpop.f32.mrf.mxu0
        %v2749 = vadd.f32 0.0, %v2748
        %v2750 = vpop.f32.mrf.mxu0
        %v2751 = vadd.f32 0.0, %v2750
        %v2752 = vpop.f32.mrf.mxu0
        %v2753 = vadd.f32 0.0, %v2752
        %2754 = vmatprep.mubr.bf16.mxu0 0
        %2755 = vmatmul.mubr.bf16.gmra.mxu0 %v2594
        %v2756 = vpop.f32.mrf.mxu0
        %v2757 = vadd.f32 0.0, %v2756
        %v2758 = vpop.f32.mrf.mxu0
        %v2759 = vadd.f32 0.0, %v2758
        %v2760 = vpop.f32.mrf.mxu0
        %v2761 = vadd.f32 0.0, %v2760
        %v2762 = vpop.f32.mrf.mxu0
        %v2763 = vadd.f32 0.0, %v2762
        %2764 = vmatprep.mubr.bf16.mxu0 0
        %2765 = vmatmul.mubr.bf16.gmra.mxu0 %v2597
        %v2766 = vpop.f32.mrf.mxu0
        %v2767 = vadd.f32 0.0, %v2766
        %v2768 = vpop.f32.mrf.mxu0
        %v2769 = vadd.f32 0.0, %v2768
        %v2770 = vpop.f32.mrf.mxu0
        %v2771 = vadd.f32 0.0, %v2770
        %v2772 = vpop.f32.mrf.mxu0
        %v2773 = vadd.f32 0.0, %v2772
        %2774 = vmatprep.mubr.bf16.mxu0 0
        %2775 = vmatmul.mubr.bf16.gmra.mxu0 %v2600
        %v2776 = vpop.f32.mrf.mxu0
        %v2777 = vadd.f32 0.0, %v2776
        %v2778 = vpop.f32.mrf.mxu0
        %v2779 = vadd.f32 0.0, %v2778
        %v2780 = vpop.f32.mrf.mxu0
        %v2781 = vadd.f32 0.0, %v2780
        %v2782 = vpop.f32.mrf.mxu0
        %v2783 = vadd.f32 0.0, %v2782
        %2784 = vmatprep.mubr.bf16.mxu0 0
        %2785 = vmatmul.mubr.bf16.gmra.mxu0 %v2603
        %v2786 = vpop.f32.mrf.mxu0
        %v2787 = vadd.f32 0.0, %v2786
        %v2788 = vpop.f32.mrf.mxu0
        %v2789 = vadd.f32 0.0, %v2788
        %v2790 = vpop.f32.mrf.mxu0
        %v2791 = vadd.f32 0.0, %v2790
        %v2792 = vpop.f32.mrf.mxu0
        %v2793 = vadd.f32 0.0, %v2792
        %2794 = vmatprep.mubr.bf16.mxu0 0
        %2795 = vmatmul.mubr.bf16.gmra.mxu0 %v2606
        %v2796 = vpop.f32.mrf.mxu0
        %v2797 = vadd.f32 0.0, %v2796
        %v2798 = vpop.f32.mrf.mxu0
        %v2799 = vadd.f32 0.0, %v2798
        %v2800 = vpop.f32.mrf.mxu0
        %v2801 = vadd.f32 0.0, %v2800
        %v2802 = vpop.f32.mrf.mxu0
        %v2803 = vadd.f32 0.0, %v2802
        %2804 = vmatprep.mubr.bf16.mxu0 0
        %2805 = vmatmul.mubr.bf16.gmra.mxu0 %v2609
        %v2806 = vpop.f32.mrf.mxu0
        %v2807 = vadd.f32 0.0, %v2806
        %v2808 = vpop.f32.mrf.mxu0
        %v2809 = vadd.f32 0.0, %v2808
        %v2810 = vpop.f32.mrf.mxu0
        %v2811 = vadd.f32 0.0, %v2810
        %v2812 = vpop.f32.mrf.mxu0
        %v2813 = vadd.f32 0.0, %v2812
        %2814 = vmatprep.mubr.bf16.mxu0 0
        %2815 = vmatmul.mubr.bf16.gmra.mxu0 %v2612
        %v2816 = vpop.f32.mrf.mxu0
        %v2817 = vadd.f32 0.0, %v2816
        %v2818 = vpop.f32.mrf.mxu0
        %v2819 = vadd.f32 0.0, %v2818
        %v2820 = vpop.f32.mrf.mxu0
        %v2821 = vadd.f32 0.0, %v2820
        %v2822 = vpop.f32.mrf.mxu0
        %v2823 = vadd.f32 0.0, %v2822
        %2824 = vmatprep.mubr.bf16.mxu0 0
        %2825 = vmatmul.mubr.bf16.gmra.mxu0 %v2615
        %v2826 = vpop.f32.mrf.mxu0
        %v2827 = vadd.f32 0.0, %v2826
        %v2828 = vpop.f32.mrf.mxu0
        %v2829 = vadd.f32 0.0, %v2828
        %v2830 = vpop.f32.mrf.mxu0
        %v2831 = vadd.f32 0.0, %v2830
        %v2832 = vpop.f32.mrf.mxu0
        %v2833 = vadd.f32 0.0, %v2832
        %2834 = vmatprep.mubr.bf16.mxu0 0
        %2835 = vmatmul.mubr.bf16.gmra.mxu0 %v2618
        %v2836 = vpop.f32.mrf.mxu0
        %v2837 = vadd.f32 0.0, %v2836
        %v2838 = vpop.f32.mrf.mxu0
        %v2839 = vadd.f32 0.0, %v2838
        %v2840 = vpop.f32.mrf.mxu0
        %v2841 = vadd.f32 0.0, %v2840
        %v2842 = vpop.f32.mrf.mxu0
        %v2843 = vadd.f32 0.0, %v2842
        %2844 = vmatprep.mubr.bf16.mxu0 0
        %2845 = vmatmul.mubr.bf16.gmra.mxu0 %v2621
        %v2846 = vpop.f32.mrf.mxu0
        %v2847 = vadd.f32 0.0, %v2846
        %v2848 = vpop.f32.mrf.mxu0
        %v2849 = vadd.f32 0.0, %v2848
        %v2850 = vpop.f32.mrf.mxu0
        %v2851 = vadd.f32 0.0, %v2850
        %v2852 = vpop.f32.mrf.mxu0
        %v2853 = vadd.f32 0.0, %v2852
        %2854 = vmatprep.mubr.bf16.mxu0 0
        %2855 = vmatmul.mubr.bf16.gmra.mxu0 %v2624
        %v2856 = vpop.f32.mrf.mxu0
        %v2857 = vadd.f32 0.0, %v2856
        %v2858 = vpop.f32.mrf.mxu0
        %v2859 = vadd.f32 0.0, %v2858
        %v2860 = vpop.f32.mrf.mxu0
        %v2861 = vadd.f32 0.0, %v2860
        %v2862 = vpop.f32.mrf.mxu0
        %v2863 = vadd.f32 0.0, %v2862
        %2864 = vmatprep.mubr.bf16.mxu0 0
        %2865 = vmatmul.mubr.bf16.gmra.mxu0 %v2627
        %v2866 = vpop.f32.mrf.mxu0
        %v2867 = vadd.f32 0.0, %v2866
        %v2868 = vpop.f32.mrf.mxu0
        %v2869 = vadd.f32 0.0, %v2868
        %v2870 = vpop.f32.mrf.mxu0
        %v2871 = vadd.f32 0.0, %v2870
        %v2872 = vpop.f32.mrf.mxu0
        %v2873 = vadd.f32 0.0, %v2872
        %2874 = vmatprep.mubr.bf16.mxu0 0
        %2875 = vmatmul.mubr.bf16.gmra.mxu0 %v2630
        %v2876 = vpop.f32.mrf.mxu0
        %v2877 = vadd.f32 0.0, %v2876
        %v2878 = vpop.f32.mrf.mxu0
        %v2879 = vadd.f32 0.0, %v2878
        %v2880 = vpop.f32.mrf.mxu0
        %v2881 = vadd.f32 0.0, %v2880
        %v2882 = vpop.f32.mrf.mxu0
        %v2883 = vadd.f32 0.0, %v2882
        %2884 = vmatprep.mubr.bf16.mxu0 0
        %2885 = vmatmul.mubr.bf16.gmra.mxu0 %v2633
        %v2886 = vpop.f32.mrf.mxu0
        %v2887 = vadd.f32 0.0, %v2886
        %v2888 = vpop.f32.mrf.mxu0
        %v2889 = vadd.f32 0.0, %v2888
        %v2890 = vpop.f32.mrf.mxu0
        %v2891 = vadd.f32 0.0, %v2890
        %v2892 = vpop.f32.mrf.mxu0
        %v2893 = vadd.f32 0.0, %v2892
        %2894 = vmatprep.mubr.bf16.mxu0 0
        %2895 = vmatmul.mubr.bf16.gmra.mxu0 %v2636
        %v2896 = vpop.f32.mrf.mxu0
        %v2897 = vadd.f32 0.0, %v2896
        %v2898 = vpop.f32.mrf.mxu0
        %v2899 = vadd.f32 0.0, %v2898
        %v2900 = vpop.f32.mrf.mxu0
        %v2901 = vadd.f32 0.0, %v2900
        %v2902 = vpop.f32.mrf.mxu0
        %v2903 = vadd.f32 0.0, %v2902
        %2904 = vmatprep.mubr.bf16.mxu0 0
        %2905 = vmatmul.mubr.bf16.gmra.mxu0 %v2639
        %v2906 = vpop.f32.mrf.mxu0
        %v2907 = vadd.f32 0.0, %v2906
        %v2908 = vpop.f32.mrf.mxu0
        %v2909 = vadd.f32 0.0, %v2908
        %v2910 = vpop.f32.mrf.mxu0
        %v2911 = vadd.f32 0.0, %v2910
        %v2912 = vpop.f32.mrf.mxu0
        %v2913 = vadd.f32 0.0, %v2912
        %2914 = vmatprep.mubr.bf16.mxu0 0
        %2915 = vmatmul.mubr.bf16.gmra.mxu0 %v2642
        %v2916 = vpop.f32.mrf.mxu0
        %v2917 = vadd.f32 0.0, %v2916
        %v2918 = vpop.f32.mrf.mxu0
        %v2919 = vadd.f32 0.0, %v2918
        %v2920 = vpop.f32.mrf.mxu0
        %v2921 = vadd.f32 0.0, %v2920
        %v2922 = vpop.f32.mrf.mxu0
        %v2923 = vadd.f32 0.0, %v2922
        %2924 = vmatprep.mubr.bf16.mxu0 0
        %2925 = vmatmul.mubr.bf16.gmra.mxu0 %v2645
        %v2926 = vpop.f32.mrf.mxu0
        %v2927 = vadd.f32 0.0, %v2926
        %v2928 = vpop.f32.mrf.mxu0
        %v2929 = vadd.f32 0.0, %v2928
        %v2930 = vpop.f32.mrf.mxu0
        %v2931 = vadd.f32 0.0, %v2930
        %v2932 = vpop.f32.mrf.mxu0
        %v2933 = vadd.f32 0.0, %v2932
        %2934 = vmatprep.mubr.bf16.mxu0 0
        %2935 = vmatmul.mubr.bf16.gmra.mxu0 %v2648
        %v2936 = vpop.f32.mrf.mxu0
        %v2937 = vadd.f32 0.0, %v2936
        %v2938 = vpop.f32.mrf.mxu0
        %v2939 = vadd.f32 0.0, %v2938
        %v2940 = vpop.f32.mrf.mxu0
        %v2941 = vadd.f32 0.0, %v2940
        %v2942 = vpop.f32.mrf.mxu0
        %v2943 = vadd.f32 0.0, %v2942
        %2944 = vmatprep.mubr.bf16.mxu0 0
        %2945 = vmatmul.mubr.bf16.gmra.mxu0 %v2651
        %v2946 = vpop.f32.mrf.mxu0
        %v2947 = vadd.f32 0.0, %v2946
        %v2948 = vpop.f32.mrf.mxu0
        %v2949 = vadd.f32 0.0, %v2948
        %v2950 = vpop.f32.mrf.mxu0
        %v2951 = vadd.f32 0.0, %v2950
        %v2952 = vpop.f32.mrf.mxu0
        %v2953 = vadd.f32 0.0, %v2952
        %2954 = vdwg.mxu0
        %2955 = vmatprep.subr.bf16.mxu0 0
        %2956 = vmatpush1.bf16.msra.mxu0 0
        %2957 = vmatprep.subr.bf16.mxu0 0
        %2958 = vmatpush1.bf16.msra.mxu0 0
        %2959 = vmatprep.subr.bf16.mxu0 0
        %2960 = vmatpush1.bf16.msra.mxu0 0
        %2961 = vmatprep.subr.bf16.mxu0 0
        %2962 = vmatpush1.bf16.msra.mxu0 0
        %2963 = vmatprep.subr.bf16.mxu0 0
        %2964 = vmatpush1.bf16.msra.mxu0 0
        %2965 = vmatprep.subr.bf16.mxu0 0
        %2966 = vmatpush1.bf16.msra.mxu0 0
        %2967 = vmatprep.subr.bf16.mxu0 0
        %2968 = vmatpush1.bf16.msra.mxu0 %v2660
        %2969 = vmatprep.subr.bf16.mxu0 0
        %2970 = vmatpush1.bf16.msra.mxu0 %v2568
        %2971 = vmatprep.subr.bf16.mxu0 0
        %2972 = vmatpush2.bf16.msra.mxu0 0
        %2973 = vmatprep.subr.bf16.mxu0 0
        %2974 = vmatpush2.bf16.msra.mxu0 0
        %2975 = vmatprep.subr.bf16.mxu0 0
        %2976 = vmatpush2.bf16.msra.mxu0 0
        %2977 = vmatprep.subr.bf16.mxu0 0
        %2978 = vmatpush2.bf16.msra.mxu0 0
        %2979 = vmatprep.subr.bf16.mxu0 0
        %2980 = vmatpush2.bf16.msra.mxu0 0
        %2981 = vmatprep.subr.bf16.mxu0 0
        %2982 = vmatpush2.bf16.msra.mxu0 0
        %2983 = vmatprep.subr.bf16.mxu0 0
        %2984 = vmatpush2.bf16.msra.mxu0 0
        %2985 = vmatprep.subr.bf16.mxu0 0
        %2986 = vmatpush2.bf16.msra.mxu0 0
        %2987 = vmatprep.mubr.bf16.mxu0 0
        %2988 = vmatmul.mubr.bf16.gmra.mxu0 %v2576
        %v2989 = vpop.f32.mrf.mxu0
        %v2990 = vadd.f32 0.0, %v2989
        %v2991 = vpop.f32.mrf.mxu0
        %v2992 = vpop.f32.mrf.mxu0
        %v2993 = vadd.f32 0.0, %v2992
        %v2994 = vpop.f32.mrf.mxu0
        %2995 = vmatprep.mubr.bf16.mxu0 0
        %2996 = vmatmul.mubr.bf16.gmra.mxu0 %v2579
        %v2997 = vpop.f32.mrf.mxu0
        %v2998 = vadd.f32 0.0, %v2997
        %v2999 = vpop.f32.mrf.mxu0
        %v3000 = vpop.f32.mrf.mxu0
        %v3001 = vadd.f32 0.0, %v3000
        %v3002 = vpop.f32.mrf.mxu0
        %3003 = vmatprep.mubr.bf16.mxu0 0
        %3004 = vmatmul.mubr.bf16.gmra.mxu0 %v2582
        %v3005 = vpop.f32.mrf.mxu0
        %v3006 = vadd.f32 0.0, %v3005
        %v3007 = vpop.f32.mrf.mxu0
        %v3008 = vpop.f32.mrf.mxu0
        %v3009 = vadd.f32 0.0, %v3008
        %v3010 = vpop.f32.mrf.mxu0
        %3011 = vmatprep.mubr.bf16.mxu0 0
        %3012 = vmatmul.mubr.bf16.gmra.mxu0 %v2585
        %v3013 = vpop.f32.mrf.mxu0
        %v3014 = vadd.f32 0.0, %v3013
        %v3015 = vpop.f32.mrf.mxu0
        %v3016 = vpop.f32.mrf.mxu0
        %v3017 = vadd.f32 0.0, %v3016
        %v3018 = vpop.f32.mrf.mxu0
        %3019 = vmatprep.mubr.bf16.mxu0 0
        %3020 = vmatmul.mubr.bf16.gmra.mxu0 %v2588
        %v3021 = vpop.f32.mrf.mxu0
        %v3022 = vadd.f32 0.0, %v3021
        %v3023 = vpop.f32.mrf.mxu0
        %v3024 = vpop.f32.mrf.mxu0
        %v3025 = vadd.f32 0.0, %v3024
        %v3026 = vpop.f32.mrf.mxu0
        %3027 = vmatprep.mubr.bf16.mxu0 0
        %3028 = vmatmul.mubr.bf16.gmra.mxu0 %v2591
        %v3029 = vpop.f32.mrf.mxu0
        %v3030 = vadd.f32 0.0, %v3029
        %v3031 = vpop.f32.mrf.mxu0
        %v3032 = vpop.f32.mrf.mxu0
        %v3033 = vadd.f32 0.0, %v3032
        %v3034 = vpop.f32.mrf.mxu0
        %3035 = vmatprep.mubr.bf16.mxu0 0
        %3036 = vmatmul.mubr.bf16.gmra.mxu0 %v2594
        %v3037 = vpop.f32.mrf.mxu0
        %v3038 = vadd.f32 0.0, %v3037
        %v3039 = vpop.f32.mrf.mxu0
        %v3040 = vpop.f32.mrf.mxu0
        %v3041 = vadd.f32 0.0, %v3040
        %v3042 = vpop.f32.mrf.mxu0
        %3043 = vmatprep.mubr.bf16.mxu0 0
        %3044 = vmatmul.mubr.bf16.gmra.mxu0 %v2597
        %v3045 = vpop.f32.mrf.mxu0
        %v3046 = vadd.f32 0.0, %v3045
        %v3047 = vpop.f32.mrf.mxu0
        %v3048 = vpop.f32.mrf.mxu0
        %v3049 = vadd.f32 0.0, %v3048
        %v3050 = vpop.f32.mrf.mxu0
        %3051 = vmatprep.mubr.bf16.mxu0 0
        %3052 = vmatmul.mubr.bf16.gmra.mxu0 %v2600
        %v3053 = vpop.f32.mrf.mxu0
        %v3054 = vadd.f32 0.0, %v3053
        %v3055 = vpop.f32.mrf.mxu0
        %v3056 = vpop.f32.mrf.mxu0
        %v3057 = vadd.f32 0.0, %v3056
        %v3058 = vpop.f32.mrf.mxu0
        %3059 = vmatprep.mubr.bf16.mxu0 0
        %3060 = vmatmul.mubr.bf16.gmra.mxu0 %v2603
        %v3061 = vpop.f32.mrf.mxu0
        %v3062 = vadd.f32 0.0, %v3061
        %v3063 = vpop.f32.mrf.mxu0
        %v3064 = vpop.f32.mrf.mxu0
        %v3065 = vadd.f32 0.0, %v3064
        %v3066 = vpop.f32.mrf.mxu0
        %3067 = vmatprep.mubr.bf16.mxu0 0
        %3068 = vmatmul.mubr.bf16.gmra.mxu0 %v2606
        %v3069 = vpop.f32.mrf.mxu0
        %v3070 = vadd.f32 0.0, %v3069
        %v3071 = vpop.f32.mrf.mxu0
        %v3072 = vpop.f32.mrf.mxu0
        %v3073 = vadd.f32 0.0, %v3072
        %v3074 = vpop.f32.mrf.mxu0
        %3075 = vmatprep.mubr.bf16.mxu0 0
        %3076 = vmatmul.mubr.bf16.gmra.mxu0 %v2609
        %v3077 = vpop.f32.mrf.mxu0
        %v3078 = vadd.f32 0.0, %v3077
        %v3079 = vpop.f32.mrf.mxu0
        %v3080 = vpop.f32.mrf.mxu0
        %v3081 = vadd.f32 0.0, %v3080
        %v3082 = vpop.f32.mrf.mxu0
        %3083 = vmatprep.mubr.bf16.mxu0 0
        %3084 = vmatmul.mubr.bf16.gmra.mxu0 %v2612
        %v3085 = vpop.f32.mrf.mxu0
        %v3086 = vadd.f32 0.0, %v3085
        %v3087 = vpop.f32.mrf.mxu0
        %v3088 = vpop.f32.mrf.mxu0
        %v3089 = vadd.f32 0.0, %v3088
        %v3090 = vpop.f32.mrf.mxu0
        %3091 = vmatprep.mubr.bf16.mxu0 0
        %3092 = vmatmul.mubr.bf16.gmra.mxu0 %v2615
        %v3093 = vpop.f32.mrf.mxu0
        %v3094 = vadd.f32 0.0, %v3093
        %v3095 = vpop.f32.mrf.mxu0
        %v3096 = vpop.f32.mrf.mxu0
        %v3097 = vadd.f32 0.0, %v3096
        %v3098 = vpop.f32.mrf.mxu0
        %3099 = vmatprep.mubr.bf16.mxu0 0
        %3100 = vmatmul.mubr.bf16.gmra.mxu0 %v2618
        %v3101 = vpop.f32.mrf.mxu0
        %v3102 = vadd.f32 0.0, %v3101
        %v3103 = vpop.f32.mrf.mxu0
        %v3104 = vpop.f32.mrf.mxu0
        %v3105 = vadd.f32 0.0, %v3104
        %v3106 = vpop.f32.mrf.mxu0
        %3107 = vmatprep.mubr.bf16.mxu0 0
        %3108 = vmatmul.mubr.bf16.gmra.mxu0 %v2621
        %v3109 = vpop.f32.mrf.mxu0
        %v3110 = vadd.f32 0.0, %v3109
        %v3111 = vpop.f32.mrf.mxu0
        %v3112 = vpop.f32.mrf.mxu0
        %v3113 = vadd.f32 0.0, %v3112
        %v3114 = vpop.f32.mrf.mxu0
        %3115 = vmatprep.mubr.bf16.mxu0 0
        %3116 = vmatmul.mubr.bf16.gmra.mxu0 %v2624
        %v3117 = vpop.f32.mrf.mxu0
        %v3118 = vadd.f32 0.0, %v3117
        %v3119 = vpop.f32.mrf.mxu0
        %v3120 = vpop.f32.mrf.mxu0
        %v3121 = vadd.f32 0.0, %v3120
        %v3122 = vpop.f32.mrf.mxu0
        %3123 = vmatprep.mubr.bf16.mxu0 0
        %3124 = vmatmul.mubr.bf16.gmra.mxu0 %v2627
        %v3125 = vpop.f32.mrf.mxu0
        %v3126 = vadd.f32 0.0, %v3125
        %v3127 = vpop.f32.mrf.mxu0
        %v3128 = vpop.f32.mrf.mxu0
        %v3129 = vadd.f32 0.0, %v3128
        %v3130 = vpop.f32.mrf.mxu0
        %3131 = vmatprep.mubr.bf16.mxu0 0
        %3132 = vmatmul.mubr.bf16.gmra.mxu0 %v2630
        %v3133 = vpop.f32.mrf.mxu0
        %v3134 = vadd.f32 0.0, %v3133
        %v3135 = vpop.f32.mrf.mxu0
        %v3136 = vpop.f32.mrf.mxu0
        %v3137 = vadd.f32 0.0, %v3136
        %v3138 = vpop.f32.mrf.mxu0
        %3139 = vmatprep.mubr.bf16.mxu0 0
        %3140 = vmatmul.mubr.bf16.gmra.mxu0 %v2633
        %v3141 = vpop.f32.mrf.mxu0
        %v3142 = vadd.f32 0.0, %v3141
        %v3143 = vpop.f32.mrf.mxu0
        %v3144 = vpop.f32.mrf.mxu0
        %v3145 = vadd.f32 0.0, %v3144
        %v3146 = vpop.f32.mrf.mxu0
        %3147 = vmatprep.mubr.bf16.mxu0 0
        %3148 = vmatmul.mubr.bf16.gmra.mxu0 %v2636
        %v3149 = vpop.f32.mrf.mxu0
        %v3150 = vadd.f32 0.0, %v3149
        %v3151 = vpop.f32.mrf.mxu0
        %v3152 = vpop.f32.mrf.mxu0
        %v3153 = vadd.f32 0.0, %v3152
        %v3154 = vpop.f32.mrf.mxu0
        %3155 = vmatprep.mubr.bf16.mxu0 0
        %3156 = vmatmul.mubr.bf16.gmra.mxu0 %v2639
        %v3157 = vpop.f32.mrf.mxu0
        %v3158 = vadd.f32 0.0, %v3157
        %v3159 = vpop.f32.mrf.mxu0
        %v3160 = vpop.f32.mrf.mxu0
        %v3161 = vadd.f32 0.0, %v3160
        %v3162 = vpop.f32.mrf.mxu0
        %3163 = vmatprep.mubr.bf16.mxu0 0
        %3164 = vmatmul.mubr.bf16.gmra.mxu0 %v2642
        %v3165 = vpop.f32.mrf.mxu0
        %v3166 = vadd.f32 0.0, %v3165
        %v3167 = vpop.f32.mrf.mxu0
        %v3168 = vpop.f32.mrf.mxu0
        %v3169 = vadd.f32 0.0, %v3168
        %v3170 = vpop.f32.mrf.mxu0
        %3171 = vmatprep.mubr.bf16.mxu0 0
        %3172 = vmatmul.mubr.bf16.gmra.mxu0 %v2645
        %v3173 = vpop.f32.mrf.mxu0
        %v3174 = vadd.f32 0.0, %v3173
        %v3175 = vpop.f32.mrf.mxu0
        %v3176 = vpop.f32.mrf.mxu0
        %v3177 = vadd.f32 0.0, %v3176
        %v3178 = vpop.f32.mrf.mxu0
        %3179 = vmatprep.mubr.bf16.mxu0 0
        %3180 = vmatmul.mubr.bf16.gmra.mxu0 %v2648
        %v3181 = vpop.f32.mrf.mxu0
        %v3182 = vadd.f32 0.0, %v3181
        %v3183 = vpop.f32.mrf.mxu0
        %v3184 = vpop.f32.mrf.mxu0
        %v3185 = vadd.f32 0.0, %v3184
        %v3186 = vpop.f32.mrf.mxu0
        %3187 = vmatprep.mubr.bf16.mxu0 0
        %3188 = vmatmul.mubr.bf16.gmra.mxu0 %v2651
        %v3189 = vpop.f32.mrf.mxu0
        %v3190 = vadd.f32 0.0, %v3189
        %v3191 = vpop.f32.mrf.mxu0
        %v3192 = vpop.f32.mrf.mxu0
        %v3193 = vadd.f32 0.0, %v3192
        %v3194 = vpop.f32.mrf.mxu0
        %3195 = vdwg.mxu0
        %v3196 = vadd.f32 %v1855, %v2697
        %v3197 = vadd.f32 %v1857, %v2699
        %v3198 = vadd.f32 %v2148, %v2990
        %v3199 = vadd.f32 %v1859, %v2701
        %v3200 = vadd.f32 %v1861, %v2703
        %v3201 = vadd.f32 %v2151, %v2993
        %v3202 = vadd.f32 %v1865, %v2707
        %v3203 = vadd.f32 %v1867, %v2709
        %v3204 = vadd.f32 %v2156, %v2998
        %v3205 = vadd.f32 %v1869, %v2711
        %v3206 = vadd.f32 %v1871, %v2713
        %v3207 = vadd.f32 %v2159, %v3001
        %v3208 = vadd.f32 %v1875, %v2717
        %v3209 = vadd.f32 %v1877, %v2719
        %v3210 = vadd.f32 %v2164, %v3006
        %v3211 = vadd.f32 %v1879, %v2721
        %v3212 = vadd.f32 %v1881, %v2723
        %v3213 = vadd.f32 %v2167, %v3009
        %v3214 = vadd.f32 %v1885, %v2727
        %v3215 = vadd.f32 %v1887, %v2729
        %v3216 = vadd.f32 %v2172, %v3014
        %v3217 = vadd.f32 %v1889, %v2731
        %v3218 = vadd.f32 %v1891, %v2733
        %v3219 = vadd.f32 %v2175, %v3017
        %v3220 = vadd.f32 %v1895, %v2737
        %v3221 = vadd.f32 %v1897, %v2739
        %v3222 = vadd.f32 %v2180, %v3022
        %v3223 = vadd.f32 %v1899, %v2741
        %v3224 = vadd.f32 %v1901, %v2743
        %v3225 = vadd.f32 %v2183, %v3025
        %v3226 = vadd.f32 %v1905, %v2747
        %v3227 = vadd.f32 %v1907, %v2749
        %v3228 = vadd.f32 %v2188, %v3030
        %v3229 = vadd.f32 %v1909, %v2751
        %v3230 = vadd.f32 %v1911, %v2753
        %v3231 = vadd.f32 %v2191, %v3033
        %v3232 = vadd.f32 %v1915, %v2757
        %v3233 = vadd.f32 %v1917, %v2759
        %v3234 = vadd.f32 %v2196, %v3038
        %v3235 = vadd.f32 %v1919, %v2761
        %v3236 = vadd.f32 %v1921, %v2763
        %v3237 = vadd.f32 %v2199, %v3041
        %v3238 = vadd.f32 %v1925, %v2767
        %v3239 = vadd.f32 %v1927, %v2769
        %v3240 = vadd.f32 %v2204, %v3046
        %v3241 = vadd.f32 %v1929, %v2771
        %v3242 = vadd.f32 %v1931, %v2773
        %v3243 = vadd.f32 %v2207, %v3049
        %v3244 = vadd.f32 %v1935, %v2777
        %v3245 = vadd.f32 %v1937, %v2779
        %v3246 = vadd.f32 %v2212, %v3054
        %v3247 = vadd.f32 %v1939, %v2781
        %v3248 = vadd.f32 %v1941, %v2783
        %v3249 = vadd.f32 %v2215, %v3057
        %v3250 = vadd.f32 %v1945, %v2787
        %v3251 = vadd.f32 %v1947, %v2789
        %v3252 = vadd.f32 %v2220, %v3062
        %v3253 = vadd.f32 %v1949, %v2791
        %v3254 = vadd.f32 %v1951, %v2793
        %v3255 = vadd.f32 %v2223, %v3065
        %v3256 = vadd.f32 %v1955, %v2797
        %v3257 = vadd.f32 %v1957, %v2799
        %v3258 = vadd.f32 %v2228, %v3070
        %v3259 = vadd.f32 %v1959, %v2801
        %v3260 = vadd.f32 %v1961, %v2803
        %v3261 = vadd.f32 %v2231, %v3073
        %v3262 = vadd.f32 %v1965, %v2807
        %v3263 = vadd.f32 %v1967, %v2809
        %v3264 = vadd.f32 %v2236, %v3078
        %v3265 = vadd.f32 %v1969, %v2811
        %v3266 = vadd.f32 %v1971, %v2813
        %v3267 = vadd.f32 %v2239, %v3081
        %v3268 = vadd.f32 %v1975, %v2817
        %v3269 = vadd.f32 %v1977, %v2819
        %v3270 = vadd.f32 %v2244, %v3086
        %v3271 = vadd.f32 %v1979, %v2821
        %v3272 = vadd.f32 %v1981, %v2823
        %v3273 = vadd.f32 %v2247, %v3089
        %v3274 = vadd.f32 %v1985, %v2827
        %v3275 = vadd.f32 %v1987, %v2829
        %v3276 = vadd.f32 %v2252, %v3094
        %v3277 = vadd.f32 %v1989, %v2831
        %v3278 = vadd.f32 %v1991, %v2833
        %v3279 = vadd.f32 %v2255, %v3097
        %v3280 = vadd.f32 %v1995, %v2837
        %v3281 = vadd.f32 %v1997, %v2839
        %v3282 = vadd.f32 %v2260, %v3102
        %v3283 = vadd.f32 %v1999, %v2841
        %v3284 = vadd.f32 %v2001, %v2843
        %v3285 = vadd.f32 %v2263, %v3105
        %v3286 = vadd.f32 %v2005, %v2847
        %v3287 = vadd.f32 %v2007, %v2849
        %v3288 = vadd.f32 %v2268, %v3110
        %v3289 = vadd.f32 %v2009, %v2851
        %v3290 = vadd.f32 %v2011, %v2853
        %v3291 = vadd.f32 %v2271, %v3113
        %v3292 = vadd.f32 %v2015, %v2857
        %v3293 = vadd.f32 %v2017, %v2859
        %v3294 = vadd.f32 %v2276, %v3118
        %v3295 = vadd.f32 %v2019, %v2861
        %v3296 = vadd.f32 %v2021, %v2863
        %v3297 = vadd.f32 %v2279, %v3121
        %v3298 = vadd.f32 %v2025, %v2867
        %v3299 = vadd.f32 %v2027, %v2869
        %v3300 = vadd.f32 %v2284, %v3126
        %v3301 = vadd.f32 %v2029, %v2871
        %v3302 = vadd.f32 %v2031, %v2873
        %v3303 = vadd.f32 %v2287, %v3129
        %v3304 = vadd.f32 %v2035, %v2877
        %v3305 = vadd.f32 %v2037, %v2879
        %v3306 = vadd.f32 %v2292, %v3134
        %v3307 = vadd.f32 %v2039, %v2881
        %v3308 = vadd.f32 %v2041, %v2883
        %v3309 = vadd.f32 %v2295, %v3137
        %v3310 = vadd.f32 %v2045, %v2887
        %v3311 = vadd.f32 %v2047, %v2889
        %v3312 = vadd.f32 %v2300, %v3142
        %v3313 = vadd.f32 %v2049, %v2891
        %v3314 = vadd.f32 %v2051, %v2893
        %v3315 = vadd.f32 %v2303, %v3145
        %v3316 = vadd.f32 %v2055, %v2897
        %v3317 = vadd.f32 %v2057, %v2899
        %v3318 = vadd.f32 %v2308, %v3150
        %v3319 = vadd.f32 %v2059, %v2901
        %v3320 = vadd.f32 %v2061, %v2903
        %v3321 = vadd.f32 %v2311, %v3153
        %v3322 = vadd.f32 %v2065, %v2907
        %v3323 = vadd.f32 %v2067, %v2909
        %v3324 = vadd.f32 %v2316, %v3158
        %v3325 = vadd.f32 %v2069, %v2911
        %v3326 = vadd.f32 %v2071, %v2913
        %v3327 = vadd.f32 %v2319, %v3161
        %v3328 = vadd.f32 %v2075, %v2917
        %v3329 = vadd.f32 %v2077, %v2919
        %v3330 = vadd.f32 %v2324, %v3166
        %v3331 = vadd.f32 %v2079, %v2921
        %v3332 = vadd.f32 %v2081, %v2923
        %v3333 = vadd.f32 %v2327, %v3169
        %v3334 = vadd.f32 %v2085, %v2927
        %v3335 = vadd.f32 %v2087, %v2929
        %v3336 = vadd.f32 %v2332, %v3174
        %v3337 = vadd.f32 %v2089, %v2931
        %v3338 = vadd.f32 %v2091, %v2933
        %v3339 = vadd.f32 %v2335, %v3177
        %v3340 = vadd.f32 %v2095, %v2937
        %v3341 = vadd.f32 %v2097, %v2939
        %v3342 = vadd.f32 %v2340, %v3182
        %v3343 = vadd.f32 %v2099, %v2941
        %v3344 = vadd.f32 %v2101, %v2943
        %v3345 = vadd.f32 %v2343, %v3185
        %v3346 = vadd.f32 %v2105, %v2947
        %v3347 = vadd.f32 %v2107, %v2949
        %v3348 = vadd.f32 %v2348, %v3190
        %v3349 = vadd.f32 %v2109, %v2951
        %v3350 = vadd.f32 %v2111, %v2953
        %v3351 = vadd.f32 %v2351, %v3193
        %s3352 = scalar_lea.vmem %s625, 24 [#allocation4]
        %v3353 = vld [vmem:[%s3352] sm:$0xf]
        %v3354 = vld [vmem:[%s3352 + $0x4] sm:$0xf]
        %v3355 = vld [vmem:[%s3352 + $0x8] sm:$0xf]
        %v3356 = vld [vmem:[%s3352 + $0xc] sm:$0xf]
        %v3357 = vld [vmem:[%s3352 + $0x10] sm:$0xf]
        %v3358 = vld [vmem:[%s3352 + $0x14] sm:$0xf]
        %v3359 = vld [vmem:[%s3352 + $0x18] sm:$0xf]
        %v3360 = vld [vmem:[%s3352 + $0x1c] sm:$0xf]
        %v3361 = vld [vmem:[%s3352 + $0x20] sm:$0xf]
        %v3362 = vld [vmem:[%s3352 + $0x24] sm:$0xf]
        %v3363 = vld [vmem:[%s3352 + $0x28] sm:$0xf]
        %v3364 = vld [vmem:[%s3352 + $0x2c] sm:$0xf]
        %v3365 = vld [vmem:[%s3352 + $0x30] sm:$0xf]
        %v3366 = vld [vmem:[%s3352 + $0x34] sm:$0xf]
        %v3367 = vld [vmem:[%s3352 + $0x38] sm:$0xf]
        %v3368 = vld [vmem:[%s3352 + $0x3c] sm:$0xf]
        %v3369 = vld [vmem:[%s3352 + $0x40] sm:$0xf]
        %v3370 = vld [vmem:[%s3352 + $0x44] sm:$0xf]
        %v3371 = vld [vmem:[%s3352 + $0x48] sm:$0xf]
        %v3372 = vld [vmem:[%s3352 + $0x4c] sm:$0xf]
        %v3373 = vld [vmem:[%s3352 + $0x50] sm:$0xf]
        %v3374 = vld [vmem:[%s3352 + $0x54] sm:$0xf]
        %v3375 = vld [vmem:[%s3352 + $0x58] sm:$0xf]
        %v3376 = vld [vmem:[%s3352 + $0x5c] sm:$0xf]
        %v3377 = vld [vmem:[%s3352 + $0x60] sm:$0xf]
        %v3378 = vld [vmem:[%s3352 + $0x64] sm:$0xf]
        %v3379 = vld [vmem:[%s3352 + $0x68] sm:$0xf]
        %v3380 = vld [vmem:[%s3352 + $0x6c] sm:$0xf]
        %v3381 = vld [vmem:[%s3352 + $0x70] sm:$0xf]
        %v3382 = vld [vmem:[%s3352 + $0x74] sm:$0xf]
        %v3383 = vld [vmem:[%s3352 + $0x78] sm:$0xf]
        %v3384 = vld [vmem:[%s3352 + $0x7c] sm:$0xf]
        %v3385 = vld [vmem:[%s3352 + $0x80] sm:$0xf]
        %v3386 = vld [vmem:[%s3352 + $0x84] sm:$0xf]
        %v3387 = vld [vmem:[%s3352 + $0x88] sm:$0xf]
        %v3388 = vld [vmem:[%s3352 + $0x8c] sm:$0xf]
        %v3389 = vld [vmem:[%s3352 + $0x90] sm:$0xf]
        %v3390 = vld [vmem:[%s3352 + $0x94] sm:$0xf]
        %v3391 = vld [vmem:[%s3352 + $0x98] sm:$0xf]
        %v3392 = vld [vmem:[%s3352 + $0x9c] sm:$0xf]
        %v3393 = vld [vmem:[%s3352 + $0xa0] sm:$0xf]
        %v3394 = vld [vmem:[%s3352 + $0xa4] sm:$0xf]
        %v3395 = vld [vmem:[%s3352 + $0xa8] sm:$0xf]
        %v3396 = vld [vmem:[%s3352 + $0xac] sm:$0xf]
        %v3397 = vld [vmem:[%s3352 + $0xb0] sm:$0xf]
        %v3398 = vld [vmem:[%s3352 + $0xb4] sm:$0xf]
        %v3399 = vld [vmem:[%s3352 + $0xb8] sm:$0xf]
        %v3400 = vld [vmem:[%s3352 + $0xbc] sm:$0xf]
        %v3401 = vld [vmem:[%s3352 + $0xc0] sm:$0xf]
        %v3402 = vld [vmem:[%s3352 + $0xc4] sm:$0xf]
        %v3403 = vld [vmem:[%s3352 + $0xc8] sm:$0xf]
        %v3404 = vld [vmem:[%s3352 + $0xcc] sm:$0xf]
        %s3405 = scalar_lea.vmem %s1, 144
        %v3406 = vld [vmem:[%s3405] sm:$0xff]
        %v3407 = vld [vmem:[%s3405 + $0x8] sm:$0xf]
        %v3408 = vld [vmem:[%s3405 + $0xc] sm:$0xff]
        %v3409 = vld [vmem:[%s3405 + $0x14] sm:$0xf]
        %v3410 = vld [vmem:[%s3405 + $0x18] sm:$0xff]
        %v3411 = vld [vmem:[%s3405 + $0x20] sm:$0xf]
        %v3412 = vld [vmem:[%s3405 + $0x24] sm:$0x33]
        %v3413 = vld [vmem:[%s3405 + $0x2c] sm:$0x3]
        %v3466 = vunpack.c.l.b16 %v3353
        %v3467 = vunpack.c.l.b16 %v3354
        %v3468 = vunpack.c.l.b16 %v3355
        %v3469 = vunpack.c.l.b16 %v3356
        %v3470 = vunpack.c.l.b16 %v3357
        %v3471 = vunpack.c.l.b16 %v3358
        %v3472 = vunpack.c.l.b16 %v3359
        %v3473 = vunpack.c.l.b16 %v3360
        %v3474 = vunpack.c.l.b16 %v3361
        %v3475 = vunpack.c.l.b16 %v3362
        %v3476 = vunpack.c.l.b16 %v3363
        %v3477 = vunpack.c.l.b16 %v3364
        %v3478 = vunpack.c.l.b16 %v3365
        %v3479 = vunpack.c.l.b16 %v3366
        %v3480 = vunpack.c.l.b16 %v3367
        %v3481 = vunpack.c.l.b16 %v3368
        %v3482 = vunpack.c.l.b16 %v3369
        %v3483 = vunpack.c.l.b16 %v3370
        %v3484 = vunpack.c.l.b16 %v3371
        %v3485 = vunpack.c.l.b16 %v3372
        %v3486 = vunpack.c.l.b16 %v3373
        %v3487 = vunpack.c.l.b16 %v3374
        %v3488 = vunpack.c.l.b16 %v3375
        %v3489 = vunpack.c.l.b16 %v3376
        %v3490 = vunpack.c.l.b16 %v3377
        %v3491 = vunpack.c.l.b16 %v3378
        %v3492 = vunpack.c.l.b16 %v3379
        %v3493 = vunpack.c.l.b16 %v3380
        %v3494 = vunpack.c.l.b16 %v3381
        %v3495 = vunpack.c.l.b16 %v3382
        %v3496 = vunpack.c.l.b16 %v3383
        %v3497 = vunpack.c.l.b16 %v3384
        %v3498 = vunpack.c.l.b16 %v3385
        %v3499 = vunpack.c.l.b16 %v3386
        %v3500 = vunpack.c.l.b16 %v3387
        %v3501 = vunpack.c.l.b16 %v3388
        %v3502 = vunpack.c.l.b16 %v3389
        %v3503 = vunpack.c.l.b16 %v3390
        %v3504 = vunpack.c.l.b16 %v3391
        %v3505 = vunpack.c.l.b16 %v3392
        %v3506 = vunpack.c.l.b16 %v3393
        %v3507 = vunpack.c.l.b16 %v3394
        %v3508 = vunpack.c.l.b16 %v3395
        %v3509 = vunpack.c.l.b16 %v3396
        %v3510 = vunpack.c.l.b16 %v3397
        %v3511 = vunpack.c.l.b16 %v3398
        %v3512 = vunpack.c.l.b16 %v3399
        %v3513 = vunpack.c.l.b16 %v3400
        %v3514 = vunpack.c.l.b16 %v3401
        %v3515 = vunpack.c.l.b16 %v3402
        %v3516 = vunpack.c.l.b16 %v3403
        %v3517 = vunpack.c.l.b16 %v3404
        %v3518 = vpack.c.b16 %v3467, %v3466
        %v3519 = vpack.c.b16 %v3469, %v3468
        %v3520 = vpack.c.b16 %v3471, %v3470
        %v3521 = vpack.c.b16 %v3473, %v3472
        %v3522 = vpack.c.b16 %v3475, %v3474
        %v3523 = vpack.c.b16 %v3477, %v3476
        %v3524 = vpack.c.b16 %v3479, %v3478
        %v3525 = vpack.c.b16 %v3481, %v3480
        %v3526 = vpack.c.b16 %v3483, %v3482
        %v3527 = vpack.c.b16 %v3485, %v3484
        %v3528 = vpack.c.b16 %v3487, %v3486
        %v3529 = vpack.c.b16 %v3489, %v3488
        %v3530 = vpack.c.b16 %v3491, %v3490
        %v3531 = vpack.c.b16 %v3493, %v3492
        %v3532 = vpack.c.b16 %v3495, %v3494
        %v3533 = vpack.c.b16 %v3497, %v3496
        %v3534 = vpack.c.b16 %v3499, %v3498
        %v3535 = vpack.c.b16 %v3501, %v3500
        %v3536 = vpack.c.b16 %v3503, %v3502
        %v3537 = vpack.c.b16 %v3505, %v3504
        %v3538 = vpack.c.b16 %v3507, %v3506
        %v3539 = vpack.c.b16 %v3509, %v3508
        %v3540 = vpack.c.b16 %v3511, %v3510
        %v3541 = vpack.c.b16 %v3513, %v3512
        %v3542 = vpack.c.b16 %v3515, %v3514
        %v3543 = vpack.c.b16 %v3517, %v3516
        %v3552 = vunpack.c.l.b16 %v3406
        %v3553 = vunpack.c.h.b16 %v3406
        %v3554 = vunpack.c.l.b16 %v3407
        %v3555 = vunpack.c.l.b16 %v3408
        %v3556 = vunpack.c.h.b16 %v3408
        %v3557 = vunpack.c.l.b16 %v3409
        %v3558 = vunpack.c.l.b16 %v3410
        %v3559 = vunpack.c.h.b16 %v3410
        %v3560 = vunpack.c.l.b16 %v3411
        %v3561 = vunpack.c.l.b16 %v3412
        %v3562 = vunpack.c.h.b16 %v3412
        %v3563 = vunpack.c.l.b16 %v3413
        %v3564 = vpack.c.b16 %v3555, %v3552
        %v3565 = vpack.c.b16 %v3556, %v3553
        %v3566 = vpack.c.b16 %v3557, %v3554
        %v3567 = vpack.c.b16 %v3561, %v3558
        %v3568 = vpack.c.b16 %v3562, %v3559
        %v3569 = vpack.c.b16 %v3563, %v3560
        %v3574 = vsel %vm951, %v3518, 0
        %v3577 = vsel %vm951, %v3519, 0
        %v3580 = vsel %vm951, %v3520, 0
        %v3583 = vsel %vm951, %v3521, 0
        %v3586 = vsel %vm951, %v3522, 0
        %v3589 = vsel %vm951, %v3523, 0
        %v3592 = vsel %vm951, %v3524, 0
        %v3595 = vsel %vm951, %v3525, 0
        %v3598 = vsel %vm951, %v3526, 0
        %v3601 = vsel %vm951, %v3527, 0
        %v3604 = vsel %vm951, %v3528, 0
        %v3607 = vsel %vm951, %v3529, 0
        %v3610 = vsel %vm951, %v3530, 0
        %v3613 = vsel %vm951, %v3531, 0
        %v3616 = vsel %vm951, %v3532, 0
        %v3619 = vsel %vm951, %v3533, 0
        %v3622 = vsel %vm951, %v3534, 0
        %v3625 = vsel %vm951, %v3535, 0
        %v3628 = vsel %vm951, %v3536, 0
        %v3631 = vsel %vm951, %v3537, 0
        %v3634 = vsel %vm951, %v3538, 0
        %v3637 = vsel %vm951, %v3539, 0
        %v3640 = vsel %vm951, %v3540, 0
        %v3643 = vsel %vm951, %v3541, 0
        %v3646 = vsel %vm951, %v3542, 0
        %v3649 = vsel %vm951, %v3543, 0
        %v3652 = vsel %vm1030, %v3567, 0
        %v3655 = vsel %vm1030, %v3568, 0
        %v3658 = vsel %vm1030, %v3569, 0
        %3660 = vmatprep.subr.bf16.mxu0 0
        %3661 = vmatpush1.bf16.msra.mxu0 0
        %3662 = vmatprep.subr.bf16.mxu0 0
        %3663 = vmatpush1.bf16.msra.mxu0 0
        %3664 = vmatprep.subr.bf16.mxu0 0
        %3665 = vmatpush1.bf16.msra.mxu0 0
        %3666 = vmatprep.subr.bf16.mxu0 0
        %3667 = vmatpush1.bf16.msra.mxu0 0
        %3668 = vmatprep.subr.bf16.mxu0 0
        %3669 = vmatpush1.bf16.msra.mxu0 0
        %3670 = vmatprep.subr.bf16.mxu0 0
        %3671 = vmatpush1.bf16.msra.mxu0 0
        %3672 = vmatprep.subr.bf16.mxu0 %v3655
        %3673 = vmatpush1.bf16.msra.mxu0 %v3652
        %3674 = vmatprep.subr.bf16.mxu0 %v3565
        %3675 = vmatpush1.bf16.msra.mxu0 %v3564
        %3676 = vmatprep.subr.bf16.mxu0 0
        %3677 = vmatpush2.bf16.msra.mxu0 0
        %3678 = vmatprep.subr.bf16.mxu0 0
        %3679 = vmatpush2.bf16.msra.mxu0 0
        %3680 = vmatprep.subr.bf16.mxu0 0
        %3681 = vmatpush2.bf16.msra.mxu0 0
        %3682 = vmatprep.subr.bf16.mxu0 0
        %3683 = vmatpush2.bf16.msra.mxu0 0
        %3684 = vmatprep.subr.bf16.mxu0 0
        %3685 = vmatpush2.bf16.msra.mxu0 0
        %3686 = vmatprep.subr.bf16.mxu0 0
        %3687 = vmatpush2.bf16.msra.mxu0 0
        %3688 = vmatprep.subr.bf16.mxu0 0
        %3689 = vmatpush2.bf16.msra.mxu0 0
        %3690 = vmatprep.subr.bf16.mxu0 0
        %3691 = vmatpush2.bf16.msra.mxu0 0
        %3692 = vmatprep.mubr.bf16.mxu0 0
        %3693 = vmatmul.mubr.bf16.gmra.mxu0 %v3574
        %v3694 = vpop.f32.mrf.mxu0
        %v3695 = vadd.f32 0.0, %v3694
        %v3696 = vpop.f32.mrf.mxu0
        %v3697 = vadd.f32 0.0, %v3696
        %v3698 = vpop.f32.mrf.mxu0
        %v3699 = vadd.f32 0.0, %v3698
        %v3700 = vpop.f32.mrf.mxu0
        %v3701 = vadd.f32 0.0, %v3700
        %3702 = vmatprep.mubr.bf16.mxu0 0
        %3703 = vmatmul.mubr.bf16.gmra.mxu0 %v3577
        %v3704 = vpop.f32.mrf.mxu0
        %v3705 = vadd.f32 0.0, %v3704
        %v3706 = vpop.f32.mrf.mxu0
        %v3707 = vadd.f32 0.0, %v3706
        %v3708 = vpop.f32.mrf.mxu0
        %v3709 = vadd.f32 0.0, %v3708
        %v3710 = vpop.f32.mrf.mxu0
        %v3711 = vadd.f32 0.0, %v3710
        %3712 = vmatprep.mubr.bf16.mxu0 0
        %3713 = vmatmul.mubr.bf16.gmra.mxu0 %v3580
        %v3714 = vpop.f32.mrf.mxu0
        %v3715 = vadd.f32 0.0, %v3714
        %v3716 = vpop.f32.mrf.mxu0
        %v3717 = vadd.f32 0.0, %v3716
        %v3718 = vpop.f32.mrf.mxu0
        %v3719 = vadd.f32 0.0, %v3718
        %v3720 = vpop.f32.mrf.mxu0
        %v3721 = vadd.f32 0.0, %v3720
        %3722 = vmatprep.mubr.bf16.mxu0 0
        %3723 = vmatmul.mubr.bf16.gmra.mxu0 %v3583
        %v3724 = vpop.f32.mrf.mxu0
        %v3725 = vadd.f32 0.0, %v3724
        %v3726 = vpop.f32.mrf.mxu0
        %v3727 = vadd.f32 0.0, %v3726
        %v3728 = vpop.f32.mrf.mxu0
        %v3729 = vadd.f32 0.0, %v3728
        %v3730 = vpop.f32.mrf.mxu0
        %v3731 = vadd.f32 0.0, %v3730
        %3732 = vmatprep.mubr.bf16.mxu0 0
        %3733 = vmatmul.mubr.bf16.gmra.mxu0 %v3586
        %v3734 = vpop.f32.mrf.mxu0
        %v3735 = vadd.f32 0.0, %v3734
        %v3736 = vpop.f32.mrf.mxu0
        %v3737 = vadd.f32 0.0, %v3736
        %v3738 = vpop.f32.mrf.mxu0
        %v3739 = vadd.f32 0.0, %v3738
        %v3740 = vpop.f32.mrf.mxu0
        %v3741 = vadd.f32 0.0, %v3740
        %3742 = vmatprep.mubr.bf16.mxu0 0
        %3743 = vmatmul.mubr.bf16.gmra.mxu0 %v3589
        %v3744 = vpop.f32.mrf.mxu0
        %v3745 = vadd.f32 0.0, %v3744
        %v3746 = vpop.f32.mrf.mxu0
        %v3747 = vadd.f32 0.0, %v3746
        %v3748 = vpop.f32.mrf.mxu0
        %v3749 = vadd.f32 0.0, %v3748
        %v3750 = vpop.f32.mrf.mxu0
        %v3751 = vadd.f32 0.0, %v3750
        %3752 = vmatprep.mubr.bf16.mxu0 0
        %3753 = vmatmul.mubr.bf16.gmra.mxu0 %v3592
        %v3754 = vpop.f32.mrf.mxu0
        %v3755 = vadd.f32 0.0, %v3754
        %v3756 = vpop.f32.mrf.mxu0
        %v3757 = vadd.f32 0.0, %v3756
        %v3758 = vpop.f32.mrf.mxu0
        %v3759 = vadd.f32 0.0, %v3758
        %v3760 = vpop.f32.mrf.mxu0
        %v3761 = vadd.f32 0.0, %v3760
        %3762 = vmatprep.mubr.bf16.mxu0 0
        %3763 = vmatmul.mubr.bf16.gmra.mxu0 %v3595
        %v3764 = vpop.f32.mrf.mxu0
        %v3765 = vadd.f32 0.0, %v3764
        %v3766 = vpop.f32.mrf.mxu0
        %v3767 = vadd.f32 0.0, %v3766
        %v3768 = vpop.f32.mrf.mxu0
        %v3769 = vadd.f32 0.0, %v3768
        %v3770 = vpop.f32.mrf.mxu0
        %v3771 = vadd.f32 0.0, %v3770
        %3772 = vmatprep.mubr.bf16.mxu0 0
        %3773 = vmatmul.mubr.bf16.gmra.mxu0 %v3598
        %v3774 = vpop.f32.mrf.mxu0
        %v3775 = vadd.f32 0.0, %v3774
        %v3776 = vpop.f32.mrf.mxu0
        %v3777 = vadd.f32 0.0, %v3776
        %v3778 = vpop.f32.mrf.mxu0
        %v3779 = vadd.f32 0.0, %v3778
        %v3780 = vpop.f32.mrf.mxu0
        %v3781 = vadd.f32 0.0, %v3780
        %3782 = vmatprep.mubr.bf16.mxu0 0
        %3783 = vmatmul.mubr.bf16.gmra.mxu0 %v3601
        %v3784 = vpop.f32.mrf.mxu0
        %v3785 = vadd.f32 0.0, %v3784
        %v3786 = vpop.f32.mrf.mxu0
        %v3787 = vadd.f32 0.0, %v3786
        %v3788 = vpop.f32.mrf.mxu0
        %v3789 = vadd.f32 0.0, %v3788
        %v3790 = vpop.f32.mrf.mxu0
        %v3791 = vadd.f32 0.0, %v3790
        %3792 = vmatprep.mubr.bf16.mxu0 0
        %3793 = vmatmul.mubr.bf16.gmra.mxu0 %v3604
        %v3794 = vpop.f32.mrf.mxu0
        %v3795 = vadd.f32 0.0, %v3794
        %v3796 = vpop.f32.mrf.mxu0
        %v3797 = vadd.f32 0.0, %v3796
        %v3798 = vpop.f32.mrf.mxu0
        %v3799 = vadd.f32 0.0, %v3798
        %v3800 = vpop.f32.mrf.mxu0
        %v3801 = vadd.f32 0.0, %v3800
        %3802 = vmatprep.mubr.bf16.mxu0 0
        %3803 = vmatmul.mubr.bf16.gmra.mxu0 %v3607
        %v3804 = vpop.f32.mrf.mxu0
        %v3805 = vadd.f32 0.0, %v3804
        %v3806 = vpop.f32.mrf.mxu0
        %v3807 = vadd.f32 0.0, %v3806
        %v3808 = vpop.f32.mrf.mxu0
        %v3809 = vadd.f32 0.0, %v3808
        %v3810 = vpop.f32.mrf.mxu0
        %v3811 = vadd.f32 0.0, %v3810
        %3812 = vmatprep.mubr.bf16.mxu0 0
        %3813 = vmatmul.mubr.bf16.gmra.mxu0 %v3610
        %v3814 = vpop.f32.mrf.mxu0
        %v3815 = vadd.f32 0.0, %v3814
        %v3816 = vpop.f32.mrf.mxu0
        %v3817 = vadd.f32 0.0, %v3816
        %v3818 = vpop.f32.mrf.mxu0
        %v3819 = vadd.f32 0.0, %v3818
        %v3820 = vpop.f32.mrf.mxu0
        %v3821 = vadd.f32 0.0, %v3820
        %3822 = vmatprep.mubr.bf16.mxu0 0
        %3823 = vmatmul.mubr.bf16.gmra.mxu0 %v3613
        %v3824 = vpop.f32.mrf.mxu0
        %v3825 = vadd.f32 0.0, %v3824
        %v3826 = vpop.f32.mrf.mxu0
        %v3827 = vadd.f32 0.0, %v3826
        %v3828 = vpop.f32.mrf.mxu0
        %v3829 = vadd.f32 0.0, %v3828
        %v3830 = vpop.f32.mrf.mxu0
        %v3831 = vadd.f32 0.0, %v3830
        %3832 = vmatprep.mubr.bf16.mxu0 0
        %3833 = vmatmul.mubr.bf16.gmra.mxu0 %v3616
        %v3834 = vpop.f32.mrf.mxu0
        %v3835 = vadd.f32 0.0, %v3834
        %v3836 = vpop.f32.mrf.mxu0
        %v3837 = vadd.f32 0.0, %v3836
        %v3838 = vpop.f32.mrf.mxu0
        %v3839 = vadd.f32 0.0, %v3838
        %v3840 = vpop.f32.mrf.mxu0
        %v3841 = vadd.f32 0.0, %v3840
        %3842 = vmatprep.mubr.bf16.mxu0 0
        %3843 = vmatmul.mubr.bf16.gmra.mxu0 %v3619
        %v3844 = vpop.f32.mrf.mxu0
        %v3845 = vadd.f32 0.0, %v3844
        %v3846 = vpop.f32.mrf.mxu0
        %v3847 = vadd.f32 0.0, %v3846
        %v3848 = vpop.f32.mrf.mxu0
        %v3849 = vadd.f32 0.0, %v3848
        %v3850 = vpop.f32.mrf.mxu0
        %v3851 = vadd.f32 0.0, %v3850
        %3852 = vmatprep.mubr.bf16.mxu0 0
        %3853 = vmatmul.mubr.bf16.gmra.mxu0 %v3622
        %v3854 = vpop.f32.mrf.mxu0
        %v3855 = vadd.f32 0.0, %v3854
        %v3856 = vpop.f32.mrf.mxu0
        %v3857 = vadd.f32 0.0, %v3856
        %v3858 = vpop.f32.mrf.mxu0
        %v3859 = vadd.f32 0.0, %v3858
        %v3860 = vpop.f32.mrf.mxu0
        %v3861 = vadd.f32 0.0, %v3860
        %3862 = vmatprep.mubr.bf16.mxu0 0
        %3863 = vmatmul.mubr.bf16.gmra.mxu0 %v3625
        %v3864 = vpop.f32.mrf.mxu0
        %v3865 = vadd.f32 0.0, %v3864
        %v3866 = vpop.f32.mrf.mxu0
        %v3867 = vadd.f32 0.0, %v3866
        %v3868 = vpop.f32.mrf.mxu0
        %v3869 = vadd.f32 0.0, %v3868
        %v3870 = vpop.f32.mrf.mxu0
        %v3871 = vadd.f32 0.0, %v3870
        %3872 = vmatprep.mubr.bf16.mxu0 0
        %3873 = vmatmul.mubr.bf16.gmra.mxu0 %v3628
        %v3874 = vpop.f32.mrf.mxu0
        %v3875 = vadd.f32 0.0, %v3874
        %v3876 = vpop.f32.mrf.mxu0
        %v3877 = vadd.f32 0.0, %v3876
        %v3878 = vpop.f32.mrf.mxu0
        %v3879 = vadd.f32 0.0, %v3878
        %v3880 = vpop.f32.mrf.mxu0
        %v3881 = vadd.f32 0.0, %v3880
        %3882 = vmatprep.mubr.bf16.mxu0 0
        %3883 = vmatmul.mubr.bf16.gmra.mxu0 %v3631
        %v3884 = vpop.f32.mrf.mxu0
        %v3885 = vadd.f32 0.0, %v3884
        %v3886 = vpop.f32.mrf.mxu0
        %v3887 = vadd.f32 0.0, %v3886
        %v3888 = vpop.f32.mrf.mxu0
        %v3889 = vadd.f32 0.0, %v3888
        %v3890 = vpop.f32.mrf.mxu0
        %v3891 = vadd.f32 0.0, %v3890
        %3892 = vmatprep.mubr.bf16.mxu0 0
        %3893 = vmatmul.mubr.bf16.gmra.mxu0 %v3634
        %v3894 = vpop.f32.mrf.mxu0
        %v3895 = vadd.f32 0.0, %v3894
        %v3896 = vpop.f32.mrf.mxu0
        %v3897 = vadd.f32 0.0, %v3896
        %v3898 = vpop.f32.mrf.mxu0
        %v3899 = vadd.f32 0.0, %v3898
        %v3900 = vpop.f32.mrf.mxu0
        %v3901 = vadd.f32 0.0, %v3900
        %3902 = vmatprep.mubr.bf16.mxu0 0
        %3903 = vmatmul.mubr.bf16.gmra.mxu0 %v3637
        %v3904 = vpop.f32.mrf.mxu0
        %v3905 = vadd.f32 0.0, %v3904
        %v3906 = vpop.f32.mrf.mxu0
        %v3907 = vadd.f32 0.0, %v3906
        %v3908 = vpop.f32.mrf.mxu0
        %v3909 = vadd.f32 0.0, %v3908
        %v3910 = vpop.f32.mrf.mxu0
        %v3911 = vadd.f32 0.0, %v3910
        %3912 = vmatprep.mubr.bf16.mxu0 0
        %3913 = vmatmul.mubr.bf16.gmra.mxu0 %v3640
        %v3914 = vpop.f32.mrf.mxu0
        %v3915 = vadd.f32 0.0, %v3914
        %v3916 = vpop.f32.mrf.mxu0
        %v3917 = vadd.f32 0.0, %v3916
        %v3918 = vpop.f32.mrf.mxu0
        %v3919 = vadd.f32 0.0, %v3918
        %v3920 = vpop.f32.mrf.mxu0
        %v3921 = vadd.f32 0.0, %v3920
        %3922 = vmatprep.mubr.bf16.mxu0 0
        %3923 = vmatmul.mubr.bf16.gmra.mxu0 %v3643
        %v3924 = vpop.f32.mrf.mxu0
        %v3925 = vadd.f32 0.0, %v3924
        %v3926 = vpop.f32.mrf.mxu0
        %v3927 = vadd.f32 0.0, %v3926
        %v3928 = vpop.f32.mrf.mxu0
        %v3929 = vadd.f32 0.0, %v3928
        %v3930 = vpop.f32.mrf.mxu0
        %v3931 = vadd.f32 0.0, %v3930
        %3932 = vmatprep.mubr.bf16.mxu0 0
        %3933 = vmatmul.mubr.bf16.gmra.mxu0 %v3646
        %v3934 = vpop.f32.mrf.mxu0
        %v3935 = vadd.f32 0.0, %v3934
        %v3936 = vpop.f32.mrf.mxu0
        %v3937 = vadd.f32 0.0, %v3936
        %v3938 = vpop.f32.mrf.mxu0
        %v3939 = vadd.f32 0.0, %v3938
        %v3940 = vpop.f32.mrf.mxu0
        %v3941 = vadd.f32 0.0, %v3940
        %3942 = vmatprep.mubr.bf16.mxu0 0
        %3943 = vmatmul.mubr.bf16.gmra.mxu0 %v3649
        %v3944 = vpop.f32.mrf.mxu0
        %v3945 = vadd.f32 0.0, %v3944
        %v3946 = vpop.f32.mrf.mxu0
        %v3947 = vadd.f32 0.0, %v3946
        %v3948 = vpop.f32.mrf.mxu0
        %v3949 = vadd.f32 0.0, %v3948
        %v3950 = vpop.f32.mrf.mxu0
        %v3951 = vadd.f32 0.0, %v3950
        %3952 = vdwg.mxu0
        %3953 = vmatprep.subr.bf16.mxu0 0
        %3954 = vmatpush1.bf16.msra.mxu0 0
        %3955 = vmatprep.subr.bf16.mxu0 0
        %3956 = vmatpush1.bf16.msra.mxu0 0
        %3957 = vmatprep.subr.bf16.mxu0 0
        %3958 = vmatpush1.bf16.msra.mxu0 0
        %3959 = vmatprep.subr.bf16.mxu0 0
        %3960 = vmatpush1.bf16.msra.mxu0 0
        %3961 = vmatprep.subr.bf16.mxu0 0
        %3962 = vmatpush1.bf16.msra.mxu0 0
        %3963 = vmatprep.subr.bf16.mxu0 0
        %3964 = vmatpush1.bf16.msra.mxu0 0
        %3965 = vmatprep.subr.bf16.mxu0 0
        %3966 = vmatpush1.bf16.msra.mxu0 %v3658
        %3967 = vmatprep.subr.bf16.mxu0 0
        %3968 = vmatpush1.bf16.msra.mxu0 %v3566
        %3969 = vmatprep.subr.bf16.mxu0 0
        %3970 = vmatpush2.bf16.msra.mxu0 0
        %3971 = vmatprep.subr.bf16.mxu0 0
        %3972 = vmatpush2.bf16.msra.mxu0 0
        %3973 = vmatprep.subr.bf16.mxu0 0
        %3974 = vmatpush2.bf16.msra.mxu0 0
        %3975 = vmatprep.subr.bf16.mxu0 0
        %3976 = vmatpush2.bf16.msra.mxu0 0
        %3977 = vmatprep.subr.bf16.mxu0 0
        %3978 = vmatpush2.bf16.msra.mxu0 0
        %3979 = vmatprep.subr.bf16.mxu0 0
        %3980 = vmatpush2.bf16.msra.mxu0 0
        %3981 = vmatprep.subr.bf16.mxu0 0
        %3982 = vmatpush2.bf16.msra.mxu0 0
        %3983 = vmatprep.subr.bf16.mxu0 0
        %3984 = vmatpush2.bf16.msra.mxu0 0
        %3985 = vmatprep.mubr.bf16.mxu0 0
        %3986 = vmatmul.mubr.bf16.gmra.mxu0 %v3574
        %v3987 = vpop.f32.mrf.mxu0
        %v3988 = vadd.f32 0.0, %v3987
        %v3989 = vpop.f32.mrf.mxu0
        %v3990 = vpop.f32.mrf.mxu0
        %v3991 = vadd.f32 0.0, %v3990
        %v3992 = vpop.f32.mrf.mxu0
        %3993 = vmatprep.mubr.bf16.mxu0 0
        %3994 = vmatmul.mubr.bf16.gmra.mxu0 %v3577
        %v3995 = vpop.f32.mrf.mxu0
        %v3996 = vadd.f32 0.0, %v3995
        %v3997 = vpop.f32.mrf.mxu0
        %v3998 = vpop.f32.mrf.mxu0
        %v3999 = vadd.f32 0.0, %v3998
        %v4000 = vpop.f32.mrf.mxu0
        %4001 = vmatprep.mubr.bf16.mxu0 0
        %4002 = vmatmul.mubr.bf16.gmra.mxu0 %v3580
        %v4003 = vpop.f32.mrf.mxu0
        %v4004 = vadd.f32 0.0, %v4003
        %v4005 = vpop.f32.mrf.mxu0
        %v4006 = vpop.f32.mrf.mxu0
        %v4007 = vadd.f32 0.0, %v4006
        %v4008 = vpop.f32.mrf.mxu0
        %4009 = vmatprep.mubr.bf16.mxu0 0
        %4010 = vmatmul.mubr.bf16.gmra.mxu0 %v3583
        %v4011 = vpop.f32.mrf.mxu0
        %v4012 = vadd.f32 0.0, %v4011
        %v4013 = vpop.f32.mrf.mxu0
        %v4014 = vpop.f32.mrf.mxu0
        %v4015 = vadd.f32 0.0, %v4014
        %v4016 = vpop.f32.mrf.mxu0
        %4017 = vmatprep.mubr.bf16.mxu0 0
        %4018 = vmatmul.mubr.bf16.gmra.mxu0 %v3586
        %v4019 = vpop.f32.mrf.mxu0
        %v4020 = vadd.f32 0.0, %v4019
        %v4021 = vpop.f32.mrf.mxu0
        %v4022 = vpop.f32.mrf.mxu0
        %v4023 = vadd.f32 0.0, %v4022
        %v4024 = vpop.f32.mrf.mxu0
        %4025 = vmatprep.mubr.bf16.mxu0 0
        %4026 = vmatmul.mubr.bf16.gmra.mxu0 %v3589
        %v4027 = vpop.f32.mrf.mxu0
        %v4028 = vadd.f32 0.0, %v4027
        %v4029 = vpop.f32.mrf.mxu0
        %v4030 = vpop.f32.mrf.mxu0
        %v4031 = vadd.f32 0.0, %v4030
        %v4032 = vpop.f32.mrf.mxu0
        %4033 = vmatprep.mubr.bf16.mxu0 0
        %4034 = vmatmul.mubr.bf16.gmra.mxu0 %v3592
        %v4035 = vpop.f32.mrf.mxu0
        %v4036 = vadd.f32 0.0, %v4035
        %v4037 = vpop.f32.mrf.mxu0
        %v4038 = vpop.f32.mrf.mxu0
        %v4039 = vadd.f32 0.0, %v4038
        %v4040 = vpop.f32.mrf.mxu0
        %4041 = vmatprep.mubr.bf16.mxu0 0
        %4042 = vmatmul.mubr.bf16.gmra.mxu0 %v3595
        %v4043 = vpop.f32.mrf.mxu0
        %v4044 = vadd.f32 0.0, %v4043
        %v4045 = vpop.f32.mrf.mxu0
        %v4046 = vpop.f32.mrf.mxu0
        %v4047 = vadd.f32 0.0, %v4046
        %v4048 = vpop.f32.mrf.mxu0
        %4049 = vmatprep.mubr.bf16.mxu0 0
        %4050 = vmatmul.mubr.bf16.gmra.mxu0 %v3598
        %v4051 = vpop.f32.mrf.mxu0
        %v4052 = vadd.f32 0.0, %v4051
        %v4053 = vpop.f32.mrf.mxu0
        %v4054 = vpop.f32.mrf.mxu0
        %v4055 = vadd.f32 0.0, %v4054
        %v4056 = vpop.f32.mrf.mxu0
        %4057 = vmatprep.mubr.bf16.mxu0 0
        %4058 = vmatmul.mubr.bf16.gmra.mxu0 %v3601
        %v4059 = vpop.f32.mrf.mxu0
        %v4060 = vadd.f32 0.0, %v4059
        %v4061 = vpop.f32.mrf.mxu0
        %v4062 = vpop.f32.mrf.mxu0
        %v4063 = vadd.f32 0.0, %v4062
        %v4064 = vpop.f32.mrf.mxu0
        %4065 = vmatprep.mubr.bf16.mxu0 0
        %4066 = vmatmul.mubr.bf16.gmra.mxu0 %v3604
        %v4067 = vpop.f32.mrf.mxu0
        %v4068 = vadd.f32 0.0, %v4067
        %v4069 = vpop.f32.mrf.mxu0
        %v4070 = vpop.f32.mrf.mxu0
        %v4071 = vadd.f32 0.0, %v4070
        %v4072 = vpop.f32.mrf.mxu0
        %4073 = vmatprep.mubr.bf16.mxu0 0
        %4074 = vmatmul.mubr.bf16.gmra.mxu0 %v3607
        %v4075 = vpop.f32.mrf.mxu0
        %v4076 = vadd.f32 0.0, %v4075
        %v4077 = vpop.f32.mrf.mxu0
        %v4078 = vpop.f32.mrf.mxu0
        %v4079 = vadd.f32 0.0, %v4078
        %v4080 = vpop.f32.mrf.mxu0
        %4081 = vmatprep.mubr.bf16.mxu0 0
        %4082 = vmatmul.mubr.bf16.gmra.mxu0 %v3610
        %v4083 = vpop.f32.mrf.mxu0
        %v4084 = vadd.f32 0.0, %v4083
        %v4085 = vpop.f32.mrf.mxu0
        %v4086 = vpop.f32.mrf.mxu0
        %v4087 = vadd.f32 0.0, %v4086
        %v4088 = vpop.f32.mrf.mxu0
        %4089 = vmatprep.mubr.bf16.mxu0 0
        %4090 = vmatmul.mubr.bf16.gmra.mxu0 %v3613
        %v4091 = vpop.f32.mrf.mxu0
        %v4092 = vadd.f32 0.0, %v4091
        %v4093 = vpop.f32.mrf.mxu0
        %v4094 = vpop.f32.mrf.mxu0
        %v4095 = vadd.f32 0.0, %v4094
        %v4096 = vpop.f32.mrf.mxu0
        %4097 = vmatprep.mubr.bf16.mxu0 0
        %4098 = vmatmul.mubr.bf16.gmra.mxu0 %v3616
        %v4099 = vpop.f32.mrf.mxu0
        %v4100 = vadd.f32 0.0, %v4099
        %v4101 = vpop.f32.mrf.mxu0
        %v4102 = vpop.f32.mrf.mxu0
        %v4103 = vadd.f32 0.0, %v4102
        %v4104 = vpop.f32.mrf.mxu0
        %4105 = vmatprep.mubr.bf16.mxu0 0
        %4106 = vmatmul.mubr.bf16.gmra.mxu0 %v3619
        %v4107 = vpop.f32.mrf.mxu0
        %v4108 = vadd.f32 0.0, %v4107
        %v4109 = vpop.f32.mrf.mxu0
        %v4110 = vpop.f32.mrf.mxu0
        %v4111 = vadd.f32 0.0, %v4110
        %v4112 = vpop.f32.mrf.mxu0
        %4113 = vmatprep.mubr.bf16.mxu0 0
        %4114 = vmatmul.mubr.bf16.gmra.mxu0 %v3622
        %v4115 = vpop.f32.mrf.mxu0
        %v4116 = vadd.f32 0.0, %v4115
        %v4117 = vpop.f32.mrf.mxu0
        %v4118 = vpop.f32.mrf.mxu0
        %v4119 = vadd.f32 0.0, %v4118
        %v4120 = vpop.f32.mrf.mxu0
        %4121 = vmatprep.mubr.bf16.mxu0 0
        %4122 = vmatmul.mubr.bf16.gmra.mxu0 %v3625
        %v4123 = vpop.f32.mrf.mxu0
        %v4124 = vadd.f32 0.0, %v4123
        %v4125 = vpop.f32.mrf.mxu0
        %v4126 = vpop.f32.mrf.mxu0
        %v4127 = vadd.f32 0.0, %v4126
        %v4128 = vpop.f32.mrf.mxu0
        %4129 = vmatprep.mubr.bf16.mxu0 0
        %4130 = vmatmul.mubr.bf16.gmra.mxu0 %v3628
        %v4131 = vpop.f32.mrf.mxu0
        %v4132 = vadd.f32 0.0, %v4131
        %v4133 = vpop.f32.mrf.mxu0
        %v4134 = vpop.f32.mrf.mxu0
        %v4135 = vadd.f32 0.0, %v4134
        %v4136 = vpop.f32.mrf.mxu0
        %4137 = vmatprep.mubr.bf16.mxu0 0
        %4138 = vmatmul.mubr.bf16.gmra.mxu0 %v3631
        %v4139 = vpop.f32.mrf.mxu0
        %v4140 = vadd.f32 0.0, %v4139
        %v4141 = vpop.f32.mrf.mxu0
        %v4142 = vpop.f32.mrf.mxu0
        %v4143 = vadd.f32 0.0, %v4142
        %v4144 = vpop.f32.mrf.mxu0
        %4145 = vmatprep.mubr.bf16.mxu0 0
        %4146 = vmatmul.mubr.bf16.gmra.mxu0 %v3634
        %v4147 = vpop.f32.mrf.mxu0
        %v4148 = vadd.f32 0.0, %v4147
        %v4149 = vpop.f32.mrf.mxu0
        %v4150 = vpop.f32.mrf.mxu0
        %v4151 = vadd.f32 0.0, %v4150
        %v4152 = vpop.f32.mrf.mxu0
        %4153 = vmatprep.mubr.bf16.mxu0 0
        %4154 = vmatmul.mubr.bf16.gmra.mxu0 %v3637
        %v4155 = vpop.f32.mrf.mxu0
        %v4156 = vadd.f32 0.0, %v4155
        %v4157 = vpop.f32.mrf.mxu0
        %v4158 = vpop.f32.mrf.mxu0
        %v4159 = vadd.f32 0.0, %v4158
        %v4160 = vpop.f32.mrf.mxu0
        %4161 = vmatprep.mubr.bf16.mxu0 0
        %4162 = vmatmul.mubr.bf16.gmra.mxu0 %v3640
        %v4163 = vpop.f32.mrf.mxu0
        %v4164 = vadd.f32 0.0, %v4163
        %v4165 = vpop.f32.mrf.mxu0
        %v4166 = vpop.f32.mrf.mxu0
        %v4167 = vadd.f32 0.0, %v4166
        %v4168 = vpop.f32.mrf.mxu0
        %4169 = vmatprep.mubr.bf16.mxu0 0
        %4170 = vmatmul.mubr.bf16.gmra.mxu0 %v3643
        %v4171 = vpop.f32.mrf.mxu0
        %v4172 = vadd.f32 0.0, %v4171
        %v4173 = vpop.f32.mrf.mxu0
        %v4174 = vpop.f32.mrf.mxu0
        %v4175 = vadd.f32 0.0, %v4174
        %v4176 = vpop.f32.mrf.mxu0
        %4177 = vmatprep.mubr.bf16.mxu0 0
        %4178 = vmatmul.mubr.bf16.gmra.mxu0 %v3646
        %v4179 = vpop.f32.mrf.mxu0
        %v4180 = vadd.f32 0.0, %v4179
        %v4181 = vpop.f32.mrf.mxu0
        %v4182 = vpop.f32.mrf.mxu0
        %v4183 = vadd.f32 0.0, %v4182
        %v4184 = vpop.f32.mrf.mxu0
        %4185 = vmatprep.mubr.bf16.mxu0 0
        %4186 = vmatmul.mubr.bf16.gmra.mxu0 %v3649
        %v4187 = vpop.f32.mrf.mxu0
        %v4188 = vadd.f32 0.0, %v4187
        %v4189 = vpop.f32.mrf.mxu0
        %v4190 = vpop.f32.mrf.mxu0
        %v4191 = vadd.f32 0.0, %v4190
        %v4192 = vpop.f32.mrf.mxu0
        %4193 = vdwg.mxu0
        %v4194 = vadd.f32 %v3196, %v3695
        %v4195 = vadd.f32 %v3197, %v3697
        %v4196 = vadd.f32 %v3198, %v3988
        %v4197 = vadd.f32 %v3199, %v3699
        %v4198 = vadd.f32 %v3200, %v3701
        %v4199 = vadd.f32 %v3201, %v3991
        %v4200 = vadd.f32 %v3202, %v3705
        %v4201 = vadd.f32 %v3203, %v3707
        %v4202 = vadd.f32 %v3204, %v3996
        %v4203 = vadd.f32 %v3205, %v3709
        %v4204 = vadd.f32 %v3206, %v3711
        %v4205 = vadd.f32 %v3207, %v3999
        %v4206 = vadd.f32 %v3208, %v3715
        %v4207 = vadd.f32 %v3209, %v3717
        %v4208 = vadd.f32 %v3210, %v4004
        %v4209 = vadd.f32 %v3211, %v3719
        %v4210 = vadd.f32 %v3212, %v3721
        %v4211 = vadd.f32 %v3213, %v4007
        %v4212 = vadd.f32 %v3214, %v3725
        %v4213 = vadd.f32 %v3215, %v3727
        %v4214 = vadd.f32 %v3216, %v4012
        %v4215 = vadd.f32 %v3217, %v3729
        %v4216 = vadd.f32 %v3218, %v3731
        %v4217 = vadd.f32 %v3219, %v4015
        %v4218 = vadd.f32 %v3220, %v3735
        %v4219 = vadd.f32 %v3221, %v3737
        %v4220 = vadd.f32 %v3222, %v4020
        %v4221 = vadd.f32 %v3223, %v3739
        %v4222 = vadd.f32 %v3224, %v3741
        %v4223 = vadd.f32 %v3225, %v4023
        %v4224 = vadd.f32 %v3226, %v3745
        %v4225 = vadd.f32 %v3227, %v3747
        %v4226 = vadd.f32 %v3228, %v4028
        %v4227 = vadd.f32 %v3229, %v3749
        %v4228 = vadd.f32 %v3230, %v3751
        %v4229 = vadd.f32 %v3231, %v4031
        %v4230 = vadd.f32 %v3232, %v3755
        %v4231 = vadd.f32 %v3233, %v3757
        %v4232 = vadd.f32 %v3234, %v4036
        %v4233 = vadd.f32 %v3235, %v3759
        %v4234 = vadd.f32 %v3236, %v3761
        %v4235 = vadd.f32 %v3237, %v4039
        %v4236 = vadd.f32 %v3238, %v3765
        %v4237 = vadd.f32 %v3239, %v3767
        %v4238 = vadd.f32 %v3240, %v4044
        %v4239 = vadd.f32 %v3241, %v3769
        %v4240 = vadd.f32 %v3242, %v3771
        %v4241 = vadd.f32 %v3243, %v4047
        %v4242 = vadd.f32 %v3244, %v3775
        %v4243 = vadd.f32 %v3245, %v3777
        %v4244 = vadd.f32 %v3246, %v4052
        %v4245 = vadd.f32 %v3247, %v3779
        %v4246 = vadd.f32 %v3248, %v3781
        %v4247 = vadd.f32 %v3249, %v4055
        %v4248 = vadd.f32 %v3250, %v3785
        %v4249 = vadd.f32 %v3251, %v3787
        %v4250 = vadd.f32 %v3252, %v4060
        %v4251 = vadd.f32 %v3253, %v3789
        %v4252 = vadd.f32 %v3254, %v3791
        %v4253 = vadd.f32 %v3255, %v4063
        %v4254 = vadd.f32 %v3256, %v3795
        %v4255 = vadd.f32 %v3257, %v3797
        %v4256 = vadd.f32 %v3258, %v4068
        %v4257 = vadd.f32 %v3259, %v3799
        %v4258 = vadd.f32 %v3260, %v3801
        %v4259 = vadd.f32 %v3261, %v4071
        %v4260 = vadd.f32 %v3262, %v3805
        %v4261 = vadd.f32 %v3263, %v3807
        %v4262 = vadd.f32 %v3264, %v4076
        %v4263 = vadd.f32 %v3265, %v3809
        %v4264 = vadd.f32 %v3266, %v3811
        %v4265 = vadd.f32 %v3267, %v4079
        %v4266 = vadd.f32 %v3268, %v3815
        %v4267 = vadd.f32 %v3269, %v3817
        %v4268 = vadd.f32 %v3270, %v4084
        %v4269 = vadd.f32 %v3271, %v3819
        %v4270 = vadd.f32 %v3272, %v3821
        %v4271 = vadd.f32 %v3273, %v4087
        %v4272 = vadd.f32 %v3274, %v3825
        %v4273 = vadd.f32 %v3275, %v3827
        %v4274 = vadd.f32 %v3276, %v4092
        %v4275 = vadd.f32 %v3277, %v3829
        %v4276 = vadd.f32 %v3278, %v3831
        %v4277 = vadd.f32 %v3279, %v4095
        %v4278 = vadd.f32 %v3280, %v3835
        %v4279 = vadd.f32 %v3281, %v3837
        %v4280 = vadd.f32 %v3282, %v4100
        %v4281 = vadd.f32 %v3283, %v3839
        %v4282 = vadd.f32 %v3284, %v3841
        %v4283 = vadd.f32 %v3285, %v4103
        %v4284 = vadd.f32 %v3286, %v3845
        %v4285 = vadd.f32 %v3287, %v3847
        %v4286 = vadd.f32 %v3288, %v4108
        %v4287 = vadd.f32 %v3289, %v3849
        %v4288 = vadd.f32 %v3290, %v3851
        %v4289 = vadd.f32 %v3291, %v4111
        %v4290 = vadd.f32 %v3292, %v3855
        %v4291 = vadd.f32 %v3293, %v3857
        %v4292 = vadd.f32 %v3294, %v4116
        %v4293 = vadd.f32 %v3295, %v3859
        %v4294 = vadd.f32 %v3296, %v3861
        %v4295 = vadd.f32 %v3297, %v4119
        %v4296 = vadd.f32 %v3298, %v3865
        %v4297 = vadd.f32 %v3299, %v3867
        %v4298 = vadd.f32 %v3300, %v4124
        %v4299 = vadd.f32 %v3301, %v3869
        %v4300 = vadd.f32 %v3302, %v3871
        %v4301 = vadd.f32 %v3303, %v4127
        %v4302 = vadd.f32 %v3304, %v3875
        %v4303 = vadd.f32 %v3305, %v3877
        %v4304 = vadd.f32 %v3306, %v4132
        %v4305 = vadd.f32 %v3307, %v3879
        %v4306 = vadd.f32 %v3308, %v3881
        %v4307 = vadd.f32 %v3309, %v4135
        %v4308 = vadd.f32 %v3310, %v3885
        %v4309 = vadd.f32 %v3311, %v3887
        %v4310 = vadd.f32 %v3312, %v4140
        %v4311 = vadd.f32 %v3313, %v3889
        %v4312 = vadd.f32 %v3314, %v3891
        %v4313 = vadd.f32 %v3315, %v4143
        %v4314 = vadd.f32 %v3316, %v3895
        %v4315 = vadd.f32 %v3317, %v3897
        %v4316 = vadd.f32 %v3318, %v4148
        %v4317 = vadd.f32 %v3319, %v3899
        %v4318 = vadd.f32 %v3320, %v3901
        %v4319 = vadd.f32 %v3321, %v4151
        %v4320 = vadd.f32 %v3322, %v3905
        %v4321 = vadd.f32 %v3323, %v3907
        %v4322 = vadd.f32 %v3324, %v4156
        %v4323 = vadd.f32 %v3325, %v3909
        %v4324 = vadd.f32 %v3326, %v3911
        %v4325 = vadd.f32 %v3327, %v4159
        %v4326 = vadd.f32 %v3328, %v3915
        %v4327 = vadd.f32 %v3329, %v3917
        %v4328 = vadd.f32 %v3330, %v4164
        %v4329 = vadd.f32 %v3331, %v3919
        %v4330 = vadd.f32 %v3332, %v3921
        %v4331 = vadd.f32 %v3333, %v4167
        %v4332 = vadd.f32 %v3334, %v3925
        %v4333 = vadd.f32 %v3335, %v3927
        %v4334 = vadd.f32 %v3336, %v4172
        %v4335 = vadd.f32 %v3337, %v3929
        %v4336 = vadd.f32 %v3338, %v3931
        %v4337 = vadd.f32 %v3339, %v4175
        %v4338 = vadd.f32 %v3340, %v3935
        %v4339 = vadd.f32 %v3341, %v3937
        %v4340 = vadd.f32 %v3342, %v4180
        %v4341 = vadd.f32 %v3343, %v3939
        %v4342 = vadd.f32 %v3344, %v3941
        %v4343 = vadd.f32 %v3345, %v4183
        %v4344 = vadd.f32 %v3346, %v3945
        %v4345 = vadd.f32 %v3347, %v3947
        %v4346 = vadd.f32 %v3348, %v4188
        %v4347 = vadd.f32 %v3349, %v3949
        %v4348 = vadd.f32 %v3350, %v3951
        %v4349 = vadd.f32 %v3351, %v4191
        %s4350 = scalar_lea.vmem %s625, 32 [#allocation4]
        %v4351 = vld [vmem:[%s4350] sm:$0xf]
        %v4352 = vld [vmem:[%s4350 + $0x4] sm:$0xf]
        %v4353 = vld [vmem:[%s4350 + $0x8] sm:$0xf]
        %v4354 = vld [vmem:[%s4350 + $0xc] sm:$0xf]
        %v4355 = vld [vmem:[%s4350 + $0x10] sm:$0xf]
        %v4356 = vld [vmem:[%s4350 + $0x14] sm:$0xf]
        %v4357 = vld [vmem:[%s4350 + $0x18] sm:$0xf]
        %v4358 = vld [vmem:[%s4350 + $0x1c] sm:$0xf]
        %v4359 = vld [vmem:[%s4350 + $0x20] sm:$0xf]
        %v4360 = vld [vmem:[%s4350 + $0x24] sm:$0xf]
        %v4361 = vld [vmem:[%s4350 + $0x28] sm:$0xf]
        %v4362 = vld [vmem:[%s4350 + $0x2c] sm:$0xf]
        %v4363 = vld [vmem:[%s4350 + $0x30] sm:$0xf]
        %v4364 = vld [vmem:[%s4350 + $0x34] sm:$0xf]
        %v4365 = vld [vmem:[%s4350 + $0x38] sm:$0xf]
        %v4366 = vld [vmem:[%s4350 + $0x3c] sm:$0xf]
        %v4367 = vld [vmem:[%s4350 + $0x40] sm:$0xf]
        %v4368 = vld [vmem:[%s4350 + $0x44] sm:$0xf]
        %v4369 = vld [vmem:[%s4350 + $0x48] sm:$0xf]
        %v4370 = vld [vmem:[%s4350 + $0x4c] sm:$0xf]
        %v4371 = vld [vmem:[%s4350 + $0x50] sm:$0xf]
        %v4372 = vld [vmem:[%s4350 + $0x54] sm:$0xf]
        %v4373 = vld [vmem:[%s4350 + $0x58] sm:$0xf]
        %v4374 = vld [vmem:[%s4350 + $0x5c] sm:$0xf]
        %v4375 = vld [vmem:[%s4350 + $0x60] sm:$0xf]
        %v4376 = vld [vmem:[%s4350 + $0x64] sm:$0xf]
        %v4377 = vld [vmem:[%s4350 + $0x68] sm:$0xf]
        %v4378 = vld [vmem:[%s4350 + $0x6c] sm:$0xf]
        %v4379 = vld [vmem:[%s4350 + $0x70] sm:$0xf]
        %v4380 = vld [vmem:[%s4350 + $0x74] sm:$0xf]
        %v4381 = vld [vmem:[%s4350 + $0x78] sm:$0xf]
        %v4382 = vld [vmem:[%s4350 + $0x7c] sm:$0xf]
        %v4383 = vld [vmem:[%s4350 + $0x80] sm:$0xf]
        %v4384 = vld [vmem:[%s4350 + $0x84] sm:$0xf]
        %v4385 = vld [vmem:[%s4350 + $0x88] sm:$0xf]
        %v4386 = vld [vmem:[%s4350 + $0x8c] sm:$0xf]
        %v4387 = vld [vmem:[%s4350 + $0x90] sm:$0xf]
        %v4388 = vld [vmem:[%s4350 + $0x94] sm:$0xf]
        %v4389 = vld [vmem:[%s4350 + $0x98] sm:$0xf]
        %v4390 = vld [vmem:[%s4350 + $0x9c] sm:$0xf]
        %v4391 = vld [vmem:[%s4350 + $0xa0] sm:$0xf]
        %v4392 = vld [vmem:[%s4350 + $0xa4] sm:$0xf]
        %v4393 = vld [vmem:[%s4350 + $0xa8] sm:$0xf]
        %v4394 = vld [vmem:[%s4350 + $0xac] sm:$0xf]
        %v4395 = vld [vmem:[%s4350 + $0xb0] sm:$0xf]
        %v4396 = vld [vmem:[%s4350 + $0xb4] sm:$0xf]
        %v4397 = vld [vmem:[%s4350 + $0xb8] sm:$0xf]
        %v4398 = vld [vmem:[%s4350 + $0xbc] sm:$0xf]
        %v4399 = vld [vmem:[%s4350 + $0xc0] sm:$0xf]
        %v4400 = vld [vmem:[%s4350 + $0xc4] sm:$0xf]
        %v4401 = vld [vmem:[%s4350 + $0xc8] sm:$0xf]
        %v4402 = vld [vmem:[%s4350 + $0xcc] sm:$0xf]
        %s4403 = scalar_lea.vmem %s1, 192
        %v4404 = vld [vmem:[%s4403] sm:$0xff]
        %v4405 = vld [vmem:[%s4403 + $0x8] sm:$0xf]
        %v4406 = vld [vmem:[%s4403 + $0xc] sm:$0xff]
        %v4407 = vld [vmem:[%s4403 + $0x14] sm:$0xf]
        %v4408 = vld [vmem:[%s4403 + $0x18] sm:$0xff]
        %v4409 = vld [vmem:[%s4403 + $0x20] sm:$0xf]
        %v4410 = vld [vmem:[%s4403 + $0x24] sm:$0x33]
        %v4411 = vld [vmem:[%s4403 + $0x2c] sm:$0x3]
        %v4464 = vunpack.c.l.b16 %v4351
        %v4465 = vunpack.c.l.b16 %v4352
        %v4466 = vunpack.c.l.b16 %v4353
        %v4467 = vunpack.c.l.b16 %v4354
        %v4468 = vunpack.c.l.b16 %v4355
        %v4469 = vunpack.c.l.b16 %v4356
        %v4470 = vunpack.c.l.b16 %v4357
        %v4471 = vunpack.c.l.b16 %v4358
        %v4472 = vunpack.c.l.b16 %v4359
        %v4473 = vunpack.c.l.b16 %v4360
        %v4474 = vunpack.c.l.b16 %v4361
        %v4475 = vunpack.c.l.b16 %v4362
        %v4476 = vunpack.c.l.b16 %v4363
        %v4477 = vunpack.c.l.b16 %v4364
        %v4478 = vunpack.c.l.b16 %v4365
        %v4479 = vunpack.c.l.b16 %v4366
        %v4480 = vunpack.c.l.b16 %v4367
        %v4481 = vunpack.c.l.b16 %v4368
        %v4482 = vunpack.c.l.b16 %v4369
        %v4483 = vunpack.c.l.b16 %v4370
        %v4484 = vunpack.c.l.b16 %v4371
        %v4485 = vunpack.c.l.b16 %v4372
        %v4486 = vunpack.c.l.b16 %v4373
        %v4487 = vunpack.c.l.b16 %v4374
        %v4488 = vunpack.c.l.b16 %v4375
        %v4489 = vunpack.c.l.b16 %v4376
        %v4490 = vunpack.c.l.b16 %v4377
        %v4491 = vunpack.c.l.b16 %v4378
        %v4492 = vunpack.c.l.b16 %v4379
        %v4493 = vunpack.c.l.b16 %v4380
        %v4494 = vunpack.c.l.b16 %v4381
        %v4495 = vunpack.c.l.b16 %v4382
        %v4496 = vunpack.c.l.b16 %v4383
        %v4497 = vunpack.c.l.b16 %v4384
        %v4498 = vunpack.c.l.b16 %v4385
        %v4499 = vunpack.c.l.b16 %v4386
        %v4500 = vunpack.c.l.b16 %v4387
        %v4501 = vunpack.c.l.b16 %v4388
        %v4502 = vunpack.c.l.b16 %v4389
        %v4503 = vunpack.c.l.b16 %v4390
        %v4504 = vunpack.c.l.b16 %v4391
        %v4505 = vunpack.c.l.b16 %v4392
        %v4506 = vunpack.c.l.b16 %v4393
        %v4507 = vunpack.c.l.b16 %v4394
        %v4508 = vunpack.c.l.b16 %v4395
        %v4509 = vunpack.c.l.b16 %v4396
        %v4510 = vunpack.c.l.b16 %v4397
        %v4511 = vunpack.c.l.b16 %v4398
        %v4512 = vunpack.c.l.b16 %v4399
        %v4513 = vunpack.c.l.b16 %v4400
        %v4514 = vunpack.c.l.b16 %v4401
        %v4515 = vunpack.c.l.b16 %v4402
        %v4516 = vpack.c.b16 %v4465, %v4464
        %v4517 = vpack.c.b16 %v4467, %v4466
        %v4518 = vpack.c.b16 %v4469, %v4468
        %v4519 = vpack.c.b16 %v4471, %v4470
        %v4520 = vpack.c.b16 %v4473, %v4472
        %v4521 = vpack.c.b16 %v4475, %v4474
        %v4522 = vpack.c.b16 %v4477, %v4476
        %v4523 = vpack.c.b16 %v4479, %v4478
        %v4524 = vpack.c.b16 %v4481, %v4480
        %v4525 = vpack.c.b16 %v4483, %v4482
        %v4526 = vpack.c.b16 %v4485, %v4484
        %v4527 = vpack.c.b16 %v4487, %v4486
        %v4528 = vpack.c.b16 %v4489, %v4488
        %v4529 = vpack.c.b16 %v4491, %v4490
        %v4530 = vpack.c.b16 %v4493, %v4492
        %v4531 = vpack.c.b16 %v4495, %v4494
        %v4532 = vpack.c.b16 %v4497, %v4496
        %v4533 = vpack.c.b16 %v4499, %v4498
        %v4534 = vpack.c.b16 %v4501, %v4500
        %v4535 = vpack.c.b16 %v4503, %v4502
        %v4536 = vpack.c.b16 %v4505, %v4504
        %v4537 = vpack.c.b16 %v4507, %v4506
        %v4538 = vpack.c.b16 %v4509, %v4508
        %v4539 = vpack.c.b16 %v4511, %v4510
        %v4540 = vpack.c.b16 %v4513, %v4512
        %v4541 = vpack.c.b16 %v4515, %v4514
        %v4550 = vunpack.c.l.b16 %v4404
        %v4551 = vunpack.c.h.b16 %v4404
        %v4552 = vunpack.c.l.b16 %v4405
        %v4553 = vunpack.c.l.b16 %v4406
        %v4554 = vunpack.c.h.b16 %v4406
        %v4555 = vunpack.c.l.b16 %v4407
        %v4556 = vunpack.c.l.b16 %v4408
        %v4557 = vunpack.c.h.b16 %v4408
        %v4558 = vunpack.c.l.b16 %v4409
        %v4559 = vunpack.c.l.b16 %v4410
        %v4560 = vunpack.c.h.b16 %v4410
        %v4561 = vunpack.c.l.b16 %v4411
        %v4562 = vpack.c.b16 %v4553, %v4550
        %v4563 = vpack.c.b16 %v4554, %v4551
        %v4564 = vpack.c.b16 %v4555, %v4552
        %v4565 = vpack.c.b16 %v4559, %v4556
        %v4566 = vpack.c.b16 %v4560, %v4557
        %v4567 = vpack.c.b16 %v4561, %v4558
        %v4572 = vsel %vm951, %v4516, 0
        %v4575 = vsel %vm951, %v4517, 0
        %v4578 = vsel %vm951, %v4518, 0
        %v4581 = vsel %vm951, %v4519, 0
        %v4584 = vsel %vm951, %v4520, 0
        %v4587 = vsel %vm951, %v4521, 0
        %v4590 = vsel %vm951, %v4522, 0
        %v4593 = vsel %vm951, %v4523, 0
        %v4596 = vsel %vm951, %v4524, 0
        %v4599 = vsel %vm951, %v4525, 0
        %v4602 = vsel %vm951, %v4526, 0
        %v4605 = vsel %vm951, %v4527, 0
        %v4608 = vsel %vm951, %v4528, 0
        %v4611 = vsel %vm951, %v4529, 0
        %v4614 = vsel %vm951, %v4530, 0
        %v4617 = vsel %vm951, %v4531, 0
        %v4620 = vsel %vm951, %v4532, 0
        %v4623 = vsel %vm951, %v4533, 0
        %v4626 = vsel %vm951, %v4534, 0
        %v4629 = vsel %vm951, %v4535, 0
        %v4632 = vsel %vm951, %v4536, 0
        %v4635 = vsel %vm951, %v4537, 0
        %v4638 = vsel %vm951, %v4538, 0
        %v4641 = vsel %vm951, %v4539, 0
        %v4644 = vsel %vm951, %v4540, 0
        %v4647 = vsel %vm951, %v4541, 0
        %v4650 = vsel %vm1030, %v4565, 0
        %v4653 = vsel %vm1030, %v4566, 0
        %v4656 = vsel %vm1030, %v4567, 0
        %4658 = vmatprep.subr.bf16.mxu0 0
        %4659 = vmatpush1.bf16.msra.mxu0 0
        %4660 = vmatprep.subr.bf16.mxu0 0
        %4661 = vmatpush1.bf16.msra.mxu0 0
        %4662 = vmatprep.subr.bf16.mxu0 0
        %4663 = vmatpush1.bf16.msra.mxu0 0
        %4664 = vmatprep.subr.bf16.mxu0 0
        %4665 = vmatpush1.bf16.msra.mxu0 0
        %4666 = vmatprep.subr.bf16.mxu0 0
        %4667 = vmatpush1.bf16.msra.mxu0 0
        %4668 = vmatprep.subr.bf16.mxu0 0
        %4669 = vmatpush1.bf16.msra.mxu0 0
        %4670 = vmatprep.subr.bf16.mxu0 %v4653
        %4671 = vmatpush1.bf16.msra.mxu0 %v4650
        %4672 = vmatprep.subr.bf16.mxu0 %v4563
        %4673 = vmatpush1.bf16.msra.mxu0 %v4562
        %4674 = vmatprep.subr.bf16.mxu0 0
        %4675 = vmatpush2.bf16.msra.mxu0 0
        %4676 = vmatprep.subr.bf16.mxu0 0
        %4677 = vmatpush2.bf16.msra.mxu0 0
        %4678 = vmatprep.subr.bf16.mxu0 0
        %4679 = vmatpush2.bf16.msra.mxu0 0
        %4680 = vmatprep.subr.bf16.mxu0 0
        %4681 = vmatpush2.bf16.msra.mxu0 0
        %4682 = vmatprep.subr.bf16.mxu0 0
        %4683 = vmatpush2.bf16.msra.mxu0 0
        %4684 = vmatprep.subr.bf16.mxu0 0
        %4685 = vmatpush2.bf16.msra.mxu0 0
        %4686 = vmatprep.subr.bf16.mxu0 0
        %4687 = vmatpush2.bf16.msra.mxu0 0
        %4688 = vmatprep.subr.bf16.mxu0 0
        %4689 = vmatpush2.bf16.msra.mxu0 0
        %4690 = vmatprep.mubr.bf16.mxu0 0
        %4691 = vmatmul.mubr.bf16.gmra.mxu0 %v4572
        %v4692 = vpop.f32.mrf.mxu0
        %v4693 = vadd.f32 0.0, %v4692
        %v4694 = vpop.f32.mrf.mxu0
        %v4695 = vadd.f32 0.0, %v4694
        %v4696 = vpop.f32.mrf.mxu0
        %v4697 = vadd.f32 0.0, %v4696
        %v4698 = vpop.f32.mrf.mxu0
        %v4699 = vadd.f32 0.0, %v4698
        %4700 = vmatprep.mubr.bf16.mxu0 0
        %4701 = vmatmul.mubr.bf16.gmra.mxu0 %v4575
        %v4702 = vpop.f32.mrf.mxu0
        %v4703 = vadd.f32 0.0, %v4702
        %v4704 = vpop.f32.mrf.mxu0
        %v4705 = vadd.f32 0.0, %v4704
        %v4706 = vpop.f32.mrf.mxu0
        %v4707 = vadd.f32 0.0, %v4706
        %v4708 = vpop.f32.mrf.mxu0
        %v4709 = vadd.f32 0.0, %v4708
        %4710 = vmatprep.mubr.bf16.mxu0 0
        %4711 = vmatmul.mubr.bf16.gmra.mxu0 %v4578
        %v4712 = vpop.f32.mrf.mxu0
        %v4713 = vadd.f32 0.0, %v4712
        %v4714 = vpop.f32.mrf.mxu0
        %v4715 = vadd.f32 0.0, %v4714
        %v4716 = vpop.f32.mrf.mxu0
        %v4717 = vadd.f32 0.0, %v4716
        %v4718 = vpop.f32.mrf.mxu0
        %v4719 = vadd.f32 0.0, %v4718
        %4720 = vmatprep.mubr.bf16.mxu0 0
        %4721 = vmatmul.mubr.bf16.gmra.mxu0 %v4581
        %v4722 = vpop.f32.mrf.mxu0
        %v4723 = vadd.f32 0.0, %v4722
        %v4724 = vpop.f32.mrf.mxu0
        %v4725 = vadd.f32 0.0, %v4724
        %v4726 = vpop.f32.mrf.mxu0
        %v4727 = vadd.f32 0.0, %v4726
        %v4728 = vpop.f32.mrf.mxu0
        %v4729 = vadd.f32 0.0, %v4728
        %4730 = vmatprep.mubr.bf16.mxu0 0
        %4731 = vmatmul.mubr.bf16.gmra.mxu0 %v4584
        %v4732 = vpop.f32.mrf.mxu0
        %v4733 = vadd.f32 0.0, %v4732
        %v4734 = vpop.f32.mrf.mxu0
        %v4735 = vadd.f32 0.0, %v4734
        %v4736 = vpop.f32.mrf.mxu0
        %v4737 = vadd.f32 0.0, %v4736
        %v4738 = vpop.f32.mrf.mxu0
        %v4739 = vadd.f32 0.0, %v4738
        %4740 = vmatprep.mubr.bf16.mxu0 0
        %4741 = vmatmul.mubr.bf16.gmra.mxu0 %v4587
        %v4742 = vpop.f32.mrf.mxu0
        %v4743 = vadd.f32 0.0, %v4742
        %v4744 = vpop.f32.mrf.mxu0
        %v4745 = vadd.f32 0.0, %v4744
        %v4746 = vpop.f32.mrf.mxu0
        %v4747 = vadd.f32 0.0, %v4746
        %v4748 = vpop.f32.mrf.mxu0
        %v4749 = vadd.f32 0.0, %v4748
        %4750 = vmatprep.mubr.bf16.mxu0 0
        %4751 = vmatmul.mubr.bf16.gmra.mxu0 %v4590
        %v4752 = vpop.f32.mrf.mxu0
        %v4753 = vadd.f32 0.0, %v4752
        %v4754 = vpop.f32.mrf.mxu0
        %v4755 = vadd.f32 0.0, %v4754
        %v4756 = vpop.f32.mrf.mxu0
        %v4757 = vadd.f32 0.0, %v4756
        %v4758 = vpop.f32.mrf.mxu0
        %v4759 = vadd.f32 0.0, %v4758
        %4760 = vmatprep.mubr.bf16.mxu0 0
        %4761 = vmatmul.mubr.bf16.gmra.mxu0 %v4593
        %v4762 = vpop.f32.mrf.mxu0
        %v4763 = vadd.f32 0.0, %v4762
        %v4764 = vpop.f32.mrf.mxu0
        %v4765 = vadd.f32 0.0, %v4764
        %v4766 = vpop.f32.mrf.mxu0
        %v4767 = vadd.f32 0.0, %v4766
        %v4768 = vpop.f32.mrf.mxu0
        %v4769 = vadd.f32 0.0, %v4768
        %4770 = vmatprep.mubr.bf16.mxu0 0
        %4771 = vmatmul.mubr.bf16.gmra.mxu0 %v4596
        %v4772 = vpop.f32.mrf.mxu0
        %v4773 = vadd.f32 0.0, %v4772
        %v4774 = vpop.f32.mrf.mxu0
        %v4775 = vadd.f32 0.0, %v4774
        %v4776 = vpop.f32.mrf.mxu0
        %v4777 = vadd.f32 0.0, %v4776
        %v4778 = vpop.f32.mrf.mxu0
        %v4779 = vadd.f32 0.0, %v4778
        %4780 = vmatprep.mubr.bf16.mxu0 0
        %4781 = vmatmul.mubr.bf16.gmra.mxu0 %v4599
        %v4782 = vpop.f32.mrf.mxu0
        %v4783 = vadd.f32 0.0, %v4782
        %v4784 = vpop.f32.mrf.mxu0
        %v4785 = vadd.f32 0.0, %v4784
        %v4786 = vpop.f32.mrf.mxu0
        %v4787 = vadd.f32 0.0, %v4786
        %v4788 = vpop.f32.mrf.mxu0
        %v4789 = vadd.f32 0.0, %v4788
        %4790 = vmatprep.mubr.bf16.mxu0 0
        %4791 = vmatmul.mubr.bf16.gmra.mxu0 %v4602
        %v4792 = vpop.f32.mrf.mxu0
        %v4793 = vadd.f32 0.0, %v4792
        %v4794 = vpop.f32.mrf.mxu0
        %v4795 = vadd.f32 0.0, %v4794
        %v4796 = vpop.f32.mrf.mxu0
        %v4797 = vadd.f32 0.0, %v4796
        %v4798 = vpop.f32.mrf.mxu0
        %v4799 = vadd.f32 0.0, %v4798
        %4800 = vmatprep.mubr.bf16.mxu0 0
        %4801 = vmatmul.mubr.bf16.gmra.mxu0 %v4605
        %v4802 = vpop.f32.mrf.mxu0
        %v4803 = vadd.f32 0.0, %v4802
        %v4804 = vpop.f32.mrf.mxu0
        %v4805 = vadd.f32 0.0, %v4804
        %v4806 = vpop.f32.mrf.mxu0
        %v4807 = vadd.f32 0.0, %v4806
        %v4808 = vpop.f32.mrf.mxu0
        %v4809 = vadd.f32 0.0, %v4808
        %4810 = vmatprep.mubr.bf16.mxu0 0
        %4811 = vmatmul.mubr.bf16.gmra.mxu0 %v4608
        %v4812 = vpop.f32.mrf.mxu0
        %v4813 = vadd.f32 0.0, %v4812
        %v4814 = vpop.f32.mrf.mxu0
        %v4815 = vadd.f32 0.0, %v4814
        %v4816 = vpop.f32.mrf.mxu0
        %v4817 = vadd.f32 0.0, %v4816
        %v4818 = vpop.f32.mrf.mxu0
        %v4819 = vadd.f32 0.0, %v4818
        %4820 = vmatprep.mubr.bf16.mxu0 0
        %4821 = vmatmul.mubr.bf16.gmra.mxu0 %v4611
        %v4822 = vpop.f32.mrf.mxu0
        %v4823 = vadd.f32 0.0, %v4822
        %v4824 = vpop.f32.mrf.mxu0
        %v4825 = vadd.f32 0.0, %v4824
        %v4826 = vpop.f32.mrf.mxu0
        %v4827 = vadd.f32 0.0, %v4826
        %v4828 = vpop.f32.mrf.mxu0
        %v4829 = vadd.f32 0.0, %v4828
        %4830 = vmatprep.mubr.bf16.mxu0 0
        %4831 = vmatmul.mubr.bf16.gmra.mxu0 %v4614
        %v4832 = vpop.f32.mrf.mxu0
        %v4833 = vadd.f32 0.0, %v4832
        %v4834 = vpop.f32.mrf.mxu0
        %v4835 = vadd.f32 0.0, %v4834
        %v4836 = vpop.f32.mrf.mxu0
        %v4837 = vadd.f32 0.0, %v4836
        %v4838 = vpop.f32.mrf.mxu0
        %v4839 = vadd.f32 0.0, %v4838
        %4840 = vmatprep.mubr.bf16.mxu0 0
        %4841 = vmatmul.mubr.bf16.gmra.mxu0 %v4617
        %v4842 = vpop.f32.mrf.mxu0
        %v4843 = vadd.f32 0.0, %v4842
        %v4844 = vpop.f32.mrf.mxu0
        %v4845 = vadd.f32 0.0, %v4844
        %v4846 = vpop.f32.mrf.mxu0
        %v4847 = vadd.f32 0.0, %v4846
        %v4848 = vpop.f32.mrf.mxu0
        %v4849 = vadd.f32 0.0, %v4848
        %4850 = vmatprep.mubr.bf16.mxu0 0
        %4851 = vmatmul.mubr.bf16.gmra.mxu0 %v4620
        %v4852 = vpop.f32.mrf.mxu0
        %v4853 = vadd.f32 0.0, %v4852
        %v4854 = vpop.f32.mrf.mxu0
        %v4855 = vadd.f32 0.0, %v4854
        %v4856 = vpop.f32.mrf.mxu0
        %v4857 = vadd.f32 0.0, %v4856
        %v4858 = vpop.f32.mrf.mxu0
        %v4859 = vadd.f32 0.0, %v4858
        %4860 = vmatprep.mubr.bf16.mxu0 0
        %4861 = vmatmul.mubr.bf16.gmra.mxu0 %v4623
        %v4862 = vpop.f32.mrf.mxu0
        %v4863 = vadd.f32 0.0, %v4862
        %v4864 = vpop.f32.mrf.mxu0
        %v4865 = vadd.f32 0.0, %v4864
        %v4866 = vpop.f32.mrf.mxu0
        %v4867 = vadd.f32 0.0, %v4866
        %v4868 = vpop.f32.mrf.mxu0
        %v4869 = vadd.f32 0.0, %v4868
        %4870 = vmatprep.mubr.bf16.mxu0 0
        %4871 = vmatmul.mubr.bf16.gmra.mxu0 %v4626
        %v4872 = vpop.f32.mrf.mxu0
        %v4873 = vadd.f32 0.0, %v4872
        %v4874 = vpop.f32.mrf.mxu0
        %v4875 = vadd.f32 0.0, %v4874
        %v4876 = vpop.f32.mrf.mxu0
        %v4877 = vadd.f32 0.0, %v4876
        %v4878 = vpop.f32.mrf.mxu0
        %v4879 = vadd.f32 0.0, %v4878
        %4880 = vmatprep.mubr.bf16.mxu0 0
        %4881 = vmatmul.mubr.bf16.gmra.mxu0 %v4629
        %v4882 = vpop.f32.mrf.mxu0
        %v4883 = vadd.f32 0.0, %v4882
        %v4884 = vpop.f32.mrf.mxu0
        %v4885 = vadd.f32 0.0, %v4884
        %v4886 = vpop.f32.mrf.mxu0
        %v4887 = vadd.f32 0.0, %v4886
        %v4888 = vpop.f32.mrf.mxu0
        %v4889 = vadd.f32 0.0, %v4888
        %4890 = vmatprep.mubr.bf16.mxu0 0
        %4891 = vmatmul.mubr.bf16.gmra.mxu0 %v4632
        %v4892 = vpop.f32.mrf.mxu0
        %v4893 = vadd.f32 0.0, %v4892
        %v4894 = vpop.f32.mrf.mxu0
        %v4895 = vadd.f32 0.0, %v4894
        %v4896 = vpop.f32.mrf.mxu0
        %v4897 = vadd.f32 0.0, %v4896
        %v4898 = vpop.f32.mrf.mxu0
        %v4899 = vadd.f32 0.0, %v4898
        %4900 = vmatprep.mubr.bf16.mxu0 0
        %4901 = vmatmul.mubr.bf16.gmra.mxu0 %v4635
        %v4902 = vpop.f32.mrf.mxu0
        %v4903 = vadd.f32 0.0, %v4902
        %v4904 = vpop.f32.mrf.mxu0
        %v4905 = vadd.f32 0.0, %v4904
        %v4906 = vpop.f32.mrf.mxu0
        %v4907 = vadd.f32 0.0, %v4906
        %v4908 = vpop.f32.mrf.mxu0
        %v4909 = vadd.f32 0.0, %v4908
        %4910 = vmatprep.mubr.bf16.mxu0 0
        %4911 = vmatmul.mubr.bf16.gmra.mxu0 %v4638
        %v4912 = vpop.f32.mrf.mxu0
        %v4913 = vadd.f32 0.0, %v4912
        %v4914 = vpop.f32.mrf.mxu0
        %v4915 = vadd.f32 0.0, %v4914
        %v4916 = vpop.f32.mrf.mxu0
        %v4917 = vadd.f32 0.0, %v4916
        %v4918 = vpop.f32.mrf.mxu0
        %v4919 = vadd.f32 0.0, %v4918
        %4920 = vmatprep.mubr.bf16.mxu0 0
        %4921 = vmatmul.mubr.bf16.gmra.mxu0 %v4641
        %v4922 = vpop.f32.mrf.mxu0
        %v4923 = vadd.f32 0.0, %v4922
        %v4924 = vpop.f32.mrf.mxu0
        %v4925 = vadd.f32 0.0, %v4924
        %v4926 = vpop.f32.mrf.mxu0
        %v4927 = vadd.f32 0.0, %v4926
        %v4928 = vpop.f32.mrf.mxu0
        %v4929 = vadd.f32 0.0, %v4928
        %4930 = vmatprep.mubr.bf16.mxu0 0
        %4931 = vmatmul.mubr.bf16.gmra.mxu0 %v4644
        %v4932 = vpop.f32.mrf.mxu0
        %v4933 = vadd.f32 0.0, %v4932
        %v4934 = vpop.f32.mrf.mxu0
        %v4935 = vadd.f32 0.0, %v4934
        %v4936 = vpop.f32.mrf.mxu0
        %v4937 = vadd.f32 0.0, %v4936
        %v4938 = vpop.f32.mrf.mxu0
        %v4939 = vadd.f32 0.0, %v4938
        %4940 = vmatprep.mubr.bf16.mxu0 0
        %4941 = vmatmul.mubr.bf16.gmra.mxu0 %v4647
        %v4942 = vpop.f32.mrf.mxu0
        %v4943 = vadd.f32 0.0, %v4942
        %v4944 = vpop.f32.mrf.mxu0
        %v4945 = vadd.f32 0.0, %v4944
        %v4946 = vpop.f32.mrf.mxu0
        %v4947 = vadd.f32 0.0, %v4946
        %v4948 = vpop.f32.mrf.mxu0
        %v4949 = vadd.f32 0.0, %v4948
        %4950 = vdwg.mxu0
        %4951 = vmatprep.subr.bf16.mxu0 0
        %4952 = vmatpush1.bf16.msra.mxu0 0
        %4953 = vmatprep.subr.bf16.mxu0 0
        %4954 = vmatpush1.bf16.msra.mxu0 0
        %4955 = vmatprep.subr.bf16.mxu0 0
        %4956 = vmatpush1.bf16.msra.mxu0 0
        %4957 = vmatprep.subr.bf16.mxu0 0
        %4958 = vmatpush1.bf16.msra.mxu0 0
        %4959 = vmatprep.subr.bf16.mxu0 0
        %4960 = vmatpush1.bf16.msra.mxu0 0
        %4961 = vmatprep.subr.bf16.mxu0 0
        %4962 = vmatpush1.bf16.msra.mxu0 0
        %4963 = vmatprep.subr.bf16.mxu0 0
        %4964 = vmatpush1.bf16.msra.mxu0 %v4656
        %4965 = vmatprep.subr.bf16.mxu0 0
        %4966 = vmatpush1.bf16.msra.mxu0 %v4564
        %4967 = vmatprep.subr.bf16.mxu0 0
        %4968 = vmatpush2.bf16.msra.mxu0 0
        %4969 = vmatprep.subr.bf16.mxu0 0
        %4970 = vmatpush2.bf16.msra.mxu0 0
        %4971 = vmatprep.subr.bf16.mxu0 0
        %4972 = vmatpush2.bf16.msra.mxu0 0
        %4973 = vmatprep.subr.bf16.mxu0 0
        %4974 = vmatpush2.bf16.msra.mxu0 0
        %4975 = vmatprep.subr.bf16.mxu0 0
        %4976 = vmatpush2.bf16.msra.mxu0 0
        %4977 = vmatprep.subr.bf16.mxu0 0
        %4978 = vmatpush2.bf16.msra.mxu0 0
        %4979 = vmatprep.subr.bf16.mxu0 0
        %4980 = vmatpush2.bf16.msra.mxu0 0
        %4981 = vmatprep.subr.bf16.mxu0 0
        %4982 = vmatpush2.bf16.msra.mxu0 0
        %4983 = vmatprep.mubr.bf16.mxu0 0
        %4984 = vmatmul.mubr.bf16.gmra.mxu0 %v4572
        %v4985 = vpop.f32.mrf.mxu0
        %v4986 = vadd.f32 0.0, %v4985
        %v4987 = vpop.f32.mrf.mxu0
        %v4988 = vpop.f32.mrf.mxu0
        %v4989 = vadd.f32 0.0, %v4988
        %v4990 = vpop.f32.mrf.mxu0
        %4991 = vmatprep.mubr.bf16.mxu0 0
        %4992 = vmatmul.mubr.bf16.gmra.mxu0 %v4575
        %v4993 = vpop.f32.mrf.mxu0
        %v4994 = vadd.f32 0.0, %v4993
        %v4995 = vpop.f32.mrf.mxu0
        %v4996 = vpop.f32.mrf.mxu0
        %v4997 = vadd.f32 0.0, %v4996
        %v4998 = vpop.f32.mrf.mxu0
        %4999 = vmatprep.mubr.bf16.mxu0 0
        %5000 = vmatmul.mubr.bf16.gmra.mxu0 %v4578
        %v5001 = vpop.f32.mrf.mxu0
        %v5002 = vadd.f32 0.0, %v5001
        %v5003 = vpop.f32.mrf.mxu0
        %v5004 = vpop.f32.mrf.mxu0
        %v5005 = vadd.f32 0.0, %v5004
        %v5006 = vpop.f32.mrf.mxu0
        %5007 = vmatprep.mubr.bf16.mxu0 0
        %5008 = vmatmul.mubr.bf16.gmra.mxu0 %v4581
        %v5009 = vpop.f32.mrf.mxu0
        %v5010 = vadd.f32 0.0, %v5009
        %v5011 = vpop.f32.mrf.mxu0
        %v5012 = vpop.f32.mrf.mxu0
        %v5013 = vadd.f32 0.0, %v5012
        %v5014 = vpop.f32.mrf.mxu0
        %5015 = vmatprep.mubr.bf16.mxu0 0
        %5016 = vmatmul.mubr.bf16.gmra.mxu0 %v4584
        %v5017 = vpop.f32.mrf.mxu0
        %v5018 = vadd.f32 0.0, %v5017
        %v5019 = vpop.f32.mrf.mxu0
        %v5020 = vpop.f32.mrf.mxu0
        %v5021 = vadd.f32 0.0, %v5020
        %v5022 = vpop.f32.mrf.mxu0
        %5023 = vmatprep.mubr.bf16.mxu0 0
        %5024 = vmatmul.mubr.bf16.gmra.mxu0 %v4587
        %v5025 = vpop.f32.mrf.mxu0
        %v5026 = vadd.f32 0.0, %v5025
        %v5027 = vpop.f32.mrf.mxu0
        %v5028 = vpop.f32.mrf.mxu0
        %v5029 = vadd.f32 0.0, %v5028
        %v5030 = vpop.f32.mrf.mxu0
        %5031 = vmatprep.mubr.bf16.mxu0 0
        %5032 = vmatmul.mubr.bf16.gmra.mxu0 %v4590
        %v5033 = vpop.f32.mrf.mxu0
        %v5034 = vadd.f32 0.0, %v5033
        %v5035 = vpop.f32.mrf.mxu0
        %v5036 = vpop.f32.mrf.mxu0
        %v5037 = vadd.f32 0.0, %v5036
        %v5038 = vpop.f32.mrf.mxu0
        %5039 = vmatprep.mubr.bf16.mxu0 0
        %5040 = vmatmul.mubr.bf16.gmra.mxu0 %v4593
        %v5041 = vpop.f32.mrf.mxu0
        %v5042 = vadd.f32 0.0, %v5041
        %v5043 = vpop.f32.mrf.mxu0
        %v5044 = vpop.f32.mrf.mxu0
        %v5045 = vadd.f32 0.0, %v5044
        %v5046 = vpop.f32.mrf.mxu0
        %5047 = vmatprep.mubr.bf16.mxu0 0
        %5048 = vmatmul.mubr.bf16.gmra.mxu0 %v4596
        %v5049 = vpop.f32.mrf.mxu0
        %v5050 = vadd.f32 0.0, %v5049
        %v5051 = vpop.f32.mrf.mxu0
        %v5052 = vpop.f32.mrf.mxu0
        %v5053 = vadd.f32 0.0, %v5052
        %v5054 = vpop.f32.mrf.mxu0
        %5055 = vmatprep.mubr.bf16.mxu0 0
        %5056 = vmatmul.mubr.bf16.gmra.mxu0 %v4599
        %v5057 = vpop.f32.mrf.mxu0
        %v5058 = vadd.f32 0.0, %v5057
        %v5059 = vpop.f32.mrf.mxu0
        %v5060 = vpop.f32.mrf.mxu0
        %v5061 = vadd.f32 0.0, %v5060
        %v5062 = vpop.f32.mrf.mxu0
        %5063 = vmatprep.mubr.bf16.mxu0 0
        %5064 = vmatmul.mubr.bf16.gmra.mxu0 %v4602
        %v5065 = vpop.f32.mrf.mxu0
        %v5066 = vadd.f32 0.0, %v5065
        %v5067 = vpop.f32.mrf.mxu0
        %v5068 = vpop.f32.mrf.mxu0
        %v5069 = vadd.f32 0.0, %v5068
        %v5070 = vpop.f32.mrf.mxu0
        %5071 = vmatprep.mubr.bf16.mxu0 0
        %5072 = vmatmul.mubr.bf16.gmra.mxu0 %v4605
        %v5073 = vpop.f32.mrf.mxu0
        %v5074 = vadd.f32 0.0, %v5073
        %v5075 = vpop.f32.mrf.mxu0
        %v5076 = vpop.f32.mrf.mxu0
        %v5077 = vadd.f32 0.0, %v5076
        %v5078 = vpop.f32.mrf.mxu0
        %5079 = vmatprep.mubr.bf16.mxu0 0
        %5080 = vmatmul.mubr.bf16.gmra.mxu0 %v4608
        %v5081 = vpop.f32.mrf.mxu0
        %v5082 = vadd.f32 0.0, %v5081
        %v5083 = vpop.f32.mrf.mxu0
        %v5084 = vpop.f32.mrf.mxu0
        %v5085 = vadd.f32 0.0, %v5084
        %v5086 = vpop.f32.mrf.mxu0
        %5087 = vmatprep.mubr.bf16.mxu0 0
        %5088 = vmatmul.mubr.bf16.gmra.mxu0 %v4611
        %v5089 = vpop.f32.mrf.mxu0
        %v5090 = vadd.f32 0.0, %v5089
        %v5091 = vpop.f32.mrf.mxu0
        %v5092 = vpop.f32.mrf.mxu0
        %v5093 = vadd.f32 0.0, %v5092
        %v5094 = vpop.f32.mrf.mxu0
        %5095 = vmatprep.mubr.bf16.mxu0 0
        %5096 = vmatmul.mubr.bf16.gmra.mxu0 %v4614
        %v5097 = vpop.f32.mrf.mxu0
        %v5098 = vadd.f32 0.0, %v5097
        %v5099 = vpop.f32.mrf.mxu0
        %v5100 = vpop.f32.mrf.mxu0
        %v5101 = vadd.f32 0.0, %v5100
        %v5102 = vpop.f32.mrf.mxu0
        %5103 = vmatprep.mubr.bf16.mxu0 0
        %5104 = vmatmul.mubr.bf16.gmra.mxu0 %v4617
        %v5105 = vpop.f32.mrf.mxu0
        %v5106 = vadd.f32 0.0, %v5105
        %v5107 = vpop.f32.mrf.mxu0
        %v5108 = vpop.f32.mrf.mxu0
        %v5109 = vadd.f32 0.0, %v5108
        %v5110 = vpop.f32.mrf.mxu0
        %5111 = vmatprep.mubr.bf16.mxu0 0
        %5112 = vmatmul.mubr.bf16.gmra.mxu0 %v4620
        %v5113 = vpop.f32.mrf.mxu0
        %v5114 = vadd.f32 0.0, %v5113
        %v5115 = vpop.f32.mrf.mxu0
        %v5116 = vpop.f32.mrf.mxu0
        %v5117 = vadd.f32 0.0, %v5116
        %v5118 = vpop.f32.mrf.mxu0
        %5119 = vmatprep.mubr.bf16.mxu0 0
        %5120 = vmatmul.mubr.bf16.gmra.mxu0 %v4623
        %v5121 = vpop.f32.mrf.mxu0
        %v5122 = vadd.f32 0.0, %v5121
        %v5123 = vpop.f32.mrf.mxu0
        %v5124 = vpop.f32.mrf.mxu0
        %v5125 = vadd.f32 0.0, %v5124
        %v5126 = vpop.f32.mrf.mxu0
        %5127 = vmatprep.mubr.bf16.mxu0 0
        %5128 = vmatmul.mubr.bf16.gmra.mxu0 %v4626
        %v5129 = vpop.f32.mrf.mxu0
        %v5130 = vadd.f32 0.0, %v5129
        %v5131 = vpop.f32.mrf.mxu0
        %v5132 = vpop.f32.mrf.mxu0
        %v5133 = vadd.f32 0.0, %v5132
        %v5134 = vpop.f32.mrf.mxu0
        %5135 = vmatprep.mubr.bf16.mxu0 0
        %5136 = vmatmul.mubr.bf16.gmra.mxu0 %v4629
        %v5137 = vpop.f32.mrf.mxu0
        %v5138 = vadd.f32 0.0, %v5137
        %v5139 = vpop.f32.mrf.mxu0
        %v5140 = vpop.f32.mrf.mxu0
        %v5141 = vadd.f32 0.0, %v5140
        %v5142 = vpop.f32.mrf.mxu0
        %5143 = vmatprep.mubr.bf16.mxu0 0
        %5144 = vmatmul.mubr.bf16.gmra.mxu0 %v4632
        %v5145 = vpop.f32.mrf.mxu0
        %v5146 = vadd.f32 0.0, %v5145
        %v5147 = vpop.f32.mrf.mxu0
        %v5148 = vpop.f32.mrf.mxu0
        %v5149 = vadd.f32 0.0, %v5148
        %v5150 = vpop.f32.mrf.mxu0
        %5151 = vmatprep.mubr.bf16.mxu0 0
        %5152 = vmatmul.mubr.bf16.gmra.mxu0 %v4635
        %v5153 = vpop.f32.mrf.mxu0
        %v5154 = vadd.f32 0.0, %v5153
        %v5155 = vpop.f32.mrf.mxu0
        %v5156 = vpop.f32.mrf.mxu0
        %v5157 = vadd.f32 0.0, %v5156
        %v5158 = vpop.f32.mrf.mxu0
        %5159 = vmatprep.mubr.bf16.mxu0 0
        %5160 = vmatmul.mubr.bf16.gmra.mxu0 %v4638
        %v5161 = vpop.f32.mrf.mxu0
        %v5162 = vadd.f32 0.0, %v5161
        %v5163 = vpop.f32.mrf.mxu0
        %v5164 = vpop.f32.mrf.mxu0
        %v5165 = vadd.f32 0.0, %v5164
        %v5166 = vpop.f32.mrf.mxu0
        %5167 = vmatprep.mubr.bf16.mxu0 0
        %5168 = vmatmul.mubr.bf16.gmra.mxu0 %v4641
        %v5169 = vpop.f32.mrf.mxu0
        %v5170 = vadd.f32 0.0, %v5169
        %v5171 = vpop.f32.mrf.mxu0
        %v5172 = vpop.f32.mrf.mxu0
        %v5173 = vadd.f32 0.0, %v5172
        %v5174 = vpop.f32.mrf.mxu0
        %5175 = vmatprep.mubr.bf16.mxu0 0
        %5176 = vmatmul.mubr.bf16.gmra.mxu0 %v4644
        %v5177 = vpop.f32.mrf.mxu0
        %v5178 = vadd.f32 0.0, %v5177
        %v5179 = vpop.f32.mrf.mxu0
        %v5180 = vpop.f32.mrf.mxu0
        %v5181 = vadd.f32 0.0, %v5180
        %v5182 = vpop.f32.mrf.mxu0
        %5183 = vmatprep.mubr.bf16.mxu0 0
        %5184 = vmatmul.mubr.bf16.gmra.mxu0 %v4647
        %v5185 = vpop.f32.mrf.mxu0
        %v5186 = vadd.f32 0.0, %v5185
        %v5187 = vpop.f32.mrf.mxu0
        %v5188 = vpop.f32.mrf.mxu0
        %v5189 = vadd.f32 0.0, %v5188
        %v5190 = vpop.f32.mrf.mxu0
        %5191 = vdwg.mxu0
        %v5192 = vadd.f32 %v4194, %v4693
        %v5193 = vadd.f32 %v4195, %v4695
        %v5194 = vadd.f32 %v4196, %v4986
        %v5195 = vadd.f32 %v4197, %v4697
        %v5196 = vadd.f32 %v4198, %v4699
        %v5197 = vadd.f32 %v4199, %v4989
        %v5198 = vadd.f32 %v4200, %v4703
        %v5199 = vadd.f32 %v4201, %v4705
        %v5200 = vadd.f32 %v4202, %v4994
        %v5201 = vadd.f32 %v4203, %v4707
        %v5202 = vadd.f32 %v4204, %v4709
        %v5203 = vadd.f32 %v4205, %v4997
        %v5204 = vadd.f32 %v4206, %v4713
        %v5205 = vadd.f32 %v4207, %v4715
        %v5206 = vadd.f32 %v4208, %v5002
        %v5207 = vadd.f32 %v4209, %v4717
        %v5208 = vadd.f32 %v4210, %v4719
        %v5209 = vadd.f32 %v4211, %v5005
        %v5210 = vadd.f32 %v4212, %v4723
        %v5211 = vadd.f32 %v4213, %v4725
        %v5212 = vadd.f32 %v4214, %v5010
        %v5213 = vadd.f32 %v4215, %v4727
        %v5214 = vadd.f32 %v4216, %v4729
        %v5215 = vadd.f32 %v4217, %v5013
        %v5216 = vadd.f32 %v4218, %v4733
        %v5217 = vadd.f32 %v4219, %v4735
        %v5218 = vadd.f32 %v4220, %v5018
        %v5219 = vadd.f32 %v4221, %v4737
        %v5220 = vadd.f32 %v4222, %v4739
        %v5221 = vadd.f32 %v4223, %v5021
        %v5222 = vadd.f32 %v4224, %v4743
        %v5223 = vadd.f32 %v4225, %v4745
        %v5224 = vadd.f32 %v4226, %v5026
        %v5225 = vadd.f32 %v4227, %v4747
        %v5226 = vadd.f32 %v4228, %v4749
        %v5227 = vadd.f32 %v4229, %v5029
        %v5228 = vadd.f32 %v4230, %v4753
        %v5229 = vadd.f32 %v4231, %v4755
        %v5230 = vadd.f32 %v4232, %v5034
        %v5231 = vadd.f32 %v4233, %v4757
        %v5232 = vadd.f32 %v4234, %v4759
        %v5233 = vadd.f32 %v4235, %v5037
        %v5234 = vadd.f32 %v4236, %v4763
        %v5235 = vadd.f32 %v4237, %v4765
        %v5236 = vadd.f32 %v4238, %v5042
        %v5237 = vadd.f32 %v4239, %v4767
        %v5238 = vadd.f32 %v4240, %v4769
        %v5239 = vadd.f32 %v4241, %v5045
        %v5240 = vadd.f32 %v4242, %v4773
        %v5241 = vadd.f32 %v4243, %v4775
        %v5242 = vadd.f32 %v4244, %v5050
        %v5243 = vadd.f32 %v4245, %v4777
        %v5244 = vadd.f32 %v4246, %v4779
        %v5245 = vadd.f32 %v4247, %v5053
        %v5246 = vadd.f32 %v4248, %v4783
        %v5247 = vadd.f32 %v4249, %v4785
        %v5248 = vadd.f32 %v4250, %v5058
        %v5249 = vadd.f32 %v4251, %v4787
        %v5250 = vadd.f32 %v4252, %v4789
        %v5251 = vadd.f32 %v4253, %v5061
        %v5252 = vadd.f32 %v4254, %v4793
        %v5253 = vadd.f32 %v4255, %v4795
        %v5254 = vadd.f32 %v4256, %v5066
        %v5255 = vadd.f32 %v4257, %v4797
        %v5256 = vadd.f32 %v4258, %v4799
        %v5257 = vadd.f32 %v4259, %v5069
        %v5258 = vadd.f32 %v4260, %v4803
        %v5259 = vadd.f32 %v4261, %v4805
        %v5260 = vadd.f32 %v4262, %v5074
        %v5261 = vadd.f32 %v4263, %v4807
        %v5262 = vadd.f32 %v4264, %v4809
        %v5263 = vadd.f32 %v4265, %v5077
        %v5264 = vadd.f32 %v4266, %v4813
        %v5265 = vadd.f32 %v4267, %v4815
        %v5266 = vadd.f32 %v4268, %v5082
        %v5267 = vadd.f32 %v4269, %v4817
        %v5268 = vadd.f32 %v4270, %v4819
        %v5269 = vadd.f32 %v4271, %v5085
        %v5270 = vadd.f32 %v4272, %v4823
        %v5271 = vadd.f32 %v4273, %v4825
        %v5272 = vadd.f32 %v4274, %v5090
        %v5273 = vadd.f32 %v4275, %v4827
        %v5274 = vadd.f32 %v4276, %v4829
        %v5275 = vadd.f32 %v4277, %v5093
        %v5276 = vadd.f32 %v4278, %v4833
        %v5277 = vadd.f32 %v4279, %v4835
        %v5278 = vadd.f32 %v4280, %v5098
        %v5279 = vadd.f32 %v4281, %v4837
        %v5280 = vadd.f32 %v4282, %v4839
        %v5281 = vadd.f32 %v4283, %v5101
        %v5282 = vadd.f32 %v4284, %v4843
        %v5283 = vadd.f32 %v4285, %v4845
        %v5284 = vadd.f32 %v4286, %v5106
        %v5285 = vadd.f32 %v4287, %v4847
        %v5286 = vadd.f32 %v4288, %v4849
        %v5287 = vadd.f32 %v4289, %v5109
        %v5288 = vadd.f32 %v4290, %v4853
        %v5289 = vadd.f32 %v4291, %v4855
        %v5290 = vadd.f32 %v4292, %v5114
        %v5291 = vadd.f32 %v4293, %v4857
        %v5292 = vadd.f32 %v4294, %v4859
        %v5293 = vadd.f32 %v4295, %v5117
        %v5294 = vadd.f32 %v4296, %v4863
        %v5295 = vadd.f32 %v4297, %v4865
        %v5296 = vadd.f32 %v4298, %v5122
        %v5297 = vadd.f32 %v4299, %v4867
        %v5298 = vadd.f32 %v4300, %v4869
        %v5299 = vadd.f32 %v4301, %v5125
        %v5300 = vadd.f32 %v4302, %v4873
        %v5301 = vadd.f32 %v4303, %v4875
        %v5302 = vadd.f32 %v4304, %v5130
        %v5303 = vadd.f32 %v4305, %v4877
        %v5304 = vadd.f32 %v4306, %v4879
        %v5305 = vadd.f32 %v4307, %v5133
        %v5306 = vadd.f32 %v4308, %v4883
        %v5307 = vadd.f32 %v4309, %v4885
        %v5308 = vadd.f32 %v4310, %v5138
        %v5309 = vadd.f32 %v4311, %v4887
        %v5310 = vadd.f32 %v4312, %v4889
        %v5311 = vadd.f32 %v4313, %v5141
        %v5312 = vadd.f32 %v4314, %v4893
        %v5313 = vadd.f32 %v4315, %v4895
        %v5314 = vadd.f32 %v4316, %v5146
        %v5315 = vadd.f32 %v4317, %v4897
        %v5316 = vadd.f32 %v4318, %v4899
        %v5317 = vadd.f32 %v4319, %v5149
        %v5318 = vadd.f32 %v4320, %v4903
        %v5319 = vadd.f32 %v4321, %v4905
        %v5320 = vadd.f32 %v4322, %v5154
        %v5321 = vadd.f32 %v4323, %v4907
        %v5322 = vadd.f32 %v4324, %v4909
        %v5323 = vadd.f32 %v4325, %v5157
        %v5324 = vadd.f32 %v4326, %v4913
        %v5325 = vadd.f32 %v4327, %v4915
        %v5326 = vadd.f32 %v4328, %v5162
        %v5327 = vadd.f32 %v4329, %v4917
        %v5328 = vadd.f32 %v4330, %v4919
        %v5329 = vadd.f32 %v4331, %v5165
        %v5330 = vadd.f32 %v4332, %v4923
        %v5331 = vadd.f32 %v4333, %v4925
        %v5332 = vadd.f32 %v4334, %v5170
        %v5333 = vadd.f32 %v4335, %v4927
        %v5334 = vadd.f32 %v4336, %v4929
        %v5335 = vadd.f32 %v4337, %v5173
        %v5336 = vadd.f32 %v4338, %v4933
        %v5337 = vadd.f32 %v4339, %v4935
        %v5338 = vadd.f32 %v4340, %v5178
        %v5339 = vadd.f32 %v4341, %v4937
        %v5340 = vadd.f32 %v4342, %v4939
        %v5341 = vadd.f32 %v4343, %v5181
        %v5342 = vadd.f32 %v4344, %v4943
        %v5343 = vadd.f32 %v4345, %v4945
        %v5344 = vadd.f32 %v4346, %v5186
        %v5345 = vadd.f32 %v4347, %v4947
        %v5346 = vadd.f32 %v4348, %v4949
        %v5347 = vadd.f32 %v4349, %v5189
        %5452 = vrot.lane.b32.xlu0 %v5193, 126
        %v5453 = vpop.permute.xlu0 %5452
        %5454 = vrot.lane.b32.xlu0 %v5194, 126
        %v5455 = vpop.permute.xlu0 %5454
        %5456 = vrot.lane.b32.xlu0 %v5196, 126
        %v5457 = vpop.permute.xlu0 %5456
        %5458 = vrot.lane.b32.xlu0 %v5197, 126
        %v5459 = vpop.permute.xlu0 %5458
        %5460 = vrot.lane.b32.xlu0 %v5199, 126
        %v5461 = vpop.permute.xlu0 %5460
        %5462 = vrot.lane.b32.xlu0 %v5200, 126
        %v5463 = vpop.permute.xlu0 %5462
        %5464 = vrot.lane.b32.xlu0 %v5202, 126
        %v5465 = vpop.permute.xlu0 %5464
        %5466 = vrot.lane.b32.xlu0 %v5203, 126
        %v5467 = vpop.permute.xlu0 %5466
        %5468 = vrot.lane.b32.xlu0 %v5205, 126
        %v5469 = vpop.permute.xlu0 %5468
        %5470 = vrot.lane.b32.xlu0 %v5206, 126
        %v5471 = vpop.permute.xlu0 %5470
        %5472 = vrot.lane.b32.xlu0 %v5208, 126
        %v5473 = vpop.permute.xlu0 %5472
        %5474 = vrot.lane.b32.xlu0 %v5209, 126
        %v5475 = vpop.permute.xlu0 %5474
        %5476 = vrot.lane.b32.xlu0 %v5211, 126
        %v5477 = vpop.permute.xlu0 %5476
        %5478 = vrot.lane.b32.xlu0 %v5212, 126
        %v5479 = vpop.permute.xlu0 %5478
        %5480 = vrot.lane.b32.xlu0 %v5214, 126
        %v5481 = vpop.permute.xlu0 %5480
        %5482 = vrot.lane.b32.xlu0 %v5215, 126
        %v5483 = vpop.permute.xlu0 %5482
        %5484 = vrot.lane.b32.xlu0 %v5217, 126
        %v5485 = vpop.permute.xlu0 %5484
        %5486 = vrot.lane.b32.xlu0 %v5218, 126
        %v5487 = vpop.permute.xlu0 %5486
        %5488 = vrot.lane.b32.xlu0 %v5220, 126
        %v5489 = vpop.permute.xlu0 %5488
        %5490 = vrot.lane.b32.xlu0 %v5221, 126
        %v5491 = vpop.permute.xlu0 %5490
        %5492 = vrot.lane.b32.xlu0 %v5223, 126
        %v5493 = vpop.permute.xlu0 %5492
        %5494 = vrot.lane.b32.xlu0 %v5224, 126
        %v5495 = vpop.permute.xlu0 %5494
        %5496 = vrot.lane.b32.xlu0 %v5226, 126
        %v5497 = vpop.permute.xlu0 %5496
        %5498 = vrot.lane.b32.xlu0 %v5227, 126
        %v5499 = vpop.permute.xlu0 %5498
        %5500 = vrot.lane.b32.xlu0 %v5229, 126
        %v5501 = vpop.permute.xlu0 %5500
        %5502 = vrot.lane.b32.xlu0 %v5230, 126
        %v5503 = vpop.permute.xlu0 %5502
        %5504 = vrot.lane.b32.xlu0 %v5232, 126
        %v5505 = vpop.permute.xlu0 %5504
        %5506 = vrot.lane.b32.xlu0 %v5233, 126
        %v5507 = vpop.permute.xlu0 %5506
        %5508 = vrot.lane.b32.xlu0 %v5235, 126
        %v5509 = vpop.permute.xlu0 %5508
        %5510 = vrot.lane.b32.xlu0 %v5236, 126
        %v5511 = vpop.permute.xlu0 %5510
        %5512 = vrot.lane.b32.xlu0 %v5238, 126
        %v5513 = vpop.permute.xlu0 %5512
        %5514 = vrot.lane.b32.xlu0 %v5239, 126
        %v5515 = vpop.permute.xlu0 %5514
        %5516 = vrot.lane.b32.xlu0 %v5241, 126
        %v5517 = vpop.permute.xlu0 %5516
        %5518 = vrot.lane.b32.xlu0 %v5242, 126
        %v5519 = vpop.permute.xlu0 %5518
        %5520 = vrot.lane.b32.xlu0 %v5244, 126
        %v5521 = vpop.permute.xlu0 %5520
        %5522 = vrot.lane.b32.xlu0 %v5245, 126
        %v5523 = vpop.permute.xlu0 %5522
        %5524 = vrot.lane.b32.xlu0 %v5247, 126
        %v5525 = vpop.permute.xlu0 %5524
        %5526 = vrot.lane.b32.xlu0 %v5248, 126
        %v5527 = vpop.permute.xlu0 %5526
        %5528 = vrot.lane.b32.xlu0 %v5250, 126
        %v5529 = vpop.permute.xlu0 %5528
        %5530 = vrot.lane.b32.xlu0 %v5251, 126
        %v5531 = vpop.permute.xlu0 %5530
        %5532 = vrot.lane.b32.xlu0 %v5253, 126
        %v5533 = vpop.permute.xlu0 %5532
        %5534 = vrot.lane.b32.xlu0 %v5254, 126
        %v5535 = vpop.permute.xlu0 %5534
        %5536 = vrot.lane.b32.xlu0 %v5256, 126
        %v5537 = vpop.permute.xlu0 %5536
        %5538 = vrot.lane.b32.xlu0 %v5257, 126
        %v5539 = vpop.permute.xlu0 %5538
        %5540 = vrot.lane.b32.xlu0 %v5259, 126
        %v5541 = vpop.permute.xlu0 %5540
        %5542 = vrot.lane.b32.xlu0 %v5260, 126
        %v5543 = vpop.permute.xlu0 %5542
        %5544 = vrot.lane.b32.xlu0 %v5262, 126
        %v5545 = vpop.permute.xlu0 %5544
        %5546 = vrot.lane.b32.xlu0 %v5263, 126
        %v5547 = vpop.permute.xlu0 %5546
        %5548 = vrot.lane.b32.xlu0 %v5265, 126
        %v5549 = vpop.permute.xlu0 %5548
        %5550 = vrot.lane.b32.xlu0 %v5266, 126
        %v5551 = vpop.permute.xlu0 %5550
        %5552 = vrot.lane.b32.xlu0 %v5268, 126
        %v5553 = vpop.permute.xlu0 %5552
        %5554 = vrot.lane.b32.xlu0 %v5269, 126
        %v5555 = vpop.permute.xlu0 %5554
        %5556 = vrot.lane.b32.xlu0 %v5271, 126
        %v5557 = vpop.permute.xlu0 %5556
        %5558 = vrot.lane.b32.xlu0 %v5272, 126
        %v5559 = vpop.permute.xlu0 %5558
        %5560 = vrot.lane.b32.xlu0 %v5274, 126
        %v5561 = vpop.permute.xlu0 %5560
        %5562 = vrot.lane.b32.xlu0 %v5275, 126
        %v5563 = vpop.permute.xlu0 %5562
        %5564 = vrot.lane.b32.xlu0 %v5277, 126
        %v5565 = vpop.permute.xlu0 %5564
        %5566 = vrot.lane.b32.xlu0 %v5278, 126
        %v5567 = vpop.permute.xlu0 %5566
        %5568 = vrot.lane.b32.xlu0 %v5280, 126
        %v5569 = vpop.permute.xlu0 %5568
        %5570 = vrot.lane.b32.xlu0 %v5281, 126
        %v5571 = vpop.permute.xlu0 %5570
        %5572 = vrot.lane.b32.xlu0 %v5283, 126
        %v5573 = vpop.permute.xlu0 %5572
        %5574 = vrot.lane.b32.xlu0 %v5284, 126
        %v5575 = vpop.permute.xlu0 %5574
        %5576 = vrot.lane.b32.xlu0 %v5286, 126
        %v5577 = vpop.permute.xlu0 %5576
        %5578 = vrot.lane.b32.xlu0 %v5287, 126
        %v5579 = vpop.permute.xlu0 %5578
        %5580 = vrot.lane.b32.xlu0 %v5289, 126
        %v5581 = vpop.permute.xlu0 %5580
        %5582 = vrot.lane.b32.xlu0 %v5290, 126
        %v5583 = vpop.permute.xlu0 %5582
        %5584 = vrot.lane.b32.xlu0 %v5292, 126
        %v5585 = vpop.permute.xlu0 %5584
        %5586 = vrot.lane.b32.xlu0 %v5293, 126
        %v5587 = vpop.permute.xlu0 %5586
        %5588 = vrot.lane.b32.xlu0 %v5295, 126
        %v5589 = vpop.permute.xlu0 %5588
        %5590 = vrot.lane.b32.xlu0 %v5296, 126
        %v5591 = vpop.permute.xlu0 %5590
        %5592 = vrot.lane.b32.xlu0 %v5298, 126
        %v5593 = vpop.permute.xlu0 %5592
        %5594 = vrot.lane.b32.xlu0 %v5299, 126
        %v5595 = vpop.permute.xlu0 %5594
        %5596 = vrot.lane.b32.xlu0 %v5301, 126
        %v5597 = vpop.permute.xlu0 %5596
        %5598 = vrot.lane.b32.xlu0 %v5302, 126
        %v5599 = vpop.permute.xlu0 %5598
        %5600 = vrot.lane.b32.xlu0 %v5304, 126
        %v5601 = vpop.permute.xlu0 %5600
        %5602 = vrot.lane.b32.xlu0 %v5305, 126
        %v5603 = vpop.permute.xlu0 %5602
        %5604 = vrot.lane.b32.xlu0 %v5307, 126
        %v5605 = vpop.permute.xlu0 %5604
        %5606 = vrot.lane.b32.xlu0 %v5308, 126
        %v5607 = vpop.permute.xlu0 %5606
        %5608 = vrot.lane.b32.xlu0 %v5310, 126
        %v5609 = vpop.permute.xlu0 %5608
        %5610 = vrot.lane.b32.xlu0 %v5311, 126
        %v5611 = vpop.permute.xlu0 %5610
        %5612 = vrot.lane.b32.xlu0 %v5313, 126
        %v5613 = vpop.permute.xlu0 %5612
        %5614 = vrot.lane.b32.xlu0 %v5314, 126
        %v5615 = vpop.permute.xlu0 %5614
        %5616 = vrot.lane.b32.xlu0 %v5316, 126
        %v5617 = vpop.permute.xlu0 %5616
        %5618 = vrot.lane.b32.xlu0 %v5317, 126
        %v5619 = vpop.permute.xlu0 %5618
        %5620 = vrot.lane.b32.xlu0 %v5319, 126
        %v5621 = vpop.permute.xlu0 %5620
        %5622 = vrot.lane.b32.xlu0 %v5320, 126
        %v5623 = vpop.permute.xlu0 %5622
        %5624 = vrot.lane.b32.xlu0 %v5322, 126
        %v5625 = vpop.permute.xlu0 %5624
        %5626 = vrot.lane.b32.xlu0 %v5323, 126
        %v5627 = vpop.permute.xlu0 %5626
        %5628 = vrot.lane.b32.xlu0 %v5325, 126
        %v5629 = vpop.permute.xlu0 %5628
        %5630 = vrot.lane.b32.xlu0 %v5326, 126
        %v5631 = vpop.permute.xlu0 %5630
        %5632 = vrot.lane.b32.xlu0 %v5328, 126
        %v5633 = vpop.permute.xlu0 %5632
        %5634 = vrot.lane.b32.xlu0 %v5329, 126
        %v5635 = vpop.permute.xlu0 %5634
        %5636 = vrot.lane.b32.xlu0 %v5331, 126
        %v5637 = vpop.permute.xlu0 %5636
        %5638 = vrot.lane.b32.xlu0 %v5332, 126
        %v5639 = vpop.permute.xlu0 %5638
        %5640 = vrot.lane.b32.xlu0 %v5334, 126
        %v5641 = vpop.permute.xlu0 %5640
        %5642 = vrot.lane.b32.xlu0 %v5335, 126
        %v5643 = vpop.permute.xlu0 %5642
        %5644 = vrot.lane.b32.xlu0 %v5337, 126
        %v5645 = vpop.permute.xlu0 %5644
        %5646 = vrot.lane.b32.xlu0 %v5338, 126
        %v5647 = vpop.permute.xlu0 %5646
        %5648 = vrot.lane.b32.xlu0 %v5340, 126
        %v5649 = vpop.permute.xlu0 %5648
        %5650 = vrot.lane.b32.xlu0 %v5341, 126
        %v5651 = vpop.permute.xlu0 %5650
        %5652 = vrot.lane.b32.xlu0 %v5343, 126
        %v5653 = vpop.permute.xlu0 %5652
        %5654 = vrot.lane.b32.xlu0 %v5344, 126
        %v5655 = vpop.permute.xlu0 %5654
        %5656 = vrot.lane.b32.xlu0 %v5346, 126
        %v5657 = vpop.permute.xlu0 %5656
        %5658 = vrot.lane.b32.xlu0 %v5347, 126
        %v5659 = vpop.permute.xlu0 %5658
        %vm5660 = vcmask 1031168
        %v5661 = vsel %vm5660, %v5453, %v5455
        %v5662 = vsel %vm5660, %v5457, %v5459
        %v5663 = vsel %vm5660, %v5461, %v5463
        %v5664 = vsel %vm5660, %v5465, %v5467
        %v5665 = vsel %vm5660, %v5469, %v5471
        %v5666 = vsel %vm5660, %v5473, %v5475
        %v5667 = vsel %vm5660, %v5477, %v5479
        %v5668 = vsel %vm5660, %v5481, %v5483
        %v5669 = vsel %vm5660, %v5485, %v5487
        %v5670 = vsel %vm5660, %v5489, %v5491
        %v5671 = vsel %vm5660, %v5493, %v5495
        %v5672 = vsel %vm5660, %v5497, %v5499
        %v5673 = vsel %vm5660, %v5501, %v5503
        %v5674 = vsel %vm5660, %v5505, %v5507
        %v5675 = vsel %vm5660, %v5509, %v5511
        %v5676 = vsel %vm5660, %v5513, %v5515
        %v5677 = vsel %vm5660, %v5517, %v5519
        %v5678 = vsel %vm5660, %v5521, %v5523
        %v5679 = vsel %vm5660, %v5525, %v5527
        %v5680 = vsel %vm5660, %v5529, %v5531
        %v5681 = vsel %vm5660, %v5533, %v5535
        %v5682 = vsel %vm5660, %v5537, %v5539
        %v5683 = vsel %vm5660, %v5541, %v5543
        %v5684 = vsel %vm5660, %v5545, %v5547
        %v5685 = vsel %vm5660, %v5549, %v5551
        %v5686 = vsel %vm5660, %v5553, %v5555
        %v5687 = vsel %vm5660, %v5557, %v5559
        %v5688 = vsel %vm5660, %v5561, %v5563
        %v5689 = vsel %vm5660, %v5565, %v5567
        %v5690 = vsel %vm5660, %v5569, %v5571
        %v5691 = vsel %vm5660, %v5573, %v5575
        %v5692 = vsel %vm5660, %v5577, %v5579
        %v5693 = vsel %vm5660, %v5581, %v5583
        %v5694 = vsel %vm5660, %v5585, %v5587
        %v5695 = vsel %vm5660, %v5589, %v5591
        %v5696 = vsel %vm5660, %v5593, %v5595
        %v5697 = vsel %vm5660, %v5597, %v5599
        %v5698 = vsel %vm5660, %v5601, %v5603
        %v5699 = vsel %vm5660, %v5605, %v5607
        %v5700 = vsel %vm5660, %v5609, %v5611
        %v5701 = vsel %vm5660, %v5613, %v5615
        %v5702 = vsel %vm5660, %v5617, %v5619
        %v5703 = vsel %vm5660, %v5621, %v5623
        %v5704 = vsel %vm5660, %v5625, %v5627
        %v5705 = vsel %vm5660, %v5629, %v5631
        %v5706 = vsel %vm5660, %v5633, %v5635
        %v5707 = vsel %vm5660, %v5637, %v5639
        %v5708 = vsel %vm5660, %v5641, %v5643
        %v5709 = vsel %vm5660, %v5645, %v5647
        %v5710 = vsel %vm5660, %v5649, %v5651
        %v5711 = vsel %vm5660, %v5653, %v5655
        %v5712 = vsel %vm5660, %v5657, %v5659
        %v5817 = vmax.f32 %v5192, %v5661
        %v5818 = vmax.f32 %v5193, %v5455
        %v5819 = vmax.f32 %v5195, %v5662
        %v5820 = vmax.f32 %v5196, %v5459
        %v5821 = vmax.f32 %v5198, %v5663
        %v5822 = vmax.f32 %v5199, %v5463
        %v5823 = vmax.f32 %v5201, %v5664
        %v5824 = vmax.f32 %v5202, %v5467
        %v5825 = vmax.f32 %v5204, %v5665
        %v5826 = vmax.f32 %v5205, %v5471
        %v5827 = vmax.f32 %v5207, %v5666
        %v5828 = vmax.f32 %v5208, %v5475
        %v5829 = vmax.f32 %v5210, %v5667
        %v5830 = vmax.f32 %v5211, %v5479
        %v5831 = vmax.f32 %v5213, %v5668
        %v5832 = vmax.f32 %v5214, %v5483
        %v5833 = vmax.f32 %v5216, %v5669
        %v5834 = vmax.f32 %v5217, %v5487
        %v5835 = vmax.f32 %v5219, %v5670
        %v5836 = vmax.f32 %v5220, %v5491
        %v5837 = vmax.f32 %v5222, %v5671
        %v5838 = vmax.f32 %v5223, %v5495
        %v5839 = vmax.f32 %v5225, %v5672
        %v5840 = vmax.f32 %v5226, %v5499
        %v5841 = vmax.f32 %v5228, %v5673
        %v5842 = vmax.f32 %v5229, %v5503
        %v5843 = vmax.f32 %v5231, %v5674
        %v5844 = vmax.f32 %v5232, %v5507
        %v5845 = vmax.f32 %v5234, %v5675
        %v5846 = vmax.f32 %v5235, %v5511
        %v5847 = vmax.f32 %v5237, %v5676
        %v5848 = vmax.f32 %v5238, %v5515
        %v5849 = vmax.f32 %v5240, %v5677
        %v5850 = vmax.f32 %v5241, %v5519
        %v5851 = vmax.f32 %v5243, %v5678
        %v5852 = vmax.f32 %v5244, %v5523
        %v5853 = vmax.f32 %v5246, %v5679
        %v5854 = vmax.f32 %v5247, %v5527
        %v5855 = vmax.f32 %v5249, %v5680
        %v5856 = vmax.f32 %v5250, %v5531
        %v5857 = vmax.f32 %v5252, %v5681
        %v5858 = vmax.f32 %v5253, %v5535
        %v5859 = vmax.f32 %v5255, %v5682
        %v5860 = vmax.f32 %v5256, %v5539
        %v5861 = vmax.f32 %v5258, %v5683
        %v5862 = vmax.f32 %v5259, %v5543
        %v5863 = vmax.f32 %v5261, %v5684
        %v5864 = vmax.f32 %v5262, %v5547
        %v5865 = vmax.f32 %v5264, %v5685
        %v5866 = vmax.f32 %v5265, %v5551
        %v5867 = vmax.f32 %v5267, %v5686
        %v5868 = vmax.f32 %v5268, %v5555
        %v5869 = vmax.f32 %v5270, %v5687
        %v5870 = vmax.f32 %v5271, %v5559
        %v5871 = vmax.f32 %v5273, %v5688
        %v5872 = vmax.f32 %v5274, %v5563
        %v5873 = vmax.f32 %v5276, %v5689
        %v5874 = vmax.f32 %v5277, %v5567
        %v5875 = vmax.f32 %v5279, %v5690
        %v5876 = vmax.f32 %v5280, %v5571
        %v5877 = vmax.f32 %v5282, %v5691
        %v5878 = vmax.f32 %v5283, %v5575
        %v5879 = vmax.f32 %v5285, %v5692
        %v5880 = vmax.f32 %v5286, %v5579
        %v5881 = vmax.f32 %v5288, %v5693
        %v5882 = vmax.f32 %v5289, %v5583
        %v5883 = vmax.f32 %v5291, %v5694
        %v5884 = vmax.f32 %v5292, %v5587
        %v5885 = vmax.f32 %v5294, %v5695
        %v5886 = vmax.f32 %v5295, %v5591
        %v5887 = vmax.f32 %v5297, %v5696
        %v5888 = vmax.f32 %v5298, %v5595
        %v5889 = vmax.f32 %v5300, %v5697
        %v5890 = vmax.f32 %v5301, %v5599
        %v5891 = vmax.f32 %v5303, %v5698
        %v5892 = vmax.f32 %v5304, %v5603
        %v5893 = vmax.f32 %v5306, %v5699
        %v5894 = vmax.f32 %v5307, %v5607
        %v5895 = vmax.f32 %v5309, %v5700
        %v5896 = vmax.f32 %v5310, %v5611
        %v5897 = vmax.f32 %v5312, %v5701
        %v5898 = vmax.f32 %v5313, %v5615
        %v5899 = vmax.f32 %v5315, %v5702
        %v5900 = vmax.f32 %v5316, %v5619
        %v5901 = vmax.f32 %v5318, %v5703
        %v5902 = vmax.f32 %v5319, %v5623
        %v5903 = vmax.f32 %v5321, %v5704
        %v5904 = vmax.f32 %v5322, %v5627
        %v5905 = vmax.f32 %v5324, %v5705
        %v5906 = vmax.f32 %v5325, %v5631
        %v5907 = vmax.f32 %v5327, %v5706
        %v5908 = vmax.f32 %v5328, %v5635
        %v5909 = vmax.f32 %v5330, %v5707
        %v5910 = vmax.f32 %v5331, %v5639
        %v5911 = vmax.f32 %v5333, %v5708
        %v5912 = vmax.f32 %v5334, %v5643
        %v5913 = vmax.f32 %v5336, %v5709
        %v5914 = vmax.f32 %v5337, %v5647
        %v5915 = vmax.f32 %v5339, %v5710
        %v5916 = vmax.f32 %v5340, %v5651
        %v5917 = vmax.f32 %v5342, %v5711
        %v5918 = vmax.f32 %v5343, %v5655
        %v5919 = vmax.f32 %v5345, %v5712
        %v5920 = vmax.f32 %v5346, %v5659
        %v5921 = vld [vmem:[%s2] sm:$0x3]
        %v5923 = vlaneseq
        %v5924 = vshrl.u32 %v5923, 7
        %v5925 = vsub.s32 0, %v5924
        %v5926 = vrot.slane %v5921, %v5925
        %v5927 = vlaneseq
        %v5928 = vshrl.u32 %v5927, 7
        %v5929 = vsub.s32 1, %v5928
        %v5930 = vrot.slane %v5921, %v5929
        %v5933 = vadd.f32 %v5817, %v5926
        %v5934 = vadd.f32 %v5818, %v5930
        %v5935 = vadd.f32 %v5819, %v5926
        %v5936 = vadd.f32 %v5820, %v5930
        %v5937 = vadd.f32 %v5821, %v5926
        %v5938 = vadd.f32 %v5822, %v5930
        %v5939 = vadd.f32 %v5823, %v5926
        %v5940 = vadd.f32 %v5824, %v5930
        %v5941 = vadd.f32 %v5825, %v5926
        %v5942 = vadd.f32 %v5826, %v5930
        %v5943 = vadd.f32 %v5827, %v5926
        %v5944 = vadd.f32 %v5828, %v5930
        %v5945 = vadd.f32 %v5829, %v5926
        %v5946 = vadd.f32 %v5830, %v5930
        %v5947 = vadd.f32 %v5831, %v5926
        %v5948 = vadd.f32 %v5832, %v5930
        %v5949 = vadd.f32 %v5833, %v5926
        %v5950 = vadd.f32 %v5834, %v5930
        %v5951 = vadd.f32 %v5835, %v5926
        %v5952 = vadd.f32 %v5836, %v5930
        %v5953 = vadd.f32 %v5837, %v5926
        %v5954 = vadd.f32 %v5838, %v5930
        %v5955 = vadd.f32 %v5839, %v5926
        %v5956 = vadd.f32 %v5840, %v5930
        %v5957 = vadd.f32 %v5841, %v5926
        %v5958 = vadd.f32 %v5842, %v5930
        %v5959 = vadd.f32 %v5843, %v5926
        %v5960 = vadd.f32 %v5844, %v5930
        %v5961 = vadd.f32 %v5845, %v5926
        %v5962 = vadd.f32 %v5846, %v5930
        %v5963 = vadd.f32 %v5847, %v5926
        %v5964 = vadd.f32 %v5848, %v5930
        %v5965 = vadd.f32 %v5849, %v5926
        %v5966 = vadd.f32 %v5850, %v5930
        %v5967 = vadd.f32 %v5851, %v5926
        %v5968 = vadd.f32 %v5852, %v5930
        %v5969 = vadd.f32 %v5853, %v5926
        %v5970 = vadd.f32 %v5854, %v5930
        %v5971 = vadd.f32 %v5855, %v5926
        %v5972 = vadd.f32 %v5856, %v5930
        %v5973 = vadd.f32 %v5857, %v5926
        %v5974 = vadd.f32 %v5858, %v5930
        %v5975 = vadd.f32 %v5859, %v5926
        %v5976 = vadd.f32 %v5860, %v5930
        %v5977 = vadd.f32 %v5861, %v5926
        %v5978 = vadd.f32 %v5862, %v5930
        %v5979 = vadd.f32 %v5863, %v5926
        %v5980 = vadd.f32 %v5864, %v5930
        %v5981 = vadd.f32 %v5865, %v5926
        %v5982 = vadd.f32 %v5866, %v5930
        %v5983 = vadd.f32 %v5867, %v5926
        %v5984 = vadd.f32 %v5868, %v5930
        %v5985 = vadd.f32 %v5869, %v5926
        %v5986 = vadd.f32 %v5870, %v5930
        %v5987 = vadd.f32 %v5871, %v5926
        %v5988 = vadd.f32 %v5872, %v5930
        %v5989 = vadd.f32 %v5873, %v5926
        %v5990 = vadd.f32 %v5874, %v5930
        %v5991 = vadd.f32 %v5875, %v5926
        %v5992 = vadd.f32 %v5876, %v5930
        %v5993 = vadd.f32 %v5877, %v5926
        %v5994 = vadd.f32 %v5878, %v5930
        %v5995 = vadd.f32 %v5879, %v5926
        %v5996 = vadd.f32 %v5880, %v5930
        %v5997 = vadd.f32 %v5881, %v5926
        %v5998 = vadd.f32 %v5882, %v5930
        %v5999 = vadd.f32 %v5883, %v5926
        %v6000 = vadd.f32 %v5884, %v5930
        %v6001 = vadd.f32 %v5885, %v5926
        %v6002 = vadd.f32 %v5886, %v5930
        %v6003 = vadd.f32 %v5887, %v5926
        %v6004 = vadd.f32 %v5888, %v5930
        %v6005 = vadd.f32 %v5889, %v5926
        %v6006 = vadd.f32 %v5890, %v5930
        %v6007 = vadd.f32 %v5891, %v5926
        %v6008 = vadd.f32 %v5892, %v5930
        %v6009 = vadd.f32 %v5893, %v5926
        %v6010 = vadd.f32 %v5894, %v5930
        %v6011 = vadd.f32 %v5895, %v5926
        %v6012 = vadd.f32 %v5896, %v5930
        %v6013 = vadd.f32 %v5897, %v5926
        %v6014 = vadd.f32 %v5898, %v5930
        %v6015 = vadd.f32 %v5899, %v5926
        %v6016 = vadd.f32 %v5900, %v5930
        %v6017 = vadd.f32 %v5901, %v5926
        %v6018 = vadd.f32 %v5902, %v5930
        %v6019 = vadd.f32 %v5903, %v5926
        %v6020 = vadd.f32 %v5904, %v5930
        %v6021 = vadd.f32 %v5905, %v5926
        %v6022 = vadd.f32 %v5906, %v5930
        %v6023 = vadd.f32 %v5907, %v5926
        %v6024 = vadd.f32 %v5908, %v5930
        %v6025 = vadd.f32 %v5909, %v5926
        %v6026 = vadd.f32 %v5910, %v5930
        %v6027 = vadd.f32 %v5911, %v5926
        %v6028 = vadd.f32 %v5912, %v5930
        %v6029 = vadd.f32 %v5913, %v5926
        %v6030 = vadd.f32 %v5914, %v5930
        %v6031 = vadd.f32 %v5915, %v5926
        %v6032 = vadd.f32 %v5916, %v5930
        %v6033 = vadd.f32 %v5917, %v5926
        %v6034 = vadd.f32 %v5918, %v5930
        %v6035 = vadd.f32 %v5919, %v5926
        %v6036 = vadd.f32 %v5920, %v5930
        %v6037 = vmax.f32 %v5933, 0.0
        %v6038 = vmax.f32 %v5934, 0.0
        %v6039 = vmax.f32 %v5935, 0.0
        %v6040 = vmax.f32 %v5936, 0.0
        %v6041 = vmax.f32 %v5937, 0.0
        %v6042 = vmax.f32 %v5938, 0.0
        %v6043 = vmax.f32 %v5939, 0.0
        %v6044 = vmax.f32 %v5940, 0.0
        %v6045 = vmax.f32 %v5941, 0.0
        %v6046 = vmax.f32 %v5942, 0.0
        %v6047 = vmax.f32 %v5943, 0.0
        %v6048 = vmax.f32 %v5944, 0.0
        %v6049 = vmax.f32 %v5945, 0.0
        %v6050 = vmax.f32 %v5946, 0.0
        %v6051 = vmax.f32 %v5947, 0.0
        %v6052 = vmax.f32 %v5948, 0.0
        %v6053 = vmax.f32 %v5949, 0.0
        %v6054 = vmax.f32 %v5950, 0.0
        %v6055 = vmax.f32 %v5951, 0.0
        %v6056 = vmax.f32 %v5952, 0.0
        %v6057 = vmax.f32 %v5953, 0.0
        %v6058 = vmax.f32 %v5954, 0.0
        %v6059 = vmax.f32 %v5955, 0.0
        %v6060 = vmax.f32 %v5956, 0.0
        %v6061 = vmax.f32 %v5957, 0.0
        %v6062 = vmax.f32 %v5958, 0.0
        %v6063 = vmax.f32 %v5959, 0.0
        %v6064 = vmax.f32 %v5960, 0.0
        %v6065 = vmax.f32 %v5961, 0.0
        %v6066 = vmax.f32 %v5962, 0.0
        %v6067 = vmax.f32 %v5963, 0.0
        %v6068 = vmax.f32 %v5964, 0.0
        %v6069 = vmax.f32 %v5965, 0.0
        %v6070 = vmax.f32 %v5966, 0.0
        %v6071 = vmax.f32 %v5967, 0.0
        %v6072 = vmax.f32 %v5968, 0.0
        %v6073 = vmax.f32 %v5969, 0.0
        %v6074 = vmax.f32 %v5970, 0.0
        %v6075 = vmax.f32 %v5971, 0.0
        %v6076 = vmax.f32 %v5972, 0.0
        %v6077 = vmax.f32 %v5973, 0.0
        %v6078 = vmax.f32 %v5974, 0.0
        %v6079 = vmax.f32 %v5975, 0.0
        %v6080 = vmax.f32 %v5976, 0.0
        %v6081 = vmax.f32 %v5977, 0.0
        %v6082 = vmax.f32 %v5978, 0.0
        %v6083 = vmax.f32 %v5979, 0.0
        %v6084 = vmax.f32 %v5980, 0.0
        %v6085 = vmax.f32 %v5981, 0.0
        %v6086 = vmax.f32 %v5982, 0.0
        %v6087 = vmax.f32 %v5983, 0.0
        %v6088 = vmax.f32 %v5984, 0.0
        %v6089 = vmax.f32 %v5985, 0.0
        %v6090 = vmax.f32 %v5986, 0.0
        %v6091 = vmax.f32 %v5987, 0.0
        %v6092 = vmax.f32 %v5988, 0.0
        %v6093 = vmax.f32 %v5989, 0.0
        %v6094 = vmax.f32 %v5990, 0.0
        %v6095 = vmax.f32 %v5991, 0.0
        %v6096 = vmax.f32 %v5992, 0.0
        %v6097 = vmax.f32 %v5993, 0.0
        %v6098 = vmax.f32 %v5994, 0.0
        %v6099 = vmax.f32 %v5995, 0.0
        %v6100 = vmax.f32 %v5996, 0.0
        %v6101 = vmax.f32 %v5997, 0.0
        %v6102 = vmax.f32 %v5998, 0.0
        %v6103 = vmax.f32 %v5999, 0.0
        %v6104 = vmax.f32 %v6000, 0.0
        %v6105 = vmax.f32 %v6001, 0.0
        %v6106 = vmax.f32 %v6002, 0.0
        %v6107 = vmax.f32 %v6003, 0.0
        %v6108 = vmax.f32 %v6004, 0.0
        %v6109 = vmax.f32 %v6005, 0.0
        %v6110 = vmax.f32 %v6006, 0.0
        %v6111 = vmax.f32 %v6007, 0.0
        %v6112 = vmax.f32 %v6008, 0.0
        %v6113 = vmax.f32 %v6009, 0.0
        %v6114 = vmax.f32 %v6010, 0.0
        %v6115 = vmax.f32 %v6011, 0.0
        %v6116 = vmax.f32 %v6012, 0.0
        %v6117 = vmax.f32 %v6013, 0.0
        %v6118 = vmax.f32 %v6014, 0.0
        %v6119 = vmax.f32 %v6015, 0.0
        %v6120 = vmax.f32 %v6016, 0.0
        %v6121 = vmax.f32 %v6017, 0.0
        %v6122 = vmax.f32 %v6018, 0.0
        %v6123 = vmax.f32 %v6019, 0.0
        %v6124 = vmax.f32 %v6020, 0.0
        %v6125 = vmax.f32 %v6021, 0.0
        %v6126 = vmax.f32 %v6022, 0.0
        %v6127 = vmax.f32 %v6023, 0.0
        %v6128 = vmax.f32 %v6024, 0.0
        %v6129 = vmax.f32 %v6025, 0.0
        %v6130 = vmax.f32 %v6026, 0.0
        %v6131 = vmax.f32 %v6027, 0.0
        %v6132 = vmax.f32 %v6028, 0.0
        %v6133 = vmax.f32 %v6029, 0.0
        %v6134 = vmax.f32 %v6030, 0.0
        %v6135 = vmax.f32 %v6031, 0.0
        %v6136 = vmax.f32 %v6032, 0.0
        %v6137 = vmax.f32 %v6033, 0.0
        %v6138 = vmax.f32 %v6034, 0.0
        %v6139 = vmax.f32 %v6035, 0.0
        %v6140 = vmax.f32 %v6036, 0.0
        %v6141 = vmax.f32 %v6037, %v6041
        %v6142 = vmax.f32 %v6038, %v6042
        %v6143 = vmax.f32 %v6039, %v6043
        %v6144 = vmax.f32 %v6040, %v6044
        %v6145 = vmax.f32 %v6045, %v6049
        %v6146 = vmax.f32 %v6046, %v6050
        %v6147 = vmax.f32 %v6047, %v6051
        %v6148 = vmax.f32 %v6048, %v6052
        %v6149 = vmax.f32 %v6053, %v6057
        %v6150 = vmax.f32 %v6054, %v6058
        %v6151 = vmax.f32 %v6055, %v6059
        %v6152 = vmax.f32 %v6056, %v6060
        %v6153 = vmax.f32 %v6061, %v6065
        %v6154 = vmax.f32 %v6062, %v6066
        %v6155 = vmax.f32 %v6063, %v6067
        %v6156 = vmax.f32 %v6064, %v6068
        %v6157 = vmax.f32 %v6069, %v6073
        %v6158 = vmax.f32 %v6070, %v6074
        %v6159 = vmax.f32 %v6071, %v6075
        %v6160 = vmax.f32 %v6072, %v6076
        %v6161 = vmax.f32 %v6077, %v6081
        %v6162 = vmax.f32 %v6078, %v6082
        %v6163 = vmax.f32 %v6079, %v6083
        %v6164 = vmax.f32 %v6080, %v6084
        %v6165 = vmax.f32 %v6085, %v6089
        %v6166 = vmax.f32 %v6086, %v6090
        %v6167 = vmax.f32 %v6087, %v6091
        %v6168 = vmax.f32 %v6088, %v6092
        %v6169 = vmax.f32 %v6093, %v6097
        %v6170 = vmax.f32 %v6094, %v6098
        %v6171 = vmax.f32 %v6095, %v6099
        %v6172 = vmax.f32 %v6096, %v6100
        %v6173 = vmax.f32 %v6101, %v6105
        %v6174 = vmax.f32 %v6102, %v6106
        %v6175 = vmax.f32 %v6103, %v6107
        %v6176 = vmax.f32 %v6104, %v6108
        %v6177 = vmax.f32 %v6109, %v6113
        %v6178 = vmax.f32 %v6110, %v6114
        %v6179 = vmax.f32 %v6111, %v6115
        %v6180 = vmax.f32 %v6112, %v6116
        %v6181 = vmax.f32 %v6117, %v6121
        %v6182 = vmax.f32 %v6118, %v6122
        %v6183 = vmax.f32 %v6119, %v6123
        %v6184 = vmax.f32 %v6120, %v6124
        %v6185 = vmax.f32 %v6125, %v6129
        %v6186 = vmax.f32 %v6126, %v6130
        %v6187 = vmax.f32 %v6127, %v6131
        %v6188 = vmax.f32 %v6128, %v6132
        %v6189 = vmax.f32 %v6133, %v6137
        %v6190 = vmax.f32 %v6134, %v6138
        %v6191 = vmax.f32 %v6135, %v6139
        %v6192 = vmax.f32 %v6136, %v6140
        %vm6193 = vcmask 1043456
        %vm6194 = vcmask 15364
        %vm6195 = vmor %vm6194, %vm6193
        %6196 = vst.msk [vmem:[#allocation2] sm:$0xff] %vm6195, 0
        %6197 = vst.msk [vmem:[#allocation2 + $0x8] sm:$0xff] %vm6195, 0
        %6198 = vst.msk [vmem:[#allocation2 + $0x10] sm:$0xff] %vm6195, 0
        %6199 = vst.msk [vmem:[#allocation2 + $0x18] sm:$0xff] %vm6195, 0
        %6200 = vst.msk [vmem:[#allocation2 + $0x20] sm:$0xff] %vm6195, 0
        %6201 = vst.msk [vmem:[#allocation2 + $0x28] sm:$0xff] %vm6195, 0
        %6202 = vst.msk [vmem:[#allocation2 + $0x30] sm:$0xff] %vm6195, 0
        %6203 = vst.msk [vmem:[#allocation2 + $0x38] sm:$0xff] %vm6195, 0
        %6204 = vst.msk [vmem:[#allocation2 + $0x40] sm:$0xff] %vm6195, 0
        %6205 = vst.msk [vmem:[#allocation2 + $0x48] sm:$0xff] %vm6195, 0
        %6206 = vst.msk [vmem:[#allocation2 + $0x50] sm:$0xff] %vm6195, 0
        %6207 = vst.msk [vmem:[#allocation2 + $0x58] sm:$0xff] %vm6195, 0
        %6208 = vst.msk [vmem:[#allocation2 + $0x60] sm:$0xff] %vm6195, 0
        %6209 = vst.msk [vmem:[#allocation2 + $0x68] sm:$0xff] %vm6195, 0
        %6210 = vst.msk [vmem:[#allocation2 + $0x70] sm:$0xff] %vm6195, 0
        %6211 = vst.msk [vmem:[#allocation2 + $0x78] sm:$0xff] %vm6195, 0
        %6212 = vst.msk [vmem:[#allocation2 + $0x80] sm:$0xff] %vm6195, 0
        %6213 = vst.msk [vmem:[#allocation2 + $0x88] sm:$0xff] %vm6195, 0
        %6214 = vst.msk [vmem:[#allocation2 + $0x90] sm:$0xff] %vm6195, 0
        %6215 = vst.msk [vmem:[#allocation2 + $0x98] sm:$0xff] %vm6195, 0
        %6216 = vst.msk [vmem:[#allocation2 + $0xa0] sm:$0xff] %vm6195, 0
        %6217 = vst.msk [vmem:[#allocation2 + $0xa8] sm:$0xff] %vm6195, 0
        %6218 = vst.msk [vmem:[#allocation2 + $0xb0] sm:$0xff] %vm6195, 0
        %6219 = vst.msk [vmem:[#allocation2 + $0xb8] sm:$0xff] %vm6195, 0
        %6220 = vst.msk [vmem:[#allocation2 + $0xc0] sm:$0xff] %vm6195, 0
        %6221 = vst.msk [vmem:[#allocation2 + $0xc8] sm:$0xff] %vm6195, 0
        %6222 = vst.msk [vmem:[#allocation2 + $0xd0] sm:$0xff] %vm6195, 0
        %6223 = vst.msk [vmem:[#allocation2 + $0xd8] sm:$0xff] %vm6195, 0
        %6224 = vst.msk [vmem:[#allocation2 + $0xe0] sm:$0xff] %vm6195, 0
        %6225 = vst.msk [vmem:[#allocation2 + $0xe8] sm:$0xff] %vm6195, 0
        %v6226 = vpack.c.bf16 %v6143, %v6141
        %v6227 = vpack.c.bf16 %v6144, %v6142
        %v6228 = vpack.c.bf16 %v6147, %v6145
        %v6229 = vpack.c.bf16 %v6148, %v6146
        %v6230 = vpack.c.bf16 %v6151, %v6149
        %v6231 = vpack.c.bf16 %v6152, %v6150
        %v6232 = vpack.c.bf16 %v6155, %v6153
        %v6233 = vpack.c.bf16 %v6156, %v6154
        %v6234 = vpack.c.bf16 %v6159, %v6157
        %v6235 = vpack.c.bf16 %v6160, %v6158
        %v6236 = vpack.c.bf16 %v6163, %v6161
        %v6237 = vpack.c.bf16 %v6164, %v6162
        %v6238 = vpack.c.bf16 %v6167, %v6165
        %v6239 = vpack.c.bf16 %v6168, %v6166
        %v6240 = vpack.c.bf16 %v6171, %v6169
        %v6241 = vpack.c.bf16 %v6172, %v6170
        %v6242 = vpack.c.bf16 %v6175, %v6173
        %v6243 = vpack.c.bf16 %v6176, %v6174
        %v6244 = vpack.c.bf16 %v6179, %v6177
        %v6245 = vpack.c.bf16 %v6180, %v6178
        %v6246 = vpack.c.bf16 %v6183, %v6181
        %v6247 = vpack.c.bf16 %v6184, %v6182
        %v6248 = vpack.c.bf16 %v6187, %v6185
        %v6249 = vpack.c.bf16 %v6188, %v6186
        %v6250 = vpack.c.bf16 %v6191, %v6189
        %v6251 = vpack.c.bf16 %v6192, %v6190
        %v6278 = vunpack.c.l.b16 %v6226
        %v6279 = vunpack.c.l.b16 %v6227
        %v6280 = vunpack.c.h.b16 %v6226
        %v6281 = vunpack.c.h.b16 %v6227
        %v6282 = vunpack.c.l.b16 %v6228
        %v6283 = vunpack.c.l.b16 %v6229
        %v6284 = vunpack.c.h.b16 %v6228
        %v6285 = vunpack.c.h.b16 %v6229
        %v6286 = vunpack.c.l.b16 %v6230
        %v6287 = vunpack.c.l.b16 %v6231
        %v6288 = vunpack.c.h.b16 %v6230
        %v6289 = vunpack.c.h.b16 %v6231
        %v6290 = vunpack.c.l.b16 %v6232
        %v6291 = vunpack.c.l.b16 %v6233
        %v6292 = vunpack.c.h.b16 %v6232
        %v6293 = vunpack.c.h.b16 %v6233
        %v6294 = vunpack.c.l.b16 %v6234
        %v6295 = vunpack.c.l.b16 %v6235
        %v6296 = vunpack.c.h.b16 %v6234
        %v6297 = vunpack.c.h.b16 %v6235
        %v6298 = vunpack.c.l.b16 %v6236
        %v6299 = vunpack.c.l.b16 %v6237
        %v6300 = vunpack.c.h.b16 %v6236
        %v6301 = vunpack.c.h.b16 %v6237
        %v6302 = vunpack.c.l.b16 %v6238
        %v6303 = vunpack.c.l.b16 %v6239
        %v6304 = vunpack.c.h.b16 %v6238
        %v6305 = vunpack.c.h.b16 %v6239
        %v6306 = vunpack.c.l.b16 %v6240
        %v6307 = vunpack.c.l.b16 %v6241
        %v6308 = vunpack.c.h.b16 %v6240
        %v6309 = vunpack.c.h.b16 %v6241
        %v6310 = vunpack.c.l.b16 %v6242
        %v6311 = vunpack.c.l.b16 %v6243
        %v6312 = vunpack.c.h.b16 %v6242
        %v6313 = vunpack.c.h.b16 %v6243
        %v6314 = vunpack.c.l.b16 %v6244
        %v6315 = vunpack.c.l.b16 %v6245
        %v6316 = vunpack.c.h.b16 %v6244
        %v6317 = vunpack.c.h.b16 %v6245
        %v6318 = vunpack.c.l.b16 %v6246
        %v6319 = vunpack.c.l.b16 %v6247
        %v6320 = vunpack.c.h.b16 %v6246
        %v6321 = vunpack.c.h.b16 %v6247
        %v6322 = vunpack.c.l.b16 %v6248
        %v6323 = vunpack.c.l.b16 %v6249
        %v6324 = vunpack.c.h.b16 %v6248
        %v6325 = vunpack.c.h.b16 %v6249
        %v6326 = vunpack.c.l.b16 %v6250
        %v6327 = vunpack.c.l.b16 %v6251
        %v6328 = vunpack.c.h.b16 %v6250
        %v6329 = vunpack.c.h.b16 %v6251
        %v6330 = vpack.c.b16 %v6279, %v6278
        %v6331 = vpack.c.b16 %v6281, %v6280
        %v6332 = vpack.c.b16 %v6283, %v6282
        %v6333 = vpack.c.b16 %v6285, %v6284
        %v6334 = vpack.c.b16 %v6287, %v6286
        %v6335 = vpack.c.b16 %v6289, %v6288
        %v6336 = vpack.c.b16 %v6291, %v6290
        %v6337 = vpack.c.b16 %v6293, %v6292
        %v6338 = vpack.c.b16 %v6295, %v6294
        %v6339 = vpack.c.b16 %v6297, %v6296
        %v6340 = vpack.c.b16 %v6299, %v6298
        %v6341 = vpack.c.b16 %v6301, %v6300
        %v6342 = vpack.c.b16 %v6303, %v6302
        %v6343 = vpack.c.b16 %v6305, %v6304
        %v6344 = vpack.c.b16 %v6307, %v6306
        %v6345 = vpack.c.b16 %v6309, %v6308
        %v6346 = vpack.c.b16 %v6311, %v6310
        %v6347 = vpack.c.b16 %v6313, %v6312
        %v6348 = vpack.c.b16 %v6315, %v6314
        %v6349 = vpack.c.b16 %v6317, %v6316
        %v6350 = vpack.c.b16 %v6319, %v6318
        %v6351 = vpack.c.b16 %v6321, %v6320
        %v6352 = vpack.c.b16 %v6323, %v6322
        %v6353 = vpack.c.b16 %v6325, %v6324
        %v6354 = vpack.c.b16 %v6327, %v6326
        %v6355 = vpack.c.b16 %v6329, %v6328
        %s6382 = scalar_lea.vmem [#allocation2], 16
        %6383 = vst.msk [vmem:[%s6382] sm:$0xff] %vm6195, %v6330
        %6384 = vst.msk [vmem:[%s6382 + $0x8] sm:$0xff] %vm6195, %v6331
        %6385 = vst.msk [vmem:[%s6382 + $0x10] sm:$0xff] %vm6195, %v6332
        %6386 = vst.msk [vmem:[%s6382 + $0x18] sm:$0xff] %vm6195, %v6333
        %6387 = vst.msk [vmem:[%s6382 + $0x20] sm:$0xff] %vm6195, %v6334
        %6388 = vst.msk [vmem:[%s6382 + $0x28] sm:$0xff] %vm6195, %v6335
        %6389 = vst.msk [vmem:[%s6382 + $0x30] sm:$0xff] %vm6195, %v6336
        %6390 = vst.msk [vmem:[%s6382 + $0x38] sm:$0xff] %vm6195, %v6337
        %6391 = vst.msk [vmem:[%s6382 + $0x40] sm:$0xff] %vm6195, %v6338
        %6392 = vst.msk [vmem:[%s6382 + $0x48] sm:$0xff] %vm6195, %v6339
        %6393 = vst.msk [vmem:[%s6382 + $0x50] sm:$0xff] %vm6195, %v6340
        %6394 = vst.msk [vmem:[%s6382 + $0x58] sm:$0xff] %vm6195, %v6341
        %6395 = vst.msk [vmem:[%s6382 + $0x60] sm:$0xff] %vm6195, %v6342
        %6396 = vst.msk [vmem:[%s6382 + $0x68] sm:$0xff] %vm6195, %v6343
        %6397 = vst.msk [vmem:[%s6382 + $0x70] sm:$0xff] %vm6195, %v6344
        %6398 = vst.msk [vmem:[%s6382 + $0x78] sm:$0xff] %vm6195, %v6345
        %6399 = vst.msk [vmem:[%s6382 + $0x80] sm:$0xff] %vm6195, %v6346
        %6400 = vst.msk [vmem:[%s6382 + $0x88] sm:$0xff] %vm6195, %v6347
        %6401 = vst.msk [vmem:[%s6382 + $0x90] sm:$0xff] %vm6195, %v6348
        %6402 = vst.msk [vmem:[%s6382 + $0x98] sm:$0xff] %vm6195, %v6349
        %6403 = vst.msk [vmem:[%s6382 + $0xa0] sm:$0xff] %vm6195, %v6350
        %6404 = vst.msk [vmem:[%s6382 + $0xa8] sm:$0xff] %vm6195, %v6351
        %6405 = vst.msk [vmem:[%s6382 + $0xb0] sm:$0xff] %vm6195, %v6352
        %6406 = vst.msk [vmem:[%s6382 + $0xb8] sm:$0xff] %vm6195, %v6353
        %6407 = vst.msk [vmem:[%s6382 + $0xc0] sm:$0xff] %vm6195, %v6354
        %6408 = vst.msk [vmem:[%s6382 + $0xc8] sm:$0xff] %vm6195, %v6355
        %v6409 = vld [vmem:[#allocation2] sm:$0xff]
        %v6410 = vld [vmem:[#allocation2 + $0x8] sm:$0xff]
        %v6411 = vld [vmem:[#allocation2 + $0x10] sm:$0xff]
        %v6412 = vld [vmem:[#allocation2 + $0x18] sm:$0xff]
        %v6413 = vld [vmem:[#allocation2 + $0x20] sm:$0xff]
        %v6414 = vld [vmem:[#allocation2 + $0x28] sm:$0xff]
        %v6415 = vld [vmem:[#allocation2 + $0x30] sm:$0xff]
        %v6416 = vld [vmem:[#allocation2 + $0x38] sm:$0xff]
        %v6417 = vld [vmem:[#allocation2 + $0x40] sm:$0xff]
        %v6418 = vld [vmem:[#allocation2 + $0x48] sm:$0xff]
        %v6419 = vld [vmem:[#allocation2 + $0x50] sm:$0xff]
        %v6420 = vld [vmem:[#allocation2 + $0x58] sm:$0xff]
        %v6421 = vld [vmem:[#allocation2 + $0x60] sm:$0xff]
        %v6422 = vld [vmem:[#allocation2 + $0x68] sm:$0xff]
        %v6423 = vld [vmem:[#allocation2 + $0x70] sm:$0xff]
        %v6424 = vld [vmem:[#allocation2 + $0x78] sm:$0xff]
        %v6425 = vld [vmem:[#allocation2 + $0x80] sm:$0xff]
        %v6426 = vld [vmem:[#allocation2 + $0x88] sm:$0xff]
        %v6427 = vld [vmem:[#allocation2 + $0x90] sm:$0xff]
        %v6428 = vld [vmem:[#allocation2 + $0x98] sm:$0xff]
        %v6429 = vld [vmem:[#allocation2 + $0xa0] sm:$0xff]
        %v6430 = vld [vmem:[#allocation2 + $0xa8] sm:$0xff]
        %v6431 = vld [vmem:[%s3] sm:$0xff]
        %v6432 = vld [vmem:[%s3 + $0x8] sm:$0xff]
        %v6433 = vld [vmem:[%s3 + $0x10] sm:$0xff]
        %v6434 = vld [vmem:[%s3 + $0x18] sm:$0xff]
        %v6435 = vld [vmem:[%s3 + $0x20] sm:$0xff]
        %v6436 = vld [vmem:[%s3 + $0x28] sm:$0xff]
        %v6437 = vld [vmem:[%s3 + $0x30] sm:$0xff]
        %v6438 = vld [vmem:[%s3 + $0x38] sm:$0xff]
        %v6439 = vld [vmem:[%s3 + $0x40] sm:$0xff]
        %v6440 = vld [vmem:[%s3 + $0x48] sm:$0xff]
        %v6441 = vld [vmem:[%s3 + $0x50] sm:$0xff]
        %v6442 = vld [vmem:[%s3 + $0x58] sm:$0xff]
        %v6443 = vld [vmem:[%s3 + $0x60] sm:$0xff]
        %v6444 = vld [vmem:[%s3 + $0x68] sm:$0xff]
        %v6445 = vld [vmem:[%s3 + $0x70] sm:$0xff]
        %v6446 = vld [vmem:[%s3 + $0x78] sm:$0xff]
        %v6447 = vld [vmem:[%s3 + $0x80] sm:$0x11]
        %v6448 = vld [vmem:[%s6382] sm:$0xff]
        %v6449 = vld [vmem:[%s6382 + $0x8] sm:$0xff]
        %v6450 = vld [vmem:[%s6382 + $0x10] sm:$0xff]
        %v6451 = vld [vmem:[%s6382 + $0x18] sm:$0xff]
        %v6452 = vld [vmem:[%s6382 + $0x20] sm:$0xff]
        %v6453 = vld [vmem:[%s6382 + $0x28] sm:$0xff]
        %v6454 = vld [vmem:[%s6382 + $0x30] sm:$0xff]
        %v6455 = vld [vmem:[%s6382 + $0x38] sm:$0xff]
        %v6456 = vld [vmem:[%s6382 + $0x40] sm:$0xff]
        %v6457 = vld [vmem:[%s6382 + $0x48] sm:$0xff]
        %v6458 = vld [vmem:[%s6382 + $0x50] sm:$0xff]
        %v6459 = vld [vmem:[%s6382 + $0x58] sm:$0xff]
        %v6460 = vld [vmem:[%s6382 + $0x60] sm:$0xff]
        %v6461 = vld [vmem:[%s6382 + $0x68] sm:$0xff]
        %v6462 = vld [vmem:[%s6382 + $0x70] sm:$0xff]
        %v6463 = vld [vmem:[%s6382 + $0x78] sm:$0xff]
        %v6464 = vld [vmem:[%s6382 + $0x80] sm:$0xff]
        %v6465 = vld [vmem:[%s6382 + $0x88] sm:$0xff]
        %v6466 = vld [vmem:[%s6382 + $0x90] sm:$0xff]
        %v6467 = vld [vmem:[%s6382 + $0x98] sm:$0xff]
        %v6468 = vld [vmem:[%s6382 + $0xa0] sm:$0xff]
        %v6469 = vld [vmem:[%s6382 + $0xa8] sm:$0xff]
        %s6470 = scalar_lea.vmem %s3, 136
        %v6471 = vld [vmem:[%s6470] sm:$0xff]
        %v6472 = vld [vmem:[%s6470 + $0x8] sm:$0xff]
        %v6473 = vld [vmem:[%s6470 + $0x10] sm:$0xff]
        %v6474 = vld [vmem:[%s6470 + $0x18] sm:$0xff]
        %v6475 = vld [vmem:[%s6470 + $0x20] sm:$0xff]
        %v6476 = vld [vmem:[%s6470 + $0x28] sm:$0xff]
        %v6477 = vld [vmem:[%s6470 + $0x30] sm:$0xff]
        %v6478 = vld [vmem:[%s6470 + $0x38] sm:$0xff]
        %v6479 = vld [vmem:[%s6470 + $0x40] sm:$0xff]
        %v6480 = vld [vmem:[%s6470 + $0x48] sm:$0xff]
        %v6481 = vld [vmem:[%s6470 + $0x50] sm:$0xff]
        %v6482 = vld [vmem:[%s6470 + $0x58] sm:$0xff]
        %v6483 = vld [vmem:[%s6470 + $0x60] sm:$0xff]
        %v6484 = vld [vmem:[%s6470 + $0x68] sm:$0xff]
        %v6485 = vld [vmem:[%s6470 + $0x70] sm:$0xff]
        %v6486 = vld [vmem:[%s6470 + $0x78] sm:$0xff]
        %v6487 = vld [vmem:[%s6470 + $0x80] sm:$0x11]
        %v6510 = vunpack.c.l.b16 %v6448
        %v6511 = vunpack.c.h.b16 %v6448
        %v6512 = vunpack.c.l.b16 %v6449
        %v6513 = vunpack.c.h.b16 %v6449
        %v6514 = vunpack.c.l.b16 %v6450
        %v6515 = vunpack.c.h.b16 %v6450
        %v6516 = vunpack.c.l.b16 %v6451
        %v6517 = vunpack.c.h.b16 %v6451
        %v6518 = vunpack.c.l.b16 %v6452
        %v6519 = vunpack.c.h.b16 %v6452
        %v6520 = vunpack.c.l.b16 %v6453
        %v6521 = vunpack.c.h.b16 %v6453
        %v6522 = vunpack.c.l.b16 %v6454
        %v6523 = vunpack.c.h.b16 %v6454
        %v6524 = vunpack.c.l.b16 %v6455
        %v6525 = vunpack.c.h.b16 %v6455
        %v6526 = vunpack.c.l.b16 %v6456
        %v6527 = vunpack.c.h.b16 %v6456
        %v6528 = vunpack.c.l.b16 %v6457
        %v6529 = vunpack.c.h.b16 %v6457
        %v6530 = vunpack.c.l.b16 %v6458
        %v6531 = vunpack.c.h.b16 %v6458
        %v6532 = vunpack.c.l.b16 %v6459
        %v6533 = vunpack.c.h.b16 %v6459
        %v6534 = vunpack.c.l.b16 %v6460
        %v6535 = vunpack.c.h.b16 %v6460
        %v6536 = vunpack.c.l.b16 %v6461
        %v6537 = vunpack.c.h.b16 %v6461
        %v6538 = vunpack.c.l.b16 %v6462
        %v6539 = vunpack.c.h.b16 %v6462
        %v6540 = vunpack.c.l.b16 %v6463
        %v6541 = vunpack.c.h.b16 %v6463
        %v6542 = vunpack.c.l.b16 %v6464
        %v6543 = vunpack.c.h.b16 %v6464
        %v6544 = vunpack.c.l.b16 %v6465
        %v6545 = vunpack.c.h.b16 %v6465
        %v6546 = vunpack.c.l.b16 %v6466
        %v6547 = vunpack.c.h.b16 %v6466
        %v6548 = vunpack.c.l.b16 %v6467
        %v6549 = vunpack.c.h.b16 %v6467
        %v6550 = vunpack.c.l.b16 %v6468
        %v6551 = vunpack.c.h.b16 %v6468
        %v6552 = vunpack.c.l.b16 %v6469
        %v6553 = vunpack.c.h.b16 %v6469
        %v6554 = vpack.c.b16 %v6512, %v6510
        %v6555 = vpack.c.b16 %v6513, %v6511
        %v6556 = vpack.c.b16 %v6516, %v6514
        %v6557 = vpack.c.b16 %v6517, %v6515
        %v6558 = vpack.c.b16 %v6520, %v6518
        %v6559 = vpack.c.b16 %v6521, %v6519
        %v6560 = vpack.c.b16 %v6524, %v6522
        %v6561 = vpack.c.b16 %v6525, %v6523
        %v6562 = vpack.c.b16 %v6528, %v6526
        %v6563 = vpack.c.b16 %v6529, %v6527
        %v6564 = vpack.c.b16 %v6532, %v6530
        %v6565 = vpack.c.b16 %v6533, %v6531
        %v6566 = vpack.c.b16 %v6536, %v6534
        %v6567 = vpack.c.b16 %v6537, %v6535
        %v6568 = vpack.c.b16 %v6540, %v6538
        %v6569 = vpack.c.b16 %v6541, %v6539
        %v6570 = vpack.c.b16 %v6544, %v6542
        %v6571 = vpack.c.b16 %v6545, %v6543
        %v6572 = vpack.c.b16 %v6548, %v6546
        %v6573 = vpack.c.b16 %v6549, %v6547
        %v6574 = vpack.c.b16 %v6552, %v6550
        %v6575 = vpack.c.b16 %v6553, %v6551
        %v6604 = vunpack.c.l.b16 %v6471
        %v6605 = vunpack.c.h.b16 %v6471
        %v6606 = vunpack.c.l.b16 %v6472
        %v6607 = vunpack.c.h.b16 %v6472
        %v6608 = vunpack.c.l.b16 %v6473
        %v6609 = vunpack.c.h.b16 %v6473
        %v6610 = vunpack.c.l.b16 %v6474
        %v6611 = vunpack.c.h.b16 %v6474
        %v6612 = vunpack.c.l.b16 %v6475
        %v6613 = vunpack.c.h.b16 %v6475
        %v6614 = vunpack.c.l.b16 %v6476
        %v6615 = vunpack.c.h.b16 %v6476
        %v6616 = vunpack.c.l.b16 %v6477
        %v6617 = vunpack.c.h.b16 %v6477
        %v6618 = vunpack.c.l.b16 %v6478
        %v6619 = vunpack.c.h.b16 %v6478
        %v6620 = vunpack.c.l.b16 %v6479
        %v6621 = vunpack.c.h.b16 %v6479
        %v6622 = vunpack.c.l.b16 %v6480
        %v6623 = vunpack.c.h.b16 %v6480
        %v6624 = vunpack.c.l.b16 %v6481
        %v6625 = vunpack.c.h.b16 %v6481
        %v6626 = vunpack.c.l.b16 %v6482
        %v6627 = vunpack.c.h.b16 %v6482
        %v6628 = vunpack.c.l.b16 %v6483
        %v6629 = vunpack.c.h.b16 %v6483
        %v6630 = vunpack.c.l.b16 %v6484
        %v6631 = vunpack.c.h.b16 %v6484
        %v6632 = vunpack.c.l.b16 %v6485
        %v6633 = vunpack.c.h.b16 %v6485
        %v6634 = vunpack.c.l.b16 %v6486
        %v6635 = vunpack.c.h.b16 %v6486
        %v6636 = vunpack.c.l.b16 %v6487
        %v6637 = vunpack.c.h.b16 %v6487
        %v6638 = vpack.c.b16 %v6606, %v6604
        %v6639 = vpack.c.b16 %v6607, %v6605
        %v6640 = vpack.c.b16 %v6610, %v6608
        %v6641 = vpack.c.b16 %v6611, %v6609
        %v6642 = vpack.c.b16 %v6614, %v6612
        %v6643 = vpack.c.b16 %v6615, %v6613
        %v6644 = vpack.c.b16 %v6618, %v6616
        %v6645 = vpack.c.b16 %v6619, %v6617
        %v6646 = vpack.c.b16 %v6622, %v6620
        %v6647 = vpack.c.b16 %v6623, %v6621
        %v6648 = vpack.c.b16 %v6626, %v6624
        %v6649 = vpack.c.b16 %v6627, %v6625
        %v6650 = vpack.c.b16 %v6630, %v6628
        %v6651 = vpack.c.b16 %v6631, %v6629
        %v6652 = vpack.c.b16 %v6634, %v6632
        %v6653 = vpack.c.b16 %v6635, %v6633
        %v6654 = vpack.c.b16 %v6636, %v6636
        %v6655 = vpack.c.b16 %v6637, %v6637
        %vm6672 = vcmask 15360
        %v6674 = vsel %vm6672, %v6555, 0
        %v6677 = vsel %vm6672, %v6557, 0
        %v6680 = vsel %vm6672, %v6559, 0
        %v6683 = vsel %vm6672, %v6561, 0
        %v6686 = vsel %vm6672, %v6563, 0
        %v6689 = vsel %vm6672, %v6565, 0
        %v6692 = vsel %vm6672, %v6567, 0
        %v6695 = vsel %vm6672, %v6569, 0
        %v6698 = vsel %vm6672, %v6571, 0
        %v6701 = vsel %vm6672, %v6573, 0
        %v6704 = vsel %vm6672, %v6575, 0
        %vm6706 = vcmask 1040384
        %v6708 = vsel %vm6706, %v6654, 0
        %v6711 = vsel %vm6706, %v6655, 0
        %6713 = vmatprep.subr.bf16.mxu0 %v6653
        %6714 = vmatpush1.bf16.msra.mxu0 %v6652
        %6715 = vmatprep.subr.bf16.mxu0 %v6651
        %6716 = vmatpush1.bf16.msra.mxu0 %v6650
        %6717 = vmatprep.subr.bf16.mxu0 %v6649
        %6718 = vmatpush1.bf16.msra.mxu0 %v6648
        %6719 = vmatprep.subr.bf16.mxu0 %v6647
        %6720 = vmatpush1.bf16.msra.mxu0 %v6646
        %6721 = vmatprep.subr.bf16.mxu0 %v6645
        %6722 = vmatpush1.bf16.msra.mxu0 %v6644
        %6723 = vmatprep.subr.bf16.mxu0 %v6643
        %6724 = vmatpush1.bf16.msra.mxu0 %v6642
        %6725 = vmatprep.subr.bf16.mxu0 %v6641
        %6726 = vmatpush1.bf16.msra.mxu0 %v6640
        %6727 = vmatprep.subr.bf16.mxu0 %v6639
        %6728 = vmatpush1.bf16.msra.mxu0 %v6638
        %6729 = vmatprep.subr.bf16.mxu0 0
        %6730 = vmatpush2.bf16.msra.mxu0 0
        %6731 = vmatprep.subr.bf16.mxu0 0
        %6732 = vmatpush2.bf16.msra.mxu0 0
        %6733 = vmatprep.subr.bf16.mxu0 0
        %6734 = vmatpush2.bf16.msra.mxu0 0
        %6735 = vmatprep.subr.bf16.mxu0 0
        %6736 = vmatpush2.bf16.msra.mxu0 0
        %6737 = vmatprep.subr.bf16.mxu0 0
        %6738 = vmatpush2.bf16.msra.mxu0 0
        %6739 = vmatprep.subr.bf16.mxu0 0
        %6740 = vmatpush2.bf16.msra.mxu0 0
        %6741 = vmatprep.subr.bf16.mxu0 0
        %6742 = vmatpush2.bf16.msra.mxu0 0
        %6743 = vmatprep.subr.bf16.mxu0 %v6711
        %6744 = vmatpush2.bf16.msra.mxu0 %v6708
        %6745 = vmatprep.mubr.bf16.mxu0 %v6674
        %6746 = vmatmul.mubr.bf16.gmra.mxu0 %v6554
        %v6747 = vpop.f32.mrf.mxu0
        %v6748 = vadd.f32 0.0, %v6747
        %v6749 = vpop.f32.mrf.mxu0
        %v6750 = vadd.f32 0.0, %v6749
        %v6751 = vpop.f32.mrf.mxu0
        %v6752 = vadd.f32 0.0, %v6751
        %v6753 = vpop.f32.mrf.mxu0
        %v6754 = vadd.f32 0.0, %v6753
        %6755 = vmatprep.mubr.bf16.mxu0 %v6677
        %6756 = vmatmul.mubr.bf16.gmra.mxu0 %v6556
        %v6757 = vpop.f32.mrf.mxu0
        %v6758 = vadd.f32 0.0, %v6757
        %v6759 = vpop.f32.mrf.mxu0
        %v6760 = vadd.f32 0.0, %v6759
        %v6761 = vpop.f32.mrf.mxu0
        %v6762 = vadd.f32 0.0, %v6761
        %v6763 = vpop.f32.mrf.mxu0
        %v6764 = vadd.f32 0.0, %v6763
        %6765 = vmatprep.mubr.bf16.mxu0 %v6680
        %6766 = vmatmul.mubr.bf16.gmra.mxu0 %v6558
        %v6767 = vpop.f32.mrf.mxu0
        %v6768 = vadd.f32 0.0, %v6767
        %v6769 = vpop.f32.mrf.mxu0
        %v6770 = vadd.f32 0.0, %v6769
        %v6771 = vpop.f32.mrf.mxu0
        %v6772 = vadd.f32 0.0, %v6771
        %v6773 = vpop.f32.mrf.mxu0
        %v6774 = vadd.f32 0.0, %v6773
        %6775 = vmatprep.mubr.bf16.mxu0 %v6683
        %6776 = vmatmul.mubr.bf16.gmra.mxu0 %v6560
        %v6777 = vpop.f32.mrf.mxu0
        %v6778 = vadd.f32 0.0, %v6777
        %v6779 = vpop.f32.mrf.mxu0
        %v6780 = vadd.f32 0.0, %v6779
        %v6781 = vpop.f32.mrf.mxu0
        %v6782 = vadd.f32 0.0, %v6781
        %v6783 = vpop.f32.mrf.mxu0
        %v6784 = vadd.f32 0.0, %v6783
        %6785 = vmatprep.mubr.bf16.mxu0 %v6686
        %6786 = vmatmul.mubr.bf16.gmra.mxu0 %v6562
        %v6787 = vpop.f32.mrf.mxu0
        %v6788 = vadd.f32 0.0, %v6787
        %v6789 = vpop.f32.mrf.mxu0
        %v6790 = vadd.f32 0.0, %v6789
        %v6791 = vpop.f32.mrf.mxu0
        %v6792 = vadd.f32 0.0, %v6791
        %v6793 = vpop.f32.mrf.mxu0
        %v6794 = vadd.f32 0.0, %v6793
        %6795 = vmatprep.mubr.bf16.mxu0 %v6689
        %6796 = vmatmul.mubr.bf16.gmra.mxu0 %v6564
        %v6797 = vpop.f32.mrf.mxu0
        %v6798 = vadd.f32 0.0, %v6797
        %v6799 = vpop.f32.mrf.mxu0
        %v6800 = vadd.f32 0.0, %v6799
        %v6801 = vpop.f32.mrf.mxu0
        %v6802 = vadd.f32 0.0, %v6801
        %v6803 = vpop.f32.mrf.mxu0
        %v6804 = vadd.f32 0.0, %v6803
        %6805 = vmatprep.mubr.bf16.mxu0 %v6692
        %6806 = vmatmul.mubr.bf16.gmra.mxu0 %v6566
        %v6807 = vpop.f32.mrf.mxu0
        %v6808 = vadd.f32 0.0, %v6807
        %v6809 = vpop.f32.mrf.mxu0
        %v6810 = vadd.f32 0.0, %v6809
        %v6811 = vpop.f32.mrf.mxu0
        %v6812 = vadd.f32 0.0, %v6811
        %v6813 = vpop.f32.mrf.mxu0
        %v6814 = vadd.f32 0.0, %v6813
        %6815 = vmatprep.mubr.bf16.mxu0 %v6695
        %6816 = vmatmul.mubr.bf16.gmra.mxu0 %v6568
        %v6817 = vpop.f32.mrf.mxu0
        %v6818 = vadd.f32 0.0, %v6817
        %v6819 = vpop.f32.mrf.mxu0
        %v6820 = vadd.f32 0.0, %v6819
        %v6821 = vpop.f32.mrf.mxu0
        %v6822 = vadd.f32 0.0, %v6821
        %v6823 = vpop.f32.mrf.mxu0
        %v6824 = vadd.f32 0.0, %v6823
        %6825 = vmatprep.mubr.bf16.mxu0 %v6698
        %6826 = vmatmul.mubr.bf16.gmra.mxu0 %v6570
        %v6827 = vpop.f32.mrf.mxu0
        %v6828 = vadd.f32 0.0, %v6827
        %v6829 = vpop.f32.mrf.mxu0
        %v6830 = vadd.f32 0.0, %v6829
        %v6831 = vpop.f32.mrf.mxu0
        %v6832 = vadd.f32 0.0, %v6831
        %v6833 = vpop.f32.mrf.mxu0
        %v6834 = vadd.f32 0.0, %v6833
        %6835 = vmatprep.mubr.bf16.mxu0 %v6701
        %6836 = vmatmul.mubr.bf16.gmra.mxu0 %v6572
        %v6837 = vpop.f32.mrf.mxu0
        %v6838 = vadd.f32 0.0, %v6837
        %v6839 = vpop.f32.mrf.mxu0
        %v6840 = vadd.f32 0.0, %v6839
        %v6841 = vpop.f32.mrf.mxu0
        %v6842 = vadd.f32 0.0, %v6841
        %v6843 = vpop.f32.mrf.mxu0
        %v6844 = vadd.f32 0.0, %v6843
        %6845 = vmatprep.mubr.bf16.mxu0 %v6704
        %6846 = vmatmul.mubr.bf16.gmra.mxu0 %v6574
        %v6847 = vpop.f32.mrf.mxu0
        %v6848 = vpop.f32.mrf.mxu0
        %v6849 = vpop.f32.mrf.mxu0
        %v6850 = vpop.f32.mrf.mxu0
        %6851 = vdwg.mxu0
        %v6874 = vunpack.c.l.b16 %v6409
        %v6875 = vunpack.c.h.b16 %v6409
        %v6876 = vunpack.c.l.b16 %v6410
        %v6877 = vunpack.c.h.b16 %v6410
        %v6878 = vunpack.c.l.b16 %v6411
        %v6879 = vunpack.c.h.b16 %v6411
        %v6880 = vunpack.c.l.b16 %v6412
        %v6881 = vunpack.c.h.b16 %v6412
        %v6882 = vunpack.c.l.b16 %v6413
        %v6883 = vunpack.c.h.b16 %v6413
        %v6884 = vunpack.c.l.b16 %v6414
        %v6885 = vunpack.c.h.b16 %v6414
        %v6886 = vunpack.c.l.b16 %v6415
        %v6887 = vunpack.c.h.b16 %v6415
        %v6888 = vunpack.c.l.b16 %v6416
        %v6889 = vunpack.c.h.b16 %v6416
        %v6890 = vunpack.c.l.b16 %v6417
        %v6891 = vunpack.c.h.b16 %v6417
        %v6892 = vunpack.c.l.b16 %v6418
        %v6893 = vunpack.c.h.b16 %v6418
        %v6894 = vunpack.c.l.b16 %v6419
        %v6895 = vunpack.c.h.b16 %v6419
        %v6896 = vunpack.c.l.b16 %v6420
        %v6897 = vunpack.c.h.b16 %v6420
        %v6898 = vunpack.c.l.b16 %v6421
        %v6899 = vunpack.c.h.b16 %v6421
        %v6900 = vunpack.c.l.b16 %v6422
        %v6901 = vunpack.c.h.b16 %v6422
        %v6902 = vunpack.c.l.b16 %v6423
        %v6903 = vunpack.c.h.b16 %v6423
        %v6904 = vunpack.c.l.b16 %v6424
        %v6905 = vunpack.c.h.b16 %v6424
        %v6906 = vunpack.c.l.b16 %v6425
        %v6907 = vunpack.c.h.b16 %v6425
        %v6908 = vunpack.c.l.b16 %v6426
        %v6909 = vunpack.c.h.b16 %v6426
        %v6910 = vunpack.c.l.b16 %v6427
        %v6911 = vunpack.c.h.b16 %v6427
        %v6912 = vunpack.c.l.b16 %v6428
        %v6913 = vunpack.c.h.b16 %v6428
        %v6914 = vunpack.c.l.b16 %v6429
        %v6915 = vunpack.c.h.b16 %v6429
        %v6916 = vunpack.c.l.b16 %v6430
        %v6917 = vunpack.c.h.b16 %v6430
        %v6918 = vpack.c.b16 %v6876, %v6874
        %v6919 = vpack.c.b16 %v6877, %v6875
        %v6920 = vpack.c.b16 %v6880, %v6878
        %v6921 = vpack.c.b16 %v6881, %v6879
        %v6922 = vpack.c.b16 %v6884, %v6882
        %v6923 = vpack.c.b16 %v6885, %v6883
        %v6924 = vpack.c.b16 %v6888, %v6886
        %v6925 = vpack.c.b16 %v6889, %v6887
        %v6926 = vpack.c.b16 %v6892, %v6890
        %v6927 = vpack.c.b16 %v6893, %v6891
        %v6928 = vpack.c.b16 %v6896, %v6894
        %v6929 = vpack.c.b16 %v6897, %v6895
        %v6930 = vpack.c.b16 %v6900, %v6898
        %v6931 = vpack.c.b16 %v6901, %v6899
        %v6932 = vpack.c.b16 %v6904, %v6902
        %v6933 = vpack.c.b16 %v6905, %v6903
        %v6934 = vpack.c.b16 %v6908, %v6906
        %v6935 = vpack.c.b16 %v6909, %v6907
        %v6936 = vpack.c.b16 %v6912, %v6910
        %v6937 = vpack.c.b16 %v6913, %v6911
        %v6938 = vpack.c.b16 %v6916, %v6914
        %v6939 = vpack.c.b16 %v6917, %v6915
        %v6968 = vunpack.c.l.b16 %v6431
        %v6969 = vunpack.c.h.b16 %v6431
        %v6970 = vunpack.c.l.b16 %v6432
        %v6971 = vunpack.c.h.b16 %v6432
        %v6972 = vunpack.c.l.b16 %v6433
        %v6973 = vunpack.c.h.b16 %v6433
        %v6974 = vunpack.c.l.b16 %v6434
        %v6975 = vunpack.c.h.b16 %v6434
        %v6976 = vunpack.c.l.b16 %v6435
        %v6977 = vunpack.c.h.b16 %v6435
        %v6978 = vunpack.c.l.b16 %v6436
        %v6979 = vunpack.c.h.b16 %v6436
        %v6980 = vunpack.c.l.b16 %v6437
        %v6981 = vunpack.c.h.b16 %v6437
        %v6982 = vunpack.c.l.b16 %v6438
        %v6983 = vunpack.c.h.b16 %v6438
        %v6984 = vunpack.c.l.b16 %v6439
        %v6985 = vunpack.c.h.b16 %v6439
        %v6986 = vunpack.c.l.b16 %v6440
        %v6987 = vunpack.c.h.b16 %v6440
        %v6988 = vunpack.c.l.b16 %v6441
        %v6989 = vunpack.c.h.b16 %v6441
        %v6990 = vunpack.c.l.b16 %v6442
        %v6991 = vunpack.c.h.b16 %v6442
        %v6992 = vunpack.c.l.b16 %v6443
        %v6993 = vunpack.c.h.b16 %v6443
        %v6994 = vunpack.c.l.b16 %v6444
        %v6995 = vunpack.c.h.b16 %v6444
        %v6996 = vunpack.c.l.b16 %v6445
        %v6997 = vunpack.c.h.b16 %v6445
        %v6998 = vunpack.c.l.b16 %v6446
        %v6999 = vunpack.c.h.b16 %v6446
        %v7000 = vunpack.c.l.b16 %v6447
        %v7001 = vunpack.c.h.b16 %v6447
        %v7002 = vpack.c.b16 %v6970, %v6968
        %v7003 = vpack.c.b16 %v6971, %v6969
        %v7004 = vpack.c.b16 %v6974, %v6972
        %v7005 = vpack.c.b16 %v6975, %v6973
        %v7006 = vpack.c.b16 %v6978, %v6976
        %v7007 = vpack.c.b16 %v6979, %v6977
        %v7008 = vpack.c.b16 %v6982, %v6980
        %v7009 = vpack.c.b16 %v6983, %v6981
        %v7010 = vpack.c.b16 %v6986, %v6984
        %v7011 = vpack.c.b16 %v6987, %v6985
        %v7012 = vpack.c.b16 %v6990, %v6988
        %v7013 = vpack.c.b16 %v6991, %v6989
        %v7014 = vpack.c.b16 %v6994, %v6992
        %v7015 = vpack.c.b16 %v6995, %v6993
        %v7016 = vpack.c.b16 %v6998, %v6996
        %v7017 = vpack.c.b16 %v6999, %v6997
        %v7018 = vpack.c.b16 %v7000, %v7000
        %v7019 = vpack.c.b16 %v7001, %v7001
        %v7037 = vsel %vm6672, %v6919, 0
        %v7040 = vsel %vm6672, %v6921, 0
        %v7043 = vsel %vm6672, %v6923, 0
        %v7046 = vsel %vm6672, %v6925, 0
        %v7049 = vsel %vm6672, %v6927, 0
        %v7052 = vsel %vm6672, %v6929, 0
        %v7055 = vsel %vm6672, %v6931, 0
        %v7058 = vsel %vm6672, %v6933, 0
        %v7061 = vsel %vm6672, %v6935, 0
        %v7064 = vsel %vm6672, %v6937, 0
        %v7067 = vsel %vm6672, %v6939, 0
        %v7070 = vsel %vm6706, %v7018, 0
        %v7073 = vsel %vm6706, %v7019, 0
        %7075 = vmatprep.subr.bf16.mxu0 %v7017
        %7076 = vmatpush1.bf16.msra.mxu0 %v7016
        %7077 = vmatprep.subr.bf16.mxu0 %v7015
        %7078 = vmatpush1.bf16.msra.mxu0 %v7014
        %7079 = vmatprep.subr.bf16.mxu0 %v7013
        %7080 = vmatpush1.bf16.msra.mxu0 %v7012
        %7081 = vmatprep.subr.bf16.mxu0 %v7011
        %7082 = vmatpush1.bf16.msra.mxu0 %v7010
        %7083 = vmatprep.subr.bf16.mxu0 %v7009
        %7084 = vmatpush1.bf16.msra.mxu0 %v7008
        %7085 = vmatprep.subr.bf16.mxu0 %v7007
        %7086 = vmatpush1.bf16.msra.mxu0 %v7006
        %7087 = vmatprep.subr.bf16.mxu0 %v7005
        %7088 = vmatpush1.bf16.msra.mxu0 %v7004
        %7089 = vmatprep.subr.bf16.mxu0 %v7003
        %7090 = vmatpush1.bf16.msra.mxu0 %v7002
        %7091 = vmatprep.subr.bf16.mxu0 0
        %7092 = vmatpush2.bf16.msra.mxu0 0
        %7093 = vmatprep.subr.bf16.mxu0 0
        %7094 = vmatpush2.bf16.msra.mxu0 0
        %7095 = vmatprep.subr.bf16.mxu0 0
        %7096 = vmatpush2.bf16.msra.mxu0 0
        %7097 = vmatprep.subr.bf16.mxu0 0
        %7098 = vmatpush2.bf16.msra.mxu0 0
        %7099 = vmatprep.subr.bf16.mxu0 0
        %7100 = vmatpush2.bf16.msra.mxu0 0
        %7101 = vmatprep.subr.bf16.mxu0 0
        %7102 = vmatpush2.bf16.msra.mxu0 0
        %7103 = vmatprep.subr.bf16.mxu0 0
        %7104 = vmatpush2.bf16.msra.mxu0 0
        %7105 = vmatprep.subr.bf16.mxu0 %v7073
        %7106 = vmatpush2.bf16.msra.mxu0 %v7070
        %7107 = vmatprep.mubr.bf16.mxu0 %v7037
        %7108 = vmatmul.mubr.bf16.gmra.mxu0 %v6918
        %v7109 = vpop.f32.mrf.mxu0
        %v7110 = vadd.f32 %v6748, %v7109
        %v7111 = vpop.f32.mrf.mxu0
        %v7112 = vadd.f32 %v6750, %v7111
        %v7113 = vpop.f32.mrf.mxu0
        %v7114 = vadd.f32 %v6752, %v7113
        %v7115 = vpop.f32.mrf.mxu0
        %v7116 = vadd.f32 %v6754, %v7115
        %7117 = vmatprep.mubr.bf16.mxu0 %v7040
        %7118 = vmatmul.mubr.bf16.gmra.mxu0 %v6920
        %v7119 = vpop.f32.mrf.mxu0
        %v7120 = vadd.f32 %v6758, %v7119
        %v7121 = vpop.f32.mrf.mxu0
        %v7122 = vadd.f32 %v6760, %v7121
        %v7123 = vpop.f32.mrf.mxu0
        %v7124 = vadd.f32 %v6762, %v7123
        %v7125 = vpop.f32.mrf.mxu0
        %v7126 = vadd.f32 %v6764, %v7125
        %7127 = vmatprep.mubr.bf16.mxu0 %v7043
        %7128 = vmatmul.mubr.bf16.gmra.mxu0 %v6922
        %v7129 = vpop.f32.mrf.mxu0
        %v7130 = vadd.f32 %v6768, %v7129
        %v7131 = vpop.f32.mrf.mxu0
        %v7132 = vadd.f32 %v6770, %v7131
        %v7133 = vpop.f32.mrf.mxu0
        %v7134 = vadd.f32 %v6772, %v7133
        %v7135 = vpop.f32.mrf.mxu0
        %v7136 = vadd.f32 %v6774, %v7135
        %7137 = vmatprep.mubr.bf16.mxu0 %v7046
        %7138 = vmatmul.mubr.bf16.gmra.mxu0 %v6924
        %v7139 = vpop.f32.mrf.mxu0
        %v7140 = vadd.f32 %v6778, %v7139
        %v7141 = vpop.f32.mrf.mxu0
        %v7142 = vadd.f32 %v6780, %v7141
        %v7143 = vpop.f32.mrf.mxu0
        %v7144 = vadd.f32 %v6782, %v7143
        %v7145 = vpop.f32.mrf.mxu0
        %v7146 = vadd.f32 %v6784, %v7145
        %7147 = vmatprep.mubr.bf16.mxu0 %v7049
        %7148 = vmatmul.mubr.bf16.gmra.mxu0 %v6926
        %v7149 = vpop.f32.mrf.mxu0
        %v7150 = vadd.f32 %v6788, %v7149
        %v7151 = vpop.f32.mrf.mxu0
        %v7152 = vadd.f32 %v6790, %v7151
        %v7153 = vpop.f32.mrf.mxu0
        %v7154 = vadd.f32 %v6792, %v7153
        %v7155 = vpop.f32.mrf.mxu0
        %v7156 = vadd.f32 %v6794, %v7155
        %7157 = vmatprep.mubr.bf16.mxu0 %v7052
        %7158 = vmatmul.mubr.bf16.gmra.mxu0 %v6928
        %v7159 = vpop.f32.mrf.mxu0
        %v7160 = vadd.f32 %v6798, %v7159
        %v7161 = vpop.f32.mrf.mxu0
        %v7162 = vadd.f32 %v6800, %v7161
        %v7163 = vpop.f32.mrf.mxu0
        %v7164 = vadd.f32 %v6802, %v7163
        %v7165 = vpop.f32.mrf.mxu0
        %v7166 = vadd.f32 %v6804, %v7165
        %7167 = vmatprep.mubr.bf16.mxu0 %v7055
        %7168 = vmatmul.mubr.bf16.gmra.mxu0 %v6930
        %v7169 = vpop.f32.mrf.mxu0
        %v7170 = vadd.f32 %v6808, %v7169
        %v7171 = vpop.f32.mrf.mxu0
        %v7172 = vadd.f32 %v6810, %v7171
        %v7173 = vpop.f32.mrf.mxu0
        %v7174 = vadd.f32 %v6812, %v7173
        %v7175 = vpop.f32.mrf.mxu0
        %v7176 = vadd.f32 %v6814, %v7175
        %7177 = vmatprep.mubr.bf16.mxu0 %v7058
        %7178 = vmatmul.mubr.bf16.gmra.mxu0 %v6932
        %v7179 = vpop.f32.mrf.mxu0
        %v7180 = vadd.f32 %v6818, %v7179
        %v7181 = vpop.f32.mrf.mxu0
        %v7182 = vadd.f32 %v6820, %v7181
        %v7183 = vpop.f32.mrf.mxu0
        %v7184 = vadd.f32 %v6822, %v7183
        %v7185 = vpop.f32.mrf.mxu0
        %v7186 = vadd.f32 %v6824, %v7185
        %7187 = vmatprep.mubr.bf16.mxu0 %v7061
        %7188 = vmatmul.mubr.bf16.gmra.mxu0 %v6934
        %v7189 = vpop.f32.mrf.mxu0
        %v7190 = vadd.f32 %v6828, %v7189
        %v7191 = vpop.f32.mrf.mxu0
        %v7192 = vadd.f32 %v6830, %v7191
        %v7193 = vpop.f32.mrf.mxu0
        %v7194 = vadd.f32 %v6832, %v7193
        %v7195 = vpop.f32.mrf.mxu0
        %v7196 = vadd.f32 %v6834, %v7195
        %7197 = vmatprep.mubr.bf16.mxu0 %v7064
        %7198 = vmatmul.mubr.bf16.gmra.mxu0 %v6936
        %v7199 = vpop.f32.mrf.mxu0
        %v7200 = vadd.f32 %v6838, %v7199
        %v7201 = vpop.f32.mrf.mxu0
        %v7202 = vadd.f32 %v6840, %v7201
        %v7203 = vpop.f32.mrf.mxu0
        %v7204 = vadd.f32 %v6842, %v7203
        %v7205 = vpop.f32.mrf.mxu0
        %v7206 = vadd.f32 %v6844, %v7205
        %7207 = vmatprep.mubr.bf16.mxu0 %v7067
        %7208 = vmatmul.mubr.bf16.gmra.mxu0 %v6938
        %v7209 = vpop.f32.mrf.mxu0
        %v7210 = vpop.f32.mrf.mxu0
        %v7211 = vpop.f32.mrf.mxu0
        %v7212 = vpop.f32.mrf.mxu0
        %7213 = vdwg.mxu0
        %s7214 = scalar_lea.vmem [#allocation2], 32
        %v7215 = vld [vmem:[%s7214] sm:$0xff]
        %v7216 = vld [vmem:[%s7214 + $0x8] sm:$0xff]
        %v7217 = vld [vmem:[%s7214 + $0x10] sm:$0xff]
        %v7218 = vld [vmem:[%s7214 + $0x18] sm:$0xff]
        %v7219 = vld [vmem:[%s7214 + $0x20] sm:$0xff]
        %v7220 = vld [vmem:[%s7214 + $0x28] sm:$0xff]
        %v7221 = vld [vmem:[%s7214 + $0x30] sm:$0xff]
        %v7222 = vld [vmem:[%s7214 + $0x38] sm:$0xff]
        %v7223 = vld [vmem:[%s7214 + $0x40] sm:$0xff]
        %v7224 = vld [vmem:[%s7214 + $0x48] sm:$0xff]
        %v7225 = vld [vmem:[%s7214 + $0x50] sm:$0xff]
        %v7226 = vld [vmem:[%s7214 + $0x58] sm:$0xff]
        %v7227 = vld [vmem:[%s7214 + $0x60] sm:$0xff]
        %v7228 = vld [vmem:[%s7214 + $0x68] sm:$0xff]
        %v7229 = vld [vmem:[%s7214 + $0x70] sm:$0xff]
        %v7230 = vld [vmem:[%s7214 + $0x78] sm:$0xff]
        %v7231 = vld [vmem:[%s7214 + $0x80] sm:$0xff]
        %v7232 = vld [vmem:[%s7214 + $0x88] sm:$0xff]
        %v7233 = vld [vmem:[%s7214 + $0x90] sm:$0xff]
        %v7234 = vld [vmem:[%s7214 + $0x98] sm:$0xff]
        %v7235 = vld [vmem:[%s7214 + $0xa0] sm:$0xff]
        %v7236 = vld [vmem:[%s7214 + $0xa8] sm:$0xff]
        %s7237 = scalar_lea.vmem %s3, 272
        %v7238 = vld [vmem:[%s7237] sm:$0xff]
        %v7239 = vld [vmem:[%s7237 + $0x8] sm:$0xff]
        %v7240 = vld [vmem:[%s7237 + $0x10] sm:$0xff]
        %v7241 = vld [vmem:[%s7237 + $0x18] sm:$0xff]
        %v7242 = vld [vmem:[%s7237 + $0x20] sm:$0xff]
        %v7243 = vld [vmem:[%s7237 + $0x28] sm:$0xff]
        %v7244 = vld [vmem:[%s7237 + $0x30] sm:$0xff]
        %v7245 = vld [vmem:[%s7237 + $0x38] sm:$0xff]
        %v7246 = vld [vmem:[%s7237 + $0x40] sm:$0xff]
        %v7247 = vld [vmem:[%s7237 + $0x48] sm:$0xff]
        %v7248 = vld [vmem:[%s7237 + $0x50] sm:$0xff]
        %v7249 = vld [vmem:[%s7237 + $0x58] sm:$0xff]
        %v7250 = vld [vmem:[%s7237 + $0x60] sm:$0xff]
        %v7251 = vld [vmem:[%s7237 + $0x68] sm:$0xff]
        %v7252 = vld [vmem:[%s7237 + $0x70] sm:$0xff]
        %v7253 = vld [vmem:[%s7237 + $0x78] sm:$0xff]
        %v7254 = vld [vmem:[%s7237 + $0x80] sm:$0x11]
        %v7277 = vunpack.c.l.b16 %v7215
        %v7278 = vunpack.c.h.b16 %v7215
        %v7279 = vunpack.c.l.b16 %v7216
        %v7280 = vunpack.c.h.b16 %v7216
        %v7281 = vunpack.c.l.b16 %v7217
        %v7282 = vunpack.c.h.b16 %v7217
        %v7283 = vunpack.c.l.b16 %v7218
        %v7284 = vunpack.c.h.b16 %v7218
        %v7285 = vunpack.c.l.b16 %v7219
        %v7286 = vunpack.c.h.b16 %v7219
        %v7287 = vunpack.c.l.b16 %v7220
        %v7288 = vunpack.c.h.b16 %v7220
        %v7289 = vunpack.c.l.b16 %v7221
        %v7290 = vunpack.c.h.b16 %v7221
        %v7291 = vunpack.c.l.b16 %v7222
        %v7292 = vunpack.c.h.b16 %v7222
        %v7293 = vunpack.c.l.b16 %v7223
        %v7294 = vunpack.c.h.b16 %v7223
        %v7295 = vunpack.c.l.b16 %v7224
        %v7296 = vunpack.c.h.b16 %v7224
        %v7297 = vunpack.c.l.b16 %v7225
        %v7298 = vunpack.c.h.b16 %v7225
        %v7299 = vunpack.c.l.b16 %v7226
        %v7300 = vunpack.c.h.b16 %v7226
        %v7301 = vunpack.c.l.b16 %v7227
        %v7302 = vunpack.c.h.b16 %v7227
        %v7303 = vunpack.c.l.b16 %v7228
        %v7304 = vunpack.c.h.b16 %v7228
        %v7305 = vunpack.c.l.b16 %v7229
        %v7306 = vunpack.c.h.b16 %v7229
        %v7307 = vunpack.c.l.b16 %v7230
        %v7308 = vunpack.c.h.b16 %v7230
        %v7309 = vunpack.c.l.b16 %v7231
        %v7310 = vunpack.c.h.b16 %v7231
        %v7311 = vunpack.c.l.b16 %v7232
        %v7312 = vunpack.c.h.b16 %v7232
        %v7313 = vunpack.c.l.b16 %v7233
        %v7314 = vunpack.c.h.b16 %v7233
        %v7315 = vunpack.c.l.b16 %v7234
        %v7316 = vunpack.c.h.b16 %v7234
        %v7317 = vunpack.c.l.b16 %v7235
        %v7318 = vunpack.c.h.b16 %v7235
        %v7319 = vunpack.c.l.b16 %v7236
        %v7320 = vunpack.c.h.b16 %v7236
        %v7321 = vpack.c.b16 %v7279, %v7277
        %v7322 = vpack.c.b16 %v7280, %v7278
        %v7323 = vpack.c.b16 %v7283, %v7281
        %v7324 = vpack.c.b16 %v7284, %v7282
        %v7325 = vpack.c.b16 %v7287, %v7285
        %v7326 = vpack.c.b16 %v7288, %v7286
        %v7327 = vpack.c.b16 %v7291, %v7289
        %v7328 = vpack.c.b16 %v7292, %v7290
        %v7329 = vpack.c.b16 %v7295, %v7293
        %v7330 = vpack.c.b16 %v7296, %v7294
        %v7331 = vpack.c.b16 %v7299, %v7297
        %v7332 = vpack.c.b16 %v7300, %v7298
        %v7333 = vpack.c.b16 %v7303, %v7301
        %v7334 = vpack.c.b16 %v7304, %v7302
        %v7335 = vpack.c.b16 %v7307, %v7305
        %v7336 = vpack.c.b16 %v7308, %v7306
        %v7337 = vpack.c.b16 %v7311, %v7309
        %v7338 = vpack.c.b16 %v7312, %v7310
        %v7339 = vpack.c.b16 %v7315, %v7313
        %v7340 = vpack.c.b16 %v7316, %v7314
        %v7341 = vpack.c.b16 %v7319, %v7317
        %v7342 = vpack.c.b16 %v7320, %v7318
        %v7371 = vunpack.c.l.b16 %v7238
        %v7372 = vunpack.c.h.b16 %v7238
        %v7373 = vunpack.c.l.b16 %v7239
        %v7374 = vunpack.c.h.b16 %v7239
        %v7375 = vunpack.c.l.b16 %v7240
        %v7376 = vunpack.c.h.b16 %v7240
        %v7377 = vunpack.c.l.b16 %v7241
        %v7378 = vunpack.c.h.b16 %v7241
        %v7379 = vunpack.c.l.b16 %v7242
        %v7380 = vunpack.c.h.b16 %v7242
        %v7381 = vunpack.c.l.b16 %v7243
        %v7382 = vunpack.c.h.b16 %v7243
        %v7383 = vunpack.c.l.b16 %v7244
        %v7384 = vunpack.c.h.b16 %v7244
        %v7385 = vunpack.c.l.b16 %v7245
        %v7386 = vunpack.c.h.b16 %v7245
        %v7387 = vunpack.c.l.b16 %v7246
        %v7388 = vunpack.c.h.b16 %v7246
        %v7389 = vunpack.c.l.b16 %v7247
        %v7390 = vunpack.c.h.b16 %v7247
        %v7391 = vunpack.c.l.b16 %v7248
        %v7392 = vunpack.c.h.b16 %v7248
        %v7393 = vunpack.c.l.b16 %v7249
        %v7394 = vunpack.c.h.b16 %v7249
        %v7395 = vunpack.c.l.b16 %v7250
        %v7396 = vunpack.c.h.b16 %v7250
        %v7397 = vunpack.c.l.b16 %v7251
        %v7398 = vunpack.c.h.b16 %v7251
        %v7399 = vunpack.c.l.b16 %v7252
        %v7400 = vunpack.c.h.b16 %v7252
        %v7401 = vunpack.c.l.b16 %v7253
        %v7402 = vunpack.c.h.b16 %v7253
        %v7403 = vunpack.c.l.b16 %v7254
        %v7404 = vunpack.c.h.b16 %v7254
        %v7405 = vpack.c.b16 %v7373, %v7371
        %v7406 = vpack.c.b16 %v7374, %v7372
        %v7407 = vpack.c.b16 %v7377, %v7375
        %v7408 = vpack.c.b16 %v7378, %v7376
        %v7409 = vpack.c.b16 %v7381, %v7379
        %v7410 = vpack.c.b16 %v7382, %v7380
        %v7411 = vpack.c.b16 %v7385, %v7383
        %v7412 = vpack.c.b16 %v7386, %v7384
        %v7413 = vpack.c.b16 %v7389, %v7387
        %v7414 = vpack.c.b16 %v7390, %v7388
        %v7415 = vpack.c.b16 %v7393, %v7391
        %v7416 = vpack.c.b16 %v7394, %v7392
        %v7417 = vpack.c.b16 %v7397, %v7395
        %v7418 = vpack.c.b16 %v7398, %v7396
        %v7419 = vpack.c.b16 %v7401, %v7399
        %v7420 = vpack.c.b16 %v7402, %v7400
        %v7421 = vpack.c.b16 %v7403, %v7403
        %v7422 = vpack.c.b16 %v7404, %v7404
        %v7440 = vsel %vm6672, %v7322, 0
        %v7443 = vsel %vm6672, %v7324, 0
        %v7446 = vsel %vm6672, %v7326, 0
        %v7449 = vsel %vm6672, %v7328, 0
        %v7452 = vsel %vm6672, %v7330, 0
        %v7455 = vsel %vm6672, %v7332, 0
        %v7458 = vsel %vm6672, %v7334, 0
        %v7461 = vsel %vm6672, %v7336, 0
        %v7464 = vsel %vm6672, %v7338, 0
        %v7467 = vsel %vm6672, %v7340, 0
        %v7470 = vsel %vm6672, %v7342, 0
        %v7473 = vsel %vm6706, %v7421, 0
        %v7476 = vsel %vm6706, %v7422, 0
        %7478 = vmatprep.subr.bf16.mxu0 %v7420
        %7479 = vmatpush1.bf16.msra.mxu0 %v7419
        %7480 = vmatprep.subr.bf16.mxu0 %v7418
        %7481 = vmatpush1.bf16.msra.mxu0 %v7417
        %7482 = vmatprep.subr.bf16.mxu0 %v7416
        %7483 = vmatpush1.bf16.msra.mxu0 %v7415
        %7484 = vmatprep.subr.bf16.mxu0 %v7414
        %7485 = vmatpush1.bf16.msra.mxu0 %v7413
        %7486 = vmatprep.subr.bf16.mxu0 %v7412
        %7487 = vmatpush1.bf16.msra.mxu0 %v7411
        %7488 = vmatprep.subr.bf16.mxu0 %v7410
        %7489 = vmatpush1.bf16.msra.mxu0 %v7409
        %7490 = vmatprep.subr.bf16.mxu0 %v7408
        %7491 = vmatpush1.bf16.msra.mxu0 %v7407
        %7492 = vmatprep.subr.bf16.mxu0 %v7406
        %7493 = vmatpush1.bf16.msra.mxu0 %v7405
        %7494 = vmatprep.subr.bf16.mxu0 0
        %7495 = vmatpush2.bf16.msra.mxu0 0
        %7496 = vmatprep.subr.bf16.mxu0 0
        %7497 = vmatpush2.bf16.msra.mxu0 0
        %7498 = vmatprep.subr.bf16.mxu0 0
        %7499 = vmatpush2.bf16.msra.mxu0 0
        %7500 = vmatprep.subr.bf16.mxu0 0
        %7501 = vmatpush2.bf16.msra.mxu0 0
        %7502 = vmatprep.subr.bf16.mxu0 0
        %7503 = vmatpush2.bf16.msra.mxu0 0
        %7504 = vmatprep.subr.bf16.mxu0 0
        %7505 = vmatpush2.bf16.msra.mxu0 0
        %7506 = vmatprep.subr.bf16.mxu0 0
        %7507 = vmatpush2.bf16.msra.mxu0 0
        %7508 = vmatprep.subr.bf16.mxu0 %v7476
        %7509 = vmatpush2.bf16.msra.mxu0 %v7473
        %7510 = vmatprep.mubr.bf16.mxu0 %v7440
        %7511 = vmatmul.mubr.bf16.gmra.mxu0 %v7321
        %v7512 = vpop.f32.mrf.mxu0
        %v7513 = vadd.f32 0.0, %v7512
        %v7514 = vpop.f32.mrf.mxu0
        %v7515 = vadd.f32 0.0, %v7514
        %v7516 = vpop.f32.mrf.mxu0
        %v7517 = vadd.f32 0.0, %v7516
        %v7518 = vpop.f32.mrf.mxu0
        %v7519 = vadd.f32 0.0, %v7518
        %7520 = vmatprep.mubr.bf16.mxu0 %v7443
        %7521 = vmatmul.mubr.bf16.gmra.mxu0 %v7323
        %v7522 = vpop.f32.mrf.mxu0
        %v7523 = vadd.f32 0.0, %v7522
        %v7524 = vpop.f32.mrf.mxu0
        %v7525 = vadd.f32 0.0, %v7524
        %v7526 = vpop.f32.mrf.mxu0
        %v7527 = vadd.f32 0.0, %v7526
        %v7528 = vpop.f32.mrf.mxu0
        %v7529 = vadd.f32 0.0, %v7528
        %7530 = vmatprep.mubr.bf16.mxu0 %v7446
        %7531 = vmatmul.mubr.bf16.gmra.mxu0 %v7325
        %v7532 = vpop.f32.mrf.mxu0
        %v7533 = vadd.f32 0.0, %v7532
        %v7534 = vpop.f32.mrf.mxu0
        %v7535 = vadd.f32 0.0, %v7534
        %v7536 = vpop.f32.mrf.mxu0
        %v7537 = vadd.f32 0.0, %v7536
        %v7538 = vpop.f32.mrf.mxu0
        %v7539 = vadd.f32 0.0, %v7538
        %7540 = vmatprep.mubr.bf16.mxu0 %v7449
        %7541 = vmatmul.mubr.bf16.gmra.mxu0 %v7327
        %v7542 = vpop.f32.mrf.mxu0
        %v7543 = vadd.f32 0.0, %v7542
        %v7544 = vpop.f32.mrf.mxu0
        %v7545 = vadd.f32 0.0, %v7544
        %v7546 = vpop.f32.mrf.mxu0
        %v7547 = vadd.f32 0.0, %v7546
        %v7548 = vpop.f32.mrf.mxu0
        %v7549 = vadd.f32 0.0, %v7548
        %7550 = vmatprep.mubr.bf16.mxu0 %v7452
        %7551 = vmatmul.mubr.bf16.gmra.mxu0 %v7329
        %v7552 = vpop.f32.mrf.mxu0
        %v7553 = vadd.f32 0.0, %v7552
        %v7554 = vpop.f32.mrf.mxu0
        %v7555 = vadd.f32 0.0, %v7554
        %v7556 = vpop.f32.mrf.mxu0
        %v7557 = vadd.f32 0.0, %v7556
        %v7558 = vpop.f32.mrf.mxu0
        %v7559 = vadd.f32 0.0, %v7558
        %7560 = vmatprep.mubr.bf16.mxu0 %v7455
        %7561 = vmatmul.mubr.bf16.gmra.mxu0 %v7331
        %v7562 = vpop.f32.mrf.mxu0
        %v7563 = vadd.f32 0.0, %v7562
        %v7564 = vpop.f32.mrf.mxu0
        %v7565 = vadd.f32 0.0, %v7564
        %v7566 = vpop.f32.mrf.mxu0
        %v7567 = vadd.f32 0.0, %v7566
        %v7568 = vpop.f32.mrf.mxu0
        %v7569 = vadd.f32 0.0, %v7568
        %7570 = vmatprep.mubr.bf16.mxu0 %v7458
        %7571 = vmatmul.mubr.bf16.gmra.mxu0 %v7333
        %v7572 = vpop.f32.mrf.mxu0
        %v7573 = vadd.f32 0.0, %v7572
        %v7574 = vpop.f32.mrf.mxu0
        %v7575 = vadd.f32 0.0, %v7574
        %v7576 = vpop.f32.mrf.mxu0
        %v7577 = vadd.f32 0.0, %v7576
        %v7578 = vpop.f32.mrf.mxu0
        %v7579 = vadd.f32 0.0, %v7578
        %7580 = vmatprep.mubr.bf16.mxu0 %v7461
        %7581 = vmatmul.mubr.bf16.gmra.mxu0 %v7335
        %v7582 = vpop.f32.mrf.mxu0
        %v7583 = vadd.f32 0.0, %v7582
        %v7584 = vpop.f32.mrf.mxu0
        %v7585 = vadd.f32 0.0, %v7584
        %v7586 = vpop.f32.mrf.mxu0
        %v7587 = vadd.f32 0.0, %v7586
        %v7588 = vpop.f32.mrf.mxu0
        %v7589 = vadd.f32 0.0, %v7588
        %7590 = vmatprep.mubr.bf16.mxu0 %v7464
        %7591 = vmatmul.mubr.bf16.gmra.mxu0 %v7337
        %v7592 = vpop.f32.mrf.mxu0
        %v7593 = vadd.f32 0.0, %v7592
        %v7594 = vpop.f32.mrf.mxu0
        %v7595 = vadd.f32 0.0, %v7594
        %v7596 = vpop.f32.mrf.mxu0
        %v7597 = vadd.f32 0.0, %v7596
        %v7598 = vpop.f32.mrf.mxu0
        %v7599 = vadd.f32 0.0, %v7598
        %7600 = vmatprep.mubr.bf16.mxu0 %v7467
        %7601 = vmatmul.mubr.bf16.gmra.mxu0 %v7339
        %v7602 = vpop.f32.mrf.mxu0
        %v7603 = vadd.f32 0.0, %v7602
        %v7604 = vpop.f32.mrf.mxu0
        %v7605 = vadd.f32 0.0, %v7604
        %v7606 = vpop.f32.mrf.mxu0
        %v7607 = vadd.f32 0.0, %v7606
        %v7608 = vpop.f32.mrf.mxu0
        %v7609 = vadd.f32 0.0, %v7608
        %7610 = vmatprep.mubr.bf16.mxu0 %v7470
        %7611 = vmatmul.mubr.bf16.gmra.mxu0 %v7341
        %v7612 = vpop.f32.mrf.mxu0
        %v7613 = vpop.f32.mrf.mxu0
        %v7614 = vpop.f32.mrf.mxu0
        %v7615 = vpop.f32.mrf.mxu0
        %7616 = vdwg.mxu0
        %v7617 = vadd.f32 %v7110, %v7513
        %v7618 = vadd.f32 %v7112, %v7515
        %v7619 = vadd.f32 %v7114, %v7517
        %v7620 = vadd.f32 %v7116, %v7519
        %v7621 = vadd.f32 %v7120, %v7523
        %v7622 = vadd.f32 %v7122, %v7525
        %v7623 = vadd.f32 %v7124, %v7527
        %v7624 = vadd.f32 %v7126, %v7529
        %v7625 = vadd.f32 %v7130, %v7533
        %v7626 = vadd.f32 %v7132, %v7535
        %v7627 = vadd.f32 %v7134, %v7537
        %v7628 = vadd.f32 %v7136, %v7539
        %v7629 = vadd.f32 %v7140, %v7543
        %v7630 = vadd.f32 %v7142, %v7545
        %v7631 = vadd.f32 %v7144, %v7547
        %v7632 = vadd.f32 %v7146, %v7549
        %v7633 = vadd.f32 %v7150, %v7553
        %v7634 = vadd.f32 %v7152, %v7555
        %v7635 = vadd.f32 %v7154, %v7557
        %v7636 = vadd.f32 %v7156, %v7559
        %v7637 = vadd.f32 %v7160, %v7563
        %v7638 = vadd.f32 %v7162, %v7565
        %v7639 = vadd.f32 %v7164, %v7567
        %v7640 = vadd.f32 %v7166, %v7569
        %v7641 = vadd.f32 %v7170, %v7573
        %v7642 = vadd.f32 %v7172, %v7575
        %v7643 = vadd.f32 %v7174, %v7577
        %v7644 = vadd.f32 %v7176, %v7579
        %v7645 = vadd.f32 %v7180, %v7583
        %v7646 = vadd.f32 %v7182, %v7585
        %v7647 = vadd.f32 %v7184, %v7587
        %v7648 = vadd.f32 %v7186, %v7589
        %v7649 = vadd.f32 %v7190, %v7593
        %v7650 = vadd.f32 %v7192, %v7595
        %v7651 = vadd.f32 %v7194, %v7597
        %v7652 = vadd.f32 %v7196, %v7599
        %v7653 = vadd.f32 %v7200, %v7603
        %v7654 = vadd.f32 %v7202, %v7605
        %v7655 = vadd.f32 %v7204, %v7607
        %v7656 = vadd.f32 %v7206, %v7609
        %s7657 = scalar_lea.vmem [#allocation2], 48
        %v7658 = vld [vmem:[%s7657] sm:$0xff]
        %v7659 = vld [vmem:[%s7657 + $0x8] sm:$0xff]
        %v7660 = vld [vmem:[%s7657 + $0x10] sm:$0xff]
        %v7661 = vld [vmem:[%s7657 + $0x18] sm:$0xff]
        %v7662 = vld [vmem:[%s7657 + $0x20] sm:$0xff]
        %v7663 = vld [vmem:[%s7657 + $0x28] sm:$0xff]
        %v7664 = vld [vmem:[%s7657 + $0x30] sm:$0xff]
        %v7665 = vld [vmem:[%s7657 + $0x38] sm:$0xff]
        %v7666 = vld [vmem:[%s7657 + $0x40] sm:$0xff]
        %v7667 = vld [vmem:[%s7657 + $0x48] sm:$0xff]
        %v7668 = vld [vmem:[%s7657 + $0x50] sm:$0xff]
        %v7669 = vld [vmem:[%s7657 + $0x58] sm:$0xff]
        %v7670 = vld [vmem:[%s7657 + $0x60] sm:$0xff]
        %v7671 = vld [vmem:[%s7657 + $0x68] sm:$0xff]
        %v7672 = vld [vmem:[%s7657 + $0x70] sm:$0xff]
        %v7673 = vld [vmem:[%s7657 + $0x78] sm:$0xff]
        %v7674 = vld [vmem:[%s7657 + $0x80] sm:$0xff]
        %v7675 = vld [vmem:[%s7657 + $0x88] sm:$0xff]
        %v7676 = vld [vmem:[%s7657 + $0x90] sm:$0xff]
        %v7677 = vld [vmem:[%s7657 + $0x98] sm:$0xff]
        %v7678 = vld [vmem:[%s7657 + $0xa0] sm:$0xff]
        %v7679 = vld [vmem:[%s7657 + $0xa8] sm:$0xff]
        %s7680 = scalar_lea.vmem %s3, 408
        %v7681 = vld [vmem:[%s7680] sm:$0xff]
        %v7682 = vld [vmem:[%s7680 + $0x8] sm:$0xff]
        %v7683 = vld [vmem:[%s7680 + $0x10] sm:$0xff]
        %v7684 = vld [vmem:[%s7680 + $0x18] sm:$0xff]
        %v7685 = vld [vmem:[%s7680 + $0x20] sm:$0xff]
        %v7686 = vld [vmem:[%s7680 + $0x28] sm:$0xff]
        %v7687 = vld [vmem:[%s7680 + $0x30] sm:$0xff]
        %v7688 = vld [vmem:[%s7680 + $0x38] sm:$0xff]
        %v7689 = vld [vmem:[%s7680 + $0x40] sm:$0xff]
        %v7690 = vld [vmem:[%s7680 + $0x48] sm:$0xff]
        %v7691 = vld [vmem:[%s7680 + $0x50] sm:$0xff]
        %v7692 = vld [vmem:[%s7680 + $0x58] sm:$0xff]
        %v7693 = vld [vmem:[%s7680 + $0x60] sm:$0xff]
        %v7694 = vld [vmem:[%s7680 + $0x68] sm:$0xff]
        %v7695 = vld [vmem:[%s7680 + $0x70] sm:$0xff]
        %v7696 = vld [vmem:[%s7680 + $0x78] sm:$0xff]
        %v7697 = vld [vmem:[%s7680 + $0x80] sm:$0x11]
        %v7720 = vunpack.c.l.b16 %v7658
        %v7721 = vunpack.c.h.b16 %v7658
        %v7722 = vunpack.c.l.b16 %v7659
        %v7723 = vunpack.c.h.b16 %v7659
        %v7724 = vunpack.c.l.b16 %v7660
        %v7725 = vunpack.c.h.b16 %v7660
        %v7726 = vunpack.c.l.b16 %v7661
        %v7727 = vunpack.c.h.b16 %v7661
        %v7728 = vunpack.c.l.b16 %v7662
        %v7729 = vunpack.c.h.b16 %v7662
        %v7730 = vunpack.c.l.b16 %v7663
        %v7731 = vunpack.c.h.b16 %v7663
        %v7732 = vunpack.c.l.b16 %v7664
        %v7733 = vunpack.c.h.b16 %v7664
        %v7734 = vunpack.c.l.b16 %v7665
        %v7735 = vunpack.c.h.b16 %v7665
        %v7736 = vunpack.c.l.b16 %v7666
        %v7737 = vunpack.c.h.b16 %v7666
        %v7738 = vunpack.c.l.b16 %v7667
        %v7739 = vunpack.c.h.b16 %v7667
        %v7740 = vunpack.c.l.b16 %v7668
        %v7741 = vunpack.c.h.b16 %v7668
        %v7742 = vunpack.c.l.b16 %v7669
        %v7743 = vunpack.c.h.b16 %v7669
        %v7744 = vunpack.c.l.b16 %v7670
        %v7745 = vunpack.c.h.b16 %v7670
        %v7746 = vunpack.c.l.b16 %v7671
        %v7747 = vunpack.c.h.b16 %v7671
        %v7748 = vunpack.c.l.b16 %v7672
        %v7749 = vunpack.c.h.b16 %v7672
        %v7750 = vunpack.c.l.b16 %v7673
        %v7751 = vunpack.c.h.b16 %v7673
        %v7752 = vunpack.c.l.b16 %v7674
        %v7753 = vunpack.c.h.b16 %v7674
        %v7754 = vunpack.c.l.b16 %v7675
        %v7755 = vunpack.c.h.b16 %v7675
        %v7756 = vunpack.c.l.b16 %v7676
        %v7757 = vunpack.c.h.b16 %v7676
        %v7758 = vunpack.c.l.b16 %v7677
        %v7759 = vunpack.c.h.b16 %v7677
        %v7760 = vunpack.c.l.b16 %v7678
        %v7761 = vunpack.c.h.b16 %v7678
        %v7762 = vunpack.c.l.b16 %v7679
        %v7763 = vunpack.c.h.b16 %v7679
        %v7764 = vpack.c.b16 %v7722, %v7720
        %v7765 = vpack.c.b16 %v7723, %v7721
        %v7766 = vpack.c.b16 %v7726, %v7724
        %v7767 = vpack.c.b16 %v7727, %v7725
        %v7768 = vpack.c.b16 %v7730, %v7728
        %v7769 = vpack.c.b16 %v7731, %v7729
        %v7770 = vpack.c.b16 %v7734, %v7732
        %v7771 = vpack.c.b16 %v7735, %v7733
        %v7772 = vpack.c.b16 %v7738, %v7736
        %v7773 = vpack.c.b16 %v7739, %v7737
        %v7774 = vpack.c.b16 %v7742, %v7740
        %v7775 = vpack.c.b16 %v7743, %v7741
        %v7776 = vpack.c.b16 %v7746, %v7744
        %v7777 = vpack.c.b16 %v7747, %v7745
        %v7778 = vpack.c.b16 %v7750, %v7748
        %v7779 = vpack.c.b16 %v7751, %v7749
        %v7780 = vpack.c.b16 %v7754, %v7752
        %v7781 = vpack.c.b16 %v7755, %v7753
        %v7782 = vpack.c.b16 %v7758, %v7756
        %v7783 = vpack.c.b16 %v7759, %v7757
        %v7784 = vpack.c.b16 %v7762, %v7760
        %v7785 = vpack.c.b16 %v7763, %v7761
        %v7814 = vunpack.c.l.b16 %v7681
        %v7815 = vunpack.c.h.b16 %v7681
        %v7816 = vunpack.c.l.b16 %v7682
        %v7817 = vunpack.c.h.b16 %v7682
        %v7818 = vunpack.c.l.b16 %v7683
        %v7819 = vunpack.c.h.b16 %v7683
        %v7820 = vunpack.c.l.b16 %v7684
        %v7821 = vunpack.c.h.b16 %v7684
        %v7822 = vunpack.c.l.b16 %v7685
        %v7823 = vunpack.c.h.b16 %v7685
        %v7824 = vunpack.c.l.b16 %v7686
        %v7825 = vunpack.c.h.b16 %v7686
        %v7826 = vunpack.c.l.b16 %v7687
        %v7827 = vunpack.c.h.b16 %v7687
        %v7828 = vunpack.c.l.b16 %v7688
        %v7829 = vunpack.c.h.b16 %v7688
        %v7830 = vunpack.c.l.b16 %v7689
        %v7831 = vunpack.c.h.b16 %v7689
        %v7832 = vunpack.c.l.b16 %v7690
        %v7833 = vunpack.c.h.b16 %v7690
        %v7834 = vunpack.c.l.b16 %v7691
        %v7835 = vunpack.c.h.b16 %v7691
        %v7836 = vunpack.c.l.b16 %v7692
        %v7837 = vunpack.c.h.b16 %v7692
        %v7838 = vunpack.c.l.b16 %v7693
        %v7839 = vunpack.c.h.b16 %v7693
        %v7840 = vunpack.c.l.b16 %v7694
        %v7841 = vunpack.c.h.b16 %v7694
        %v7842 = vunpack.c.l.b16 %v7695
        %v7843 = vunpack.c.h.b16 %v7695
        %v7844 = vunpack.c.l.b16 %v7696
        %v7845 = vunpack.c.h.b16 %v7696
        %v7846 = vunpack.c.l.b16 %v7697
        %v7847 = vunpack.c.h.b16 %v7697
        %v7848 = vpack.c.b16 %v7816, %v7814
        %v7849 = vpack.c.b16 %v7817, %v7815
        %v7850 = vpack.c.b16 %v7820, %v7818
        %v7851 = vpack.c.b16 %v7821, %v7819
        %v7852 = vpack.c.b16 %v7824, %v7822
        %v7853 = vpack.c.b16 %v7825, %v7823
        %v7854 = vpack.c.b16 %v7828, %v7826
        %v7855 = vpack.c.b16 %v7829, %v7827
        %v7856 = vpack.c.b16 %v7832, %v7830
        %v7857 = vpack.c.b16 %v7833, %v7831
        %v7858 = vpack.c.b16 %v7836, %v7834
        %v7859 = vpack.c.b16 %v7837, %v7835
        %v7860 = vpack.c.b16 %v7840, %v7838
        %v7861 = vpack.c.b16 %v7841, %v7839
        %v7862 = vpack.c.b16 %v7844, %v7842
        %v7863 = vpack.c.b16 %v7845, %v7843
        %v7864 = vpack.c.b16 %v7846, %v7846
        %v7865 = vpack.c.b16 %v7847, %v7847
        %v7883 = vsel %vm6672, %v7765, 0
        %v7886 = vsel %vm6672, %v7767, 0
        %v7889 = vsel %vm6672, %v7769, 0
        %v7892 = vsel %vm6672, %v7771, 0
        %v7895 = vsel %vm6672, %v7773, 0
        %v7898 = vsel %vm6672, %v7775, 0
        %v7901 = vsel %vm6672, %v7777, 0
        %v7904 = vsel %vm6672, %v7779, 0
        %v7907 = vsel %vm6672, %v7781, 0
        %v7910 = vsel %vm6672, %v7783, 0
        %v7913 = vsel %vm6672, %v7785, 0
        %v7916 = vsel %vm6706, %v7864, 0
        %v7919 = vsel %vm6706, %v7865, 0
        %7921 = vmatprep.subr.bf16.mxu0 %v7863
        %7922 = vmatpush1.bf16.msra.mxu0 %v7862
        %7923 = vmatprep.subr.bf16.mxu0 %v7861
        %7924 = vmatpush1.bf16.msra.mxu0 %v7860
        %7925 = vmatprep.subr.bf16.mxu0 %v7859
        %7926 = vmatpush1.bf16.msra.mxu0 %v7858
        %7927 = vmatprep.subr.bf16.mxu0 %v7857
        %7928 = vmatpush1.bf16.msra.mxu0 %v7856
        %7929 = vmatprep.subr.bf16.mxu0 %v7855
        %7930 = vmatpush1.bf16.msra.mxu0 %v7854
        %7931 = vmatprep.subr.bf16.mxu0 %v7853
        %7932 = vmatpush1.bf16.msra.mxu0 %v7852
        %7933 = vmatprep.subr.bf16.mxu0 %v7851
        %7934 = vmatpush1.bf16.msra.mxu0 %v7850
        %7935 = vmatprep.subr.bf16.mxu0 %v7849
        %7936 = vmatpush1.bf16.msra.mxu0 %v7848
        %7937 = vmatprep.subr.bf16.mxu0 0
        %7938 = vmatpush2.bf16.msra.mxu0 0
        %7939 = vmatprep.subr.bf16.mxu0 0
        %7940 = vmatpush2.bf16.msra.mxu0 0
        %7941 = vmatprep.subr.bf16.mxu0 0
        %7942 = vmatpush2.bf16.msra.mxu0 0
        %7943 = vmatprep.subr.bf16.mxu0 0
        %7944 = vmatpush2.bf16.msra.mxu0 0
        %7945 = vmatprep.subr.bf16.mxu0 0
        %7946 = vmatpush2.bf16.msra.mxu0 0
        %7947 = vmatprep.subr.bf16.mxu0 0
        %7948 = vmatpush2.bf16.msra.mxu0 0
        %7949 = vmatprep.subr.bf16.mxu0 0
        %7950 = vmatpush2.bf16.msra.mxu0 0
        %7951 = vmatprep.subr.bf16.mxu0 %v7919
        %7952 = vmatpush2.bf16.msra.mxu0 %v7916
        %7953 = vmatprep.mubr.bf16.mxu0 %v7883
        %7954 = vmatmul.mubr.bf16.gmra.mxu0 %v7764
        %v7955 = vpop.f32.mrf.mxu0
        %v7956 = vadd.f32 0.0, %v7955
        %v7957 = vpop.f32.mrf.mxu0
        %v7958 = vadd.f32 0.0, %v7957
        %v7959 = vpop.f32.mrf.mxu0
        %v7960 = vadd.f32 0.0, %v7959
        %v7961 = vpop.f32.mrf.mxu0
        %v7962 = vadd.f32 0.0, %v7961
        %7963 = vmatprep.mubr.bf16.mxu0 %v7886
        %7964 = vmatmul.mubr.bf16.gmra.mxu0 %v7766
        %v7965 = vpop.f32.mrf.mxu0
        %v7966 = vadd.f32 0.0, %v7965
        %v7967 = vpop.f32.mrf.mxu0
        %v7968 = vadd.f32 0.0, %v7967
        %v7969 = vpop.f32.mrf.mxu0
        %v7970 = vadd.f32 0.0, %v7969
        %v7971 = vpop.f32.mrf.mxu0
        %v7972 = vadd.f32 0.0, %v7971
        %7973 = vmatprep.mubr.bf16.mxu0 %v7889
        %7974 = vmatmul.mubr.bf16.gmra.mxu0 %v7768
        %v7975 = vpop.f32.mrf.mxu0
        %v7976 = vadd.f32 0.0, %v7975
        %v7977 = vpop.f32.mrf.mxu0
        %v7978 = vadd.f32 0.0, %v7977
        %v7979 = vpop.f32.mrf.mxu0
        %v7980 = vadd.f32 0.0, %v7979
        %v7981 = vpop.f32.mrf.mxu0
        %v7982 = vadd.f32 0.0, %v7981
        %7983 = vmatprep.mubr.bf16.mxu0 %v7892
        %7984 = vmatmul.mubr.bf16.gmra.mxu0 %v7770
        %v7985 = vpop.f32.mrf.mxu0
        %v7986 = vadd.f32 0.0, %v7985
        %v7987 = vpop.f32.mrf.mxu0
        %v7988 = vadd.f32 0.0, %v7987
        %v7989 = vpop.f32.mrf.mxu0
        %v7990 = vadd.f32 0.0, %v7989
        %v7991 = vpop.f32.mrf.mxu0
        %v7992 = vadd.f32 0.0, %v7991
        %7993 = vmatprep.mubr.bf16.mxu0 %v7895
        %7994 = vmatmul.mubr.bf16.gmra.mxu0 %v7772
        %v7995 = vpop.f32.mrf.mxu0
        %v7996 = vadd.f32 0.0, %v7995
        %v7997 = vpop.f32.mrf.mxu0
        %v7998 = vadd.f32 0.0, %v7997
        %v7999 = vpop.f32.mrf.mxu0
        %v8000 = vadd.f32 0.0, %v7999
        %v8001 = vpop.f32.mrf.mxu0
        %v8002 = vadd.f32 0.0, %v8001
        %8003 = vmatprep.mubr.bf16.mxu0 %v7898
        %8004 = vmatmul.mubr.bf16.gmra.mxu0 %v7774
        %v8005 = vpop.f32.mrf.mxu0
        %v8006 = vadd.f32 0.0, %v8005
        %v8007 = vpop.f32.mrf.mxu0
        %v8008 = vadd.f32 0.0, %v8007
        %v8009 = vpop.f32.mrf.mxu0
        %v8010 = vadd.f32 0.0, %v8009
        %v8011 = vpop.f32.mrf.mxu0
        %v8012 = vadd.f32 0.0, %v8011
        %8013 = vmatprep.mubr.bf16.mxu0 %v7901
        %8014 = vmatmul.mubr.bf16.gmra.mxu0 %v7776
        %v8015 = vpop.f32.mrf.mxu0
        %v8016 = vadd.f32 0.0, %v8015
        %v8017 = vpop.f32.mrf.mxu0
        %v8018 = vadd.f32 0.0, %v8017
        %v8019 = vpop.f32.mrf.mxu0
        %v8020 = vadd.f32 0.0, %v8019
        %v8021 = vpop.f32.mrf.mxu0
        %v8022 = vadd.f32 0.0, %v8021
        %8023 = vmatprep.mubr.bf16.mxu0 %v7904
        %8024 = vmatmul.mubr.bf16.gmra.mxu0 %v7778
        %v8025 = vpop.f32.mrf.mxu0
        %v8026 = vadd.f32 0.0, %v8025
        %v8027 = vpop.f32.mrf.mxu0
        %v8028 = vadd.f32 0.0, %v8027
        %v8029 = vpop.f32.mrf.mxu0
        %v8030 = vadd.f32 0.0, %v8029
        %v8031 = vpop.f32.mrf.mxu0
        %v8032 = vadd.f32 0.0, %v8031
        %8033 = vmatprep.mubr.bf16.mxu0 %v7907
        %8034 = vmatmul.mubr.bf16.gmra.mxu0 %v7780
        %v8035 = vpop.f32.mrf.mxu0
        %v8036 = vadd.f32 0.0, %v8035
        %v8037 = vpop.f32.mrf.mxu0
        %v8038 = vadd.f32 0.0, %v8037
        %v8039 = vpop.f32.mrf.mxu0
        %v8040 = vadd.f32 0.0, %v8039
        %v8041 = vpop.f32.mrf.mxu0
        %v8042 = vadd.f32 0.0, %v8041
        %8043 = vmatprep.mubr.bf16.mxu0 %v7910
        %8044 = vmatmul.mubr.bf16.gmra.mxu0 %v7782
        %v8045 = vpop.f32.mrf.mxu0
        %v8046 = vadd.f32 0.0, %v8045
        %v8047 = vpop.f32.mrf.mxu0
        %v8048 = vadd.f32 0.0, %v8047
        %v8049 = vpop.f32.mrf.mxu0
        %v8050 = vadd.f32 0.0, %v8049
        %v8051 = vpop.f32.mrf.mxu0
        %v8052 = vadd.f32 0.0, %v8051
        %8053 = vmatprep.mubr.bf16.mxu0 %v7913
        %8054 = vmatmul.mubr.bf16.gmra.mxu0 %v7784
        %v8055 = vpop.f32.mrf.mxu0
        %v8056 = vpop.f32.mrf.mxu0
        %v8057 = vpop.f32.mrf.mxu0
        %v8058 = vpop.f32.mrf.mxu0
        %8059 = vdwg.mxu0
        %v8060 = vadd.f32 %v7617, %v7956
        %v8061 = vadd.f32 %v7618, %v7958
        %v8062 = vadd.f32 %v7619, %v7960
        %v8063 = vadd.f32 %v7620, %v7962
        %v8064 = vadd.f32 %v7621, %v7966
        %v8065 = vadd.f32 %v7622, %v7968
        %v8066 = vadd.f32 %v7623, %v7970
        %v8067 = vadd.f32 %v7624, %v7972
        %v8068 = vadd.f32 %v7625, %v7976
        %v8069 = vadd.f32 %v7626, %v7978
        %v8070 = vadd.f32 %v7627, %v7980
        %v8071 = vadd.f32 %v7628, %v7982
        %v8072 = vadd.f32 %v7629, %v7986
        %v8073 = vadd.f32 %v7630, %v7988
        %v8074 = vadd.f32 %v7631, %v7990
        %v8075 = vadd.f32 %v7632, %v7992
        %v8076 = vadd.f32 %v7633, %v7996
        %v8077 = vadd.f32 %v7634, %v7998
        %v8078 = vadd.f32 %v7635, %v8000
        %v8079 = vadd.f32 %v7636, %v8002
        %v8080 = vadd.f32 %v7637, %v8006
        %v8081 = vadd.f32 %v7638, %v8008
        %v8082 = vadd.f32 %v7639, %v8010
        %v8083 = vadd.f32 %v7640, %v8012
        %v8084 = vadd.f32 %v7641, %v8016
        %v8085 = vadd.f32 %v7642, %v8018
        %v8086 = vadd.f32 %v7643, %v8020
        %v8087 = vadd.f32 %v7644, %v8022
        %v8088 = vadd.f32 %v7645, %v8026
        %v8089 = vadd.f32 %v7646, %v8028
        %v8090 = vadd.f32 %v7647, %v8030
        %v8091 = vadd.f32 %v7648, %v8032
        %v8092 = vadd.f32 %v7649, %v8036
        %v8093 = vadd.f32 %v7650, %v8038
        %v8094 = vadd.f32 %v7651, %v8040
        %v8095 = vadd.f32 %v7652, %v8042
        %v8096 = vadd.f32 %v7653, %v8046
        %v8097 = vadd.f32 %v7654, %v8048
        %v8098 = vadd.f32 %v7655, %v8050
        %v8099 = vadd.f32 %v7656, %v8052
        %s8100 = scalar_lea.vmem [#allocation2], 64
        %v8101 = vld [vmem:[%s8100] sm:$0xff]
        %v8102 = vld [vmem:[%s8100 + $0x8] sm:$0xff]
        %v8103 = vld [vmem:[%s8100 + $0x10] sm:$0xff]
        %v8104 = vld [vmem:[%s8100 + $0x18] sm:$0xff]
        %v8105 = vld [vmem:[%s8100 + $0x20] sm:$0xff]
        %v8106 = vld [vmem:[%s8100 + $0x28] sm:$0xff]
        %v8107 = vld [vmem:[%s8100 + $0x30] sm:$0xff]
        %v8108 = vld [vmem:[%s8100 + $0x38] sm:$0xff]
        %v8109 = vld [vmem:[%s8100 + $0x40] sm:$0xff]
        %v8110 = vld [vmem:[%s8100 + $0x48] sm:$0xff]
        %v8111 = vld [vmem:[%s8100 + $0x50] sm:$0xff]
        %v8112 = vld [vmem:[%s8100 + $0x58] sm:$0xff]
        %v8113 = vld [vmem:[%s8100 + $0x60] sm:$0xff]
        %v8114 = vld [vmem:[%s8100 + $0x68] sm:$0xff]
        %v8115 = vld [vmem:[%s8100 + $0x70] sm:$0xff]
        %v8116 = vld [vmem:[%s8100 + $0x78] sm:$0xff]
        %v8117 = vld [vmem:[%s8100 + $0x80] sm:$0xff]
        %v8118 = vld [vmem:[%s8100 + $0x88] sm:$0xff]
        %v8119 = vld [vmem:[%s8100 + $0x90] sm:$0xff]
        %v8120 = vld [vmem:[%s8100 + $0x98] sm:$0xff]
        %v8121 = vld [vmem:[%s8100 + $0xa0] sm:$0xff]
        %v8122 = vld [vmem:[%s8100 + $0xa8] sm:$0xff]
        %s8123 = scalar_lea.vmem %s3, 544
        %v8124 = vld [vmem:[%s8123] sm:$0xff]
        %v8125 = vld [vmem:[%s8123 + $0x8] sm:$0xff]
        %v8126 = vld [vmem:[%s8123 + $0x10] sm:$0xff]
        %v8127 = vld [vmem:[%s8123 + $0x18] sm:$0xff]
        %v8128 = vld [vmem:[%s8123 + $0x20] sm:$0xff]
        %v8129 = vld [vmem:[%s8123 + $0x28] sm:$0xff]
        %v8130 = vld [vmem:[%s8123 + $0x30] sm:$0xff]
        %v8131 = vld [vmem:[%s8123 + $0x38] sm:$0xff]
        %v8132 = vld [vmem:[%s8123 + $0x40] sm:$0xff]
        %v8133 = vld [vmem:[%s8123 + $0x48] sm:$0xff]
        %v8134 = vld [vmem:[%s8123 + $0x50] sm:$0xff]
        %v8135 = vld [vmem:[%s8123 + $0x58] sm:$0xff]
        %v8136 = vld [vmem:[%s8123 + $0x60] sm:$0xff]
        %v8137 = vld [vmem:[%s8123 + $0x68] sm:$0xff]
        %v8138 = vld [vmem:[%s8123 + $0x70] sm:$0xff]
        %v8139 = vld [vmem:[%s8123 + $0x78] sm:$0xff]
        %v8140 = vld [vmem:[%s8123 + $0x80] sm:$0x11]
        %v8163 = vunpack.c.l.b16 %v8101
        %v8164 = vunpack.c.h.b16 %v8101
        %v8165 = vunpack.c.l.b16 %v8102
        %v8166 = vunpack.c.h.b16 %v8102
        %v8167 = vunpack.c.l.b16 %v8103
        %v8168 = vunpack.c.h.b16 %v8103
        %v8169 = vunpack.c.l.b16 %v8104
        %v8170 = vunpack.c.h.b16 %v8104
        %v8171 = vunpack.c.l.b16 %v8105
        %v8172 = vunpack.c.h.b16 %v8105
        %v8173 = vunpack.c.l.b16 %v8106
        %v8174 = vunpack.c.h.b16 %v8106
        %v8175 = vunpack.c.l.b16 %v8107
        %v8176 = vunpack.c.h.b16 %v8107
        %v8177 = vunpack.c.l.b16 %v8108
        %v8178 = vunpack.c.h.b16 %v8108
        %v8179 = vunpack.c.l.b16 %v8109
        %v8180 = vunpack.c.h.b16 %v8109
        %v8181 = vunpack.c.l.b16 %v8110
        %v8182 = vunpack.c.h.b16 %v8110
        %v8183 = vunpack.c.l.b16 %v8111
        %v8184 = vunpack.c.h.b16 %v8111
        %v8185 = vunpack.c.l.b16 %v8112
        %v8186 = vunpack.c.h.b16 %v8112
        %v8187 = vunpack.c.l.b16 %v8113
        %v8188 = vunpack.c.h.b16 %v8113
        %v8189 = vunpack.c.l.b16 %v8114
        %v8190 = vunpack.c.h.b16 %v8114
        %v8191 = vunpack.c.l.b16 %v8115
        %v8192 = vunpack.c.h.b16 %v8115
        %v8193 = vunpack.c.l.b16 %v8116
        %v8194 = vunpack.c.h.b16 %v8116
        %v8195 = vunpack.c.l.b16 %v8117
        %v8196 = vunpack.c.h.b16 %v8117
        %v8197 = vunpack.c.l.b16 %v8118
        %v8198 = vunpack.c.h.b16 %v8118
        %v8199 = vunpack.c.l.b16 %v8119
        %v8200 = vunpack.c.h.b16 %v8119
        %v8201 = vunpack.c.l.b16 %v8120
        %v8202 = vunpack.c.h.b16 %v8120
        %v8203 = vunpack.c.l.b16 %v8121
        %v8204 = vunpack.c.h.b16 %v8121
        %v8205 = vunpack.c.l.b16 %v8122
        %v8206 = vunpack.c.h.b16 %v8122
        %v8207 = vpack.c.b16 %v8165, %v8163
        %v8208 = vpack.c.b16 %v8166, %v8164
        %v8209 = vpack.c.b16 %v8169, %v8167
        %v8210 = vpack.c.b16 %v8170, %v8168
        %v8211 = vpack.c.b16 %v8173, %v8171
        %v8212 = vpack.c.b16 %v8174, %v8172
        %v8213 = vpack.c.b16 %v8177, %v8175
        %v8214 = vpack.c.b16 %v8178, %v8176
        %v8215 = vpack.c.b16 %v8181, %v8179
        %v8216 = vpack.c.b16 %v8182, %v8180
        %v8217 = vpack.c.b16 %v8185, %v8183
        %v8218 = vpack.c.b16 %v8186, %v8184
        %v8219 = vpack.c.b16 %v8189, %v8187
        %v8220 = vpack.c.b16 %v8190, %v8188
        %v8221 = vpack.c.b16 %v8193, %v8191
        %v8222 = vpack.c.b16 %v8194, %v8192
        %v8223 = vpack.c.b16 %v8197, %v8195
        %v8224 = vpack.c.b16 %v8198, %v8196
        %v8225 = vpack.c.b16 %v8201, %v8199
        %v8226 = vpack.c.b16 %v8202, %v8200
        %v8227 = vpack.c.b16 %v8205, %v8203
        %v8228 = vpack.c.b16 %v8206, %v8204
        %v8257 = vunpack.c.l.b16 %v8124
        %v8258 = vunpack.c.h.b16 %v8124
        %v8259 = vunpack.c.l.b16 %v8125
        %v8260 = vunpack.c.h.b16 %v8125
        %v8261 = vunpack.c.l.b16 %v8126
        %v8262 = vunpack.c.h.b16 %v8126
        %v8263 = vunpack.c.l.b16 %v8127
        %v8264 = vunpack.c.h.b16 %v8127
        %v8265 = vunpack.c.l.b16 %v8128
        %v8266 = vunpack.c.h.b16 %v8128
        %v8267 = vunpack.c.l.b16 %v8129
        %v8268 = vunpack.c.h.b16 %v8129
        %v8269 = vunpack.c.l.b16 %v8130
        %v8270 = vunpack.c.h.b16 %v8130
        %v8271 = vunpack.c.l.b16 %v8131
        %v8272 = vunpack.c.h.b16 %v8131
        %v8273 = vunpack.c.l.b16 %v8132
        %v8274 = vunpack.c.h.b16 %v8132
        %v8275 = vunpack.c.l.b16 %v8133
        %v8276 = vunpack.c.h.b16 %v8133
        %v8277 = vunpack.c.l.b16 %v8134
        %v8278 = vunpack.c.h.b16 %v8134
        %v8279 = vunpack.c.l.b16 %v8135
        %v8280 = vunpack.c.h.b16 %v8135
        %v8281 = vunpack.c.l.b16 %v8136
        %v8282 = vunpack.c.h.b16 %v8136
        %v8283 = vunpack.c.l.b16 %v8137
        %v8284 = vunpack.c.h.b16 %v8137
        %v8285 = vunpack.c.l.b16 %v8138
        %v8286 = vunpack.c.h.b16 %v8138
        %v8287 = vunpack.c.l.b16 %v8139
        %v8288 = vunpack.c.h.b16 %v8139
        %v8289 = vunpack.c.l.b16 %v8140
        %v8290 = vunpack.c.h.b16 %v8140
        %v8291 = vpack.c.b16 %v8259, %v8257
        %v8292 = vpack.c.b16 %v8260, %v8258
        %v8293 = vpack.c.b16 %v8263, %v8261
        %v8294 = vpack.c.b16 %v8264, %v8262
        %v8295 = vpack.c.b16 %v8267, %v8265
        %v8296 = vpack.c.b16 %v8268, %v8266
        %v8297 = vpack.c.b16 %v8271, %v8269
        %v8298 = vpack.c.b16 %v8272, %v8270
        %v8299 = vpack.c.b16 %v8275, %v8273
        %v8300 = vpack.c.b16 %v8276, %v8274
        %v8301 = vpack.c.b16 %v8279, %v8277
        %v8302 = vpack.c.b16 %v8280, %v8278
        %v8303 = vpack.c.b16 %v8283, %v8281
        %v8304 = vpack.c.b16 %v8284, %v8282
        %v8305 = vpack.c.b16 %v8287, %v8285
        %v8306 = vpack.c.b16 %v8288, %v8286
        %v8307 = vpack.c.b16 %v8289, %v8289
        %v8308 = vpack.c.b16 %v8290, %v8290
        %v8326 = vsel %vm6672, %v8208, 0
        %v8329 = vsel %vm6672, %v8210, 0
        %v8332 = vsel %vm6672, %v8212, 0
        %v8335 = vsel %vm6672, %v8214, 0
        %v8338 = vsel %vm6672, %v8216, 0
        %v8341 = vsel %vm6672, %v8218, 0
        %v8344 = vsel %vm6672, %v8220, 0
        %v8347 = vsel %vm6672, %v8222, 0
        %v8350 = vsel %vm6672, %v8224, 0
        %v8353 = vsel %vm6672, %v8226, 0
        %v8356 = vsel %vm6672, %v8228, 0
        %v8359 = vsel %vm6706, %v8307, 0
        %v8362 = vsel %vm6706, %v8308, 0
        %8364 = vmatprep.subr.bf16.mxu0 %v8306
        %8365 = vmatpush1.bf16.msra.mxu0 %v8305
        %8366 = vmatprep.subr.bf16.mxu0 %v8304
        %8367 = vmatpush1.bf16.msra.mxu0 %v8303
        %8368 = vmatprep.subr.bf16.mxu0 %v8302
        %8369 = vmatpush1.bf16.msra.mxu0 %v8301
        %8370 = vmatprep.subr.bf16.mxu0 %v8300
        %8371 = vmatpush1.bf16.msra.mxu0 %v8299
        %8372 = vmatprep.subr.bf16.mxu0 %v8298
        %8373 = vmatpush1.bf16.msra.mxu0 %v8297
        %8374 = vmatprep.subr.bf16.mxu0 %v8296
        %8375 = vmatpush1.bf16.msra.mxu0 %v8295
        %8376 = vmatprep.subr.bf16.mxu0 %v8294
        %8377 = vmatpush1.bf16.msra.mxu0 %v8293
        %8378 = vmatprep.subr.bf16.mxu0 %v8292
        %8379 = vmatpush1.bf16.msra.mxu0 %v8291
        %8380 = vmatprep.subr.bf16.mxu0 0
        %8381 = vmatpush2.bf16.msra.mxu0 0
        %8382 = vmatprep.subr.bf16.mxu0 0
        %8383 = vmatpush2.bf16.msra.mxu0 0
        %8384 = vmatprep.subr.bf16.mxu0 0
        %8385 = vmatpush2.bf16.msra.mxu0 0
        %8386 = vmatprep.subr.bf16.mxu0 0
        %8387 = vmatpush2.bf16.msra.mxu0 0
        %8388 = vmatprep.subr.bf16.mxu0 0
        %8389 = vmatpush2.bf16.msra.mxu0 0
        %8390 = vmatprep.subr.bf16.mxu0 0
        %8391 = vmatpush2.bf16.msra.mxu0 0
        %8392 = vmatprep.subr.bf16.mxu0 0
        %8393 = vmatpush2.bf16.msra.mxu0 0
        %8394 = vmatprep.subr.bf16.mxu0 %v8362
        %8395 = vmatpush2.bf16.msra.mxu0 %v8359
        %8396 = vmatprep.mubr.bf16.mxu0 %v8326
        %8397 = vmatmul.mubr.bf16.gmra.mxu0 %v8207
        %v8398 = vpop.f32.mrf.mxu0
        %v8399 = vadd.f32 0.0, %v8398
        %v8400 = vpop.f32.mrf.mxu0
        %v8401 = vadd.f32 0.0, %v8400
        %v8402 = vpop.f32.mrf.mxu0
        %v8403 = vadd.f32 0.0, %v8402
        %v8404 = vpop.f32.mrf.mxu0
        %v8405 = vadd.f32 0.0, %v8404
        %8406 = vmatprep.mubr.bf16.mxu0 %v8329
        %8407 = vmatmul.mubr.bf16.gmra.mxu0 %v8209
        %v8408 = vpop.f32.mrf.mxu0
        %v8409 = vadd.f32 0.0, %v8408
        %v8410 = vpop.f32.mrf.mxu0
        %v8411 = vadd.f32 0.0, %v8410
        %v8412 = vpop.f32.mrf.mxu0
        %v8413 = vadd.f32 0.0, %v8412
        %v8414 = vpop.f32.mrf.mxu0
        %v8415 = vadd.f32 0.0, %v8414
        %8416 = vmatprep.mubr.bf16.mxu0 %v8332
        %8417 = vmatmul.mubr.bf16.gmra.mxu0 %v8211
        %v8418 = vpop.f32.mrf.mxu0
        %v8419 = vadd.f32 0.0, %v8418
        %v8420 = vpop.f32.mrf.mxu0
        %v8421 = vadd.f32 0.0, %v8420
        %v8422 = vpop.f32.mrf.mxu0
        %v8423 = vadd.f32 0.0, %v8422
        %v8424 = vpop.f32.mrf.mxu0
        %v8425 = vadd.f32 0.0, %v8424
        %8426 = vmatprep.mubr.bf16.mxu0 %v8335
        %8427 = vmatmul.mubr.bf16.gmra.mxu0 %v8213
        %v8428 = vpop.f32.mrf.mxu0
        %v8429 = vadd.f32 0.0, %v8428
        %v8430 = vpop.f32.mrf.mxu0
        %v8431 = vadd.f32 0.0, %v8430
        %v8432 = vpop.f32.mrf.mxu0
        %v8433 = vadd.f32 0.0, %v8432
        %v8434 = vpop.f32.mrf.mxu0
        %v8435 = vadd.f32 0.0, %v8434
        %8436 = vmatprep.mubr.bf16.mxu0 %v8338
        %8437 = vmatmul.mubr.bf16.gmra.mxu0 %v8215
        %v8438 = vpop.f32.mrf.mxu0
        %v8439 = vadd.f32 0.0, %v8438
        %v8440 = vpop.f32.mrf.mxu0
        %v8441 = vadd.f32 0.0, %v8440
        %v8442 = vpop.f32.mrf.mxu0
        %v8443 = vadd.f32 0.0, %v8442
        %v8444 = vpop.f32.mrf.mxu0
        %v8445 = vadd.f32 0.0, %v8444
        %8446 = vmatprep.mubr.bf16.mxu0 %v8341
        %8447 = vmatmul.mubr.bf16.gmra.mxu0 %v8217
        %v8448 = vpop.f32.mrf.mxu0
        %v8449 = vadd.f32 0.0, %v8448
        %v8450 = vpop.f32.mrf.mxu0
        %v8451 = vadd.f32 0.0, %v8450
        %v8452 = vpop.f32.mrf.mxu0
        %v8453 = vadd.f32 0.0, %v8452
        %v8454 = vpop.f32.mrf.mxu0
        %v8455 = vadd.f32 0.0, %v8454
        %8456 = vmatprep.mubr.bf16.mxu0 %v8344
        %8457 = vmatmul.mubr.bf16.gmra.mxu0 %v8219
        %v8458 = vpop.f32.mrf.mxu0
        %v8459 = vadd.f32 0.0, %v8458
        %v8460 = vpop.f32.mrf.mxu0
        %v8461 = vadd.f32 0.0, %v8460
        %v8462 = vpop.f32.mrf.mxu0
        %v8463 = vadd.f32 0.0, %v8462
        %v8464 = vpop.f32.mrf.mxu0
        %v8465 = vadd.f32 0.0, %v8464
        %8466 = vmatprep.mubr.bf16.mxu0 %v8347
        %8467 = vmatmul.mubr.bf16.gmra.mxu0 %v8221
        %v8468 = vpop.f32.mrf.mxu0
        %v8469 = vadd.f32 0.0, %v8468
        %v8470 = vpop.f32.mrf.mxu0
        %v8471 = vadd.f32 0.0, %v8470
        %v8472 = vpop.f32.mrf.mxu0
        %v8473 = vadd.f32 0.0, %v8472
        %v8474 = vpop.f32.mrf.mxu0
        %v8475 = vadd.f32 0.0, %v8474
        %8476 = vmatprep.mubr.bf16.mxu0 %v8350
        %8477 = vmatmul.mubr.bf16.gmra.mxu0 %v8223
        %v8478 = vpop.f32.mrf.mxu0
        %v8479 = vadd.f32 0.0, %v8478
        %v8480 = vpop.f32.mrf.mxu0
        %v8481 = vadd.f32 0.0, %v8480
        %v8482 = vpop.f32.mrf.mxu0
        %v8483 = vadd.f32 0.0, %v8482
        %v8484 = vpop.f32.mrf.mxu0
        %v8485 = vadd.f32 0.0, %v8484
        %8486 = vmatprep.mubr.bf16.mxu0 %v8353
        %8487 = vmatmul.mubr.bf16.gmra.mxu0 %v8225
        %v8488 = vpop.f32.mrf.mxu0
        %v8489 = vadd.f32 0.0, %v8488
        %v8490 = vpop.f32.mrf.mxu0
        %v8491 = vadd.f32 0.0, %v8490
        %v8492 = vpop.f32.mrf.mxu0
        %v8493 = vadd.f32 0.0, %v8492
        %v8494 = vpop.f32.mrf.mxu0
        %v8495 = vadd.f32 0.0, %v8494
        %8496 = vmatprep.mubr.bf16.mxu0 %v8356
        %8497 = vmatmul.mubr.bf16.gmra.mxu0 %v8227
        %v8498 = vpop.f32.mrf.mxu0
        %v8499 = vpop.f32.mrf.mxu0
        %v8500 = vpop.f32.mrf.mxu0
        %v8501 = vpop.f32.mrf.mxu0
        %8502 = vdwg.mxu0
        %v8503 = vadd.f32 %v8060, %v8399
        %v8504 = vadd.f32 %v8061, %v8401
        %v8505 = vadd.f32 %v8062, %v8403
        %v8506 = vadd.f32 %v8063, %v8405
        %v8507 = vadd.f32 %v8064, %v8409
        %v8508 = vadd.f32 %v8065, %v8411
        %v8509 = vadd.f32 %v8066, %v8413
        %v8510 = vadd.f32 %v8067, %v8415
        %v8511 = vadd.f32 %v8068, %v8419
        %v8512 = vadd.f32 %v8069, %v8421
        %v8513 = vadd.f32 %v8070, %v8423
        %v8514 = vadd.f32 %v8071, %v8425
        %v8515 = vadd.f32 %v8072, %v8429
        %v8516 = vadd.f32 %v8073, %v8431
        %v8517 = vadd.f32 %v8074, %v8433
        %v8518 = vadd.f32 %v8075, %v8435
        %v8519 = vadd.f32 %v8076, %v8439
        %v8520 = vadd.f32 %v8077, %v8441
        %v8521 = vadd.f32 %v8078, %v8443
        %v8522 = vadd.f32 %v8079, %v8445
        %v8523 = vadd.f32 %v8080, %v8449
        %v8524 = vadd.f32 %v8081, %v8451
        %v8525 = vadd.f32 %v8082, %v8453
        %v8526 = vadd.f32 %v8083, %v8455
        %v8527 = vadd.f32 %v8084, %v8459
        %v8528 = vadd.f32 %v8085, %v8461
        %v8529 = vadd.f32 %v8086, %v8463
        %v8530 = vadd.f32 %v8087, %v8465
        %v8531 = vadd.f32 %v8088, %v8469
        %v8532 = vadd.f32 %v8089, %v8471
        %v8533 = vadd.f32 %v8090, %v8473
        %v8534 = vadd.f32 %v8091, %v8475
        %v8535 = vadd.f32 %v8092, %v8479
        %v8536 = vadd.f32 %v8093, %v8481
        %v8537 = vadd.f32 %v8094, %v8483
        %v8538 = vadd.f32 %v8095, %v8485
        %v8539 = vadd.f32 %v8096, %v8489
        %v8540 = vadd.f32 %v8097, %v8491
        %v8541 = vadd.f32 %v8098, %v8493
        %v8542 = vadd.f32 %v8099, %v8495
        %8583 = vrot.lane.b32.xlu0 %v8503, 28
        %v8584 = vpop.permute.xlu0 %8583
        %8585 = vrot.lane.b32.xlu0 %v8504, 28
        %v8586 = vpop.permute.xlu0 %8585
        %8587 = vrot.lane.b32.xlu0 %v8505, 28
        %v8588 = vpop.permute.xlu0 %8587
        %8589 = vrot.lane.b32.xlu0 %v8506, 28
        %v8590 = vpop.permute.xlu0 %8589
        %8591 = vrot.lane.b32.xlu0 %v8507, 28
        %v8592 = vpop.permute.xlu0 %8591
        %8593 = vrot.lane.b32.xlu0 %v8508, 28
        %v8594 = vpop.permute.xlu0 %8593
        %8595 = vrot.lane.b32.xlu0 %v8509, 28
        %v8596 = vpop.permute.xlu0 %8595
        %8597 = vrot.lane.b32.xlu0 %v8510, 28
        %v8598 = vpop.permute.xlu0 %8597
        %8599 = vrot.lane.b32.xlu0 %v8511, 28
        %v8600 = vpop.permute.xlu0 %8599
        %8601 = vrot.lane.b32.xlu0 %v8512, 28
        %v8602 = vpop.permute.xlu0 %8601
        %8603 = vrot.lane.b32.xlu0 %v8513, 28
        %v8604 = vpop.permute.xlu0 %8603
        %8605 = vrot.lane.b32.xlu0 %v8514, 28
        %v8606 = vpop.permute.xlu0 %8605
        %8607 = vrot.lane.b32.xlu0 %v8515, 28
        %v8608 = vpop.permute.xlu0 %8607
        %8609 = vrot.lane.b32.xlu0 %v8516, 28
        %v8610 = vpop.permute.xlu0 %8609
        %8611 = vrot.lane.b32.xlu0 %v8517, 28
        %v8612 = vpop.permute.xlu0 %8611
        %8613 = vrot.lane.b32.xlu0 %v8518, 28
        %v8614 = vpop.permute.xlu0 %8613
        %8615 = vrot.lane.b32.xlu0 %v8519, 28
        %v8616 = vpop.permute.xlu0 %8615
        %8617 = vrot.lane.b32.xlu0 %v8520, 28
        %v8618 = vpop.permute.xlu0 %8617
        %8619 = vrot.lane.b32.xlu0 %v8521, 28
        %v8620 = vpop.permute.xlu0 %8619
        %8621 = vrot.lane.b32.xlu0 %v8522, 28
        %v8622 = vpop.permute.xlu0 %8621
        %8623 = vrot.lane.b32.xlu0 %v8523, 28
        %v8624 = vpop.permute.xlu0 %8623
        %8625 = vrot.lane.b32.xlu0 %v8524, 28
        %v8626 = vpop.permute.xlu0 %8625
        %8627 = vrot.lane.b32.xlu0 %v8525, 28
        %v8628 = vpop.permute.xlu0 %8627
        %8629 = vrot.lane.b32.xlu0 %v8526, 28
        %v8630 = vpop.permute.xlu0 %8629
        %8631 = vrot.lane.b32.xlu0 %v8527, 28
        %v8632 = vpop.permute.xlu0 %8631
        %8633 = vrot.lane.b32.xlu0 %v8528, 28
        %v8634 = vpop.permute.xlu0 %8633
        %8635 = vrot.lane.b32.xlu0 %v8529, 28
        %v8636 = vpop.permute.xlu0 %8635
        %8637 = vrot.lane.b32.xlu0 %v8530, 28
        %v8638 = vpop.permute.xlu0 %8637
        %8639 = vrot.lane.b32.xlu0 %v8531, 28
        %v8640 = vpop.permute.xlu0 %8639
        %8641 = vrot.lane.b32.xlu0 %v8532, 28
        %v8642 = vpop.permute.xlu0 %8641
        %8643 = vrot.lane.b32.xlu0 %v8533, 28
        %v8644 = vpop.permute.xlu0 %8643
        %8645 = vrot.lane.b32.xlu0 %v8534, 28
        %v8646 = vpop.permute.xlu0 %8645
        %8647 = vrot.lane.b32.xlu0 %v8535, 28
        %v8648 = vpop.permute.xlu0 %8647
        %8649 = vrot.lane.b32.xlu0 %v8536, 28
        %v8650 = vpop.permute.xlu0 %8649
        %8651 = vrot.lane.b32.xlu0 %v8537, 28
        %v8652 = vpop.permute.xlu0 %8651
        %8653 = vrot.lane.b32.xlu0 %v8538, 28
        %v8654 = vpop.permute.xlu0 %8653
        %8655 = vrot.lane.b32.xlu0 %v8539, 28
        %v8656 = vpop.permute.xlu0 %8655
        %8657 = vrot.lane.b32.xlu0 %v8540, 28
        %v8658 = vpop.permute.xlu0 %8657
        %8659 = vrot.lane.b32.xlu0 %v8541, 28
        %v8660 = vpop.permute.xlu0 %8659
        %8661 = vrot.lane.b32.xlu0 %v8542, 28
        %v8662 = vpop.permute.xlu0 %8661
        %v8663 = vsel %vm951, %v8584, %v8586
        %v8664 = vsel %vm951, %v8588, %v8590
        %v8665 = vsel %vm951, %v8592, %v8594
        %v8666 = vsel %vm951, %v8596, %v8598
        %v8667 = vsel %vm951, %v8600, %v8602
        %v8668 = vsel %vm951, %v8604, %v8606
        %v8669 = vsel %vm951, %v8608, %v8610
        %v8670 = vsel %vm951, %v8612, %v8614
        %v8671 = vsel %vm951, %v8616, %v8618
        %v8672 = vsel %vm951, %v8620, %v8622
        %v8673 = vsel %vm951, %v8624, %v8626
        %v8674 = vsel %vm951, %v8628, %v8630
        %v8675 = vsel %vm951, %v8632, %v8634
        %v8676 = vsel %vm951, %v8636, %v8638
        %v8677 = vsel %vm951, %v8640, %v8642
        %v8678 = vsel %vm951, %v8644, %v8646
        %v8679 = vsel %vm951, %v8648, %v8650
        %v8680 = vsel %vm951, %v8652, %v8654
        %v8681 = vsel %vm951, %v8656, %v8658
        %v8682 = vsel %vm951, %v8660, %v8662
        %v8703 = vmax.f32 %v8503, %v8663
        %v8704 = vmax.f32 %v8505, %v8664
        %v8705 = vmax.f32 %v8507, %v8665
        %v8706 = vmax.f32 %v8509, %v8666
        %v8707 = vmax.f32 %v8511, %v8667
        %v8708 = vmax.f32 %v8513, %v8668
        %v8709 = vmax.f32 %v8515, %v8669
        %v8710 = vmax.f32 %v8517, %v8670
        %v8711 = vmax.f32 %v8519, %v8671
        %v8712 = vmax.f32 %v8521, %v8672
        %v8713 = vmax.f32 %v8523, %v8673
        %v8714 = vmax.f32 %v8525, %v8674
        %v8715 = vmax.f32 %v8527, %v8675
        %v8716 = vmax.f32 %v8529, %v8676
        %v8717 = vmax.f32 %v8531, %v8677
        %v8718 = vmax.f32 %v8533, %v8678
        %v8719 = vmax.f32 %v8535, %v8679
        %v8720 = vmax.f32 %v8537, %v8680
        %v8721 = vmax.f32 %v8539, %v8681
        %v8722 = vmax.f32 %v8541, %v8682
        %v8723 = vld [vmem:[%s4] sm:$0x1]
        %v8725 = vlaneseq
        %v8726 = vshrl.u32 %v8725, 7
        %v8727 = vsub.s32 0, %v8726
        %v8728 = vrot.slane %v8723, %v8727
        %v8730 = vadd.f32 %v8703, %v8728
        %v8731 = vadd.f32 %v8704, %v8728
        %v8732 = vadd.f32 %v8705, %v8728
        %v8733 = vadd.f32 %v8706, %v8728
        %v8734 = vadd.f32 %v8707, %v8728
        %v8735 = vadd.f32 %v8708, %v8728
        %v8736 = vadd.f32 %v8709, %v8728
        %v8737 = vadd.f32 %v8710, %v8728
        %v8738 = vadd.f32 %v8711, %v8728
        %v8739 = vadd.f32 %v8712, %v8728
        %v8740 = vadd.f32 %v8713, %v8728
        %v8741 = vadd.f32 %v8714, %v8728
        %v8742 = vadd.f32 %v8715, %v8728
        %v8743 = vadd.f32 %v8716, %v8728
        %v8744 = vadd.f32 %v8717, %v8728
        %v8745 = vadd.f32 %v8718, %v8728
        %v8746 = vadd.f32 %v8719, %v8728
        %v8747 = vadd.f32 %v8720, %v8728
        %v8748 = vadd.f32 %v8721, %v8728
        %v8749 = vadd.f32 %v8722, %v8728
        %v8750 = vmax.f32 %v8730, 0.0
        %v8751 = vmax.f32 %v8731, 0.0
        %v8752 = vmax.f32 %v8732, 0.0
        %v8753 = vmax.f32 %v8733, 0.0
        %v8754 = vmax.f32 %v8734, 0.0
        %v8755 = vmax.f32 %v8735, 0.0
        %v8756 = vmax.f32 %v8736, 0.0
        %v8757 = vmax.f32 %v8737, 0.0
        %v8758 = vmax.f32 %v8738, 0.0
        %v8759 = vmax.f32 %v8739, 0.0
        %v8760 = vmax.f32 %v8740, 0.0
        %v8761 = vmax.f32 %v8741, 0.0
        %v8762 = vmax.f32 %v8742, 0.0
        %v8763 = vmax.f32 %v8743, 0.0
        %v8764 = vmax.f32 %v8744, 0.0
        %v8765 = vmax.f32 %v8745, 0.0
        %v8766 = vmax.f32 %v8746, 0.0
        %v8767 = vmax.f32 %v8747, 0.0
        %v8768 = vmax.f32 %v8748, 0.0
        %v8769 = vmax.f32 %v8749, 0.0
        %v8770 = vmax.f32 %v8750, %v8752
        %v8771 = vmax.f32 %v8751, %v8753
        %v8772 = vmax.f32 %v8754, %v8756
        %v8773 = vmax.f32 %v8755, %v8757
        %v8774 = vmax.f32 %v8758, %v8760
        %v8775 = vmax.f32 %v8759, %v8761
        %v8776 = vmax.f32 %v8762, %v8764
        %v8777 = vmax.f32 %v8763, %v8765
        %v8778 = vmax.f32 %v8766, %v8768
        %v8779 = vmax.f32 %v8767, %v8769
        %vm8780 = vcmask 814080
        %8781 = vst.msk [vmem:[#allocation3] sm:$0xf] %vm8780, 0
        %8782 = vst.msk [vmem:[#allocation3 + $0x4] sm:$0xf] %vm8780, 0
        %8783 = vst.msk [vmem:[#allocation3 + $0x8] sm:$0xf] %vm8780, 0
        %8784 = vst.msk [vmem:[#allocation3 + $0xc] sm:$0xf] %vm8780, 0
        %8785 = vst.msk [vmem:[#allocation3 + $0x10] sm:$0xf] %vm8780, 0
        %8786 = vst.msk [vmem:[#allocation3 + $0x14] sm:$0xf] %vm8780, 0
        %8787 = vst.msk [vmem:[#allocation3 + $0x18] sm:$0xf] %vm8780, 0
        %8788 = vst.msk [vmem:[#allocation3 + $0x1c] sm:$0xf] %vm8780, 0
        %8789 = vst.msk [vmem:[#allocation3 + $0x20] sm:$0xf] %vm8780, 0
        %8790 = vst.msk [vmem:[#allocation3 + $0x24] sm:$0xf] %vm8780, 0
        %8791 = vst.msk [vmem:[#allocation3 + $0x28] sm:$0xf] %vm8780, 0
        %8792 = vst.msk [vmem:[#allocation3 + $0x2c] sm:$0xf] %vm8780, 0
        %8793 = vst.msk [vmem:[#allocation3 + $0x30] sm:$0xf] %vm8780, 0
        %8794 = vst.msk [vmem:[#allocation3 + $0x34] sm:$0xf] %vm8780, 0
        %v8795 = vpack.c.bf16 %v8771, %v8770
        %v8796 = vpack.c.bf16 %v8773, %v8772
        %v8797 = vpack.c.bf16 %v8775, %v8774
        %v8798 = vpack.c.bf16 %v8777, %v8776
        %v8799 = vpack.c.bf16 %v8779, %v8778
        %v8805 = vunpack.c.l.b16 %v8795
        %v8806 = vunpack.c.h.b16 %v8795
        %v8807 = vunpack.c.l.b16 %v8796
        %v8808 = vunpack.c.h.b16 %v8796
        %v8809 = vunpack.c.l.b16 %v8797
        %v8810 = vunpack.c.h.b16 %v8797
        %v8811 = vunpack.c.l.b16 %v8798
        %v8812 = vunpack.c.h.b16 %v8798
        %v8813 = vunpack.c.l.b16 %v8799
        %v8814 = vunpack.c.h.b16 %v8799
        %v8815 = vpack.c.b16 %v8805, %v8805
        %v8816 = vpack.c.b16 %v8806, %v8806
        %v8817 = vpack.c.b16 %v8807, %v8807
        %v8818 = vpack.c.b16 %v8808, %v8808
        %v8819 = vpack.c.b16 %v8809, %v8809
        %v8820 = vpack.c.b16 %v8810, %v8810
        %v8821 = vpack.c.b16 %v8811, %v8811
        %v8822 = vpack.c.b16 %v8812, %v8812
        %v8823 = vpack.c.b16 %v8813, %v8813
        %v8824 = vpack.c.b16 %v8814, %v8814
        %s8835 = scalar_lea.vmem [#allocation3], 8
        %8836 = vst.msk [vmem:[%s8835] sm:$0xf] %vm8780, %v8815
        %8837 = vst.msk [vmem:[%s8835 + $0x4] sm:$0xf] %vm8780, %v8816
        %8838 = vst.msk [vmem:[%s8835 + $0x8] sm:$0xf] %vm8780, %v8817
        %8839 = vst.msk [vmem:[%s8835 + $0xc] sm:$0xf] %vm8780, %v8818
        %8840 = vst.msk [vmem:[%s8835 + $0x10] sm:$0xf] %vm8780, %v8819
        %8841 = vst.msk [vmem:[%s8835 + $0x14] sm:$0xf] %vm8780, %v8820
        %8842 = vst.msk [vmem:[%s8835 + $0x18] sm:$0xf] %vm8780, %v8821
        %8843 = vst.msk [vmem:[%s8835 + $0x1c] sm:$0xf] %vm8780, %v8822
        %8844 = vst.msk [vmem:[%s8835 + $0x20] sm:$0xf] %vm8780, %v8823
        %8845 = vst.msk [vmem:[%s8835 + $0x24] sm:$0xf] %vm8780, %v8824
        %v8846 = vld [vmem:[#allocation3] sm:$0xf]
        %v8847 = vld [vmem:[#allocation3 + $0x4] sm:$0xf]
        %v8848 = vld [vmem:[#allocation3 + $0x8] sm:$0xf]
        %v8849 = vld [vmem:[#allocation3 + $0xc] sm:$0xf]
        %v8850 = vld [vmem:[#allocation3 + $0x10] sm:$0xf]
        %v8851 = vld [vmem:[#allocation3 + $0x14] sm:$0xf]
        %v8852 = vld [vmem:[%s5] sm:$0xf]
        %v8853 = vld [vmem:[%s5 + $0x4] sm:$0xf]
        %v8854 = vld [vmem:[%s5 + $0x8] sm:$0xf]
        %v8855 = vld [vmem:[%s5 + $0xc] sm:$0xf]
        %v8856 = vld [vmem:[%s5 + $0x10] sm:$0xf]
        %v8857 = vld [vmem:[%s5 + $0x14] sm:$0xf]
        %v8858 = vld [vmem:[%s5 + $0x18] sm:$0xf]
        %v8859 = vld [vmem:[%s5 + $0x1c] sm:$0xf]
        %v8860 = vld [vmem:[%s5 + $0x20] sm:$0xf]
        %v8861 = vld [vmem:[%s5 + $0x24] sm:$0xf]
        %v8862 = vld [vmem:[%s5 + $0x28] sm:$0xf]
        %v8863 = vld [vmem:[%s5 + $0x2c] sm:$0xf]
        %v8864 = vld [vmem:[%s5 + $0x30] sm:$0x3]
        %v8865 = vld [vmem:[%s8835] sm:$0xf]
        %v8866 = vld [vmem:[%s8835 + $0x4] sm:$0xf]
        %v8867 = vld [vmem:[%s8835 + $0x8] sm:$0xf]
        %v8868 = vld [vmem:[%s8835 + $0xc] sm:$0xf]
        %v8869 = vld [vmem:[%s8835 + $0x10] sm:$0xf]
        %v8870 = vld [vmem:[%s8835 + $0x14] sm:$0xf]
        %s8871 = scalar_lea.vmem %s5, 52
        %v8872 = vld [vmem:[%s8871] sm:$0xf]
        %v8873 = vld [vmem:[%s8871 + $0x4] sm:$0xf]
        %v8874 = vld [vmem:[%s8871 + $0x8] sm:$0xf]
        %v8875 = vld [vmem:[%s8871 + $0xc] sm:$0xf]
        %v8876 = vld [vmem:[%s8871 + $0x10] sm:$0xf]
        %v8877 = vld [vmem:[%s8871 + $0x14] sm:$0xf]
        %v8878 = vld [vmem:[%s8871 + $0x18] sm:$0xf]
        %v8879 = vld [vmem:[%s8871 + $0x1c] sm:$0xf]
        %v8880 = vld [vmem:[%s8871 + $0x20] sm:$0xf]
        %v8881 = vld [vmem:[%s8871 + $0x24] sm:$0xf]
        %v8882 = vld [vmem:[%s8871 + $0x28] sm:$0xf]
        %v8883 = vld [vmem:[%s8871 + $0x2c] sm:$0xf]
        %v8884 = vld [vmem:[%s8871 + $0x30] sm:$0x3]
        %v8891 = vunpack.c.l.b16 %v8865
        %v8892 = vunpack.c.l.b16 %v8866
        %v8893 = vunpack.c.l.b16 %v8867
        %v8894 = vunpack.c.l.b16 %v8868
        %v8895 = vunpack.c.l.b16 %v8869
        %v8896 = vunpack.c.l.b16 %v8870
        %v8897 = vpack.c.b16 %v8892, %v8891
        %v8898 = vpack.c.b16 %v8894, %v8893
        %v8899 = vpack.c.b16 %v8896, %v8895
        %v8913 = vunpack.c.l.b16 %v8872
        %v8914 = vunpack.c.l.b16 %v8873
        %v8915 = vunpack.c.l.b16 %v8874
        %v8916 = vunpack.c.l.b16 %v8875
        %v8917 = vunpack.c.l.b16 %v8876
        %v8918 = vunpack.c.l.b16 %v8877
        %v8919 = vunpack.c.l.b16 %v8878
        %v8920 = vunpack.c.l.b16 %v8879
        %v8921 = vunpack.c.l.b16 %v8880
        %v8922 = vunpack.c.l.b16 %v8881
        %v8923 = vunpack.c.l.b16 %v8882
        %v8924 = vunpack.c.l.b16 %v8883
        %v8925 = vunpack.c.l.b16 %v8884
        %v8926 = vpack.c.b16 %v8914, %v8913
        %v8927 = vpack.c.b16 %v8916, %v8915
        %v8928 = vpack.c.b16 %v8918, %v8917
        %v8929 = vpack.c.b16 %v8920, %v8919
        %v8930 = vpack.c.b16 %v8922, %v8921
        %v8931 = vpack.c.b16 %v8924, %v8923
        %v8932 = vpack.c.b16 %v8925, %v8925
        %vm8939 = vcmask 818176
        %v8941 = vsel %vm8939, %v8897, 0
        %v8944 = vsel %vm8939, %v8898, 0
        %v8947 = vsel %vm8939, %v8899, 0
        %vm8949 = vcmask 1041408
        %v8951 = vsel %vm8949, %v8932, 0
        %8953 = vmatprep.subr.bf16.mxu0 0
        %8954 = vmatpush1.bf16.msra.mxu0 0
        %8955 = vmatprep.subr.bf16.mxu0 0
        %8956 = vmatpush1.bf16.msra.mxu0 %v8951
        %8957 = vmatprep.subr.bf16.mxu0 0
        %8958 = vmatpush1.bf16.msra.mxu0 %v8931
        %8959 = vmatprep.subr.bf16.mxu0 0
        %8960 = vmatpush1.bf16.msra.mxu0 %v8930
        %8961 = vmatprep.subr.bf16.mxu0 0
        %8962 = vmatpush1.bf16.msra.mxu0 %v8929
        %8963 = vmatprep.subr.bf16.mxu0 0
        %8964 = vmatpush1.bf16.msra.mxu0 %v8928
        %8965 = vmatprep.subr.bf16.mxu0 0
        %8966 = vmatpush1.bf16.msra.mxu0 %v8927
        %8967 = vmatprep.subr.bf16.mxu0 0
        %8968 = vmatpush1.bf16.msra.mxu0 %v8926
        %8969 = vmatprep.subr.bf16.mxu0 0
        %8970 = vmatpush2.bf16.msra.mxu0 0
        %8971 = vmatprep.subr.bf16.mxu0 0
        %8972 = vmatpush2.bf16.msra.mxu0 0
        %8973 = vmatprep.subr.bf16.mxu0 0
        %8974 = vmatpush2.bf16.msra.mxu0 0
        %8975 = vmatprep.subr.bf16.mxu0 0
        %8976 = vmatpush2.bf16.msra.mxu0 0
        %8977 = vmatprep.subr.bf16.mxu0 0
        %8978 = vmatpush2.bf16.msra.mxu0 0
        %8979 = vmatprep.subr.bf16.mxu0 0
        %8980 = vmatpush2.bf16.msra.mxu0 0
        %8981 = vmatprep.subr.bf16.mxu0 0
        %8982 = vmatpush2.bf16.msra.mxu0 0
        %8983 = vmatprep.subr.bf16.mxu0 0
        %8984 = vmatpush2.bf16.msra.mxu0 0
        %8985 = vmatprep.mubr.bf16.mxu0 0
        %8986 = vmatmul.mubr.bf16.gmra.mxu0 %v8941
        %v8987 = vpop.f32.mrf.mxu0
        %v8988 = vadd.f32 0.0, %v8987
        %v8989 = vpop.f32.mrf.mxu0
        %v8990 = vpop.f32.mrf.mxu0
        %v8991 = vadd.f32 0.0, %v8990
        %v8992 = vpop.f32.mrf.mxu0
        %8993 = vmatprep.mubr.bf16.mxu0 0
        %8994 = vmatmul.mubr.bf16.gmra.mxu0 %v8944
        %v8995 = vpop.f32.mrf.mxu0
        %v8996 = vadd.f32 0.0, %v8995
        %v8997 = vpop.f32.mrf.mxu0
        %v8998 = vpop.f32.mrf.mxu0
        %v8999 = vadd.f32 0.0, %v8998
        %v9000 = vpop.f32.mrf.mxu0
        %9001 = vmatprep.mubr.bf16.mxu0 0
        %9002 = vmatmul.mubr.bf16.gmra.mxu0 %v8947
        %v9003 = vpop.f32.mrf.mxu0
        %v9004 = vpop.f32.mrf.mxu0
        %v9005 = vpop.f32.mrf.mxu0
        %v9006 = vpop.f32.mrf.mxu0
        %9007 = vdwg.mxu0
        %v9014 = vunpack.c.l.b16 %v8846
        %v9015 = vunpack.c.l.b16 %v8847
        %v9016 = vunpack.c.l.b16 %v8848
        %v9017 = vunpack.c.l.b16 %v8849
        %v9018 = vunpack.c.l.b16 %v8850
        %v9019 = vunpack.c.l.b16 %v8851
        %v9020 = vpack.c.b16 %v9015, %v9014
        %v9021 = vpack.c.b16 %v9017, %v9016
        %v9022 = vpack.c.b16 %v9019, %v9018
        %v9036 = vunpack.c.l.b16 %v8852
        %v9037 = vunpack.c.l.b16 %v8853
        %v9038 = vunpack.c.l.b16 %v8854
        %v9039 = vunpack.c.l.b16 %v8855
        %v9040 = vunpack.c.l.b16 %v8856
        %v9041 = vunpack.c.l.b16 %v8857
        %v9042 = vunpack.c.l.b16 %v8858
        %v9043 = vunpack.c.l.b16 %v8859
        %v9044 = vunpack.c.l.b16 %v8860
        %v9045 = vunpack.c.l.b16 %v8861
        %v9046 = vunpack.c.l.b16 %v8862
        %v9047 = vunpack.c.l.b16 %v8863
        %v9048 = vunpack.c.l.b16 %v8864
        %v9049 = vpack.c.b16 %v9037, %v9036
        %v9050 = vpack.c.b16 %v9039, %v9038
        %v9051 = vpack.c.b16 %v9041, %v9040
        %v9052 = vpack.c.b16 %v9043, %v9042
        %v9053 = vpack.c.b16 %v9045, %v9044
        %v9054 = vpack.c.b16 %v9047, %v9046
        %v9055 = vpack.c.b16 %v9048, %v9048
        %v9063 = vsel %vm8939, %v9020, 0
        %v9066 = vsel %vm8939, %v9021, 0
        %v9069 = vsel %vm8939, %v9022, 0
        %v9072 = vsel %vm8949, %v9055, 0
        %9074 = vmatprep.subr.bf16.mxu0 0
        %9075 = vmatpush1.bf16.msra.mxu0 0
        %9076 = vmatprep.subr.bf16.mxu0 0
        %9077 = vmatpush1.bf16.msra.mxu0 %v9072
        %9078 = vmatprep.subr.bf16.mxu0 0
        %9079 = vmatpush1.bf16.msra.mxu0 %v9054
        %9080 = vmatprep.subr.bf16.mxu0 0
        %9081 = vmatpush1.bf16.msra.mxu0 %v9053
        %9082 = vmatprep.subr.bf16.mxu0 0
        %9083 = vmatpush1.bf16.msra.mxu0 %v9052
        %9084 = vmatprep.subr.bf16.mxu0 0
        %9085 = vmatpush1.bf16.msra.mxu0 %v9051
        %9086 = vmatprep.subr.bf16.mxu0 0
        %9087 = vmatpush1.bf16.msra.mxu0 %v9050
        %9088 = vmatprep.subr.bf16.mxu0 0
        %9089 = vmatpush1.bf16.msra.mxu0 %v9049
        %9090 = vmatprep.subr.bf16.mxu0 0
        %9091 = vmatpush2.bf16.msra.mxu0 0
        %9092 = vmatprep.subr.bf16.mxu0 0
        %9093 = vmatpush2.bf16.msra.mxu0 0
        %9094 = vmatprep.subr.bf16.mxu0 0
        %9095 = vmatpush2.bf16.msra.mxu0 0
        %9096 = vmatprep.subr.bf16.mxu0 0
        %9097 = vmatpush2.bf16.msra.mxu0 0
        %9098 = vmatprep.subr.bf16.mxu0 0
        %9099 = vmatpush2.bf16.msra.mxu0 0
        %9100 = vmatprep.subr.bf16.mxu0 0
        %9101 = vmatpush2.bf16.msra.mxu0 0
        %9102 = vmatprep.subr.bf16.mxu0 0
        %9103 = vmatpush2.bf16.msra.mxu0 0
        %9104 = vmatprep.subr.bf16.mxu0 0
        %9105 = vmatpush2.bf16.msra.mxu0 0
        %9106 = vmatprep.mubr.bf16.mxu0 0
        %9107 = vmatmul.mubr.bf16.gmra.mxu0 %v9063
        %v9108 = vpop.f32.mrf.mxu0
        %v9109 = vadd.f32 %v8988, %v9108
        %v9110 = vpop.f32.mrf.mxu0
        %v9111 = vpop.f32.mrf.mxu0
        %v9112 = vadd.f32 %v8991, %v9111
        %v9113 = vpop.f32.mrf.mxu0
        %9114 = vmatprep.mubr.bf16.mxu0 0
        %9115 = vmatmul.mubr.bf16.gmra.mxu0 %v9066
        %v9116 = vpop.f32.mrf.mxu0
        %v9117 = vadd.f32 %v8996, %v9116
        %v9118 = vpop.f32.mrf.mxu0
        %v9119 = vpop.f32.mrf.mxu0
        %v9120 = vadd.f32 %v8999, %v9119
        %v9121 = vpop.f32.mrf.mxu0
        %9122 = vmatprep.mubr.bf16.mxu0 0
        %9123 = vmatmul.mubr.bf16.gmra.mxu0 %v9069
        %v9124 = vpop.f32.mrf.mxu0
        %v9125 = vpop.f32.mrf.mxu0
        %v9126 = vpop.f32.mrf.mxu0
        %v9127 = vpop.f32.mrf.mxu0
        %9128 = vdwg.mxu0
        %s9129 = scalar_lea.vmem [#allocation3], 16
        %v9130 = vld [vmem:[%s9129] sm:$0xf]
        %v9131 = vld [vmem:[%s9129 + $0x4] sm:$0xf]
        %v9132 = vld [vmem:[%s9129 + $0x8] sm:$0xf]
        %v9133 = vld [vmem:[%s9129 + $0xc] sm:$0xf]
        %v9134 = vld [vmem:[%s9129 + $0x10] sm:$0xf]
        %v9135 = vld [vmem:[%s9129 + $0x14] sm:$0xf]
        %s9136 = scalar_lea.vmem %s5, 104
        %v9137 = vld [vmem:[%s9136] sm:$0xf]
        %v9138 = vld [vmem:[%s9136 + $0x4] sm:$0xf]
        %v9139 = vld [vmem:[%s9136 + $0x8] sm:$0xf]
        %v9140 = vld [vmem:[%s9136 + $0xc] sm:$0xf]
        %v9141 = vld [vmem:[%s9136 + $0x10] sm:$0xf]
        %v9142 = vld [vmem:[%s9136 + $0x14] sm:$0xf]
        %v9143 = vld [vmem:[%s9136 + $0x18] sm:$0xf]
        %v9144 = vld [vmem:[%s9136 + $0x1c] sm:$0xf]
        %v9145 = vld [vmem:[%s9136 + $0x20] sm:$0xf]
        %v9146 = vld [vmem:[%s9136 + $0x24] sm:$0xf]
        %v9147 = vld [vmem:[%s9136 + $0x28] sm:$0xf]
        %v9148 = vld [vmem:[%s9136 + $0x2c] sm:$0xf]
        %v9149 = vld [vmem:[%s9136 + $0x30] sm:$0x3]
        %v9156 = vunpack.c.l.b16 %v9130
        %v9157 = vunpack.c.l.b16 %v9131
        %v9158 = vunpack.c.l.b16 %v9132
        %v9159 = vunpack.c.l.b16 %v9133
        %v9160 = vunpack.c.l.b16 %v9134
        %v9161 = vunpack.c.l.b16 %v9135
        %v9162 = vpack.c.b16 %v9157, %v9156
        %v9163 = vpack.c.b16 %v9159, %v9158
        %v9164 = vpack.c.b16 %v9161, %v9160
        %v9178 = vunpack.c.l.b16 %v9137
        %v9179 = vunpack.c.l.b16 %v9138
        %v9180 = vunpack.c.l.b16 %v9139
        %v9181 = vunpack.c.l.b16 %v9140
        %v9182 = vunpack.c.l.b16 %v9141
        %v9183 = vunpack.c.l.b16 %v9142
        %v9184 = vunpack.c.l.b16 %v9143
        %v9185 = vunpack.c.l.b16 %v9144
        %v9186 = vunpack.c.l.b16 %v9145
        %v9187 = vunpack.c.l.b16 %v9146
        %v9188 = vunpack.c.l.b16 %v9147
        %v9189 = vunpack.c.l.b16 %v9148
        %v9190 = vunpack.c.l.b16 %v9149
        %v9191 = vpack.c.b16 %v9179, %v9178
        %v9192 = vpack.c.b16 %v9181, %v9180
        %v9193 = vpack.c.b16 %v9183, %v9182
        %v9194 = vpack.c.b16 %v9185, %v9184
        %v9195 = vpack.c.b16 %v9187, %v9186
        %v9196 = vpack.c.b16 %v9189, %v9188
        %v9197 = vpack.c.b16 %v9190, %v9190
        %v9205 = vsel %vm8939, %v9162, 0
        %v9208 = vsel %vm8939, %v9163, 0
        %v9211 = vsel %vm8939, %v9164, 0
        %v9214 = vsel %vm8949, %v9197, 0
        %9216 = vmatprep.subr.bf16.mxu0 0
        %9217 = vmatpush1.bf16.msra.mxu0 0
        %9218 = vmatprep.subr.bf16.mxu0 0
        %9219 = vmatpush1.bf16.msra.mxu0 %v9214
        %9220 = vmatprep.subr.bf16.mxu0 0
        %9221 = vmatpush1.bf16.msra.mxu0 %v9196
        %9222 = vmatprep.subr.bf16.mxu0 0
        %9223 = vmatpush1.bf16.msra.mxu0 %v9195
        %9224 = vmatprep.subr.bf16.mxu0 0
        %9225 = vmatpush1.bf16.msra.mxu0 %v9194
        %9226 = vmatprep.subr.bf16.mxu0 0
        %9227 = vmatpush1.bf16.msra.mxu0 %v9193
        %9228 = vmatprep.subr.bf16.mxu0 0
        %9229 = vmatpush1.bf16.msra.mxu0 %v9192
        %9230 = vmatprep.subr.bf16.mxu0 0
        %9231 = vmatpush1.bf16.msra.mxu0 %v9191
        %9232 = vmatprep.subr.bf16.mxu0 0
        %9233 = vmatpush2.bf16.msra.mxu0 0
        %9234 = vmatprep.subr.bf16.mxu0 0
        %9235 = vmatpush2.bf16.msra.mxu0 0
        %9236 = vmatprep.subr.bf16.mxu0 0
        %9237 = vmatpush2.bf16.msra.mxu0 0
        %9238 = vmatprep.subr.bf16.mxu0 0
        %9239 = vmatpush2.bf16.msra.mxu0 0
        %9240 = vmatprep.subr.bf16.mxu0 0
        %9241 = vmatpush2.bf16.msra.mxu0 0
        %9242 = vmatprep.subr.bf16.mxu0 0
        %9243 = vmatpush2.bf16.msra.mxu0 0
        %9244 = vmatprep.subr.bf16.mxu0 0
        %9245 = vmatpush2.bf16.msra.mxu0 0
        %9246 = vmatprep.subr.bf16.mxu0 0
        %9247 = vmatpush2.bf16.msra.mxu0 0
        %9248 = vmatprep.mubr.bf16.mxu0 0
        %9249 = vmatmul.mubr.bf16.gmra.mxu0 %v9205
        %v9250 = vpop.f32.mrf.mxu0
        %v9251 = vadd.f32 0.0, %v9250
        %v9252 = vpop.f32.mrf.mxu0
        %v9253 = vpop.f32.mrf.mxu0
        %v9254 = vadd.f32 0.0, %v9253
        %v9255 = vpop.f32.mrf.mxu0
        %9256 = vmatprep.mubr.bf16.mxu0 0
        %9257 = vmatmul.mubr.bf16.gmra.mxu0 %v9208
        %v9258 = vpop.f32.mrf.mxu0
        %v9259 = vadd.f32 0.0, %v9258
        %v9260 = vpop.f32.mrf.mxu0
        %v9261 = vpop.f32.mrf.mxu0
        %v9262 = vadd.f32 0.0, %v9261
        %v9263 = vpop.f32.mrf.mxu0
        %9264 = vmatprep.mubr.bf16.mxu0 0
        %9265 = vmatmul.mubr.bf16.gmra.mxu0 %v9211
        %v9266 = vpop.f32.mrf.mxu0
        %v9267 = vpop.f32.mrf.mxu0
        %v9268 = vpop.f32.mrf.mxu0
        %v9269 = vpop.f32.mrf.mxu0
        %9270 = vdwg.mxu0
        %v9271 = vadd.f32 %v9109, %v9251
        %v9272 = vadd.f32 %v9112, %v9254
        %v9273 = vadd.f32 %v9117, %v9259
        %v9274 = vadd.f32 %v9120, %v9262
        %s9275 = scalar_lea.vmem [#allocation3], 24
        %v9276 = vld [vmem:[%s9275] sm:$0xf]
        %v9277 = vld [vmem:[%s9275 + $0x4] sm:$0xf]
        %v9278 = vld [vmem:[%s9275 + $0x8] sm:$0xf]
        %v9279 = vld [vmem:[%s9275 + $0xc] sm:$0xf]
        %v9280 = vld [vmem:[%s9275 + $0x10] sm:$0xf]
        %v9281 = vld [vmem:[%s9275 + $0x14] sm:$0xf]
        %s9282 = scalar_lea.vmem %s5, 156
        %v9283 = vld [vmem:[%s9282] sm:$0xf]
        %v9284 = vld [vmem:[%s9282 + $0x4] sm:$0xf]
        %v9285 = vld [vmem:[%s9282 + $0x8] sm:$0xf]
        %v9286 = vld [vmem:[%s9282 + $0xc] sm:$0xf]
        %v9287 = vld [vmem:[%s9282 + $0x10] sm:$0xf]
        %v9288 = vld [vmem:[%s9282 + $0x14] sm:$0xf]
        %v9289 = vld [vmem:[%s9282 + $0x18] sm:$0xf]
        %v9290 = vld [vmem:[%s9282 + $0x1c] sm:$0xf]
        %v9291 = vld [vmem:[%s9282 + $0x20] sm:$0xf]
        %v9292 = vld [vmem:[%s9282 + $0x24] sm:$0xf]
        %v9293 = vld [vmem:[%s9282 + $0x28] sm:$0xf]
        %v9294 = vld [vmem:[%s9282 + $0x2c] sm:$0xf]
        %v9295 = vld [vmem:[%s9282 + $0x30] sm:$0x3]
        %v9302 = vunpack.c.l.b16 %v9276
        %v9303 = vunpack.c.l.b16 %v9277
        %v9304 = vunpack.c.l.b16 %v9278
        %v9305 = vunpack.c.l.b16 %v9279
        %v9306 = vunpack.c.l.b16 %v9280
        %v9307 = vunpack.c.l.b16 %v9281
        %v9308 = vpack.c.b16 %v9303, %v9302
        %v9309 = vpack.c.b16 %v9305, %v9304
        %v9310 = vpack.c.b16 %v9307, %v9306
        %v9324 = vunpack.c.l.b16 %v9283
        %v9325 = vunpack.c.l.b16 %v9284
        %v9326 = vunpack.c.l.b16 %v9285
        %v9327 = vunpack.c.l.b16 %v9286
        %v9328 = vunpack.c.l.b16 %v9287
        %v9329 = vunpack.c.l.b16 %v9288
        %v9330 = vunpack.c.l.b16 %v9289
        %v9331 = vunpack.c.l.b16 %v9290
        %v9332 = vunpack.c.l.b16 %v9291
        %v9333 = vunpack.c.l.b16 %v9292
        %v9334 = vunpack.c.l.b16 %v9293
        %v9335 = vunpack.c.l.b16 %v9294
        %v9336 = vunpack.c.l.b16 %v9295
        %v9337 = vpack.c.b16 %v9325, %v9324
        %v9338 = vpack.c.b16 %v9327, %v9326
        %v9339 = vpack.c.b16 %v9329, %v9328
        %v9340 = vpack.c.b16 %v9331, %v9330
        %v9341 = vpack.c.b16 %v9333, %v9332
        %v9342 = vpack.c.b16 %v9335, %v9334
        %v9343 = vpack.c.b16 %v9336, %v9336
        %v9351 = vsel %vm8939, %v9308, 0
        %v9354 = vsel %vm8939, %v9309, 0
        %v9357 = vsel %vm8939, %v9310, 0
        %v9360 = vsel %vm8949, %v9343, 0
        %9362 = vmatprep.subr.bf16.mxu0 0
        %9363 = vmatpush1.bf16.msra.mxu0 0
        %9364 = vmatprep.subr.bf16.mxu0 0
        %9365 = vmatpush1.bf16.msra.mxu0 %v9360
        %9366 = vmatprep.subr.bf16.mxu0 0
        %9367 = vmatpush1.bf16.msra.mxu0 %v9342
        %9368 = vmatprep.subr.bf16.mxu0 0
        %9369 = vmatpush1.bf16.msra.mxu0 %v9341
        %9370 = vmatprep.subr.bf16.mxu0 0
        %9371 = vmatpush1.bf16.msra.mxu0 %v9340
        %9372 = vmatprep.subr.bf16.mxu0 0
        %9373 = vmatpush1.bf16.msra.mxu0 %v9339
        %9374 = vmatprep.subr.bf16.mxu0 0
        %9375 = vmatpush1.bf16.msra.mxu0 %v9338
        %9376 = vmatprep.subr.bf16.mxu0 0
        %9377 = vmatpush1.bf16.msra.mxu0 %v9337
        %9378 = vmatprep.subr.bf16.mxu0 0
        %9379 = vmatpush2.bf16.msra.mxu0 0
        %9380 = vmatprep.subr.bf16.mxu0 0
        %9381 = vmatpush2.bf16.msra.mxu0 0
        %9382 = vmatprep.subr.bf16.mxu0 0
        %9383 = vmatpush2.bf16.msra.mxu0 0
        %9384 = vmatprep.subr.bf16.mxu0 0
        %9385 = vmatpush2.bf16.msra.mxu0 0
        %9386 = vmatprep.subr.bf16.mxu0 0
        %9387 = vmatpush2.bf16.msra.mxu0 0
        %9388 = vmatprep.subr.bf16.mxu0 0
        %9389 = vmatpush2.bf16.msra.mxu0 0
        %9390 = vmatprep.subr.bf16.mxu0 0
        %9391 = vmatpush2.bf16.msra.mxu0 0
        %9392 = vmatprep.subr.bf16.mxu0 0
        %9393 = vmatpush2.bf16.msra.mxu0 0
        %9394 = vmatprep.mubr.bf16.mxu0 0
        %9395 = vmatmul.mubr.bf16.gmra.mxu0 %v9351
        %v9396 = vpop.f32.mrf.mxu0
        %v9397 = vadd.f32 0.0, %v9396
        %v9398 = vpop.f32.mrf.mxu0
        %v9399 = vpop.f32.mrf.mxu0
        %v9400 = vadd.f32 0.0, %v9399
        %v9401 = vpop.f32.mrf.mxu0
        %9402 = vmatprep.mubr.bf16.mxu0 0
        %9403 = vmatmul.mubr.bf16.gmra.mxu0 %v9354
        %v9404 = vpop.f32.mrf.mxu0
        %v9405 = vadd.f32 0.0, %v9404
        %v9406 = vpop.f32.mrf.mxu0
        %v9407 = vpop.f32.mrf.mxu0
        %v9408 = vadd.f32 0.0, %v9407
        %v9409 = vpop.f32.mrf.mxu0
        %9410 = vmatprep.mubr.bf16.mxu0 0
        %9411 = vmatmul.mubr.bf16.gmra.mxu0 %v9357
        %v9412 = vpop.f32.mrf.mxu0
        %v9413 = vpop.f32.mrf.mxu0
        %v9414 = vpop.f32.mrf.mxu0
        %v9415 = vpop.f32.mrf.mxu0
        %9416 = vdwg.mxu0
        %v9417 = vadd.f32 %v9271, %v9397
        %v9418 = vadd.f32 %v9272, %v9400
        %v9419 = vadd.f32 %v9273, %v9405
        %v9420 = vadd.f32 %v9274, %v9408
        %s9421 = scalar_lea.vmem [#allocation3], 32
        %v9422 = vld [vmem:[%s9421] sm:$0xf]
        %v9423 = vld [vmem:[%s9421 + $0x4] sm:$0xf]
        %v9424 = vld [vmem:[%s9421 + $0x8] sm:$0xf]
        %v9425 = vld [vmem:[%s9421 + $0xc] sm:$0xf]
        %v9426 = vld [vmem:[%s9421 + $0x10] sm:$0xf]
        %v9427 = vld [vmem:[%s9421 + $0x14] sm:$0xf]
        %s9428 = scalar_lea.vmem %s5, 208
        %v9429 = vld [vmem:[%s9428] sm:$0xf]
        %v9430 = vld [vmem:[%s9428 + $0x4] sm:$0xf]
        %v9431 = vld [vmem:[%s9428 + $0x8] sm:$0xf]
        %v9432 = vld [vmem:[%s9428 + $0xc] sm:$0xf]
        %v9433 = vld [vmem:[%s9428 + $0x10] sm:$0xf]
        %v9434 = vld [vmem:[%s9428 + $0x14] sm:$0xf]
        %v9435 = vld [vmem:[%s9428 + $0x18] sm:$0xf]
        %v9436 = vld [vmem:[%s9428 + $0x1c] sm:$0xf]
        %v9437 = vld [vmem:[%s9428 + $0x20] sm:$0xf]
        %v9438 = vld [vmem:[%s9428 + $0x24] sm:$0xf]
        %v9439 = vld [vmem:[%s9428 + $0x28] sm:$0xf]
        %v9440 = vld [vmem:[%s9428 + $0x2c] sm:$0xf]
        %v9441 = vld [vmem:[%s9428 + $0x30] sm:$0x3]
        %v9448 = vunpack.c.l.b16 %v9422
        %v9449 = vunpack.c.l.b16 %v9423
        %v9450 = vunpack.c.l.b16 %v9424
        %v9451 = vunpack.c.l.b16 %v9425
        %v9452 = vunpack.c.l.b16 %v9426
        %v9453 = vunpack.c.l.b16 %v9427
        %v9454 = vpack.c.b16 %v9449, %v9448
        %v9455 = vpack.c.b16 %v9451, %v9450
        %v9456 = vpack.c.b16 %v9453, %v9452
        %v9470 = vunpack.c.l.b16 %v9429
        %v9471 = vunpack.c.l.b16 %v9430
        %v9472 = vunpack.c.l.b16 %v9431
        %v9473 = vunpack.c.l.b16 %v9432
        %v9474 = vunpack.c.l.b16 %v9433
        %v9475 = vunpack.c.l.b16 %v9434
        %v9476 = vunpack.c.l.b16 %v9435
        %v9477 = vunpack.c.l.b16 %v9436
        %v9478 = vunpack.c.l.b16 %v9437
        %v9479 = vunpack.c.l.b16 %v9438
        %v9480 = vunpack.c.l.b16 %v9439
        %v9481 = vunpack.c.l.b16 %v9440
        %v9482 = vunpack.c.l.b16 %v9441
        %v9483 = vpack.c.b16 %v9471, %v9470
        %v9484 = vpack.c.b16 %v9473, %v9472
        %v9485 = vpack.c.b16 %v9475, %v9474
        %v9486 = vpack.c.b16 %v9477, %v9476
        %v9487 = vpack.c.b16 %v9479, %v9478
        %v9488 = vpack.c.b16 %v9481, %v9480
        %v9489 = vpack.c.b16 %v9482, %v9482
        %v9497 = vsel %vm8939, %v9454, 0
        %v9500 = vsel %vm8939, %v9455, 0
        %v9503 = vsel %vm8939, %v9456, 0
        %v9506 = vsel %vm8949, %v9489, 0
        %9508 = vmatprep.subr.bf16.mxu0 0
        %9509 = vmatpush1.bf16.msra.mxu0 0
        %9510 = vmatprep.subr.bf16.mxu0 0
        %9511 = vmatpush1.bf16.msra.mxu0 %v9506
        %9512 = vmatprep.subr.bf16.mxu0 0
        %9513 = vmatpush1.bf16.msra.mxu0 %v9488
        %9514 = vmatprep.subr.bf16.mxu0 0
        %9515 = vmatpush1.bf16.msra.mxu0 %v9487
        %9516 = vmatprep.subr.bf16.mxu0 0
        %9517 = vmatpush1.bf16.msra.mxu0 %v9486
        %9518 = vmatprep.subr.bf16.mxu0 0
        %9519 = vmatpush1.bf16.msra.mxu0 %v9485
        %9520 = vmatprep.subr.bf16.mxu0 0
        %9521 = vmatpush1.bf16.msra.mxu0 %v9484
        %9522 = vmatprep.subr.bf16.mxu0 0
        %9523 = vmatpush1.bf16.msra.mxu0 %v9483
        %9524 = vmatprep.subr.bf16.mxu0 0
        %9525 = vmatpush2.bf16.msra.mxu0 0
        %9526 = vmatprep.subr.bf16.mxu0 0
        %9527 = vmatpush2.bf16.msra.mxu0 0
        %9528 = vmatprep.subr.bf16.mxu0 0
        %9529 = vmatpush2.bf16.msra.mxu0 0
        %9530 = vmatprep.subr.bf16.mxu0 0
        %9531 = vmatpush2.bf16.msra.mxu0 0
        %9532 = vmatprep.subr.bf16.mxu0 0
        %9533 = vmatpush2.bf16.msra.mxu0 0
        %9534 = vmatprep.subr.bf16.mxu0 0
        %9535 = vmatpush2.bf16.msra.mxu0 0
        %9536 = vmatprep.subr.bf16.mxu0 0
        %9537 = vmatpush2.bf16.msra.mxu0 0
        %9538 = vmatprep.subr.bf16.mxu0 0
        %9539 = vmatpush2.bf16.msra.mxu0 0
        %9540 = vmatprep.mubr.bf16.mxu0 0
        %9541 = vmatmul.mubr.bf16.gmra.mxu0 %v9497
        %v9542 = vpop.f32.mrf.mxu0
        %v9543 = vadd.f32 0.0, %v9542
        %v9544 = vpop.f32.mrf.mxu0
        %v9545 = vpop.f32.mrf.mxu0
        %v9546 = vadd.f32 0.0, %v9545
        %v9547 = vpop.f32.mrf.mxu0
        %9548 = vmatprep.mubr.bf16.mxu0 0
        %9549 = vmatmul.mubr.bf16.gmra.mxu0 %v9500
        %v9550 = vpop.f32.mrf.mxu0
        %v9551 = vadd.f32 0.0, %v9550
        %v9552 = vpop.f32.mrf.mxu0
        %v9553 = vpop.f32.mrf.mxu0
        %v9554 = vadd.f32 0.0, %v9553
        %v9555 = vpop.f32.mrf.mxu0
        %9556 = vmatprep.mubr.bf16.mxu0 0
        %9557 = vmatmul.mubr.bf16.gmra.mxu0 %v9503
        %v9558 = vpop.f32.mrf.mxu0
        %v9559 = vpop.f32.mrf.mxu0
        %v9560 = vpop.f32.mrf.mxu0
        %v9561 = vpop.f32.mrf.mxu0
        %9562 = vdwg.mxu0
        %v9563 = vadd.f32 %v9417, %v9543
        %v9564 = vadd.f32 %v9418, %v9546
        %v9565 = vadd.f32 %v9419, %v9551
        %v9566 = vadd.f32 %v9420, %v9554
        %9571 = vrot.lane.b32.xlu0 %v9563, 96
        %v9572 = vpop.permute.xlu0 %9571
        %9573 = vrot.lane.b32.xlu0 %v9564, 96
        %v9574 = vpop.permute.xlu0 %9573
        %9575 = vrot.lane.b32.xlu0 %v9565, 96
        %v9576 = vpop.permute.xlu0 %9575
        %9577 = vrot.lane.b32.xlu0 %v9566, 96
        %v9578 = vpop.permute.xlu0 %9577
        %v9583 = vmax.f32 %v9563, %v9572
        %v9584 = vmax.f32 %v9564, %v9574
        %v9585 = vmax.f32 %v9565, %v9576
        %v9586 = vmax.f32 %v9566, %v9578
        %v9587 = vld [vmem:[%s6] sm:$0x1]
        %v9589 = vlaneseq
        %v9590 = vshrl.u32 %v9589, 7
        %v9591 = vsub.s32 0, %v9590
        %v9592 = vrot.slane %v9587, %v9591
        %v9594 = vadd.f32 %v9583, %v9592
        %v9595 = vadd.f32 %v9584, %v9592
        %v9596 = vadd.f32 %v9585, %v9592
        %v9597 = vadd.f32 %v9586, %v9592
        %v9598 = vmax.f32 %v9594, 0.0
        %v9599 = vmax.f32 %v9595, 0.0
        %v9600 = vmax.f32 %v9596, 0.0
        %v9601 = vmax.f32 %v9597, 0.0
        %v9602 = vmax.f32 %v9598, %v9600
        %v9603 = vmax.f32 %v9599, %v9601
        %v9604 = vld [vmem:[%s7] sm:$0xff]
        %v9605 = vld [vmem:[%s7 + $0x8] sm:$0xff]
        %v9606 = vld [vmem:[%s7 + $0x10] sm:$0xff]
        %v9607 = vld [vmem:[%s7 + $0x18] sm:$0xff]
        %v9608 = vld [vmem:[%s8] sm:$0x1]
        %v9610 = vlaneseq
        %v9611 = vshrl.u32 %v9610, 7
        %v9612 = vsub.s32 0, %v9611
        %v9613 = vrot.slane %v9608, %v9612
        %vm9615 = vcmask 261120
        %v9617 = vsel %vm9615, %v9602, 0
        %v9620 = vsel %vm9615, %v9603, 0
        %9622 = vmatprep.subr.mxu0 0.0
        %9623 = vmatpush1.msra.mxu0 0.0
        %9624 = vmatprep.subr.mxu0 0.0
        %9625 = vmatpush1.msra.mxu0 0.0
        %9626 = vmatprep.subr.mxu0 0.0
        %9627 = vmatpush1.msra.mxu0 0.0
        %9628 = vmatprep.subr.mxu0 0.0
        %9629 = vmatpush1.msra.mxu0 0.0
        %9630 = vmatprep.subr.mxu0 0.0
        %9631 = vmatpush1.msra.mxu0 0.0
        %9632 = vmatprep.subr.mxu0 0.0
        %9633 = vmatpush1.msra.mxu0 0.0
        %9634 = vmatprep.subr.mxu0 0.0
        %9635 = vmatpush1.msra.mxu0 0.0
        %9636 = vmatprep.subr.mxu0 0.0
        %9637 = vmatpush1.msra.mxu0 0.0
        %9638 = vmatprep.subr.mxu0 0.0
        %9639 = vmatpush1.msra.mxu0 0.0
        %9640 = vmatprep.subr.mxu0 0.0
        %9641 = vmatpush1.msra.mxu0 0.0
        %9642 = vmatprep.subr.mxu0 0.0
        %9643 = vmatpush1.msra.mxu0 0.0
        %9644 = vmatprep.subr.mxu0 0.0
        %9645 = vmatpush1.msra.mxu0 0.0
        %9646 = vmatprep.subr.mxu0 0.0
        %9647 = vmatpush1.msra.mxu0 %v9607
        %9648 = vmatprep.subr.mxu0 0.0
        %9649 = vmatpush1.msra.mxu0 %v9606
        %9650 = vmatprep.subr.mxu0 0.0
        %9651 = vmatpush1.msra.mxu0 %v9605
        %9652 = vmatprep.subr.mxu0 0.0
        %9653 = vmatpush1.msra.mxu0 %v9604
        %9654 = vmatprep.subr.mxu0 0.0
        %9655 = vmatpush2.msra.mxu0 0.0
        %9656 = vmatprep.subr.mxu0 0.0
        %9657 = vmatpush2.msra.mxu0 0.0
        %9658 = vmatprep.subr.mxu0 0.0
        %9659 = vmatpush2.msra.mxu0 0.0
        %9660 = vmatprep.subr.mxu0 0.0
        %9661 = vmatpush2.msra.mxu0 0.0
        %9662 = vmatprep.subr.mxu0 0.0
        %9663 = vmatpush2.msra.mxu0 0.0
        %9664 = vmatprep.subr.mxu0 0.0
        %9665 = vmatpush2.msra.mxu0 0.0
        %9666 = vmatprep.subr.mxu0 0.0
        %9667 = vmatpush2.msra.mxu0 0.0
        %9668 = vmatprep.subr.mxu0 0.0
        %9669 = vmatpush2.msra.mxu0 0.0
        %9670 = vmatprep.subr.mxu0 0.0
        %9671 = vmatpush2.msra.mxu0 0.0
        %9672 = vmatprep.subr.mxu0 0.0
        %9673 = vmatpush2.msra.mxu0 0.0
        %9674 = vmatprep.subr.mxu0 0.0
        %9675 = vmatpush2.msra.mxu0 0.0
        %9676 = vmatprep.subr.mxu0 0.0
        %9677 = vmatpush2.msra.mxu0 0.0
        %9678 = vmatprep.subr.mxu0 0.0
        %9679 = vmatpush2.msra.mxu0 0.0
        %9680 = vmatprep.subr.mxu0 0.0
        %9681 = vmatpush2.msra.mxu0 0.0
        %9682 = vmatprep.subr.mxu0 0.0
        %9683 = vmatpush2.msra.mxu0 0.0
        %9684 = vmatprep.subr.mxu0 0.0
        %9685 = vmatpush2.msra.mxu0 0.0
        %9686 = vmatprep.mubr.f32.mxu0 0.0
        %9687 = vmatmul.mubr.f32.gmra.mxu0 %v9617
        %v9688 = vpop.f32.mrf.mxu0
        %v9689 = vadd.f32 %v9613, %v9688
        %v9690 = vpop.f32.mrf.mxu0
        %9691 = vmatprep.mubr.f32.mxu0 0.0
        %9692 = vmatmul.mubr.f32.gmra.mxu0 %v9620
        %v9693 = vpop.f32.mrf.mxu0
        %v9694 = vadd.f32 %v9613, %v9693
        %v9695 = vpop.f32.mrf.mxu0
        %9696 = vdwg.mxu0
        %v9697 = vmax.f32 %v9689, 0.0
        %v9698 = vmax.f32 %v9694, 0.0
        %v9699 = vld [vmem:[%s9] sm:$0xff]
        %v9700 = vld [vmem:[%s9 + $0x8] sm:$0xff]
        %v9701 = vld [vmem:[%s9 + $0x10] sm:$0xff]
        %v9702 = vld [vmem:[%s9 + $0x18] sm:$0xff]
        %v9703 = vld [vmem:[%s9 + $0x20] sm:$0xff]
        %v9704 = vld [vmem:[%s9 + $0x28] sm:$0xff]
        %v9705 = vld [vmem:[%s9 + $0x30] sm:$0xff]
        %v9706 = vld [vmem:[%s9 + $0x38] sm:$0xff]
        %v9707 = vld [vmem:[%s10] sm:$0x1]
        %v9709 = vlaneseq
        %v9710 = vshrl.u32 %v9709, 7
        %v9711 = vsub.s32 0, %v9710
        %v9712 = vrot.slane %v9707, %v9711
        %vm9714 = vcmask 523264
        %v9716 = vsel %vm9714, %v9697, 0
        %v9719 = vsel %vm9714, %v9698, 0
        %9721 = vmatprep.subr.mxu0 0.0
        %9722 = vmatpush1.msra.mxu0 0.0
        %9723 = vmatprep.subr.mxu0 0.0
        %9724 = vmatpush1.msra.mxu0 0.0
        %9725 = vmatprep.subr.mxu0 0.0
        %9726 = vmatpush1.msra.mxu0 0.0
        %9727 = vmatprep.subr.mxu0 0.0
        %9728 = vmatpush1.msra.mxu0 0.0
        %9729 = vmatprep.subr.mxu0 0.0
        %9730 = vmatpush1.msra.mxu0 0.0
        %9731 = vmatprep.subr.mxu0 0.0
        %9732 = vmatpush1.msra.mxu0 0.0
        %9733 = vmatprep.subr.mxu0 0.0
        %9734 = vmatpush1.msra.mxu0 0.0
        %9735 = vmatprep.subr.mxu0 0.0
        %9736 = vmatpush1.msra.mxu0 0.0
        %9737 = vmatprep.subr.mxu0 0.0
        %9738 = vmatpush1.msra.mxu0 %v9706
        %9739 = vmatprep.subr.mxu0 0.0
        %9740 = vmatpush1.msra.mxu0 %v9705
        %9741 = vmatprep.subr.mxu0 0.0
        %9742 = vmatpush1.msra.mxu0 %v9704
        %9743 = vmatprep.subr.mxu0 0.0
        %9744 = vmatpush1.msra.mxu0 %v9703
        %9745 = vmatprep.subr.mxu0 0.0
        %9746 = vmatpush1.msra.mxu0 %v9702
        %9747 = vmatprep.subr.mxu0 0.0
        %9748 = vmatpush1.msra.mxu0 %v9701
        %9749 = vmatprep.subr.mxu0 0.0
        %9750 = vmatpush1.msra.mxu0 %v9700
        %9751 = vmatprep.subr.mxu0 0.0
        %9752 = vmatpush1.msra.mxu0 %v9699
        %9753 = vmatprep.subr.mxu0 0.0
        %9754 = vmatpush2.msra.mxu0 0.0
        %9755 = vmatprep.subr.mxu0 0.0
        %9756 = vmatpush2.msra.mxu0 0.0
        %9757 = vmatprep.subr.mxu0 0.0
        %9758 = vmatpush2.msra.mxu0 0.0
        %9759 = vmatprep.subr.mxu0 0.0
        %9760 = vmatpush2.msra.mxu0 0.0
        %9761 = vmatprep.subr.mxu0 0.0
        %9762 = vmatpush2.msra.mxu0 0.0
        %9763 = vmatprep.subr.mxu0 0.0
        %9764 = vmatpush2.msra.mxu0 0.0
        %9765 = vmatprep.subr.mxu0 0.0
        %9766 = vmatpush2.msra.mxu0 0.0
        %9767 = vmatprep.subr.mxu0 0.0
        %9768 = vmatpush2.msra.mxu0 0.0
        %9769 = vmatprep.subr.mxu0 0.0
        %9770 = vmatpush2.msra.mxu0 0.0
        %9771 = vmatprep.subr.mxu0 0.0
        %9772 = vmatpush2.msra.mxu0 0.0
        %9773 = vmatprep.subr.mxu0 0.0
        %9774 = vmatpush2.msra.mxu0 0.0
        %9775 = vmatprep.subr.mxu0 0.0
        %9776 = vmatpush2.msra.mxu0 0.0
        %9777 = vmatprep.subr.mxu0 0.0
        %9778 = vmatpush2.msra.mxu0 0.0
        %9779 = vmatprep.subr.mxu0 0.0
        %9780 = vmatpush2.msra.mxu0 0.0
        %9781 = vmatprep.subr.mxu0 0.0
        %9782 = vmatpush2.msra.mxu0 0.0
        %9783 = vmatprep.subr.mxu0 0.0
        %9784 = vmatpush2.msra.mxu0 0.0
        %9785 = vmatprep.mubr.f32.mxu0 0.0
        %9786 = vmatmul.mubr.f32.gmra.mxu0 %v9716
        %v9787 = vpop.f32.mrf.mxu0
        %v9788 = vadd.f32 %v9712, %v9787
        %v9789 = vpop.f32.mrf.mxu0
        %9790 = vmatprep.mubr.f32.mxu0 0.0
        %9791 = vmatmul.mubr.f32.gmra.mxu0 %v9719
        %v9792 = vpop.f32.mrf.mxu0
        %v9793 = vadd.f32 %v9712, %v9792
        %v9794 = vpop.f32.mrf.mxu0
        %9795 = vdwg.mxu0
        %vm9796 = vcmask 80896
        %v9797 = vsel %vm9796, %v9788, -inf
        %9798 = vmax.xlane.f32.xlu0 %v9797
        %v9799 = vpop.xlane.xlu0 %9798
        %v9800 = vsel %vm9796, %v9793, -inf
        %9801 = vmax.xlane.f32.xlu0 %v9800
        %v9802 = vpop.xlane.xlu0 %9801
        %v9803 = vsub.f32 %v9788, %v9799
        %v9804 = vsub.f32 %v9793, %v9802
        %v9805 = vmul.f32 %v9803, 1.442695
        %v9806 = vpow.pop %v9805
        %v9807 = vmul.f32 %v9804, 1.442695
        %v9808 = vpow.pop %v9807
        %v9809 = vsel %vm9796, %v9806, 0.0
        %9810 = vadd.xlane.f32.xlu0 %v9809
        %v9811 = vpop.xlane.xlu0 %9810
        %v9812 = vsel %vm9796, %v9808, 0.0
        %9813 = vadd.xlane.f32.xlu0 %v9812
        %v9814 = vpop.xlane.xlu0 %9813
        %v9815 = vlog2.pop %v9811
        %v9816 = vmul.f32 %v9815, 0.6931472
        %v9817 = vlog2.pop %v9814
        %v9818 = vmul.f32 %v9817, 0.6931472
        %v9819 = vadd.f32 %v9799, %v9816
        %v9820 = vadd.f32 %v9802, %v9818
        %v9821 = vsub.f32 %v9788, %v9819
        %v9822 = vsub.f32 %v9793, %v9820
        %9823 = vst.msk [vmem:[%s667] sm:$0xff] %vm9796, %v9821
        %9824 = vst.msk [vmem:[%s667 + $0x8] sm:$0xff] %vm9796, %v9822
        %s9825 = smul.u32 2, %s22
        %p9826 = scmp.lt.s32.totalorder %s9825, 3
        %s9827 = scalar_select %p9826, %s9825, 3
        %s9828 = smul.addr %s9827, 8
        %s9829 = scalar_lea.vmem %s11, %s9828
        // Predicated region
        $region106: #{net_forward.1} parent=100 // pred_check
          %p9830 = pneg %p276
        $region107: #{net_forward.1} parent=100 // pred_check_branch
          %9832 = sbr.rel (%p9830) target = $region109
        $region108: #{net_forward.1} parent=100 // pred_region
          %s9833 = smul.u32 2, %s22
        $region109: #{net_forward.1} parent=100 // pred_fallthru
          _
      $region101: #{net_forward.1} parent=5 // pred_fallthru
        _
      %p9834 = scmp.le.s32.totalorder 2, %s17
      // Predicated region
      $region110: #{net_forward.1} parent=5 // pred_check
        %p9835 = pneg %p9834
      $region111: #{net_forward.1} parent=5 // pred_check_branch
        %9837 = sbr.rel (%p9835) target = $region113
      $region112: #{net_forward.1} parent=5 // pred_region
        %s9838 = ssub.s32 %s17, 2
        // Predicated region
        $region114: #{net_forward.1} parent=112 // pred_check
          %p9839 = pneg %p282
        $region115: #{net_forward.1} parent=112 // pred_check_branch
          %9841 = sbr.rel (%p9839) target = $region117
        $region116: #{net_forward.1} parent=112 // pred_region
          %s9842 = smul.u32 2, %s23
          %p9843 = scmp.lt.s32.totalorder %s9842, 3
          %s9844 = scalar_select %p9843, %s9842, 3
          %s9845 = smul.addr %s9844, 8
          %s9846 = scalar_lea.vmem %s11, %s9845
        $region117: #{net_forward.1} parent=112 // pred_fallthru
          _
      $region113: #{net_forward.1} parent=5 // pred_fallthru
        _
    $region6: #{net_forward.1} parent=1 // loop_footer
      %s21 = sadd.s32 1, %s17
    $region7: #{net_forward.1} parent=1 // loop_footer_branch
      %16 = sbr.rel target = $region3
    $region8: #{net_forward.1} parent=1 // loop_exit
      _

</llo_original>
